<compile_context>
chip_gen: v7x
topology: tpu7x:2x2x1
jax: 0.10.0
libtpu: 0.0.40
codegen_flags: <defaults>
</compile_context>

<pallas_src>
import functools

import jax
import jax.numpy as jnp
from jax import lax
from jax.experimental import pallas as pl
from jax.experimental.pallas import tpu as pltpu


def _resblock_down_kernel(xpad_ref, wl_ref, bl_ref, w1_ref, b1_ref, w2_ref, b2_ref,
                          out_ref, col_ref, pbuf_ref, *, ksize, pk, H, W, To):
    # xpad_ref : (H+4p, W+2p, Cp)   bf16, zero-padded input (2p rows / p cols / lane-pad C)
    # wl_ref   : (Cp, Cpo)          bf16 1x1 conv weight
    # w1_ref   : (kk*Cp, Cp)        bf16 fused 3x3 conv weight (in->in)
    # w2_ref   : (kk*Cp, Cpo)       bf16 fused 3x3 conv weight (in->out)
    # col_ref  : (nr1*W, kk*Cp)     bf16 im2col scratch (shared by both convs)
    # pbuf_ref : (nr1, W+2p, Cp)    bf16 zero-padded r1 scratch
    # out_ref  : (To*Wo, Cpo)       f32 lane-dense output slab for this row tile
    pad = ksize // 2
    kk = ksize * ksize
    th = To * pk                     # un-pooled rows produced by this tile
    nr1 = th + 2 * pad               # conv1 rows needed (incl. halo for conv2)
    Wo = W // pk
    Cp = w1_ref.shape[-1]            # padded in-channels
    Cpo = wl_ref.shape[-1]           # padded out-channels

    j = pl.program_id(1)
    r0 = pl.multiple_of(j * th, th)  # first un-pooled row of this tile (image coords)

    # ---------------- left branch: 1x1 conv on the tile rows ----------------
    xl = xpad_ref[pl.ds(r0 + 2 * pad, th), pl.ds(pad, W), :].reshape(th * W, Cp)
    left = jnp.dot(xl, wl_ref[...], preferred_element_type=jnp.float32) + bl_ref[...]

    # ---------------- right branch, conv1: im2col -> single MXU matmul ------
    # r1 rows [r0-pad, r0+th+pad) are needed by conv2; x is padded by 2*pad rows so
    # every tap exists.  relu is applied on the fly (relu(pad(x)) == pad(relu(x))).
    for k in range(kk):
        dy, dx = k // ksize, k % ksize
        patch = xpad_ref[pl.ds(r0 + dy, nr1), pl.ds(dx, W), :]
        col_ref[:, k * Cp:(k + 1) * Cp] = jnp.maximum(patch, 0).reshape(nr1 * W, Cp)
    r1 = jnp.dot(col_ref[...], w1_ref[...], preferred_element_type=jnp.float32) + b1_ref[...]
    r1 = jnp.maximum(r1, 0.0).reshape(nr1, W, Cp)
    # conv2's 'same' padding treats rows outside the image as ZERO -> mask halo rows.
    grow = (r0 - pad) + lax.broadcasted_iota(jnp.int32, (nr1, W, Cp), 0)
    r1 = jnp.where((grow >= 0) & (grow < H), r1, 0.0)

    # zero-padded r1 scratch: zero border columns, write interior in place.
    pbuf_ref[:, :pad, :] = jnp.zeros((nr1, pad, Cp), jnp.bfloat16)
    pbuf_ref[:, pad + W:, :] = jnp.zeros((nr1, pad, Cp), jnp.bfloat16)
    pbuf_ref[:, pad:pad + W, :] = r1.astype(jnp.bfloat16)

    # ---------------- right branch, conv2: im2col -> single MXU matmul ------
    m2 = th * W
    for k in range(kk):
        dy, dx = k // ksize, k % ksize
        col_ref[:m2, k * Cp:(k + 1) * Cp] = (
            pbuf_ref[dy:dy + th, dx:dx + W, :].reshape(m2, Cp))
    right = jnp.dot(col_ref[:m2, :], w2_ref[...],
                    preferred_element_type=jnp.float32) + b2_ref[...]

    # ---------------- avg-pool(left + right): reshape + sums ----------------
    s = (left + right).reshape(To, pk, W, Cpo).sum(axis=1)   # pool rows
    s = s.reshape(To * Wo, pk, Cpo).sum(axis=1)              # pool cols
    out_ref[...] = (s * (1.0 / (pk * pk))).astype(out_ref.dtype)


def _round_up(n, m):
    return ((n + m - 1) // m) * m


def residual_block_down(x_nchw, wl, bl, wr1, br1, wr2, br2,
                        kernel_size=3, pooling_kernel=2, row_tile=4):
    B, Cin, H, W = x_nchw.shape
    Cout = wl.shape[-1]
    ks, pk = kernel_size, pooling_kernel
    pad = ks // 2
    kk = ks * ks
    assert H % pk == 0 and W % pk == 0
    Ho, Wo = H // pk, W // pk

    LANES = 128
    Cp = _round_up(Cin, LANES)       # lane-dense in-channels
    Cpo = _round_up(Cout, LANES)     # lane-dense out-channels

    To = min(row_tile, Ho)           # output rows per grid step
    while Ho % To:
        To -= 1
    nt = Ho // To
    th = To * pk
    nr1 = th + 2 * pad
    Hp, Wp = H + 4 * pad, W + 2 * pad

    # NCHW -> NHWC; rows padded by 2*pad (conv1+conv2 receptive field), cols by pad,
    # channels zero-padded to lane width; bf16 halves DMA bytes and feeds the MXU.
    x = jnp.transpose(x_nchw, (0, 2, 3, 1))
    xpad = jnp.pad(x, ((0, 0), (2 * pad, 2 * pad), (pad, pad), (0, Cp - Cin)))
    xpad = xpad.astype(jnp.bfloat16)

    wl_p = jnp.pad(wl, ((0, Cp - Cin), (0, Cpo - Cout))).astype(jnp.bfloat16)
    bl_p = jnp.pad(bl, (0, Cpo - Cout)).reshape(1, Cpo).astype(jnp.float32)
    # Fuse the kk taps into one (kk*Cp, C) weight: each conv becomes ONE matmul.
    w1f = jnp.pad(wr1, ((0, 0), (0, 0), (0, Cp - Cin), (0, Cp - Cin)))
    w1f = w1f.reshape(kk * Cp, Cp).astype(jnp.bfloat16)
    b1p = jnp.pad(br1, (0, Cp - Cin)).reshape(1, Cp).astype(jnp.float32)
    w2f = jnp.pad(wr2, ((0, 0), (0, 0), (0, Cp - Cin), (0, Cpo - Cout)))
    w2f = w2f.reshape(kk * Cp, Cpo).astype(jnp.bfloat16)
    b2p = jnp.pad(br2, (0, Cpo - Cout)).reshape(1, Cpo).astype(jnp.float32)

    kernel = functools.partial(_resblock_down_kernel,
                               ksize=ks, pk=pk, H=H, W=W, To=To)

    out = pl.pallas_call(
        kernel,
        out_shape=jax.ShapeDtypeStruct((B, Ho * Wo, Cpo), jnp.float32),
        grid_spec=pltpu.PrefetchScalarGridSpec(
            num_scalar_prefetch=0,
            grid=(B, nt),
            in_specs=[
                pl.BlockSpec((None, Hp, Wp, Cp), lambda b, j: (b, 0, 0, 0)),
                pl.BlockSpec((Cp, Cpo), lambda b, j: (0, 0)),
                pl.BlockSpec((1, Cpo), lambda b, j: (0, 0)),
                pl.BlockSpec((kk * Cp, Cp), lambda b, j: (0, 0)),
                pl.BlockSpec((1, Cp), lambda b, j: (0, 0)),
                pl.BlockSpec((kk * Cp, Cpo), lambda b, j: (0, 0)),
                pl.BlockSpec((1, Cpo), lambda b, j: (0, 0)),
            ],
            out_specs=pl.BlockSpec((None, To * Wo, Cpo), lambda b, j: (b, j, 0)),
            scratch_shapes=[
                pltpu.VMEM((nr1 * W, kk * Cp), jnp.bfloat16),       # im2col slab
                pltpu.VMEM((nr1, W + 2 * pad, Cp), jnp.bfloat16),   # zero-padded r1
            ],
        ),
        compiler_params=pltpu.CompilerParams(
            dimension_semantics=("parallel", "parallel"),
            vmem_limit_bytes=48 * 1024 * 1024,
        ),
    )(xpad, wl_p, bl_p, w1f, b1p, w2f, b2p)

    # (B, Ho*Wo, Cpo) lane-dense slab -> NCHW, drop channel padding.
    out = out[:, :, :Cout].reshape(B, Ho, Wo, Cout)
    return jnp.transpose(out, (0, 3, 1, 2))


# ---------------- pure-JAX reference (for correctness check) ----------------
def _avg_pool_nchw(x, pk):
    B, C, H, W = x.shape
    return x.reshape(B, C, H // pk, pk, W // pk, pk).mean(axis=(3, 5))


def ref_forward(x, wl, bl, wr1, br1, wr2, br2, ks=3, pk=2):
    dn = ('NCHW', 'HWIO', 'NCHW')
    pad = ks // 2
    Cin, Cout = wl.shape
    left = lax.conv_general_dilated(x, wl.reshape(1, 1, Cin, Cout), (1, 1),
                                    [(0, 0), (0, 0)], dimension_numbers=dn)
    left = _avg_pool_nchw(left + bl.reshape(1, -1, 1, 1), pk)
    r = jnp.maximum(x, 0.0)
    r = lax.conv_general_dilated(r, wr1, (1, 1), [(pad, pad), (pad, pad)],
                                 dimension_numbers=dn)
    r = jnp.maximum(r + br1.reshape(1, -1, 1, 1), 0.0)
    r = lax.conv_general_dilated(r, wr2, (1, 1), [(pad, pad), (pad, pad)],
                                 dimension_numbers=dn)
    r = _avg_pool_nchw(r + br2.reshape(1, -1, 1, 1), pk)
    return left + r


if __name__ == "__main__":
    B, Cin, Cout, H, W = 2, 4, 8, 16, 16

    key = jax.random.PRNGKey(0)
    k = jax.random.split(key, 7)
    x = jax.random.normal(k[0], (B, Cin, H, W), jnp.float32)

    # Deterministic synthetic parameters (HWIO conv weight layout).
    wl  = jax.random.normal(k[1], (Cin, Cout), jnp.float32) * 0.1       # 1x1 conv
    bl  = jax.random.normal(k[2], (Cout,), jnp.float32) * 0.1
    wr1 = jax.random.normal(k[3], (3, 3, Cin, Cin), jnp.float32) * 0.1  # 3x3 conv
    br1 = jax.random.normal(k[4], (Cin,), jnp.float32) * 0.1
    wr2 = jax.random.normal(k[5], (3, 3, Cin, Cout), jnp.float32) * 0.1  # 3x3 conv
    br2 = jax.random.normal(k[6], (Cout,), jnp.float32) * 0.1

    out = residual_block_down(x, wl, bl, wr1, br1, wr2, br2)
    out = jax.block_until_ready(out)

    ref = ref_forward(x, wl, bl, wr1, br1, wr2, br2)
    assert out.shape == (B, Cout, H // 2, W // 2), out.shape
    # bf16 MXU inputs with f32 accumulation -> tolerance loosened vs pure-f32.
    assert jnp.allclose(out, ref, rtol=3e-2, atol=3e-2), \
        float(jnp.max(jnp.abs(out - ref)))

    print("KERNEL_OK")
</pallas_src>

<mosaic_0001>
module attributes {stable_mosaic.version = 11 : i64} {
  func.func @_resblock_down_kernel(%arg0: i32, %arg1: i32, %arg2: memref<1x20x18x128xbf16, #tpu.memory_space<vmem>>, %arg3: memref<128x128xbf16, #tpu.memory_space<vmem>>, %arg4: memref<1x128xf32, #tpu.memory_space<vmem>>, %arg5: memref<1152x128xbf16, #tpu.memory_space<vmem>>, %arg6: memref<1x128xf32, #tpu.memory_space<vmem>>, %arg7: memref<1152x128xbf16, #tpu.memory_space<vmem>>, %arg8: memref<1x128xf32, #tpu.memory_space<vmem>>, %arg9: memref<1x32x128xf32, #tpu.memory_space<vmem>>, %arg10: memref<160x1152xbf16, #tpu.memory_space<vmem>>, %arg11: memref<10x18x128xbf16, #tpu.memory_space<vmem>>) attributes {dimension_semantics = [#tpu.dimension_semantics<parallel>, #tpu.dimension_semantics<parallel>], iteration_bounds = array<i64: 2, 2>, scalar_prefetch = 0 : i64, scratch_operands = 2 : i64, tpu.core_type = #tpu.core_type<tc>, window_params = [{transform_indices = @transform_0, window_bounds = array<i64: 1, 20, 18, 128>}, {pipeline_mode = #tpu.pipeline_mode<synchronous>, transform_indices = @transform_1, window_bounds = array<i64: 128, 128>}, {pipeline_mode = #tpu.pipeline_mode<synchronous>, transform_indices = @transform_2, window_bounds = array<i64: 1, 128>}, {pipeline_mode = #tpu.pipeline_mode<synchronous>, transform_indices = @transform_3, window_bounds = array<i64: 1152, 128>}, {pipeline_mode = #tpu.pipeline_mode<synchronous>, transform_indices = @transform_4, window_bounds = array<i64: 1, 128>}, {pipeline_mode = #tpu.pipeline_mode<synchronous>, transform_indices = @transform_5, window_bounds = array<i64: 1152, 128>}, {pipeline_mode = #tpu.pipeline_mode<synchronous>, transform_indices = @transform_6, window_bounds = array<i64: 1, 128>}, {transform_indices = @transform_7, window_bounds = array<i64: 1, 32, 128>}]} {
    %c8_i32 = arith.constant 8 : i32
    %0 = arith.muli %arg1, %c8_i32 : i32
    %1 = tpu.assume_multiple %0, 8 : i32
    %c2_i32 = arith.constant 2 : i32
    %2 = arith.addi %1, %c2_i32 : i32
    %c0 = arith.constant 0 : index
    %3 = arith.index_cast %2 : i32 to index
    %c1 = arith.constant 1 : index
    %c0_0 = arith.constant 0 : index
    %4 = vector.load %arg2[%c0, %3, %c1, %c0_0] : memref<1x20x18x128xbf16, #tpu.memory_space<vmem>>, vector<1x8x16x128xbf16>
    %5 = vector.shape_cast %4 : vector<1x8x16x128xbf16> to vector<8x16x128xbf16>
    %6 = vector.shape_cast %5 : vector<8x16x128xbf16> to vector<128x128xbf16>
    %c0_1 = arith.constant 0 : index
    %c0_2 = arith.constant 0 : index
    %7 = vector.load %arg3[%c0_1, %c0_2] : memref<128x128xbf16, #tpu.memory_space<vmem>>, vector<128x128xbf16>
    %cst = arith.constant dense<0.000000e+00> : vector<128x128xf32>
    %8 = tpu.matmul %6, %7, %cst {dimension_numbers = #tpu.dot_dimension_numbers<[1], [0], [0], [1], [0, 0, 1, 1], [], []>} : vector<128x128xbf16>, vector<128x128xbf16>, vector<128x128xf32> -> vector<128x128xf32>
    %c0_3 = arith.constant 0 : index
    %c0_4 = arith.constant 0 : index
    %9 = vector.load %arg4[%c0_3, %c0_4] : memref<1x128xf32, #tpu.memory_space<vmem>>, vector<1x128xf32>
    %10 = vector.broadcast %9 : vector<1x128xf32> to vector<128x128xf32>
    %11 = arith.addf %8, %10 : vector<128x128xf32>
    %c0_i32 = arith.constant 0 : i32
    %12 = arith.addi %1, %c0_i32 : i32
    %c0_5 = arith.constant 0 : index
    %13 = arith.index_cast %12 : i32 to index
    %c0_6 = arith.constant 0 : index
    %c0_7 = arith.constant 0 : index
    %14 = vector.load %arg2[%c0_5, %13, %c0_6, %c0_7] : memref<1x20x18x128xbf16, #tpu.memory_space<vmem>>, vector<1x10x16x128xbf16>
    %15 = vector.shape_cast %14 : vector<1x10x16x128xbf16> to vector<10x16x128xbf16>
    %cst_8 = arith.constant 0.000000e+00 : bf16
    %16 = vector.broadcast %cst_8 : bf16 to vector<10x16x128xbf16>
    %17 = arith.maximumf %15, %16 : vector<10x16x128xbf16>
    %18 = vector.shape_cast %17 : vector<10x16x128xbf16> to vector<160x128xbf16>
    %c0_9 = arith.constant 0 : index
    %c0_10 = arith.constant 0 : index
    %19 = vector.load %arg10[%c0_9, %c0_10] : memref<160x1152xbf16, #tpu.memory_space<vmem>>, vector<160x128xbf16>
    tpu.vector_store %arg10[%c0_9, %c0_10], %18 {strides = array<i32>} : memref<160x1152xbf16, #tpu.memory_space<vmem>>, vector<160x128xbf16>,
    %c0_i32_11 = arith.constant 0 : i32
    %20 = arith.addi %1, %c0_i32_11 : i32
    %c0_12 = arith.constant 0 : index
    %21 = arith.index_cast %20 : i32 to index
    %c1_13 = arith.constant 1 : index
    %c0_14 = arith.constant 0 : index
    %22 = vector.load %arg2[%c0_12, %21, %c1_13, %c0_14] : memref<1x20x18x128xbf16, #tpu.memory_space<vmem>>, vector<1x10x16x128xbf16>
    %23 = vector.shape_cast %22 : vector<1x10x16x128xbf16> to vector<10x16x128xbf16>
    %cst_15 = arith.constant 0.000000e+00 : bf16
    %24 = vector.broadcast %cst_15 : bf16 to vector<10x16x128xbf16>
    %25 = arith.maximumf %23, %24 : vector<10x16x128xbf16>
    %26 = vector.shape_cast %25 : vector<10x16x128xbf16> to vector<160x128xbf16>
    %c0_16 = arith.constant 0 : index
    %c128 = arith.constant 128 : index
    %27 = vector.load %arg10[%c0_16, %c128] : memref<160x1152xbf16, #tpu.memory_space<vmem>>, vector<160x128xbf16>
    tpu.vector_store %arg10[%c0_16, %c128], %26 {strides = array<i32>} : memref<160x1152xbf16, #tpu.memory_space<vmem>>, vector<160x128xbf16>,
    %c0_i32_17 = arith.constant 0 : i32
    %28 = arith.addi %1, %c0_i32_17 : i32
    %c0_18 = arith.constant 0 : index
    %29 = arith.index_cast %28 : i32 to index
    %c2 = arith.constant 2 : index
    %c0_19 = arith.constant 0 : index
    %30 = vector.load %arg2[%c0_18, %29, %c2, %c0_19] : memref<1x20x18x128xbf16, #tpu.memory_space<vmem>>, vector<1x10x16x128xbf16>
    %31 = vector.shape_cast %30 : vector<1x10x16x128xbf16> to vector<10x16x128xbf16>
    %cst_20 = arith.constant 0.000000e+00 : bf16
    %32 = vector.broadcast %cst_20 : bf16 to vector<10x16x128xbf16>
    %33 = arith.maximumf %31, %32 : vector<10x16x128xbf16>
    %34 = vector.shape_cast %33 : vector<10x16x128xbf16> to vector<160x128xbf16>
    %c0_21 = arith.constant 0 : index
    %c256 = arith.constant 256 : index
    %35 = vector.load %arg10[%c0_21, %c256] : memref<160x1152xbf16, #tpu.memory_space<vmem>>, vector<160x128xbf16>
    tpu.vector_store %arg10[%c0_21, %c256], %34 {strides = array<i32>} : memref<160x1152xbf16, #tpu.memory_space<vmem>>, vector<160x128xbf16>,
    %c1_i32 = arith.constant 1 : i32
    %36 = arith.addi %1, %c1_i32 : i32
    %c0_22 = arith.constant 0 : index
    %37 = arith.index_cast %36 : i32 to index
    %c0_23 = arith.constant 0 : index
    %c0_24 = arith.constant 0 : index
    %38 = vector.load %arg2[%c0_22, %37, %c0_23, %c0_24] : memref<1x20x18x128xbf16, #tpu.memory_space<vmem>>, vector<1x10x16x128xbf16>
    %39 = vector.shape_cast %38 : vector<1x10x16x128xbf16> to vector<10x16x128xbf16>
    %cst_25 = arith.constant 0.000000e+00 : bf16
    %40 = vector.broadcast %cst_25 : bf16 to vector<10x16x128xbf16>
    %41 = arith.maximumf %39, %40 : vector<10x16x128xbf16>
    %42 = vector.shape_cast %41 : vector<10x16x128xbf16> to vector<160x128xbf16>
    %c0_26 = arith.constant 0 : index
    %c384 = arith.constant 384 : index
    %43 = vector.load %arg10[%c0_26, %c384] : memref<160x1152xbf16, #tpu.memory_space<vmem>>, vector<160x128xbf16>
    tpu.vector_store %arg10[%c0_26, %c384], %42 {strides = array<i32>} : memref<160x1152xbf16, #tpu.memory_space<vmem>>, vector<160x128xbf16>,
    %c1_i32_27 = arith.constant 1 : i32
    %44 = arith.addi %1, %c1_i32_27 : i32
    %c0_28 = arith.constant 0 : index
    %45 = arith.index_cast %44 : i32 to index
    %c1_29 = arith.constant 1 : index
    %c0_30 = arith.constant 0 : index
    %46 = vector.load %arg2[%c0_28, %45, %c1_29, %c0_30] : memref<1x20x18x128xbf16, #tpu.memory_space<vmem>>, vector<1x10x16x128xbf16>
    %47 = vector.shape_cast %46 : vector<1x10x16x128xbf16> to vector<10x16x128xbf16>
    %cst_31 = arith.constant 0.000000e+00 : bf16
    %48 = vector.broadcast %cst_31 : bf16 to vector<10x16x128xbf16>
    %49 = arith.maximumf %47, %48 : vector<10x16x128xbf16>
    %50 = vector.shape_cast %49 : vector<10x16x128xbf16> to vector<160x128xbf16>
    %c0_32 = arith.constant 0 : index
    %c512 = arith.constant 512 : index
    %51 = vector.load %arg10[%c0_32, %c512] : memref<160x1152xbf16, #tpu.memory_space<vmem>>, vector<160x128xbf16>
    tpu.vector_store %arg10[%c0_32, %c512], %50 {strides = array<i32>} : memref<160x1152xbf16, #tpu.memory_space<vmem>>, vector<160x128xbf16>,
    %c1_i32_33 = arith.constant 1 : i32
    %52 = arith.addi %1, %c1_i32_33 : i32
    %c0_34 = arith.constant 0 : index
    %53 = arith.index_cast %52 : i32 to index
    %c2_35 = arith.constant 2 : index
    %c0_36 = arith.constant 0 : index
    %54 = vector.load %arg2[%c0_34, %53, %c2_35, %c0_36] : memref<1x20x18x128xbf16, #tpu.memory_space<vmem>>, vector<1x10x16x128xbf16>
    %55 = vector.shape_cast %54 : vector<1x10x16x128xbf16> to vector<10x16x128xbf16>
    %cst_37 = arith.constant 0.000000e+00 : bf16
    %56 = vector.broadcast %cst_37 : bf16 to vector<10x16x128xbf16>
    %57 = arith.maximumf %55, %56 : vector<10x16x128xbf16>
    %58 = vector.shape_cast %57 : vector<10x16x128xbf16> to vector<160x128xbf16>
    %c0_38 = arith.constant 0 : index
    %c640 = arith.constant 640 : index
    %59 = vector.load %arg10[%c0_38, %c640] : memref<160x1152xbf16, #tpu.memory_space<vmem>>, vector<160x128xbf16>
    tpu.vector_store %arg10[%c0_38, %c640], %58 {strides = array<i32>} : memref<160x1152xbf16, #tpu.memory_space<vmem>>, vector<160x128xbf16>,
    %c2_i32_39 = arith.constant 2 : i32
    %60 = arith.addi %1, %c2_i32_39 : i32
    %c0_40 = arith.constant 0 : index
    %61 = arith.index_cast %60 : i32 to index
    %c0_41 = arith.constant 0 : index
    %c0_42 = arith.constant 0 : index
    %62 = vector.load %arg2[%c0_40, %61, %c0_41, %c0_42] : memref<1x20x18x128xbf16, #tpu.memory_space<vmem>>, vector<1x10x16x128xbf16>
    %63 = vector.shape_cast %62 : vector<1x10x16x128xbf16> to vector<10x16x128xbf16>
    %cst_43 = arith.constant 0.000000e+00 : bf16
    %64 = vector.broadcast %cst_43 : bf16 to vector<10x16x128xbf16>
    %65 = arith.maximumf %63, %64 : vector<10x16x128xbf16>
    %66 = vector.shape_cast %65 : vector<10x16x128xbf16> to vector<160x128xbf16>
    %c0_44 = arith.constant 0 : index
    %c768 = arith.constant 768 : index
    %67 = vector.load %arg10[%c0_44, %c768] : memref<160x1152xbf16, #tpu.memory_space<vmem>>, vector<160x128xbf16>
    tpu.vector_store %arg10[%c0_44, %c768], %66 {strides = array<i32>} : memref<160x1152xbf16, #tpu.memory_space<vmem>>, vector<160x128xbf16>,
    %c2_i32_45 = arith.constant 2 : i32
    %68 = arith.addi %1, %c2_i32_45 : i32
    %c0_46 = arith.constant 0 : index
    %69 = arith.index_cast %68 : i32 to index
    %c1_47 = arith.constant 1 : index
    %c0_48 = arith.constant 0 : index
    %70 = vector.load %arg2[%c0_46, %69, %c1_47, %c0_48] : memref<1x20x18x128xbf16, #tpu.memory_space<vmem>>, vector<1x10x16x128xbf16>
    %71 = vector.shape_cast %70 : vector<1x10x16x128xbf16> to vector<10x16x128xbf16>
    %cst_49 = arith.constant 0.000000e+00 : bf16
    %72 = vector.broadcast %cst_49 : bf16 to vector<10x16x128xbf16>
    %73 = arith.maximumf %71, %72 : vector<10x16x128xbf16>
    %74 = vector.shape_cast %73 : vector<10x16x128xbf16> to vector<160x128xbf16>
    %c0_50 = arith.constant 0 : index
    %c896 = arith.constant 896 : index
    %75 = vector.load %arg10[%c0_50, %c896] : memref<160x1152xbf16, #tpu.memory_space<vmem>>, vector<160x128xbf16>
    tpu.vector_store %arg10[%c0_50, %c896], %74 {strides = array<i32>} : memref<160x1152xbf16, #tpu.memory_space<vmem>>, vector<160x128xbf16>,
    %c2_i32_51 = arith.constant 2 : i32
    %76 = arith.addi %1, %c2_i32_51 : i32
    %c0_52 = arith.constant 0 : index
    %77 = arith.index_cast %76 : i32 to index
    %c2_53 = arith.constant 2 : index
    %c0_54 = arith.constant 0 : index
    %78 = vector.load %arg2[%c0_52, %77, %c2_53, %c0_54] : memref<1x20x18x128xbf16, #tpu.memory_space<vmem>>, vector<1x10x16x128xbf16>
    %79 = vector.shape_cast %78 : vector<1x10x16x128xbf16> to vector<10x16x128xbf16>
    %cst_55 = arith.constant 0.000000e+00 : bf16
    %80 = vector.broadcast %cst_55 : bf16 to vector<10x16x128xbf16>
    %81 = arith.maximumf %79, %80 : vector<10x16x128xbf16>
    %82 = vector.shape_cast %81 : vector<10x16x128xbf16> to vector<160x128xbf16>
    %c0_56 = arith.constant 0 : index
    %c1024 = arith.constant 1024 : index
    %83 = vector.load %arg10[%c0_56, %c1024] : memref<160x1152xbf16, #tpu.memory_space<vmem>>, vector<160x128xbf16>
    tpu.vector_store %arg10[%c0_56, %c1024], %82 {strides = array<i32>} : memref<160x1152xbf16, #tpu.memory_space<vmem>>, vector<160x128xbf16>,
    %c0_57 = arith.constant 0 : index
    %c0_58 = arith.constant 0 : index
    %84 = vector.load %arg10[%c0_57, %c0_58] : memref<160x1152xbf16, #tpu.memory_space<vmem>>, vector<160x1152xbf16>
    %c0_59 = arith.constant 0 : index
    %c0_60 = arith.constant 0 : index
    %85 = vector.load %arg5[%c0_59, %c0_60] : memref<1152x128xbf16, #tpu.memory_space<vmem>>, vector<1152x128xbf16>
    %cst_61 = arith.constant dense<0.000000e+00> : vector<160x128xf32>
    %86 = tpu.matmul %84, %85, %cst_61 {dimension_numbers = #tpu.dot_dimension_numbers<[1], [0], [0], [1], [0, 0, 1, 1], [], []>} : vector<160x1152xbf16>, vector<1152x128xbf16>, vector<160x128xf32> -> vector<160x128xf32>
    %c0_62 = arith.constant 0 : index
    %c0_63 = arith.constant 0 : index
    %87 = vector.load %arg6[%c0_62, %c0_63] : memref<1x128xf32, #tpu.memory_space<vmem>>, vector<1x128xf32>
    %88 = vector.broadcast %87 : vector<1x128xf32> to vector<160x128xf32>
    %89 = arith.addf %86, %88 : vector<160x128xf32>
    %cst_64 = arith.constant 0.000000e+00 : f32
    %90 = vector.broadcast %cst_64 : f32 to vector<160x128xf32>
    %91 = arith.maximumf %89, %90 : vector<160x128xf32>
    %92 = vector.shape_cast %91 : vector<160x128xf32> to vector<10x16x128xf32>
    %c1_i32_65 = arith.constant 1 : i32
    %93 = arith.subi %1, %c1_i32_65 : i32
    %94 = tpu.iota {dimensions = array<i32: 0>} : vector<10x16x128xi32>
    %95 = vector.broadcast %93 : i32 to vector<10x16x128xi32>
    %96 = arith.addi %95, %94 : vector<10x16x128xi32>
    %c0_i32_66 = arith.constant 0 : i32
    %97 = vector.broadcast %c0_i32_66 : i32 to vector<10x16x128xi32>
    %98 = arith.cmpi sge, %96, %97 : vector<10x16x128xi32>
    %c16_i32 = arith.constant 16 : i32
    %99 = vector.broadcast %c16_i32 : i32 to vector<10x16x128xi32>
    %100 = arith.cmpi slt, %96, %99 : vector<10x16x128xi32>
    %101 = arith.andi %98, %100 : vector<10x16x128xi1>
    %cst_67 = arith.constant 0.000000e+00 : f32
    %102 = vector.broadcast %cst_67 : f32 to vector<10x16x128xf32>
    %103 = arith.select %101, %92, %102 : vector<10x16x128xi1>, vector<10x16x128xf32>
    %cst_68 = arith.constant 0.000000e+00 : bf16
    %104 = vector.broadcast %cst_68 : bf16 to vector<10x1x128xbf16>
    %c0_69 = arith.constant 0 : index
    %c0_70 = arith.constant 0 : index
    %c0_71 = arith.constant 0 : index
    %105 = vector.load %arg11[%c0_69, %c0_70, %c0_71] : memref<10x18x128xbf16, #tpu.memory_space<vmem>>, vector<10x1x128xbf16>
    tpu.vector_store %arg11[%c0_69, %c0_70, %c0_71], %104 {strides = array<i32>} : memref<10x18x128xbf16, #tpu.memory_space<vmem>>, vector<10x1x128xbf16>,
    %cst_72 = arith.constant 0.000000e+00 : bf16
    %106 = vector.broadcast %cst_72 : bf16 to vector<10x1x128xbf16>
    %c0_73 = arith.constant 0 : index
    %c17 = arith.constant 17 : index
    %c0_74 = arith.constant 0 : index
    %107 = vector.load %arg11[%c0_73, %c17, %c0_74] : memref<10x18x128xbf16, #tpu.memory_space<vmem>>, vector<10x1x128xbf16>
    tpu.vector_store %arg11[%c0_73, %c17, %c0_74], %106 {strides = array<i32>} : memref<10x18x128xbf16, #tpu.memory_space<vmem>>, vector<10x1x128xbf16>,
    %108 = arith.truncf %103 : vector<10x16x128xf32> to vector<10x16x128xbf16>
    %c0_75 = arith.constant 0 : index
    %c1_76 = arith.constant 1 : index
    %c0_77 = arith.constant 0 : index
    %109 = vector.load %arg11[%c0_75, %c1_76, %c0_77] : memref<10x18x128xbf16, #tpu.memory_space<vmem>>, vector<10x16x128xbf16>
    tpu.vector_store %arg11[%c0_75, %c1_76, %c0_77], %108 {strides = array<i32>} : memref<10x18x128xbf16, #tpu.memory_space<vmem>>, vector<10x16x128xbf16>,
    %c0_78 = arith.constant 0 : index
    %c0_79 = arith.constant 0 : index
    %c0_80 = arith.constant 0 : index
    %110 = vector.load %arg11[%c0_78, %c0_79, %c0_80] : memref<10x18x128xbf16, #tpu.memory_space<vmem>>, vector<8x16x128xbf16>
    %111 = vector.shape_cast %110 : vector<8x16x128xbf16> to vector<128x128xbf16>
    %c0_81 = arith.constant 0 : index
    %c0_82 = arith.constant 0 : index
    %112 = vector.load %arg10[%c0_81, %c0_82] : memref<160x1152xbf16, #tpu.memory_space<vmem>>, vector<128x128xbf16>
    tpu.vector_store %arg10[%c0_81, %c0_82], %111 {strides = array<i32>} : memref<160x1152xbf16, #tpu.memory_space<vmem>>, vector<128x128xbf16>,
    %c0_83 = arith.constant 0 : index
    %c1_84 = arith.constant 1 : index
    %c0_85 = arith.constant 0 : index
    %113 = vector.load %arg11[%c0_83, %c1_84, %c0_85] : memref<10x18x128xbf16, #tpu.memory_space<vmem>>, vector<8x16x128xbf16>
    %114 = vector.shape_cast %113 : vector<8x16x128xbf16> to vector<128x128xbf16>
    %c0_86 = arith.constant 0 : index
    %c128_87 = arith.constant 128 : index
    %115 = vector.load %arg10[%c0_86, %c128_87] : memref<160x1152xbf16, #tpu.memory_space<vmem>>, vector<128x128xbf16>
    tpu.vector_store %arg10[%c0_86, %c128_87], %114 {strides = array<i32>} : memref<160x1152xbf16, #tpu.memory_space<vmem>>, vector<128x128xbf16>,
    %c0_88 = arith.constant 0 : index
    %c2_89 = arith.constant 2 : index
    %c0_90 = arith.constant 0 : index
    %116 = vector.load %arg11[%c0_88, %c2_89, %c0_90] : memref<10x18x128xbf16, #tpu.memory_space<vmem>>, vector<8x16x128xbf16>
    %117 = vector.shape_cast %116 : vector<8x16x128xbf16> to vector<128x128xbf16>
    %c0_91 = arith.constant 0 : index
    %c256_92 = arith.constant 256 : index
    %118 = vector.load %arg10[%c0_91, %c256_92] : memref<160x1152xbf16, #tpu.memory_space<vmem>>, vector<128x128xbf16>
    tpu.vector_store %arg10[%c0_91, %c256_92], %117 {strides = array<i32>} : memref<160x1152xbf16, #tpu.memory_space<vmem>>, vector<128x128xbf16>,
    %c1_93 = arith.constant 1 : index
    %c0_94 = arith.constant 0 : index
    %c0_95 = arith.constant 0 : index
    %119 = vector.load %arg11[%c1_93, %c0_94, %c0_95] : memref<10x18x128xbf16, #tpu.memory_space<vmem>>, vector<8x16x128xbf16>
    %120 = vector.shape_cast %119 : vector<8x16x128xbf16> to vector<128x128xbf16>
    %c0_96 = arith.constant 0 : index
    %c384_97 = arith.constant 384 : index
    %121 = vector.load %arg10[%c0_96, %c384_97] : memref<160x1152xbf16, #tpu.memory_space<vmem>>, vector<128x128xbf16>
    tpu.vector_store %arg10[%c0_96, %c384_97], %120 {strides = array<i32>} : memref<160x1152xbf16, #tpu.memory_space<vmem>>, vector<128x128xbf16>,
    %c1_98 = arith.constant 1 : index
    %c1_99 = arith.constant 1 : index
    %c0_100 = arith.constant 0 : index
    %122 = vector.load %arg11[%c1_98, %c1_99, %c0_100] : memref<10x18x128xbf16, #tpu.memory_space<vmem>>, vector<8x16x128xbf16>
    %123 = vector.shape_cast %122 : vector<8x16x128xbf16> to vector<128x128xbf16>
    %c0_101 = arith.constant 0 : index
    %c512_102 = arith.constant 512 : index
    %124 = vector.load %arg10[%c0_101, %c512_102] : memref<160x1152xbf16, #tpu.memory_space<vmem>>, vector<128x128xbf16>
    tpu.vector_store %arg10[%c0_101, %c512_102], %123 {strides = array<i32>} : memref<160x1152xbf16, #tpu.memory_space<vmem>>, vector<128x128xbf16>,
    %c1_103 = arith.constant 1 : index
    %c2_104 = arith.constant 2 : index
    %c0_105 = arith.constant 0 : index
    %125 = vector.load %arg11[%c1_103, %c2_104, %c0_105] : memref<10x18x128xbf16, #tpu.memory_space<vmem>>, vector<8x16x128xbf16>
    %126 = vector.shape_cast %125 : vector<8x16x128xbf16> to vector<128x128xbf16>
    %c0_106 = arith.constant 0 : index
    %c640_107 = arith.constant 640 : index
    %127 = vector.load %arg10[%c0_106, %c640_107] : memref<160x1152xbf16, #tpu.memory_space<vmem>>, vector<128x128xbf16>
    tpu.vector_store %arg10[%c0_106, %c640_107], %126 {strides = array<i32>} : memref<160x1152xbf16, #tpu.memory_space<vmem>>, vector<128x128xbf16>,
    %c2_108 = arith.constant 2 : index
    %c0_109 = arith.constant 0 : index
    %c0_110 = arith.constant 0 : index
    %128 = vector.load %arg11[%c2_108, %c0_109, %c0_110] : memref<10x18x128xbf16, #tpu.memory_space<vmem>>, vector<8x16x128xbf16>
    %129 = vector.shape_cast %128 : vector<8x16x128xbf16> to vector<128x128xbf16>
    %c0_111 = arith.constant 0 : index
    %c768_112 = arith.constant 768 : index
    %130 = vector.load %arg10[%c0_111, %c768_112] : memref<160x1152xbf16, #tpu.memory_space<vmem>>, vector<128x128xbf16>
    tpu.vector_store %arg10[%c0_111, %c768_112], %129 {strides = array<i32>} : memref<160x1152xbf16, #tpu.memory_space<vmem>>, vector<128x128xbf16>,
    %c2_113 = arith.constant 2 : index
    %c1_114 = arith.constant 1 : index
    %c0_115 = arith.constant 0 : index
    %131 = vector.load %arg11[%c2_113, %c1_114, %c0_115] : memref<10x18x128xbf16, #tpu.memory_space<vmem>>, vector<8x16x128xbf16>
    %132 = vector.shape_cast %131 : vector<8x16x128xbf16> to vector<128x128xbf16>
    %c0_116 = arith.constant 0 : index
    %c896_117 = arith.constant 896 : index
    %133 = vector.load %arg10[%c0_116, %c896_117] : memref<160x1152xbf16, #tpu.memory_space<vmem>>, vector<128x128xbf16>
    tpu.vector_store %arg10[%c0_116, %c896_117], %132 {strides = array<i32>} : memref<160x1152xbf16, #tpu.memory_space<vmem>>, vector<128x128xbf16>,
    %c2_118 = arith.constant 2 : index
    %c2_119 = arith.constant 2 : index
    %c0_120 = arith.constant 0 : index
    %134 = vector.load %arg11[%c2_118, %c2_119, %c0_120] : memref<10x18x128xbf16, #tpu.memory_space<vmem>>, vector<8x16x128xbf16>
    %135 = vector.shape_cast %134 : vector<8x16x128xbf16> to vector<128x128xbf16>
    %c0_121 = arith.constant 0 : index
    %c1024_122 = arith.constant 1024 : index
    %136 = vector.load %arg10[%c0_121, %c1024_122] : memref<160x1152xbf16, #tpu.memory_space<vmem>>, vector<128x128xbf16>
    tpu.vector_store %arg10[%c0_121, %c1024_122], %135 {strides = array<i32>} : memref<160x1152xbf16, #tpu.memory_space<vmem>>, vector<128x128xbf16>,
    %c0_123 = arith.constant 0 : index
    %c0_124 = arith.constant 0 : index
    %137 = vector.load %arg10[%c0_123, %c0_124] : memref<160x1152xbf16, #tpu.memory_space<vmem>>, vector<128x1152xbf16>
    %c0_125 = arith.constant 0 : index
    %c0_126 = arith.constant 0 : index
    %138 = vector.load %arg7[%c0_125, %c0_126] : memref<1152x128xbf16, #tpu.memory_space<vmem>>, vector<1152x128xbf16>
    %cst_127 = arith.constant dense<0.000000e+00> : vector<128x128xf32>
    %139 = tpu.matmul %137, %138, %cst_127 {dimension_numbers = #tpu.dot_dimension_numbers<[1], [0], [0], [1], [0, 0, 1, 1], [], []>} : vector<128x1152xbf16>, vector<1152x128xbf16>, vector<128x128xf32> -> vector<128x128xf32>
    %c0_128 = arith.constant 0 : index
    %c0_129 = arith.constant 0 : index
    %140 = vector.load %arg8[%c0_128, %c0_129] : memref<1x128xf32, #tpu.memory_space<vmem>>, vector<1x128xf32>
    %141 = vector.broadcast %140 : vector<1x128xf32> to vector<128x128xf32>
    %142 = arith.addf %139, %141 : vector<128x128xf32>
    %143 = arith.addf %11, %142 : vector<128x128xf32>
    %144 = vector.shape_cast %143 : vector<128x128xf32> to vector<4x2x16x128xf32>
    %cst_130 = arith.constant dense<0.000000e+00> : vector<4x16x128xf32>
    %145 = vector.multi_reduction <add>, %144, %cst_130 [1] : vector<4x2x16x128xf32> to vector<4x16x128xf32>
    %146 = vector.shape_cast %145 : vector<4x16x128xf32> to vector<32x2x128xf32>
    %cst_131 = arith.constant dense<0.000000e+00> : vector<32x128xf32>
    %147 = vector.multi_reduction <add>, %146, %cst_131 [1] : vector<32x2x128xf32> to vector<32x128xf32>
    %cst_132 = arith.constant 2.500000e-01 : f32
    %148 = vector.broadcast %cst_132 : f32 to vector<32x128xf32>
    %149 = arith.mulf %147, %148 : vector<32x128xf32>
    %c0_133 = arith.constant 0 : index
    %c0_134 = arith.constant 0 : index
    %c0_135 = arith.constant 0 : index
    %150 = vector.load %arg9[%c0_133, %c0_134, %c0_135] : memref<1x32x128xf32, #tpu.memory_space<vmem>>, vector<1x32x128xf32>
    %151 = vector.shape_cast %150 : vector<1x32x128xf32> to vector<32x128xf32>
    %152 = vector.shape_cast %149 : vector<32x128xf32> to vector<1x32x128xf32>
    tpu.vector_store %arg9[%c0_133, %c0_134, %c0_135], %152 {strides = array<i32>} : memref<1x32x128xf32, #tpu.memory_space<vmem>>, vector<1x32x128xf32>,
    return
  }
  func.func @transform_0(%arg0: i32, %arg1: i32) -> (i32, i32, i32, i32) {
    %c0_i32 = arith.constant 0 : i32
    %c0_i32_0 = arith.constant 0 : i32
    %c0_i32_1 = arith.constant 0 : i32
    %c0_i32_2 = arith.constant 0 : i32
    return %arg0, %c0_i32, %c0_i32_0, %c0_i32_1 : i32, i32, i32, i32
  }
  func.func @transform_1(%arg0: i32, %arg1: i32) -> (i32, i32) {
    %c0_i32 = arith.constant 0 : i32
    %c0_i32_0 = arith.constant 0 : i32
    %c0_i32_1 = arith.constant 0 : i32
    return %c0_i32, %c0_i32_0 : i32, i32
  }
  func.func @transform_2(%arg0: i32, %arg1: i32) -> (i32, i32) {
    %c0_i32 = arith.constant 0 : i32
    %c0_i32_0 = arith.constant 0 : i32
    %c0_i32_1 = arith.constant 0 : i32
    return %c0_i32, %c0_i32_0 : i32, i32
  }
  func.func @transform_3(%arg0: i32, %arg1: i32) -> (i32, i32) {
    %c0_i32 = arith.constant 0 : i32
    %c0_i32_0 = arith.constant 0 : i32
    %c0_i32_1 = arith.constant 0 : i32
    return %c0_i32, %c0_i32_0 : i32, i32
  }
  func.func @transform_4(%arg0: i32, %arg1: i32) -> (i32, i32) {
    %c0_i32 = arith.constant 0 : i32
    %c0_i32_0 = arith.constant 0 : i32
    %c0_i32_1 = arith.constant 0 : i32
    return %c0_i32, %c0_i32_0 : i32, i32
  }
  func.func @transform_5(%arg0: i32, %arg1: i32) -> (i32, i32) {
    %c0_i32 = arith.constant 0 : i32
    %c0_i32_0 = arith.constant 0 : i32
    %c0_i32_1 = arith.constant 0 : i32
    return %c0_i32, %c0_i32_0 : i32, i32
  }
  func.func @transform_6(%arg0: i32, %arg1: i32) -> (i32, i32) {
    %c0_i32 = arith.constant 0 : i32
    %c0_i32_0 = arith.constant 0 : i32
    %c0_i32_1 = arith.constant 0 : i32
    return %c0_i32, %c0_i32_0 : i32, i32
  }
  func.func @transform_7(%arg0: i32, %arg1: i32) -> (i32, i32, i32) {
    %c0_i32 = arith.constant 0 : i32
    %c0_i32_0 = arith.constant 0 : i32
    return %arg0, %arg1, %c0_i32 : i32, i32, i32
  }
}

</mosaic_0001>

<llo_original>
// kernel: tpu_custom_call.1
$region0: #{tpu_custom_call.1}
  #allocation0 [shape = 'u32[]', space=smem, size = 0x4, offset = 0x4, fixed_abs, tag = 'smem constant byte address 0x4 - core index']
  #allocation1 [shape = 'u32[144,128]{1,0:T(1,128)}', space=vmem, size = 0x12000, scoped, tag = 'internal scratch']
  #allocation2 [shape = 'bf16[160,1152]{1,0:T(16,128)(2,1)}', space=vmem, size = 0x5a000, scoped, tag = 'scratch operand']
  #allocation3 [shape = 'bf16[10,18,128]{2,1,0:T(8,128)(2,1)}', space=vmem, size = 0xf000, scoped, tag = 'scratch operand']
  %s0 = inlined_call_operand.vmem [shape: bf16[2,20,18,128], index: 0, kind: input, shape index: {}]
  %s1 = inlined_call_operand.vmem [shape: bf16[128,128], index: 1, kind: input, shape index: {}]
  %s2 = inlined_call_operand.vmem [shape: f32[1,128], index: 2, kind: input, shape index: {}]
  %s3 = inlined_call_operand.vmem [shape: bf16[1152,128], index: 3, kind: input, shape index: {}]
  %s4 = inlined_call_operand.vmem [shape: f32[1,128], index: 4, kind: input, shape index: {}]
  %s5 = inlined_call_operand.hbm [shape: bf16[1152,128], index: 5, kind: input, shape index: {}]
  %s6 = inlined_call_operand.vmem [shape: f32[1,128], index: 6, kind: input, shape index: {}]
  %s7 = inlined_call_operand.hbm [shape: f32[2,64,128], index: 7, kind: output, shape index: {}]
  %s8 = sld [smem:[#allocation0]]
  $region65: #{tpu_custom_call.1} parent=0
    _
  %s10 = ssub.s32 1, %s8
  %s11 = scalar_select 0, %s10, %s8
  $region1: #{tpu_custom_call.1} parent=0
    #allocation4 [shape = 'u8[294912]{0}', space=vmem, size = 0x48000, scoped, tag = 'input window, operand 5, single buffered']
    #allocation5 [shape = 's32[2]{0}', space=sflag, size = 0x8, scoped, tag = 'scoped memory for tpu_custom_call.1']
    #allocation6 [shape = 's32[2]{0}', space=sflag, size = 0x8, scoped, tag = 'scoped memory for tpu_custom_call.1']
    #allocation7 [shape = 'u8[32768]{0}', space=vmem, size = 0x8000, scoped, tag = 'output window, operand 0']
    %12 = vsyncpa [#allocation5], 0
    %13 = vsyncpa [#allocation6], 0
    %s14 = scalar_lea.sflag [#allocation6], 1
    %15 = vsyncpa %s14, 0
    loop: start=0, step=1, limit=6
    $region2: #{tpu_custom_call.1} parent=1 // loop_pre_header
      _
    $region3: #{tpu_custom_call.1} parent=1 // loop_header
      %s17 = sphi 0, %s21
      %p18 = scmp.ge.s32.totalorder %s17, 6
      %s24 = sphi 0, %s36
      %s25 = sphi 0, %s32
      %s26 = sphi 0, %s24
      %s27 = sphi 0, %s25
      %s28 = sphi 0, %s26
      %s29 = sphi 0, %s27
      %s39 = sphi 0, %s41
      %s42 = sphi 0, %s39
      %s43 = sphi 0, %s42
      %s59 = sphi 0, %s43
      %s63 = sphi 0, %s63
      %s65 = sphi 0, %s63
      %s66 = sphi 0, %s65
      %s80 = sphi 0, %s66
      %s84 = sphi 0, %s84
      %s86 = sphi 0, %s84
      %s87 = sphi 0, %s86
      %s101 = sphi 0, %s87
      %s105 = sphi 0, %s105
      %s107 = sphi 0, %s105
      %s108 = sphi 0, %s107
      %s122 = sphi 0, %s108
      %s126 = sphi 0, %s126
      %s128 = sphi 0, %s126
      %s129 = sphi 0, %s128
      %s143 = sphi 0, %s129
      %s147 = sphi 0, %s147
      %s149 = sphi 0, %s147
      %s150 = sphi 0, %s149
      %s164 = sphi 0, %s150
      %s168 = sphi 0, %s168
      %s170 = sphi 0, %s168
      %s171 = sphi 0, %s170
      %s185 = sphi 0, %s171
      %s193 = sphi 0, %s195
      %s196 = sphi 0, %s193
      %s197 = sphi 0, %s196
      %s213 = sphi 0, %s197
    $region4: #{tpu_custom_call.1} parent=1 // loop_header_branch
      %20 = sbr.rel (%p18) target = $region8
    $region5: #{tpu_custom_call.1} parent=1 // loop_body
      %s22 = ssub.s32 %s17, 1
      %s23 = ssub.s32 %s17, 2
      %s30 = sadd.s32 1, %s25
      %p31 = scmp.ge.s32.totalorder %s30, 2
      %s32 = scalar_select %p31, 0, %s30
      %s33 = sadd.s32 1, %s24
      %s34 = scalar_select %p31, %s33, %s24
      %p35 = scmp.ge.s32.totalorder %s34, 2
      %s36 = scalar_select %p35, 0, %s34
      %s37 = ssub.s32 %s24, %s36
      %p38 = scmp.eq.s32.totalorder %s37, 0
      %s40 = sadd.s32 %s39, 1
      %s41 = scalar_select %p38, %s39, %s40
      %p44 = pneg %p38
      %p45 = scmp.eq.s32.totalorder %s17, 3
      %p46 = por %p44, %p45
      %p47 = scmp.ne.s32.totalorder %s39, %s42
      %p48 = scmp.eq.s32.totalorder %s17, 0
      %p49 = por %p47, %p48
      %p50 = scmp.ne.s32.totalorder %s39, %s42
      %p51 = scmp.eq.s32.totalorder %s22, 3
      %p52 = por %p50, %p51
      %p53 = scmp.ne.s32.totalorder %s42, %s43
      %p54 = scmp.eq.s32.totalorder %s22, 0
      %p55 = por %p53, %p54
      %p56 = scmp.ne.s32.totalorder %s42, %s43
      %p57 = scmp.eq.s32.totalorder %s23, 3
      %p58 = por %p56, %p57
      %p60 = scmp.ne.s32.totalorder %s43, %s59
      %p61 = scmp.eq.s32.totalorder %s23, 0
      %p62 = por %p60, %p61
      %s64 = sadd.s32 %s63, 1
      %p67 = scmp.eq.s32.totalorder %s17, 3
      %p68 = scmp.ne.s32.totalorder %s63, %s65
      %p69 = scmp.eq.s32.totalorder %s17, 0
      %p70 = por %p68, %p69
      %p71 = scmp.ne.s32.totalorder %s63, %s65
      %p72 = scmp.eq.s32.totalorder %s22, 3
      %p73 = por %p71, %p72
      %p74 = scmp.ne.s32.totalorder %s65, %s66
      %p75 = scmp.eq.s32.totalorder %s22, 0
      %p76 = por %p74, %p75
      %p77 = scmp.ne.s32.totalorder %s65, %s66
      %p78 = scmp.eq.s32.totalorder %s23, 3
      %p79 = por %p77, %p78
      %p81 = scmp.ne.s32.totalorder %s66, %s80
      %p82 = scmp.eq.s32.totalorder %s23, 0
      %p83 = por %p81, %p82
      %s85 = sadd.s32 %s84, 1
      %p88 = scmp.eq.s32.totalorder %s17, 3
      %p89 = scmp.ne.s32.totalorder %s84, %s86
      %p90 = scmp.eq.s32.totalorder %s17, 0
      %p91 = por %p89, %p90
      %p92 = scmp.ne.s32.totalorder %s84, %s86
      %p93 = scmp.eq.s32.totalorder %s22, 3
      %p94 = por %p92, %p93
      %p95 = scmp.ne.s32.totalorder %s86, %s87
      %p96 = scmp.eq.s32.totalorder %s22, 0
      %p97 = por %p95, %p96
      %p98 = scmp.ne.s32.totalorder %s86, %s87
      %p99 = scmp.eq.s32.totalorder %s23, 3
      %p100 = por %p98, %p99
      %p102 = scmp.ne.s32.totalorder %s87, %s101
      %p103 = scmp.eq.s32.totalorder %s23, 0
      %p104 = por %p102, %p103
      %s106 = sadd.s32 %s105, 1
      %p109 = scmp.eq.s32.totalorder %s17, 3
      %p110 = scmp.ne.s32.totalorder %s105, %s107
      %p111 = scmp.eq.s32.totalorder %s17, 0
      %p112 = por %p110, %p111
      %p113 = scmp.ne.s32.totalorder %s105, %s107
      %p114 = scmp.eq.s32.totalorder %s22, 3
      %p115 = por %p113, %p114
      %p116 = scmp.ne.s32.totalorder %s107, %s108
      %p117 = scmp.eq.s32.totalorder %s22, 0
      %p118 = por %p116, %p117
      %p119 = scmp.ne.s32.totalorder %s107, %s108
      %p120 = scmp.eq.s32.totalorder %s23, 3
      %p121 = por %p119, %p120
      %p123 = scmp.ne.s32.totalorder %s108, %s122
      %p124 = scmp.eq.s32.totalorder %s23, 0
      %p125 = por %p123, %p124
      %s127 = sadd.s32 %s126, 1
      %p130 = scmp.eq.s32.totalorder %s17, 3
      %p131 = scmp.ne.s32.totalorder %s126, %s128
      %p132 = scmp.eq.s32.totalorder %s17, 0
      %p133 = por %p131, %p132
      %p134 = scmp.ne.s32.totalorder %s126, %s128
      %p135 = scmp.eq.s32.totalorder %s22, 3
      %p136 = por %p134, %p135
      %p137 = scmp.ne.s32.totalorder %s128, %s129
      %p138 = scmp.eq.s32.totalorder %s22, 0
      %p139 = por %p137, %p138
      %p140 = scmp.ne.s32.totalorder %s128, %s129
      %p141 = scmp.eq.s32.totalorder %s23, 3
      %p142 = por %p140, %p141
      %p144 = scmp.ne.s32.totalorder %s129, %s143
      %p145 = scmp.eq.s32.totalorder %s23, 0
      %p146 = por %p144, %p145
      %s148 = sadd.s32 %s147, 1
      %p151 = scmp.eq.s32.totalorder %s17, 3
      %p152 = scmp.ne.s32.totalorder %s147, %s149
      %p153 = scmp.eq.s32.totalorder %s17, 0
      %p154 = por %p152, %p153
      %p155 = scmp.ne.s32.totalorder %s147, %s149
      %p156 = scmp.eq.s32.totalorder %s22, 3
      %p157 = por %p155, %p156
      %p158 = scmp.ne.s32.totalorder %s149, %s150
      %p159 = scmp.eq.s32.totalorder %s22, 0
      %p160 = por %p158, %p159
      %p161 = scmp.ne.s32.totalorder %s149, %s150
      %p162 = scmp.eq.s32.totalorder %s23, 3
      %p163 = por %p161, %p162
      %p165 = scmp.ne.s32.totalorder %s150, %s164
      %p166 = scmp.eq.s32.totalorder %s23, 0
      %p167 = por %p165, %p166
      %s169 = sadd.s32 %s168, 1
      %p172 = scmp.eq.s32.totalorder %s17, 3
      %p173 = scmp.ne.s32.totalorder %s168, %s170
      %p174 = scmp.eq.s32.totalorder %s17, 0
      %p175 = por %p173, %p174
      %p176 = scmp.ne.s32.totalorder %s168, %s170
      %p177 = scmp.eq.s32.totalorder %s22, 3
      %p178 = por %p176, %p177
      %p179 = scmp.ne.s32.totalorder %s170, %s171
      %p180 = scmp.eq.s32.totalorder %s22, 0
      %p181 = por %p179, %p180
      %p182 = scmp.ne.s32.totalorder %s170, %s171
      %p183 = scmp.eq.s32.totalorder %s23, 3
      %p184 = por %p182, %p183
      %p186 = scmp.ne.s32.totalorder %s171, %s185
      %p187 = scmp.eq.s32.totalorder %s23, 0
      %p188 = por %p186, %p187
      %s189 = ssub.s32 %s24, %s36
      %s190 = ssub.s32 %s25, %s32
      %s191 = sor.u32 %s189, %s190
      %p192 = scmp.eq.s32.totalorder %s191, 0
      %s194 = sadd.s32 %s193, 1
      %s195 = scalar_select %p192, %s193, %s194
      %p198 = pneg %p192
      %p199 = scmp.eq.s32.totalorder %s17, 3
      %p200 = por %p198, %p199
      %p201 = scmp.ne.s32.totalorder %s193, %s196
      %p202 = scmp.eq.s32.totalorder %s17, 0
      %p203 = por %p201, %p202
      %p204 = scmp.ne.s32.totalorder %s193, %s196
      %p205 = scmp.eq.s32.totalorder %s22, 3
      %p206 = por %p204, %p205
      %p207 = scmp.ne.s32.totalorder %s196, %s197
      %p208 = scmp.eq.s32.totalorder %s22, 0
      %p209 = por %p207, %p208
      %p210 = scmp.ne.s32.totalorder %s196, %s197
      %p211 = scmp.eq.s32.totalorder %s23, 3
      %p212 = por %p210, %p211
      %p214 = scmp.ne.s32.totalorder %s197, %s213
      %p215 = scmp.eq.s32.totalorder %s23, 0
      %p216 = por %p214, %p215
      %p217 = scmp.le.s32.totalorder 1, %s17
      %p218 = scmp.lt.s32.totalorder %s17, 5
      %p219 = pnand %p217, %p218
      %p220 = pneg %p219
      // Predicated region
      $region9: #{tpu_custom_call.1} parent=5 // pred_check
        _
      $region10: #{tpu_custom_call.1} parent=5 // pred_check_branch
        %222 = sbr.rel (%p219) target = $region12
      $region11: #{tpu_custom_call.1} parent=5 // pred_region
        %s223 = ssub.s32 %s17, 1
        // Predicated region
        $region13: #{tpu_custom_call.1} parent=11 // pred_check
          %p224 = pneg %p76
        $region14: #{tpu_custom_call.1} parent=11 // pred_check_branch
          %226 = sbr.rel (%p224) target = $region16
        $region15: #{tpu_custom_call.1} parent=11 // pred_region
          _
        $region16: #{tpu_custom_call.1} parent=11 // pred_fallthru
          _
        // Predicated region
        $region17: #{tpu_custom_call.1} parent=11 // pred_check
          %p227 = pneg %p97
        $region18: #{tpu_custom_call.1} parent=11 // pred_check_branch
          %229 = sbr.rel (%p227) target = $region20
        $region19: #{tpu_custom_call.1} parent=11 // pred_region
          _
        $region20: #{tpu_custom_call.1} parent=11 // pred_fallthru
          _
        // Predicated region
        $region21: #{tpu_custom_call.1} parent=11 // pred_check
          %p230 = pneg %p118
        $region22: #{tpu_custom_call.1} parent=11 // pred_check_branch
          %232 = sbr.rel (%p230) target = $region24
        $region23: #{tpu_custom_call.1} parent=11 // pred_region
          _
        $region24: #{tpu_custom_call.1} parent=11 // pred_fallthru
          _
        // Predicated region
        $region25: #{tpu_custom_call.1} parent=11 // pred_check
          %p233 = pneg %p139
        $region26: #{tpu_custom_call.1} parent=11 // pred_check_branch
          %235 = sbr.rel (%p233) target = $region28
        $region27: #{tpu_custom_call.1} parent=11 // pred_region
          _
        $region28: #{tpu_custom_call.1} parent=11 // pred_fallthru
          _
        // Predicated region
        $region29: #{tpu_custom_call.1} parent=11 // pred_check
          %p236 = pneg %p160
        $region30: #{tpu_custom_call.1} parent=11 // pred_check_branch
          %238 = sbr.rel (%p236) target = $region32
        $region31: #{tpu_custom_call.1} parent=11 // pred_region
          %s240 = ssub.s32 9216, 9216
          %241 = vsyncadd [#allocation5], %s240
          %s242 = sshll.u32 [#allocation4], 4
          %s243 = int_to_ptr.vmem [resolvable:$true] %s242
          %248 = dma.hbm_to_vmem [thread:$0]  %s5, 9216, %s243, [#allocation5], 64, 64, 4
        $region32: #{tpu_custom_call.1} parent=11 // pred_fallthru
          _
        // Predicated region
        $region33: #{tpu_custom_call.1} parent=11 // pred_check
          %p249 = pneg %p181
        $region34: #{tpu_custom_call.1} parent=11 // pred_check_branch
          %251 = sbr.rel (%p249) target = $region36
        $region35: #{tpu_custom_call.1} parent=11 // pred_region
          _
        $region36: #{tpu_custom_call.1} parent=11 // pred_fallthru
          _
      $region12: #{tpu_custom_call.1} parent=5 // pred_fallthru
        _
      %p252 = scmp.lt.s32.totalorder %s17, 4
      // Predicated region
      $region37: #{tpu_custom_call.1} parent=5 // pred_check
        %p253 = pneg %p252
      $region38: #{tpu_custom_call.1} parent=5 // pred_check_branch
        %255 = sbr.rel (%p253) target = $region40
      $region39: #{tpu_custom_call.1} parent=5 // pred_region
        // Predicated region
        $region41: #{tpu_custom_call.1} parent=39 // pred_check
          %p256 = pneg %p49
        $region42: #{tpu_custom_call.1} parent=39 // pred_check_branch
          %258 = sbr.rel (%p256) target = $region44
        $region43: #{tpu_custom_call.1} parent=39 // pred_region
          %p259 = scmp.lt.s32.totalorder %s24, 1
          %s260 = scalar_select %p259, %s24, 1
          %s261 = smul.addr %s260, 60
          %s262 = smul.addr %s261, 4
          %s263 = scalar_lea.vmem %s0, %s262
        $region44: #{tpu_custom_call.1} parent=39 // pred_fallthru
          _
      $region40: #{tpu_custom_call.1} parent=5 // pred_fallthru
        _
      %p264 = scmp.le.s32.totalorder 1, %s17
      %p265 = scmp.lt.s32.totalorder %s17, 5
      %p266 = pnand %p264, %p265
      %p267 = pneg %p266
      // Predicated region
      $region45: #{tpu_custom_call.1} parent=5 // pred_check
        _
      $region46: #{tpu_custom_call.1} parent=5 // pred_check_branch
        %269 = sbr.rel (%p266) target = $region48
      $region47: #{tpu_custom_call.1} parent=5 // pred_region
        %s270 = ssub.s32 %s17, 1
        // Predicated region
        $region49: #{tpu_custom_call.1} parent=47 // pred_check
          %p271 = pneg %p160
        $region50: #{tpu_custom_call.1} parent=47 // pred_check_branch
          %273 = sbr.rel (%p271) target = $region52
        $region51: #{tpu_custom_call.1} parent=47 // pred_region
          %274 = dma.done [#allocation5], 9216
        $region52: #{tpu_custom_call.1} parent=47 // pred_fallthru
          _
        %p275 = scmp.lt.s32.totalorder %s26, 1
        %s276 = scalar_select %p275, %s26, 1
        %s277 = smul.addr %s276, 60
        %s278 = smul.addr %s277, 4
        %s279 = scalar_lea.vmem %s0, %s278
        %p280 = pneg %p55
        %p281 = pneg %p52
        %p282 = pneg %p76
        %p283 = pneg %p73
        %p284 = pneg %p97
        %p285 = pneg %p94
        %p286 = pneg %p118
        %p287 = pneg %p115
        %p288 = pneg %p139
        %p289 = pneg %p136
        %p290 = pneg %p160
        %p291 = pneg %p157
        %p292 = pneg %p181
        %p293 = pneg %p178
        %p294 = pneg %p209
        %p295 = pneg %p206
        %s296 = sand.u32 %s196, 1
        %s297 = scalar_lea.sflag [#allocation6], %s296
        %s298 = sand.u32 %s196, 1
        %s299 = smul.addr %s298, 32
        %s300 = scalar_lea.vmem [#allocation7], %s299
        %p301 = scmp.lt.s32.totalorder %s26, 1
        %s302 = scalar_select %p301, %s26, 1
        %s303 = smul.addr %s302, 60
        %s304 = smul.addr %s303, 4
        %s305 = scalar_lea.vmem %s0, %s304
        %s306 = smul.u32 4, %s27
        %s308 = smul.u32 %s27, 8
        %s309 = sadd.s32 %s308, 2
        %s310 = smul.u32 %s309, 3
        %s311 = smul.addr %s310, 4
        %s312 = scalar_lea.vmem %s305, %s311
        %v313 = vld [vmem:[%s312] sm:$0xf]
        %v314 = vld [vmem:[%s312 + $0x4] sm:$0xf]
        %v315 = vld [vmem:[%s312 + $0x8] sm:$0x1]
        %v316 = vld [vmem:[%s312 + $0xc] sm:$0xf]
        %v317 = vld [vmem:[%s312 + $0x10] sm:$0xf]
        %v318 = vld [vmem:[%s312 + $0x14] sm:$0x1]
        %v319 = vld [vmem:[%s312 + $0x18] sm:$0xf]
        %v320 = vld [vmem:[%s312 + $0x1c] sm:$0xf]
        %v321 = vld [vmem:[%s312 + $0x20] sm:$0x1]
        %v322 = vld [vmem:[%s312 + $0x24] sm:$0xf]
        %v323 = vld [vmem:[%s312 + $0x28] sm:$0xf]
        %v324 = vld [vmem:[%s312 + $0x2c] sm:$0x1]
        %v325 = vld [vmem:[%s312 + $0x30] sm:$0xf]
        %v326 = vld [vmem:[%s312 + $0x34] sm:$0xf]
        %v327 = vld [vmem:[%s312 + $0x38] sm:$0x1]
        %v328 = vld [vmem:[%s312 + $0x3c] sm:$0xf]
        %v329 = vld [vmem:[%s312 + $0x40] sm:$0xf]
        %v330 = vld [vmem:[%s312 + $0x44] sm:$0x1]
        %v331 = vld [vmem:[%s312 + $0x48] sm:$0xf]
        %v332 = vld [vmem:[%s312 + $0x4c] sm:$0xf]
        %v333 = vld [vmem:[%s312 + $0x50] sm:$0x1]
        %v334 = vld [vmem:[%s312 + $0x54] sm:$0xf]
        %v335 = vld [vmem:[%s312 + $0x58] sm:$0xf]
        %v336 = vld [vmem:[%s312 + $0x5c] sm:$0x1]
        %vm337 = vsmask.f32 3328
        %vm338 = vsmask.f32 7440
        %vm339 = vmor %vm337, %vm338
        %v341 = vshrl.u32 %v313, 16
        %v343 = vrot.slane %v341, 4
        %v344 = vshll.u32 %v313, 16
        %v346 = vrot.slane %v344, 5
        %v347 = vor.u32 %v343, %v346
        %v348 = vrot.slane %v347, 4
        %v350 = vshll.u32 %v314, 16
        %v352 = vrot.slane %v350, 5
        %v353 = vsel %vm339, %v348, %v352
        %v354 = vshrl.u32 %v314, 16
        %v356 = vrot.slane %v354, 4
        %v357 = vor.u32 %v356, %v352
        %v358 = vrot.slane %v357, 4
        %v360 = vshll.u32 %v315, 16
        %v362 = vrot.slane %v360, 5
        %v363 = vsel %vm339, %v358, %v362
        %v365 = vshrl.u32 %v316, 16
        %v367 = vrot.slane %v365, 4
        %v368 = vshll.u32 %v316, 16
        %v370 = vrot.slane %v368, 5
        %v371 = vor.u32 %v367, %v370
        %v372 = vrot.slane %v371, 4
        %v374 = vshll.u32 %v317, 16
        %v376 = vrot.slane %v374, 5
        %v377 = vsel %vm339, %v372, %v376
        %v378 = vshrl.u32 %v317, 16
        %v380 = vrot.slane %v378, 4
        %v381 = vor.u32 %v380, %v376
        %v382 = vrot.slane %v381, 4
        %v384 = vshll.u32 %v318, 16
        %v386 = vrot.slane %v384, 5
        %v387 = vsel %vm339, %v382, %v386
        %v389 = vshrl.u32 %v319, 16
        %v391 = vrot.slane %v389, 4
        %v392 = vshll.u32 %v319, 16
        %v394 = vrot.slane %v392, 5
        %v395 = vor.u32 %v391, %v394
        %v396 = vrot.slane %v395, 4
        %v398 = vshll.u32 %v320, 16
        %v400 = vrot.slane %v398, 5
        %v401 = vsel %vm339, %v396, %v400
        %v402 = vshrl.u32 %v320, 16
        %v404 = vrot.slane %v402, 4
        %v405 = vor.u32 %v404, %v400
        %v406 = vrot.slane %v405, 4
        %v408 = vshll.u32 %v321, 16
        %v410 = vrot.slane %v408, 5
        %v411 = vsel %vm339, %v406, %v410
        %v413 = vshrl.u32 %v322, 16
        %v415 = vrot.slane %v413, 4
        %v416 = vshll.u32 %v322, 16
        %v418 = vrot.slane %v416, 5
        %v419 = vor.u32 %v415, %v418
        %v420 = vrot.slane %v419, 4
        %v422 = vshll.u32 %v323, 16
        %v424 = vrot.slane %v422, 5
        %v425 = vsel %vm339, %v420, %v424
        %v426 = vshrl.u32 %v323, 16
        %v428 = vrot.slane %v426, 4
        %v429 = vor.u32 %v428, %v424
        %v430 = vrot.slane %v429, 4
        %v432 = vshll.u32 %v324, 16
        %v434 = vrot.slane %v432, 5
        %v435 = vsel %vm339, %v430, %v434
        %v437 = vshrl.u32 %v325, 16
        %v439 = vrot.slane %v437, 4
        %v440 = vshll.u32 %v325, 16
        %v442 = vrot.slane %v440, 5
        %v443 = vor.u32 %v439, %v442
        %v444 = vrot.slane %v443, 4
        %v446 = vshll.u32 %v326, 16
        %v448 = vrot.slane %v446, 5
        %v449 = vsel %vm339, %v444, %v448
        %v450 = vshrl.u32 %v326, 16
        %v452 = vrot.slane %v450, 4
        %v453 = vor.u32 %v452, %v448
        %v454 = vrot.slane %v453, 4
        %v456 = vshll.u32 %v327, 16
        %v458 = vrot.slane %v456, 5
        %v459 = vsel %vm339, %v454, %v458
        %v461 = vshrl.u32 %v328, 16
        %v463 = vrot.slane %v461, 4
        %v464 = vshll.u32 %v328, 16
        %v466 = vrot.slane %v464, 5
        %v467 = vor.u32 %v463, %v466
        %v468 = vrot.slane %v467, 4
        %v470 = vshll.u32 %v329, 16
        %v472 = vrot.slane %v470, 5
        %v473 = vsel %vm339, %v468, %v472
        %v474 = vshrl.u32 %v329, 16
        %v476 = vrot.slane %v474, 4
        %v477 = vor.u32 %v476, %v472
        %v478 = vrot.slane %v477, 4
        %v480 = vshll.u32 %v330, 16
        %v482 = vrot.slane %v480, 5
        %v483 = vsel %vm339, %v478, %v482
        %v485 = vshrl.u32 %v331, 16
        %v487 = vrot.slane %v485, 4
        %v488 = vshll.u32 %v331, 16
        %v490 = vrot.slane %v488, 5
        %v491 = vor.u32 %v487, %v490
        %v492 = vrot.slane %v491, 4
        %v494 = vshll.u32 %v332, 16
        %v496 = vrot.slane %v494, 5
        %v497 = vsel %vm339, %v492, %v496
        %v498 = vshrl.u32 %v332, 16
        %v500 = vrot.slane %v498, 4
        %v501 = vor.u32 %v500, %v496
        %v502 = vrot.slane %v501, 4
        %v504 = vshll.u32 %v333, 16
        %v506 = vrot.slane %v504, 5
        %v507 = vsel %vm339, %v502, %v506
        %v509 = vshrl.u32 %v334, 16
        %v511 = vrot.slane %v509, 4
        %v512 = vshll.u32 %v334, 16
        %v514 = vrot.slane %v512, 5
        %v515 = vor.u32 %v511, %v514
        %v516 = vrot.slane %v515, 4
        %v518 = vshll.u32 %v335, 16
        %v520 = vrot.slane %v518, 5
        %v521 = vsel %vm339, %v516, %v520
        %v522 = vshrl.u32 %v335, 16
        %v524 = vrot.slane %v522, 4
        %v525 = vor.u32 %v524, %v520
        %v526 = vrot.slane %v525, 4
        %v528 = vshll.u32 %v336, 16
        %v530 = vrot.slane %v528, 5
        %v531 = vsel %vm339, %v526, %v530
        %v532 = vld [vmem:[%s1] sm:$0xf]
        %v533 = vld [vmem:[%s1 + $0x4] sm:$0xf]
        %v534 = vld [vmem:[%s1 + $0x8] sm:$0xf]
        %v535 = vld [vmem:[%s1 + $0xc] sm:$0xf]
        %v536 = vld [vmem:[%s1 + $0x10] sm:$0xf]
        %v537 = vld [vmem:[%s1 + $0x14] sm:$0xf]
        %v538 = vld [vmem:[%s1 + $0x18] sm:$0xf]
        %v539 = vld [vmem:[%s1 + $0x1c] sm:$0xf]
        %v540 = vld [vmem:[%s1 + $0x20] sm:$0xf]
        %v541 = vld [vmem:[%s1 + $0x24] sm:$0xf]
        %v542 = vld [vmem:[%s1 + $0x28] sm:$0xf]
        %v543 = vld [vmem:[%s1 + $0x2c] sm:$0xf]
        %v544 = vld [vmem:[%s1 + $0x30] sm:$0xf]
        %v545 = vld [vmem:[%s1 + $0x34] sm:$0xf]
        %v546 = vld [vmem:[%s1 + $0x38] sm:$0xf]
        %v547 = vld [vmem:[%s1 + $0x3c] sm:$0xf]
        %v548 = vld [vmem:[%s2] sm:$0x1]
        %v550 = vlaneseq
        %v551 = vshrl.u32 %v550, 7
        %v552 = vsub.s32 0, %v551
        %v553 = vrot.slane %v548, %v552
        %v555 = vunpack.c.l.b16 %v353
        %v556 = vunpack.c.l.b16 %v363
        %v557 = vunpack.c.l.b16 %v377
        %v558 = vunpack.c.l.b16 %v387
        %v559 = vunpack.c.l.b16 %v401
        %v560 = vunpack.c.l.b16 %v411
        %v561 = vunpack.c.l.b16 %v425
        %v562 = vunpack.c.l.b16 %v435
        %v563 = vunpack.c.l.b16 %v449
        %v564 = vunpack.c.l.b16 %v459
        %v565 = vunpack.c.l.b16 %v473
        %v566 = vunpack.c.l.b16 %v483
        %v567 = vunpack.c.l.b16 %v497
        %v568 = vunpack.c.l.b16 %v507
        %v569 = vunpack.c.l.b16 %v521
        %v570 = vunpack.c.l.b16 %v531
        %v571 = vpack.c.b16 %v556, %v555
        %v572 = vpack.c.b16 %v558, %v557
        %v573 = vpack.c.b16 %v560, %v559
        %v574 = vpack.c.b16 %v562, %v561
        %v575 = vpack.c.b16 %v564, %v563
        %v576 = vpack.c.b16 %v566, %v565
        %v577 = vpack.c.b16 %v568, %v567
        %v578 = vpack.c.b16 %v570, %v569
        %v603 = vunpack.c.l.b16 %v532
        %v604 = vunpack.c.l.b16 %v533
        %v605 = vunpack.c.l.b16 %v534
        %v606 = vunpack.c.l.b16 %v535
        %v607 = vunpack.c.l.b16 %v536
        %v608 = vunpack.c.l.b16 %v537
        %v609 = vunpack.c.l.b16 %v538
        %v610 = vunpack.c.l.b16 %v539
        %v611 = vunpack.c.l.b16 %v540
        %v612 = vunpack.c.l.b16 %v541
        %v613 = vunpack.c.l.b16 %v542
        %v614 = vunpack.c.l.b16 %v543
        %v615 = vunpack.c.l.b16 %v544
        %v616 = vunpack.c.l.b16 %v545
        %v617 = vunpack.c.l.b16 %v546
        %v618 = vunpack.c.l.b16 %v547
        %v619 = vpack.c.b16 %v604, %v603
        %v620 = vpack.c.b16 %v606, %v605
        %v621 = vpack.c.b16 %v608, %v607
        %v622 = vpack.c.b16 %v610, %v609
        %v623 = vpack.c.b16 %v612, %v611
        %v624 = vpack.c.b16 %v614, %v613
        %v625 = vpack.c.b16 %v616, %v615
        %v626 = vpack.c.b16 %v618, %v617
        %635 = vmatprep.subr.bf16.mxu0 0
        %636 = vmatpush1.bf16.msra.mxu0 %v619
        %637 = vmatprep.subr.bf16.mxu0 0
        %638 = vmatpush1.bf16.msra.mxu0 %v620
        %639 = vmatprep.subr.bf16.mxu0 0
        %640 = vmatpush1.bf16.msra.mxu0 %v621
        %641 = vmatprep.subr.bf16.mxu0 0
        %642 = vmatpush1.bf16.msra.mxu0 %v622
        %643 = vmatprep.subr.bf16.mxu0 0
        %644 = vmatpush1.bf16.msra.mxu0 %v623
        %645 = vmatprep.subr.bf16.mxu0 0
        %646 = vmatpush1.bf16.msra.mxu0 %v624
        %647 = vmatprep.subr.bf16.mxu0 0
        %648 = vmatpush1.bf16.msra.mxu0 %v625
        %649 = vmatprep.subr.bf16.mxu0 0
        %650 = vmatpush1.bf16.msra.mxu0 %v626
        %651 = vmatprep.subr.bf16.mxu0 0
        %652 = vmatpush1.bf16.msra.mxu0 0
        %653 = vmatprep.subr.bf16.mxu0 0
        %654 = vmatpush1.bf16.msra.mxu0 0
        %655 = vmatprep.subr.bf16.mxu0 0
        %656 = vmatpush1.bf16.msra.mxu0 0
        %657 = vmatprep.subr.bf16.mxu0 0
        %658 = vmatpush1.bf16.msra.mxu0 0
        %659 = vmatprep.subr.bf16.mxu0 0
        %660 = vmatpush1.bf16.msra.mxu0 0
        %661 = vmatprep.subr.bf16.mxu0 0
        %662 = vmatpush1.bf16.msra.mxu0 0
        %663 = vmatprep.subr.bf16.mxu0 0
        %664 = vmatpush1.bf16.msra.mxu0 0
        %665 = vmatprep.subr.bf16.mxu0 0
        %666 = vmatpush1.bf16.msra.mxu0 0
        %667 = vmatprep.mubr.bf16.mxu0 0
        %668 = vmatmul.mubr.bf16.gmra.mrb[0].mxu0 %v571
        %v669 = vpop.f32.mrb[0].mxu0
        %v670 = vadd.f32 %v553, %v669
        %v671 = vpop.f32.mrb[0].mxu0
        %v672 = vpop.f32.mrb[0].mxu0
        %v673 = vadd.f32 %v553, %v672
        %v674 = vpop.f32.mrb[0].mxu0
        %675 = vmatprep.mubr.bf16.mxu0 0
        %676 = vmatmul.mubr.bf16.gmra.mrb[0].mxu0 %v572
        %v677 = vpop.f32.mrb[0].mxu0
        %v678 = vadd.f32 %v553, %v677
        %v679 = vpop.f32.mrb[0].mxu0
        %v680 = vpop.f32.mrb[0].mxu0
        %v681 = vadd.f32 %v553, %v680
        %v682 = vpop.f32.mrb[0].mxu0
        %683 = vmatprep.mubr.bf16.mxu0 0
        %684 = vmatmul.mubr.bf16.gmra.mrb[0].mxu0 %v573
        %v685 = vpop.f32.mrb[0].mxu0
        %v686 = vadd.f32 %v553, %v685
        %v687 = vpop.f32.mrb[0].mxu0
        %v688 = vpop.f32.mrb[0].mxu0
        %v689 = vadd.f32 %v553, %v688
        %v690 = vpop.f32.mrb[0].mxu0
        %691 = vmatprep.mubr.bf16.mxu0 0
        %692 = vmatmul.mubr.bf16.gmra.mrb[0].mxu0 %v574
        %v693 = vpop.f32.mrb[0].mxu0
        %v694 = vadd.f32 %v553, %v693
        %v695 = vpop.f32.mrb[0].mxu0
        %v696 = vpop.f32.mrb[0].mxu0
        %v697 = vadd.f32 %v553, %v696
        %v698 = vpop.f32.mrb[0].mxu0
        %699 = vmatprep.mubr.bf16.mxu0 0
        %700 = vmatmul.mubr.bf16.gmra.mrb[0].mxu0 %v575
        %v701 = vpop.f32.mrb[0].mxu0
        %v702 = vadd.f32 %v553, %v701
        %v703 = vpop.f32.mrb[0].mxu0
        %v704 = vpop.f32.mrb[0].mxu0
        %v705 = vadd.f32 %v553, %v704
        %v706 = vpop.f32.mrb[0].mxu0
        %707 = vmatprep.mubr.bf16.mxu0 0
        %708 = vmatmul.mubr.bf16.gmra.mrb[0].mxu0 %v576
        %v709 = vpop.f32.mrb[0].mxu0
        %v710 = vadd.f32 %v553, %v709
        %v711 = vpop.f32.mrb[0].mxu0
        %v712 = vpop.f32.mrb[0].mxu0
        %v713 = vadd.f32 %v553, %v712
        %v714 = vpop.f32.mrb[0].mxu0
        %715 = vmatprep.mubr.bf16.mxu0 0
        %716 = vmatmul.mubr.bf16.gmra.mrb[0].mxu0 %v577
        %v717 = vpop.f32.mrb[0].mxu0
        %v718 = vadd.f32 %v553, %v717
        %v719 = vpop.f32.mrb[0].mxu0
        %v720 = vpop.f32.mrb[0].mxu0
        %v721 = vadd.f32 %v553, %v720
        %v722 = vpop.f32.mrb[0].mxu0
        %723 = vmatprep.mubr.bf16.mxu0 0
        %724 = vmatmul.mubr.bf16.gmra.mrb[0].mxu0 %v578
        %v725 = vpop.f32.mrb[0].mxu0
        %v726 = vadd.f32 %v553, %v725
        %v727 = vpop.f32.mrb[0].mxu0
        %v728 = vpop.f32.mrb[0].mxu0
        %v729 = vadd.f32 %v553, %v728
        %v730 = vpop.f32.mrb[0].mxu0
        %731 = vdwg.mxu0
        %s732 = smul.u32 %s308, 3
        %s733 = smul.addr %s732, 4
        %s734 = scalar_lea.vmem %s305, %s733
        %v735 = vld [vmem:[%s734] sm:$0xf]
        %v736 = vld [vmem:[%s734 + $0x4] sm:$0xf]
        %v737 = vld [vmem:[%s734 + $0xc] sm:$0xf]
        %v738 = vld [vmem:[%s734 + $0x10] sm:$0xf]
        %v739 = vld [vmem:[%s734 + $0x18] sm:$0xf]
        %v740 = vld [vmem:[%s734 + $0x1c] sm:$0xf]
        %v741 = vld [vmem:[%s734 + $0x24] sm:$0xf]
        %v742 = vld [vmem:[%s734 + $0x28] sm:$0xf]
        %v743 = vld [vmem:[%s734 + $0x30] sm:$0xf]
        %v744 = vld [vmem:[%s734 + $0x34] sm:$0xf]
        %v745 = vld [vmem:[%s734 + $0x3c] sm:$0xf]
        %v746 = vld [vmem:[%s734 + $0x40] sm:$0xf]
        %v747 = vld [vmem:[%s734 + $0x48] sm:$0xf]
        %v748 = vld [vmem:[%s734 + $0x4c] sm:$0xf]
        %v749 = vld [vmem:[%s734 + $0x54] sm:$0xf]
        %v750 = vld [vmem:[%s734 + $0x58] sm:$0xf]
        %v751 = vld [vmem:[%s734 + $0x60] sm:$0xf]
        %v752 = vld [vmem:[%s734 + $0x64] sm:$0xf]
        %v753 = vld [vmem:[%s734 + $0x6c] sm:$0xf]
        %v754 = vld [vmem:[%s734 + $0x70] sm:$0xf]
        %v755 = vmax.bf16 %v735, 0
        %v756 = vmax.bf16 %v736, 0
        %v757 = vmax.bf16 %v737, 0
        %v758 = vmax.bf16 %v738, 0
        %v759 = vmax.bf16 %v739, 0
        %v760 = vmax.bf16 %v740, 0
        %v761 = vmax.bf16 %v741, 0
        %v762 = vmax.bf16 %v742, 0
        %v763 = vmax.bf16 %v743, 0
        %v764 = vmax.bf16 %v744, 0
        %v765 = vmax.bf16 %v745, 0
        %v766 = vmax.bf16 %v746, 0
        %v767 = vmax.bf16 %v747, 0
        %v768 = vmax.bf16 %v748, 0
        %v769 = vmax.bf16 %v749, 0
        %v770 = vmax.bf16 %v750, 0
        %v771 = vmax.bf16 %v751, 0
        %v772 = vmax.bf16 %v752, 0
        %v773 = vmax.bf16 %v753, 0
        %v774 = vmax.bf16 %v754, 0
        %v795 = vunpack.c.l.b16 %v755
        %v796 = vunpack.c.l.b16 %v756
        %v797 = vunpack.c.l.b16 %v757
        %v798 = vunpack.c.l.b16 %v758
        %v799 = vunpack.c.l.b16 %v759
        %v800 = vunpack.c.l.b16 %v760
        %v801 = vunpack.c.l.b16 %v761
        %v802 = vunpack.c.l.b16 %v762
        %v803 = vunpack.c.l.b16 %v763
        %v804 = vunpack.c.l.b16 %v764
        %v805 = vunpack.c.l.b16 %v765
        %v806 = vunpack.c.l.b16 %v766
        %v807 = vunpack.c.l.b16 %v767
        %v808 = vunpack.c.l.b16 %v768
        %v809 = vunpack.c.l.b16 %v769
        %v810 = vunpack.c.l.b16 %v770
        %v811 = vunpack.c.l.b16 %v771
        %v812 = vunpack.c.l.b16 %v772
        %v813 = vunpack.c.l.b16 %v773
        %v814 = vunpack.c.l.b16 %v774
        %v815 = vpack.c.b16 %v796, %v795
        %v816 = vpack.c.b16 %v798, %v797
        %v817 = vpack.c.b16 %v800, %v799
        %v818 = vpack.c.b16 %v802, %v801
        %v819 = vpack.c.b16 %v804, %v803
        %v820 = vpack.c.b16 %v806, %v805
        %v821 = vpack.c.b16 %v808, %v807
        %v822 = vpack.c.b16 %v810, %v809
        %v823 = vpack.c.b16 %v812, %v811
        %v824 = vpack.c.b16 %v814, %v813
        %835 = vst [vmem:[#allocation2] sm:$0xff] %v815
        %836 = vst [vmem:[#allocation2 + $0x48] sm:$0xff] %v816
        %837 = vst [vmem:[#allocation2 + $0x90] sm:$0xff] %v817
        %838 = vst [vmem:[#allocation2 + $0xd8] sm:$0xff] %v818
        %839 = vst [vmem:[#allocation2 + $0x120] sm:$0xff] %v819
        %840 = vst [vmem:[#allocation2 + $0x168] sm:$0xff] %v820
        %841 = vst [vmem:[#allocation2 + $0x1b0] sm:$0xff] %v821
        %842 = vst [vmem:[#allocation2 + $0x1f8] sm:$0xff] %v822
        %843 = vst [vmem:[#allocation2 + $0x240] sm:$0xff] %v823
        %844 = vst [vmem:[#allocation2 + $0x288] sm:$0xff] %v824
        %v845 = vld [vmem:[%s734] sm:$0xf]
        %v846 = vld [vmem:[%s734 + $0x4] sm:$0xf]
        %v847 = vld [vmem:[%s734 + $0x8] sm:$0x1]
        %v848 = vld [vmem:[%s734 + $0xc] sm:$0xf]
        %v849 = vld [vmem:[%s734 + $0x10] sm:$0xf]
        %v850 = vld [vmem:[%s734 + $0x14] sm:$0x1]
        %v851 = vld [vmem:[%s734 + $0x18] sm:$0xf]
        %v852 = vld [vmem:[%s734 + $0x1c] sm:$0xf]
        %v853 = vld [vmem:[%s734 + $0x20] sm:$0x1]
        %v854 = vld [vmem:[%s734 + $0x24] sm:$0xf]
        %v855 = vld [vmem:[%s734 + $0x28] sm:$0xf]
        %v856 = vld [vmem:[%s734 + $0x2c] sm:$0x1]
        %v857 = vld [vmem:[%s734 + $0x30] sm:$0xf]
        %v858 = vld [vmem:[%s734 + $0x34] sm:$0xf]
        %v859 = vld [vmem:[%s734 + $0x38] sm:$0x1]
        %v860 = vld [vmem:[%s734 + $0x3c] sm:$0xf]
        %v861 = vld [vmem:[%s734 + $0x40] sm:$0xf]
        %v862 = vld [vmem:[%s734 + $0x44] sm:$0x1]
        %v863 = vld [vmem:[%s734 + $0x48] sm:$0xf]
        %v864 = vld [vmem:[%s734 + $0x4c] sm:$0xf]
        %v865 = vld [vmem:[%s734 + $0x50] sm:$0x1]
        %v866 = vld [vmem:[%s734 + $0x54] sm:$0xf]
        %v867 = vld [vmem:[%s734 + $0x58] sm:$0xf]
        %v868 = vld [vmem:[%s734 + $0x5c] sm:$0x1]
        %v869 = vld [vmem:[%s734 + $0x60] sm:$0xf]
        %v870 = vld [vmem:[%s734 + $0x64] sm:$0xf]
        %v871 = vld [vmem:[%s734 + $0x68] sm:$0x1]
        %v872 = vld [vmem:[%s734 + $0x6c] sm:$0xf]
        %v873 = vld [vmem:[%s734 + $0x70] sm:$0xf]
        %v874 = vld [vmem:[%s734 + $0x74] sm:$0x1]
        %v875 = vmax.bf16 %v845, 0
        %v876 = vmax.bf16 %v846, 0
        %v877 = vmax.bf16 %v847, 0
        %v878 = vmax.bf16 %v848, 0
        %v879 = vmax.bf16 %v849, 0
        %v880 = vmax.bf16 %v850, 0
        %v881 = vmax.bf16 %v851, 0
        %v882 = vmax.bf16 %v852, 0
        %v883 = vmax.bf16 %v853, 0
        %v884 = vmax.bf16 %v854, 0
        %v885 = vmax.bf16 %v855, 0
        %v886 = vmax.bf16 %v856, 0
        %v887 = vmax.bf16 %v857, 0
        %v888 = vmax.bf16 %v858, 0
        %v889 = vmax.bf16 %v859, 0
        %v890 = vmax.bf16 %v860, 0
        %v891 = vmax.bf16 %v861, 0
        %v892 = vmax.bf16 %v862, 0
        %v893 = vmax.bf16 %v863, 0
        %v894 = vmax.bf16 %v864, 0
        %v895 = vmax.bf16 %v865, 0
        %v896 = vmax.bf16 %v866, 0
        %v897 = vmax.bf16 %v867, 0
        %v898 = vmax.bf16 %v868, 0
        %v899 = vmax.bf16 %v869, 0
        %v900 = vmax.bf16 %v870, 0
        %v901 = vmax.bf16 %v871, 0
        %v902 = vmax.bf16 %v872, 0
        %v903 = vmax.bf16 %v873, 0
        %v904 = vmax.bf16 %v874, 0
        %v906 = vshrl.u32 %v875, 16
        %v908 = vrot.slane %v906, 4
        %v909 = vshll.u32 %v875, 16
        %v911 = vrot.slane %v909, 5
        %v912 = vor.u32 %v908, %v911
        %v913 = vrot.slane %v912, 4
        %v915 = vshll.u32 %v876, 16
        %v917 = vrot.slane %v915, 5
        %v918 = vsel %vm339, %v913, %v917
        %v919 = vshrl.u32 %v876, 16
        %v921 = vrot.slane %v919, 4
        %v922 = vor.u32 %v921, %v917
        %v923 = vrot.slane %v922, 4
        %v925 = vshll.u32 %v877, 16
        %v927 = vrot.slane %v925, 5
        %v928 = vsel %vm339, %v923, %v927
        %v930 = vshrl.u32 %v878, 16
        %v932 = vrot.slane %v930, 4
        %v933 = vshll.u32 %v878, 16
        %v935 = vrot.slane %v933, 5
        %v936 = vor.u32 %v932, %v935
        %v937 = vrot.slane %v936, 4
        %v939 = vshll.u32 %v879, 16
        %v941 = vrot.slane %v939, 5
        %v942 = vsel %vm339, %v937, %v941
        %v943 = vshrl.u32 %v879, 16
        %v945 = vrot.slane %v943, 4
        %v946 = vor.u32 %v945, %v941
        %v947 = vrot.slane %v946, 4
        %v949 = vshll.u32 %v880, 16
        %v951 = vrot.slane %v949, 5
        %v952 = vsel %vm339, %v947, %v951
        %v954 = vshrl.u32 %v881, 16
        %v956 = vrot.slane %v954, 4
        %v957 = vshll.u32 %v881, 16
        %v959 = vrot.slane %v957, 5
        %v960 = vor.u32 %v956, %v959
        %v961 = vrot.slane %v960, 4
        %v963 = vshll.u32 %v882, 16
        %v965 = vrot.slane %v963, 5
        %v966 = vsel %vm339, %v961, %v965
        %v967 = vshrl.u32 %v882, 16
        %v969 = vrot.slane %v967, 4
        %v970 = vor.u32 %v969, %v965
        %v971 = vrot.slane %v970, 4
        %v973 = vshll.u32 %v883, 16
        %v975 = vrot.slane %v973, 5
        %v976 = vsel %vm339, %v971, %v975
        %v978 = vshrl.u32 %v884, 16
        %v980 = vrot.slane %v978, 4
        %v981 = vshll.u32 %v884, 16
        %v983 = vrot.slane %v981, 5
        %v984 = vor.u32 %v980, %v983
        %v985 = vrot.slane %v984, 4
        %v987 = vshll.u32 %v885, 16
        %v989 = vrot.slane %v987, 5
        %v990 = vsel %vm339, %v985, %v989
        %v991 = vshrl.u32 %v885, 16
        %v993 = vrot.slane %v991, 4
        %v994 = vor.u32 %v993, %v989
        %v995 = vrot.slane %v994, 4
        %v997 = vshll.u32 %v886, 16
        %v999 = vrot.slane %v997, 5
        %v1000 = vsel %vm339, %v995, %v999
        %v1002 = vshrl.u32 %v887, 16
        %v1004 = vrot.slane %v1002, 4
        %v1005 = vshll.u32 %v887, 16
        %v1007 = vrot.slane %v1005, 5
        %v1008 = vor.u32 %v1004, %v1007
        %v1009 = vrot.slane %v1008, 4
        %v1011 = vshll.u32 %v888, 16
        %v1013 = vrot.slane %v1011, 5
        %v1014 = vsel %vm339, %v1009, %v1013
        %v1015 = vshrl.u32 %v888, 16
        %v1017 = vrot.slane %v1015, 4
        %v1018 = vor.u32 %v1017, %v1013
        %v1019 = vrot.slane %v1018, 4
        %v1021 = vshll.u32 %v889, 16
        %v1023 = vrot.slane %v1021, 5
        %v1024 = vsel %vm339, %v1019, %v1023
        %v1026 = vshrl.u32 %v890, 16
        %v1028 = vrot.slane %v1026, 4
        %v1029 = vshll.u32 %v890, 16
        %v1031 = vrot.slane %v1029, 5
        %v1032 = vor.u32 %v1028, %v1031
        %v1033 = vrot.slane %v1032, 4
        %v1035 = vshll.u32 %v891, 16
        %v1037 = vrot.slane %v1035, 5
        %v1038 = vsel %vm339, %v1033, %v1037
        %v1039 = vshrl.u32 %v891, 16
        %v1041 = vrot.slane %v1039, 4
        %v1042 = vor.u32 %v1041, %v1037
        %v1043 = vrot.slane %v1042, 4
        %v1045 = vshll.u32 %v892, 16
        %v1047 = vrot.slane %v1045, 5
        %v1048 = vsel %vm339, %v1043, %v1047
        %v1050 = vshrl.u32 %v893, 16
        %v1052 = vrot.slane %v1050, 4
        %v1053 = vshll.u32 %v893, 16
        %v1055 = vrot.slane %v1053, 5
        %v1056 = vor.u32 %v1052, %v1055
        %v1057 = vrot.slane %v1056, 4
        %v1059 = vshll.u32 %v894, 16
        %v1061 = vrot.slane %v1059, 5
        %v1062 = vsel %vm339, %v1057, %v1061
        %v1063 = vshrl.u32 %v894, 16
        %v1065 = vrot.slane %v1063, 4
        %v1066 = vor.u32 %v1065, %v1061
        %v1067 = vrot.slane %v1066, 4
        %v1069 = vshll.u32 %v895, 16
        %v1071 = vrot.slane %v1069, 5
        %v1072 = vsel %vm339, %v1067, %v1071
        %v1074 = vshrl.u32 %v896, 16
        %v1076 = vrot.slane %v1074, 4
        %v1077 = vshll.u32 %v896, 16
        %v1079 = vrot.slane %v1077, 5
        %v1080 = vor.u32 %v1076, %v1079
        %v1081 = vrot.slane %v1080, 4
        %v1083 = vshll.u32 %v897, 16
        %v1085 = vrot.slane %v1083, 5
        %v1086 = vsel %vm339, %v1081, %v1085
        %v1087 = vshrl.u32 %v897, 16
        %v1089 = vrot.slane %v1087, 4
        %v1090 = vor.u32 %v1089, %v1085
        %v1091 = vrot.slane %v1090, 4
        %v1093 = vshll.u32 %v898, 16
        %v1095 = vrot.slane %v1093, 5
        %v1096 = vsel %vm339, %v1091, %v1095
        %v1098 = vshrl.u32 %v899, 16
        %v1100 = vrot.slane %v1098, 4
        %v1101 = vshll.u32 %v899, 16
        %v1103 = vrot.slane %v1101, 5
        %v1104 = vor.u32 %v1100, %v1103
        %v1105 = vrot.slane %v1104, 4
        %v1107 = vshll.u32 %v900, 16
        %v1109 = vrot.slane %v1107, 5
        %v1110 = vsel %vm339, %v1105, %v1109
        %v1111 = vshrl.u32 %v900, 16
        %v1113 = vrot.slane %v1111, 4
        %v1114 = vor.u32 %v1113, %v1109
        %v1115 = vrot.slane %v1114, 4
        %v1117 = vshll.u32 %v901, 16
        %v1119 = vrot.slane %v1117, 5
        %v1120 = vsel %vm339, %v1115, %v1119
        %v1122 = vshrl.u32 %v902, 16
        %v1124 = vrot.slane %v1122, 4
        %v1125 = vshll.u32 %v902, 16
        %v1127 = vrot.slane %v1125, 5
        %v1128 = vor.u32 %v1124, %v1127
        %v1129 = vrot.slane %v1128, 4
        %v1131 = vshll.u32 %v903, 16
        %v1133 = vrot.slane %v1131, 5
        %v1134 = vsel %vm339, %v1129, %v1133
        %v1135 = vshrl.u32 %v903, 16
        %v1137 = vrot.slane %v1135, 4
        %v1138 = vor.u32 %v1137, %v1133
        %v1139 = vrot.slane %v1138, 4
        %v1141 = vshll.u32 %v904, 16
        %v1143 = vrot.slane %v1141, 5
        %v1144 = vsel %vm339, %v1139, %v1143
        %v1145 = vunpack.c.l.b16 %v918
        %v1146 = vunpack.c.l.b16 %v928
        %v1147 = vunpack.c.l.b16 %v942
        %v1148 = vunpack.c.l.b16 %v952
        %v1149 = vunpack.c.l.b16 %v966
        %v1150 = vunpack.c.l.b16 %v976
        %v1151 = vunpack.c.l.b16 %v990
        %v1152 = vunpack.c.l.b16 %v1000
        %v1153 = vunpack.c.l.b16 %v1014
        %v1154 = vunpack.c.l.b16 %v1024
        %v1155 = vunpack.c.l.b16 %v1038
        %v1156 = vunpack.c.l.b16 %v1048
        %v1157 = vunpack.c.l.b16 %v1062
        %v1158 = vunpack.c.l.b16 %v1072
        %v1159 = vunpack.c.l.b16 %v1086
        %v1160 = vunpack.c.l.b16 %v1096
        %v1161 = vunpack.c.l.b16 %v1110
        %v1162 = vunpack.c.l.b16 %v1120
        %v1163 = vunpack.c.l.b16 %v1134
        %v1164 = vunpack.c.l.b16 %v1144
        %v1165 = vpack.c.b16 %v1146, %v1145
        %v1166 = vpack.c.b16 %v1148, %v1147
        %v1167 = vpack.c.b16 %v1150, %v1149
        %v1168 = vpack.c.b16 %v1152, %v1151
        %v1169 = vpack.c.b16 %v1154, %v1153
        %v1170 = vpack.c.b16 %v1156, %v1155
        %v1171 = vpack.c.b16 %v1158, %v1157
        %v1172 = vpack.c.b16 %v1160, %v1159
        %v1173 = vpack.c.b16 %v1162, %v1161
        %v1174 = vpack.c.b16 %v1164, %v1163
        %1185 = vst [vmem:[#allocation2 + $0x8] sm:$0xff] %v1165
        %1186 = vst [vmem:[#allocation2 + $0x50] sm:$0xff] %v1166
        %1187 = vst [vmem:[#allocation2 + $0x98] sm:$0xff] %v1167
        %1188 = vst [vmem:[#allocation2 + $0xe0] sm:$0xff] %v1168
        %1189 = vst [vmem:[#allocation2 + $0x128] sm:$0xff] %v1169
        %1190 = vst [vmem:[#allocation2 + $0x170] sm:$0xff] %v1170
        %1191 = vst [vmem:[#allocation2 + $0x1b8] sm:$0xff] %v1171
        %1192 = vst [vmem:[#allocation2 + $0x200] sm:$0xff] %v1172
        %1193 = vst [vmem:[#allocation2 + $0x248] sm:$0xff] %v1173
        %1194 = vst [vmem:[#allocation2 + $0x290] sm:$0xff] %v1174
        %v1195 = vld [vmem:[%s734] sm:$0xe]
        %v1196 = vld [vmem:[%s734 + $0x4] sm:$0xf]
        %v1197 = vld [vmem:[%s734 + $0x8] sm:$0x1]
        %v1198 = vld [vmem:[%s734 + $0xc] sm:$0xe]
        %v1199 = vld [vmem:[%s734 + $0x10] sm:$0xf]
        %v1200 = vld [vmem:[%s734 + $0x14] sm:$0x1]
        %v1201 = vld [vmem:[%s734 + $0x18] sm:$0xe]
        %v1202 = vld [vmem:[%s734 + $0x1c] sm:$0xf]
        %v1203 = vld [vmem:[%s734 + $0x20] sm:$0x1]
        %v1204 = vld [vmem:[%s734 + $0x24] sm:$0xe]
        %v1205 = vld [vmem:[%s734 + $0x28] sm:$0xf]
        %v1206 = vld [vmem:[%s734 + $0x2c] sm:$0x1]
        %v1207 = vld [vmem:[%s734 + $0x30] sm:$0xe]
        %v1208 = vld [vmem:[%s734 + $0x34] sm:$0xf]
        %v1209 = vld [vmem:[%s734 + $0x38] sm:$0x1]
        %v1210 = vld [vmem:[%s734 + $0x3c] sm:$0xe]
        %v1211 = vld [vmem:[%s734 + $0x40] sm:$0xf]
        %v1212 = vld [vmem:[%s734 + $0x44] sm:$0x1]
        %v1213 = vld [vmem:[%s734 + $0x48] sm:$0xe]
        %v1214 = vld [vmem:[%s734 + $0x4c] sm:$0xf]
        %v1215 = vld [vmem:[%s734 + $0x50] sm:$0x1]
        %v1216 = vld [vmem:[%s734 + $0x54] sm:$0xe]
        %v1217 = vld [vmem:[%s734 + $0x58] sm:$0xf]
        %v1218 = vld [vmem:[%s734 + $0x5c] sm:$0x1]
        %v1219 = vld [vmem:[%s734 + $0x60] sm:$0xe]
        %v1220 = vld [vmem:[%s734 + $0x64] sm:$0xf]
        %v1221 = vld [vmem:[%s734 + $0x68] sm:$0x1]
        %v1222 = vld [vmem:[%s734 + $0x6c] sm:$0xe]
        %v1223 = vld [vmem:[%s734 + $0x70] sm:$0xf]
        %v1224 = vld [vmem:[%s734 + $0x74] sm:$0x1]
        %v1225 = vmax.bf16 %v1195, 0
        %v1226 = vmax.bf16 %v1196, 0
        %v1227 = vmax.bf16 %v1197, 0
        %v1228 = vmax.bf16 %v1198, 0
        %v1229 = vmax.bf16 %v1199, 0
        %v1230 = vmax.bf16 %v1200, 0
        %v1231 = vmax.bf16 %v1201, 0
        %v1232 = vmax.bf16 %v1202, 0
        %v1233 = vmax.bf16 %v1203, 0
        %v1234 = vmax.bf16 %v1204, 0
        %v1235 = vmax.bf16 %v1205, 0
        %v1236 = vmax.bf16 %v1206, 0
        %v1237 = vmax.bf16 %v1207, 0
        %v1238 = vmax.bf16 %v1208, 0
        %v1239 = vmax.bf16 %v1209, 0
        %v1240 = vmax.bf16 %v1210, 0
        %v1241 = vmax.bf16 %v1211, 0
        %v1242 = vmax.bf16 %v1212, 0
        %v1243 = vmax.bf16 %v1213, 0
        %v1244 = vmax.bf16 %v1214, 0
        %v1245 = vmax.bf16 %v1215, 0
        %v1246 = vmax.bf16 %v1216, 0
        %v1247 = vmax.bf16 %v1217, 0
        %v1248 = vmax.bf16 %v1218, 0
        %v1249 = vmax.bf16 %v1219, 0
        %v1250 = vmax.bf16 %v1220, 0
        %v1251 = vmax.bf16 %v1221, 0
        %v1252 = vmax.bf16 %v1222, 0
        %v1253 = vmax.bf16 %v1223, 0
        %v1254 = vmax.bf16 %v1224, 0
        %vm1285 = vcmask 1042432
        %vm1286 = vcmask 1046532
        %vm1287 = vmor %vm1285, %vm1286
        %v1288 = vrot.slane %v1225, 5
        %v1289 = vrot.slane %v1288, 4
        %v1290 = vrot.slane %v1226, 5
        %v1291 = vsel %vm1287, %v1289, %v1290
        %v1292 = vrot.slane %v1290, 4
        %v1293 = vrot.slane %v1227, 5
        %v1294 = vsel %vm1287, %v1292, %v1293
        %v1295 = vrot.slane %v1228, 5
        %v1296 = vrot.slane %v1295, 4
        %v1297 = vrot.slane %v1229, 5
        %v1298 = vsel %vm1287, %v1296, %v1297
        %v1299 = vrot.slane %v1297, 4
        %v1300 = vrot.slane %v1230, 5
        %v1301 = vsel %vm1287, %v1299, %v1300
        %v1302 = vrot.slane %v1231, 5
        %v1303 = vrot.slane %v1302, 4
        %v1304 = vrot.slane %v1232, 5
        %v1305 = vsel %vm1287, %v1303, %v1304
        %v1306 = vrot.slane %v1304, 4
        %v1307 = vrot.slane %v1233, 5
        %v1308 = vsel %vm1287, %v1306, %v1307
        %v1309 = vrot.slane %v1234, 5
        %v1310 = vrot.slane %v1309, 4
        %v1311 = vrot.slane %v1235, 5
        %v1312 = vsel %vm1287, %v1310, %v1311
        %v1313 = vrot.slane %v1311, 4
        %v1314 = vrot.slane %v1236, 5
        %v1315 = vsel %vm1287, %v1313, %v1314
        %v1316 = vrot.slane %v1237, 5
        %v1317 = vrot.slane %v1316, 4
        %v1318 = vrot.slane %v1238, 5
        %v1319 = vsel %vm1287, %v1317, %v1318
        %v1320 = vrot.slane %v1318, 4
        %v1321 = vrot.slane %v1239, 5
        %v1322 = vsel %vm1287, %v1320, %v1321
        %v1323 = vrot.slane %v1240, 5
        %v1324 = vrot.slane %v1323, 4
        %v1325 = vrot.slane %v1241, 5
        %v1326 = vsel %vm1287, %v1324, %v1325
        %v1327 = vrot.slane %v1325, 4
        %v1328 = vrot.slane %v1242, 5
        %v1329 = vsel %vm1287, %v1327, %v1328
        %v1330 = vrot.slane %v1243, 5
        %v1331 = vrot.slane %v1330, 4
        %v1332 = vrot.slane %v1244, 5
        %v1333 = vsel %vm1287, %v1331, %v1332
        %v1334 = vrot.slane %v1332, 4
        %v1335 = vrot.slane %v1245, 5
        %v1336 = vsel %vm1287, %v1334, %v1335
        %v1337 = vrot.slane %v1246, 5
        %v1338 = vrot.slane %v1337, 4
        %v1339 = vrot.slane %v1247, 5
        %v1340 = vsel %vm1287, %v1338, %v1339
        %v1341 = vrot.slane %v1339, 4
        %v1342 = vrot.slane %v1248, 5
        %v1343 = vsel %vm1287, %v1341, %v1342
        %v1344 = vrot.slane %v1249, 5
        %v1345 = vrot.slane %v1344, 4
        %v1346 = vrot.slane %v1250, 5
        %v1347 = vsel %vm1287, %v1345, %v1346
        %v1348 = vrot.slane %v1346, 4
        %v1349 = vrot.slane %v1251, 5
        %v1350 = vsel %vm1287, %v1348, %v1349
        %v1351 = vrot.slane %v1252, 5
        %v1352 = vrot.slane %v1351, 4
        %v1353 = vrot.slane %v1253, 5
        %v1354 = vsel %vm1287, %v1352, %v1353
        %v1355 = vrot.slane %v1353, 4
        %v1356 = vrot.slane %v1254, 5
        %v1357 = vsel %vm1287, %v1355, %v1356
        %v1358 = vunpack.c.l.b16 %v1291
        %v1359 = vunpack.c.l.b16 %v1294
        %v1360 = vunpack.c.l.b16 %v1298
        %v1361 = vunpack.c.l.b16 %v1301
        %v1362 = vunpack.c.l.b16 %v1305
        %v1363 = vunpack.c.l.b16 %v1308
        %v1364 = vunpack.c.l.b16 %v1312
        %v1365 = vunpack.c.l.b16 %v1315
        %v1366 = vunpack.c.l.b16 %v1319
        %v1367 = vunpack.c.l.b16 %v1322
        %v1368 = vunpack.c.l.b16 %v1326
        %v1369 = vunpack.c.l.b16 %v1329
        %v1370 = vunpack.c.l.b16 %v1333
        %v1371 = vunpack.c.l.b16 %v1336
        %v1372 = vunpack.c.l.b16 %v1340
        %v1373 = vunpack.c.l.b16 %v1343
        %v1374 = vunpack.c.l.b16 %v1347
        %v1375 = vunpack.c.l.b16 %v1350
        %v1376 = vunpack.c.l.b16 %v1354
        %v1377 = vunpack.c.l.b16 %v1357
        %v1378 = vpack.c.b16 %v1359, %v1358
        %v1379 = vpack.c.b16 %v1361, %v1360
        %v1380 = vpack.c.b16 %v1363, %v1362
        %v1381 = vpack.c.b16 %v1365, %v1364
        %v1382 = vpack.c.b16 %v1367, %v1366
        %v1383 = vpack.c.b16 %v1369, %v1368
        %v1384 = vpack.c.b16 %v1371, %v1370
        %v1385 = vpack.c.b16 %v1373, %v1372
        %v1386 = vpack.c.b16 %v1375, %v1374
        %v1387 = vpack.c.b16 %v1377, %v1376
        %1398 = vst [vmem:[#allocation2 + $0x10] sm:$0xff] %v1378
        %1399 = vst [vmem:[#allocation2 + $0x58] sm:$0xff] %v1379
        %1400 = vst [vmem:[#allocation2 + $0xa0] sm:$0xff] %v1380
        %1401 = vst [vmem:[#allocation2 + $0xe8] sm:$0xff] %v1381
        %1402 = vst [vmem:[#allocation2 + $0x130] sm:$0xff] %v1382
        %1403 = vst [vmem:[#allocation2 + $0x178] sm:$0xff] %v1383
        %1404 = vst [vmem:[#allocation2 + $0x1c0] sm:$0xff] %v1384
        %1405 = vst [vmem:[#allocation2 + $0x208] sm:$0xff] %v1385
        %1406 = vst [vmem:[#allocation2 + $0x250] sm:$0xff] %v1386
        %1407 = vst [vmem:[#allocation2 + $0x298] sm:$0xff] %v1387
        %s1408 = sadd.s32 %s308, 1
        %s1409 = smul.u32 %s1408, 3
        %s1410 = smul.addr %s1409, 4
        %s1411 = scalar_lea.vmem %s305, %s1410
        %v1412 = vld [vmem:[%s1411] sm:$0xf]
        %v1413 = vld [vmem:[%s1411 + $0x4] sm:$0xf]
        %v1414 = vld [vmem:[%s1411 + $0xc] sm:$0xf]
        %v1415 = vld [vmem:[%s1411 + $0x10] sm:$0xf]
        %v1416 = vld [vmem:[%s1411 + $0x18] sm:$0xf]
        %v1417 = vld [vmem:[%s1411 + $0x1c] sm:$0xf]
        %v1418 = vld [vmem:[%s1411 + $0x24] sm:$0xf]
        %v1419 = vld [vmem:[%s1411 + $0x28] sm:$0xf]
        %v1420 = vld [vmem:[%s1411 + $0x30] sm:$0xf]
        %v1421 = vld [vmem:[%s1411 + $0x34] sm:$0xf]
        %v1422 = vld [vmem:[%s1411 + $0x3c] sm:$0xf]
        %v1423 = vld [vmem:[%s1411 + $0x40] sm:$0xf]
        %v1424 = vld [vmem:[%s1411 + $0x48] sm:$0xf]
        %v1425 = vld [vmem:[%s1411 + $0x4c] sm:$0xf]
        %v1426 = vld [vmem:[%s1411 + $0x54] sm:$0xf]
        %v1427 = vld [vmem:[%s1411 + $0x58] sm:$0xf]
        %v1428 = vld [vmem:[%s1411 + $0x60] sm:$0xf]
        %v1429 = vld [vmem:[%s1411 + $0x64] sm:$0xf]
        %v1430 = vld [vmem:[%s1411 + $0x6c] sm:$0xf]
        %v1431 = vld [vmem:[%s1411 + $0x70] sm:$0xf]
        %v1432 = vmax.bf16 %v1412, 0
        %v1433 = vmax.bf16 %v1413, 0
        %v1434 = vmax.bf16 %v1414, 0
        %v1435 = vmax.bf16 %v1415, 0
        %v1436 = vmax.bf16 %v1416, 0
        %v1437 = vmax.bf16 %v1417, 0
        %v1438 = vmax.bf16 %v1418, 0
        %v1439 = vmax.bf16 %v1419, 0
        %v1440 = vmax.bf16 %v1420, 0
        %v1441 = vmax.bf16 %v1421, 0
        %v1442 = vmax.bf16 %v1422, 0
        %v1443 = vmax.bf16 %v1423, 0
        %v1444 = vmax.bf16 %v1424, 0
        %v1445 = vmax.bf16 %v1425, 0
        %v1446 = vmax.bf16 %v1426, 0
        %v1447 = vmax.bf16 %v1427, 0
        %v1448 = vmax.bf16 %v1428, 0
        %v1449 = vmax.bf16 %v1429, 0
        %v1450 = vmax.bf16 %v1430, 0
        %v1451 = vmax.bf16 %v1431, 0
        %v1472 = vunpack.c.l.b16 %v1432
        %v1473 = vunpack.c.l.b16 %v1433
        %v1474 = vunpack.c.l.b16 %v1434
        %v1475 = vunpack.c.l.b16 %v1435
        %v1476 = vunpack.c.l.b16 %v1436
        %v1477 = vunpack.c.l.b16 %v1437
        %v1478 = vunpack.c.l.b16 %v1438
        %v1479 = vunpack.c.l.b16 %v1439
        %v1480 = vunpack.c.l.b16 %v1440
        %v1481 = vunpack.c.l.b16 %v1441
        %v1482 = vunpack.c.l.b16 %v1442
        %v1483 = vunpack.c.l.b16 %v1443
        %v1484 = vunpack.c.l.b16 %v1444
        %v1485 = vunpack.c.l.b16 %v1445
        %v1486 = vunpack.c.l.b16 %v1446
        %v1487 = vunpack.c.l.b16 %v1447
        %v1488 = vunpack.c.l.b16 %v1448
        %v1489 = vunpack.c.l.b16 %v1449
        %v1490 = vunpack.c.l.b16 %v1450
        %v1491 = vunpack.c.l.b16 %v1451
        %v1492 = vpack.c.b16 %v1473, %v1472
        %v1493 = vpack.c.b16 %v1475, %v1474
        %v1494 = vpack.c.b16 %v1477, %v1476
        %v1495 = vpack.c.b16 %v1479, %v1478
        %v1496 = vpack.c.b16 %v1481, %v1480
        %v1497 = vpack.c.b16 %v1483, %v1482
        %v1498 = vpack.c.b16 %v1485, %v1484
        %v1499 = vpack.c.b16 %v1487, %v1486
        %v1500 = vpack.c.b16 %v1489, %v1488
        %v1501 = vpack.c.b16 %v1491, %v1490
        %1512 = vst [vmem:[#allocation2 + $0x18] sm:$0xff] %v1492
        %1513 = vst [vmem:[#allocation2 + $0x60] sm:$0xff] %v1493
        %1514 = vst [vmem:[#allocation2 + $0xa8] sm:$0xff] %v1494
        %1515 = vst [vmem:[#allocation2 + $0xf0] sm:$0xff] %v1495
        %1516 = vst [vmem:[#allocation2 + $0x138] sm:$0xff] %v1496
        %1517 = vst [vmem:[#allocation2 + $0x180] sm:$0xff] %v1497
        %1518 = vst [vmem:[#allocation2 + $0x1c8] sm:$0xff] %v1498
        %1519 = vst [vmem:[#allocation2 + $0x210] sm:$0xff] %v1499
        %1520 = vst [vmem:[#allocation2 + $0x258] sm:$0xff] %v1500
        %1521 = vst [vmem:[#allocation2 + $0x2a0] sm:$0xff] %v1501
        %v1522 = vld [vmem:[%s1411] sm:$0xf]
        %v1523 = vld [vmem:[%s1411 + $0x4] sm:$0xf]
        %v1524 = vld [vmem:[%s1411 + $0x8] sm:$0x1]
        %v1525 = vld [vmem:[%s1411 + $0xc] sm:$0xf]
        %v1526 = vld [vmem:[%s1411 + $0x10] sm:$0xf]
        %v1527 = vld [vmem:[%s1411 + $0x14] sm:$0x1]
        %v1528 = vld [vmem:[%s1411 + $0x18] sm:$0xf]
        %v1529 = vld [vmem:[%s1411 + $0x1c] sm:$0xf]
        %v1530 = vld [vmem:[%s1411 + $0x20] sm:$0x1]
        %v1531 = vld [vmem:[%s1411 + $0x24] sm:$0xf]
        %v1532 = vld [vmem:[%s1411 + $0x28] sm:$0xf]
        %v1533 = vld [vmem:[%s1411 + $0x2c] sm:$0x1]
        %v1534 = vld [vmem:[%s1411 + $0x30] sm:$0xf]
        %v1535 = vld [vmem:[%s1411 + $0x34] sm:$0xf]
        %v1536 = vld [vmem:[%s1411 + $0x38] sm:$0x1]
        %v1537 = vld [vmem:[%s1411 + $0x3c] sm:$0xf]
        %v1538 = vld [vmem:[%s1411 + $0x40] sm:$0xf]
        %v1539 = vld [vmem:[%s1411 + $0x44] sm:$0x1]
        %v1540 = vld [vmem:[%s1411 + $0x48] sm:$0xf]
        %v1541 = vld [vmem:[%s1411 + $0x4c] sm:$0xf]
        %v1542 = vld [vmem:[%s1411 + $0x50] sm:$0x1]
        %v1543 = vld [vmem:[%s1411 + $0x54] sm:$0xf]
        %v1544 = vld [vmem:[%s1411 + $0x58] sm:$0xf]
        %v1545 = vld [vmem:[%s1411 + $0x5c] sm:$0x1]
        %v1546 = vld [vmem:[%s1411 + $0x60] sm:$0xf]
        %v1547 = vld [vmem:[%s1411 + $0x64] sm:$0xf]
        %v1548 = vld [vmem:[%s1411 + $0x68] sm:$0x1]
        %v1549 = vld [vmem:[%s1411 + $0x6c] sm:$0xf]
        %v1550 = vld [vmem:[%s1411 + $0x70] sm:$0xf]
        %v1551 = vld [vmem:[%s1411 + $0x74] sm:$0x1]
        %v1552 = vmax.bf16 %v1522, 0
        %v1553 = vmax.bf16 %v1523, 0
        %v1554 = vmax.bf16 %v1524, 0
        %v1555 = vmax.bf16 %v1525, 0
        %v1556 = vmax.bf16 %v1526, 0
        %v1557 = vmax.bf16 %v1527, 0
        %v1558 = vmax.bf16 %v1528, 0
        %v1559 = vmax.bf16 %v1529, 0
        %v1560 = vmax.bf16 %v1530, 0
        %v1561 = vmax.bf16 %v1531, 0
        %v1562 = vmax.bf16 %v1532, 0
        %v1563 = vmax.bf16 %v1533, 0
        %v1564 = vmax.bf16 %v1534, 0
        %v1565 = vmax.bf16 %v1535, 0
        %v1566 = vmax.bf16 %v1536, 0
        %v1567 = vmax.bf16 %v1537, 0
        %v1568 = vmax.bf16 %v1538, 0
        %v1569 = vmax.bf16 %v1539, 0
        %v1570 = vmax.bf16 %v1540, 0
        %v1571 = vmax.bf16 %v1541, 0
        %v1572 = vmax.bf16 %v1542, 0
        %v1573 = vmax.bf16 %v1543, 0
        %v1574 = vmax.bf16 %v1544, 0
        %v1575 = vmax.bf16 %v1545, 0
        %v1576 = vmax.bf16 %v1546, 0
        %v1577 = vmax.bf16 %v1547, 0
        %v1578 = vmax.bf16 %v1548, 0
        %v1579 = vmax.bf16 %v1549, 0
        %v1580 = vmax.bf16 %v1550, 0
        %v1581 = vmax.bf16 %v1551, 0
        %v1583 = vshrl.u32 %v1552, 16
        %v1585 = vrot.slane %v1583, 4
        %v1586 = vshll.u32 %v1552, 16
        %v1588 = vrot.slane %v1586, 5
        %v1589 = vor.u32 %v1585, %v1588
        %v1590 = vrot.slane %v1589, 4
        %v1592 = vshll.u32 %v1553, 16
        %v1594 = vrot.slane %v1592, 5
        %v1595 = vsel %vm339, %v1590, %v1594
        %v1596 = vshrl.u32 %v1553, 16
        %v1598 = vrot.slane %v1596, 4
        %v1599 = vor.u32 %v1598, %v1594
        %v1600 = vrot.slane %v1599, 4
        %v1602 = vshll.u32 %v1554, 16
        %v1604 = vrot.slane %v1602, 5
        %v1605 = vsel %vm339, %v1600, %v1604
        %v1607 = vshrl.u32 %v1555, 16
        %v1609 = vrot.slane %v1607, 4
        %v1610 = vshll.u32 %v1555, 16
        %v1612 = vrot.slane %v1610, 5
        %v1613 = vor.u32 %v1609, %v1612
        %v1614 = vrot.slane %v1613, 4
        %v1616 = vshll.u32 %v1556, 16
        %v1618 = vrot.slane %v1616, 5
        %v1619 = vsel %vm339, %v1614, %v1618
        %v1620 = vshrl.u32 %v1556, 16
        %v1622 = vrot.slane %v1620, 4
        %v1623 = vor.u32 %v1622, %v1618
        %v1624 = vrot.slane %v1623, 4
        %v1626 = vshll.u32 %v1557, 16
        %v1628 = vrot.slane %v1626, 5
        %v1629 = vsel %vm339, %v1624, %v1628
        %v1631 = vshrl.u32 %v1558, 16
        %v1633 = vrot.slane %v1631, 4
        %v1634 = vshll.u32 %v1558, 16
        %v1636 = vrot.slane %v1634, 5
        %v1637 = vor.u32 %v1633, %v1636
        %v1638 = vrot.slane %v1637, 4
        %v1640 = vshll.u32 %v1559, 16
        %v1642 = vrot.slane %v1640, 5
        %v1643 = vsel %vm339, %v1638, %v1642
        %v1644 = vshrl.u32 %v1559, 16
        %v1646 = vrot.slane %v1644, 4
        %v1647 = vor.u32 %v1646, %v1642
        %v1648 = vrot.slane %v1647, 4
        %v1650 = vshll.u32 %v1560, 16
        %v1652 = vrot.slane %v1650, 5
        %v1653 = vsel %vm339, %v1648, %v1652
        %v1655 = vshrl.u32 %v1561, 16
        %v1657 = vrot.slane %v1655, 4
        %v1658 = vshll.u32 %v1561, 16
        %v1660 = vrot.slane %v1658, 5
        %v1661 = vor.u32 %v1657, %v1660
        %v1662 = vrot.slane %v1661, 4
        %v1664 = vshll.u32 %v1562, 16
        %v1666 = vrot.slane %v1664, 5
        %v1667 = vsel %vm339, %v1662, %v1666
        %v1668 = vshrl.u32 %v1562, 16
        %v1670 = vrot.slane %v1668, 4
        %v1671 = vor.u32 %v1670, %v1666
        %v1672 = vrot.slane %v1671, 4
        %v1674 = vshll.u32 %v1563, 16
        %v1676 = vrot.slane %v1674, 5
        %v1677 = vsel %vm339, %v1672, %v1676
        %v1679 = vshrl.u32 %v1564, 16
        %v1681 = vrot.slane %v1679, 4
        %v1682 = vshll.u32 %v1564, 16
        %v1684 = vrot.slane %v1682, 5
        %v1685 = vor.u32 %v1681, %v1684
        %v1686 = vrot.slane %v1685, 4
        %v1688 = vshll.u32 %v1565, 16
        %v1690 = vrot.slane %v1688, 5
        %v1691 = vsel %vm339, %v1686, %v1690
        %v1692 = vshrl.u32 %v1565, 16
        %v1694 = vrot.slane %v1692, 4
        %v1695 = vor.u32 %v1694, %v1690
        %v1696 = vrot.slane %v1695, 4
        %v1698 = vshll.u32 %v1566, 16
        %v1700 = vrot.slane %v1698, 5
        %v1701 = vsel %vm339, %v1696, %v1700
        %v1703 = vshrl.u32 %v1567, 16
        %v1705 = vrot.slane %v1703, 4
        %v1706 = vshll.u32 %v1567, 16
        %v1708 = vrot.slane %v1706, 5
        %v1709 = vor.u32 %v1705, %v1708
        %v1710 = vrot.slane %v1709, 4
        %v1712 = vshll.u32 %v1568, 16
        %v1714 = vrot.slane %v1712, 5
        %v1715 = vsel %vm339, %v1710, %v1714
        %v1716 = vshrl.u32 %v1568, 16
        %v1718 = vrot.slane %v1716, 4
        %v1719 = vor.u32 %v1718, %v1714
        %v1720 = vrot.slane %v1719, 4
        %v1722 = vshll.u32 %v1569, 16
        %v1724 = vrot.slane %v1722, 5
        %v1725 = vsel %vm339, %v1720, %v1724
        %v1727 = vshrl.u32 %v1570, 16
        %v1729 = vrot.slane %v1727, 4
        %v1730 = vshll.u32 %v1570, 16
        %v1732 = vrot.slane %v1730, 5
        %v1733 = vor.u32 %v1729, %v1732
        %v1734 = vrot.slane %v1733, 4
        %v1736 = vshll.u32 %v1571, 16
        %v1738 = vrot.slane %v1736, 5
        %v1739 = vsel %vm339, %v1734, %v1738
        %v1740 = vshrl.u32 %v1571, 16
        %v1742 = vrot.slane %v1740, 4
        %v1743 = vor.u32 %v1742, %v1738
        %v1744 = vrot.slane %v1743, 4
        %v1746 = vshll.u32 %v1572, 16
        %v1748 = vrot.slane %v1746, 5
        %v1749 = vsel %vm339, %v1744, %v1748
        %v1751 = vshrl.u32 %v1573, 16
        %v1753 = vrot.slane %v1751, 4
        %v1754 = vshll.u32 %v1573, 16
        %v1756 = vrot.slane %v1754, 5
        %v1757 = vor.u32 %v1753, %v1756
        %v1758 = vrot.slane %v1757, 4
        %v1760 = vshll.u32 %v1574, 16
        %v1762 = vrot.slane %v1760, 5
        %v1763 = vsel %vm339, %v1758, %v1762
        %v1764 = vshrl.u32 %v1574, 16
        %v1766 = vrot.slane %v1764, 4
        %v1767 = vor.u32 %v1766, %v1762
        %v1768 = vrot.slane %v1767, 4
        %v1770 = vshll.u32 %v1575, 16
        %v1772 = vrot.slane %v1770, 5
        %v1773 = vsel %vm339, %v1768, %v1772
        %v1775 = vshrl.u32 %v1576, 16
        %v1777 = vrot.slane %v1775, 4
        %v1778 = vshll.u32 %v1576, 16
        %v1780 = vrot.slane %v1778, 5
        %v1781 = vor.u32 %v1777, %v1780
        %v1782 = vrot.slane %v1781, 4
        %v1784 = vshll.u32 %v1577, 16
        %v1786 = vrot.slane %v1784, 5
        %v1787 = vsel %vm339, %v1782, %v1786
        %v1788 = vshrl.u32 %v1577, 16
        %v1790 = vrot.slane %v1788, 4
        %v1791 = vor.u32 %v1790, %v1786
        %v1792 = vrot.slane %v1791, 4
        %v1794 = vshll.u32 %v1578, 16
        %v1796 = vrot.slane %v1794, 5
        %v1797 = vsel %vm339, %v1792, %v1796
        %v1799 = vshrl.u32 %v1579, 16
        %v1801 = vrot.slane %v1799, 4
        %v1802 = vshll.u32 %v1579, 16
        %v1804 = vrot.slane %v1802, 5
        %v1805 = vor.u32 %v1801, %v1804
        %v1806 = vrot.slane %v1805, 4
        %v1808 = vshll.u32 %v1580, 16
        %v1810 = vrot.slane %v1808, 5
        %v1811 = vsel %vm339, %v1806, %v1810
        %v1812 = vshrl.u32 %v1580, 16
        %v1814 = vrot.slane %v1812, 4
        %v1815 = vor.u32 %v1814, %v1810
        %v1816 = vrot.slane %v1815, 4
        %v1818 = vshll.u32 %v1581, 16
        %v1820 = vrot.slane %v1818, 5
        %v1821 = vsel %vm339, %v1816, %v1820
        %v1822 = vunpack.c.l.b16 %v1595
        %v1823 = vunpack.c.l.b16 %v1605
        %v1824 = vunpack.c.l.b16 %v1619
        %v1825 = vunpack.c.l.b16 %v1629
        %v1826 = vunpack.c.l.b16 %v1643
        %v1827 = vunpack.c.l.b16 %v1653
        %v1828 = vunpack.c.l.b16 %v1667
        %v1829 = vunpack.c.l.b16 %v1677
        %v1830 = vunpack.c.l.b16 %v1691
        %v1831 = vunpack.c.l.b16 %v1701
        %v1832 = vunpack.c.l.b16 %v1715
        %v1833 = vunpack.c.l.b16 %v1725
        %v1834 = vunpack.c.l.b16 %v1739
        %v1835 = vunpack.c.l.b16 %v1749
        %v1836 = vunpack.c.l.b16 %v1763
        %v1837 = vunpack.c.l.b16 %v1773
        %v1838 = vunpack.c.l.b16 %v1787
        %v1839 = vunpack.c.l.b16 %v1797
        %v1840 = vunpack.c.l.b16 %v1811
        %v1841 = vunpack.c.l.b16 %v1821
        %v1842 = vpack.c.b16 %v1823, %v1822
        %v1843 = vpack.c.b16 %v1825, %v1824
        %v1844 = vpack.c.b16 %v1827, %v1826
        %v1845 = vpack.c.b16 %v1829, %v1828
        %v1846 = vpack.c.b16 %v1831, %v1830
        %v1847 = vpack.c.b16 %v1833, %v1832
        %v1848 = vpack.c.b16 %v1835, %v1834
        %v1849 = vpack.c.b16 %v1837, %v1836
        %v1850 = vpack.c.b16 %v1839, %v1838
        %v1851 = vpack.c.b16 %v1841, %v1840
        %1862 = vst [vmem:[#allocation2 + $0x20] sm:$0xff] %v1842
        %1863 = vst [vmem:[#allocation2 + $0x68] sm:$0xff] %v1843
        %1864 = vst [vmem:[#allocation2 + $0xb0] sm:$0xff] %v1844
        %1865 = vst [vmem:[#allocation2 + $0xf8] sm:$0xff] %v1845
        %1866 = vst [vmem:[#allocation2 + $0x140] sm:$0xff] %v1846
        %1867 = vst [vmem:[#allocation2 + $0x188] sm:$0xff] %v1847
        %1868 = vst [vmem:[#allocation2 + $0x1d0] sm:$0xff] %v1848
        %1869 = vst [vmem:[#allocation2 + $0x218] sm:$0xff] %v1849
        %1870 = vst [vmem:[#allocation2 + $0x260] sm:$0xff] %v1850
        %1871 = vst [vmem:[#allocation2 + $0x2a8] sm:$0xff] %v1851
        %v1872 = vld [vmem:[%s1411] sm:$0xe]
        %v1873 = vld [vmem:[%s1411 + $0x4] sm:$0xf]
        %v1874 = vld [vmem:[%s1411 + $0x8] sm:$0x1]
        %v1875 = vld [vmem:[%s1411 + $0xc] sm:$0xe]
        %v1876 = vld [vmem:[%s1411 + $0x10] sm:$0xf]
        %v1877 = vld [vmem:[%s1411 + $0x14] sm:$0x1]
        %v1878 = vld [vmem:[%s1411 + $0x18] sm:$0xe]
        %v1879 = vld [vmem:[%s1411 + $0x1c] sm:$0xf]
        %v1880 = vld [vmem:[%s1411 + $0x20] sm:$0x1]
        %v1881 = vld [vmem:[%s1411 + $0x24] sm:$0xe]
        %v1882 = vld [vmem:[%s1411 + $0x28] sm:$0xf]
        %v1883 = vld [vmem:[%s1411 + $0x2c] sm:$0x1]
        %v1884 = vld [vmem:[%s1411 + $0x30] sm:$0xe]
        %v1885 = vld [vmem:[%s1411 + $0x34] sm:$0xf]
        %v1886 = vld [vmem:[%s1411 + $0x38] sm:$0x1]
        %v1887 = vld [vmem:[%s1411 + $0x3c] sm:$0xe]
        %v1888 = vld [vmem:[%s1411 + $0x40] sm:$0xf]
        %v1889 = vld [vmem:[%s1411 + $0x44] sm:$0x1]
        %v1890 = vld [vmem:[%s1411 + $0x48] sm:$0xe]
        %v1891 = vld [vmem:[%s1411 + $0x4c] sm:$0xf]
        %v1892 = vld [vmem:[%s1411 + $0x50] sm:$0x1]
        %v1893 = vld [vmem:[%s1411 + $0x54] sm:$0xe]
        %v1894 = vld [vmem:[%s1411 + $0x58] sm:$0xf]
        %v1895 = vld [vmem:[%s1411 + $0x5c] sm:$0x1]
        %v1896 = vld [vmem:[%s1411 + $0x60] sm:$0xe]
        %v1897 = vld [vmem:[%s1411 + $0x64] sm:$0xf]
        %v1898 = vld [vmem:[%s1411 + $0x68] sm:$0x1]
        %v1899 = vld [vmem:[%s1411 + $0x6c] sm:$0xe]
        %v1900 = vld [vmem:[%s1411 + $0x70] sm:$0xf]
        %v1901 = vld [vmem:[%s1411 + $0x74] sm:$0x1]
        %v1902 = vmax.bf16 %v1872, 0
        %v1903 = vmax.bf16 %v1873, 0
        %v1904 = vmax.bf16 %v1874, 0
        %v1905 = vmax.bf16 %v1875, 0
        %v1906 = vmax.bf16 %v1876, 0
        %v1907 = vmax.bf16 %v1877, 0
        %v1908 = vmax.bf16 %v1878, 0
        %v1909 = vmax.bf16 %v1879, 0
        %v1910 = vmax.bf16 %v1880, 0
        %v1911 = vmax.bf16 %v1881, 0
        %v1912 = vmax.bf16 %v1882, 0
        %v1913 = vmax.bf16 %v1883, 0
        %v1914 = vmax.bf16 %v1884, 0
        %v1915 = vmax.bf16 %v1885, 0
        %v1916 = vmax.bf16 %v1886, 0
        %v1917 = vmax.bf16 %v1887, 0
        %v1918 = vmax.bf16 %v1888, 0
        %v1919 = vmax.bf16 %v1889, 0
        %v1920 = vmax.bf16 %v1890, 0
        %v1921 = vmax.bf16 %v1891, 0
        %v1922 = vmax.bf16 %v1892, 0
        %v1923 = vmax.bf16 %v1893, 0
        %v1924 = vmax.bf16 %v1894, 0
        %v1925 = vmax.bf16 %v1895, 0
        %v1926 = vmax.bf16 %v1896, 0
        %v1927 = vmax.bf16 %v1897, 0
        %v1928 = vmax.bf16 %v1898, 0
        %v1929 = vmax.bf16 %v1899, 0
        %v1930 = vmax.bf16 %v1900, 0
        %v1931 = vmax.bf16 %v1901, 0
        %v1962 = vrot.slane %v1902, 5
        %v1963 = vrot.slane %v1962, 4
        %v1964 = vrot.slane %v1903, 5
        %v1965 = vsel %vm1287, %v1963, %v1964
        %v1966 = vrot.slane %v1964, 4
        %v1967 = vrot.slane %v1904, 5
        %v1968 = vsel %vm1287, %v1966, %v1967
        %v1969 = vrot.slane %v1905, 5
        %v1970 = vrot.slane %v1969, 4
        %v1971 = vrot.slane %v1906, 5
        %v1972 = vsel %vm1287, %v1970, %v1971
        %v1973 = vrot.slane %v1971, 4
        %v1974 = vrot.slane %v1907, 5
        %v1975 = vsel %vm1287, %v1973, %v1974
        %v1976 = vrot.slane %v1908, 5
        %v1977 = vrot.slane %v1976, 4
        %v1978 = vrot.slane %v1909, 5
        %v1979 = vsel %vm1287, %v1977, %v1978
        %v1980 = vrot.slane %v1978, 4
        %v1981 = vrot.slane %v1910, 5
        %v1982 = vsel %vm1287, %v1980, %v1981
        %v1983 = vrot.slane %v1911, 5
        %v1984 = vrot.slane %v1983, 4
        %v1985 = vrot.slane %v1912, 5
        %v1986 = vsel %vm1287, %v1984, %v1985
        %v1987 = vrot.slane %v1985, 4
        %v1988 = vrot.slane %v1913, 5
        %v1989 = vsel %vm1287, %v1987, %v1988
        %v1990 = vrot.slane %v1914, 5
        %v1991 = vrot.slane %v1990, 4
        %v1992 = vrot.slane %v1915, 5
        %v1993 = vsel %vm1287, %v1991, %v1992
        %v1994 = vrot.slane %v1992, 4
        %v1995 = vrot.slane %v1916, 5
        %v1996 = vsel %vm1287, %v1994, %v1995
        %v1997 = vrot.slane %v1917, 5
        %v1998 = vrot.slane %v1997, 4
        %v1999 = vrot.slane %v1918, 5
        %v2000 = vsel %vm1287, %v1998, %v1999
        %v2001 = vrot.slane %v1999, 4
        %v2002 = vrot.slane %v1919, 5
        %v2003 = vsel %vm1287, %v2001, %v2002
        %v2004 = vrot.slane %v1920, 5
        %v2005 = vrot.slane %v2004, 4
        %v2006 = vrot.slane %v1921, 5
        %v2007 = vsel %vm1287, %v2005, %v2006
        %v2008 = vrot.slane %v2006, 4
        %v2009 = vrot.slane %v1922, 5
        %v2010 = vsel %vm1287, %v2008, %v2009
        %v2011 = vrot.slane %v1923, 5
        %v2012 = vrot.slane %v2011, 4
        %v2013 = vrot.slane %v1924, 5
        %v2014 = vsel %vm1287, %v2012, %v2013
        %v2015 = vrot.slane %v2013, 4
        %v2016 = vrot.slane %v1925, 5
        %v2017 = vsel %vm1287, %v2015, %v2016
        %v2018 = vrot.slane %v1926, 5
        %v2019 = vrot.slane %v2018, 4
        %v2020 = vrot.slane %v1927, 5
        %v2021 = vsel %vm1287, %v2019, %v2020
        %v2022 = vrot.slane %v2020, 4
        %v2023 = vrot.slane %v1928, 5
        %v2024 = vsel %vm1287, %v2022, %v2023
        %v2025 = vrot.slane %v1929, 5
        %v2026 = vrot.slane %v2025, 4
        %v2027 = vrot.slane %v1930, 5
        %v2028 = vsel %vm1287, %v2026, %v2027
        %v2029 = vrot.slane %v2027, 4
        %v2030 = vrot.slane %v1931, 5
        %v2031 = vsel %vm1287, %v2029, %v2030
        %v2032 = vunpack.c.l.b16 %v1965
        %v2033 = vunpack.c.l.b16 %v1968
        %v2034 = vunpack.c.l.b16 %v1972
        %v2035 = vunpack.c.l.b16 %v1975
        %v2036 = vunpack.c.l.b16 %v1979
        %v2037 = vunpack.c.l.b16 %v1982
        %v2038 = vunpack.c.l.b16 %v1986
        %v2039 = vunpack.c.l.b16 %v1989
        %v2040 = vunpack.c.l.b16 %v1993
        %v2041 = vunpack.c.l.b16 %v1996
        %v2042 = vunpack.c.l.b16 %v2000
        %v2043 = vunpack.c.l.b16 %v2003
        %v2044 = vunpack.c.l.b16 %v2007
        %v2045 = vunpack.c.l.b16 %v2010
        %v2046 = vunpack.c.l.b16 %v2014
        %v2047 = vunpack.c.l.b16 %v2017
        %v2048 = vunpack.c.l.b16 %v2021
        %v2049 = vunpack.c.l.b16 %v2024
        %v2050 = vunpack.c.l.b16 %v2028
        %v2051 = vunpack.c.l.b16 %v2031
        %v2052 = vpack.c.b16 %v2033, %v2032
        %v2053 = vpack.c.b16 %v2035, %v2034
        %v2054 = vpack.c.b16 %v2037, %v2036
        %v2055 = vpack.c.b16 %v2039, %v2038
        %v2056 = vpack.c.b16 %v2041, %v2040
        %v2057 = vpack.c.b16 %v2043, %v2042
        %v2058 = vpack.c.b16 %v2045, %v2044
        %v2059 = vpack.c.b16 %v2047, %v2046
        %v2060 = vpack.c.b16 %v2049, %v2048
        %v2061 = vpack.c.b16 %v2051, %v2050
        %2072 = vst [vmem:[#allocation2 + $0x28] sm:$0xff] %v2052
        %2073 = vst [vmem:[#allocation2 + $0x70] sm:$0xff] %v2053
        %2074 = vst [vmem:[#allocation2 + $0xb8] sm:$0xff] %v2054
        %2075 = vst [vmem:[#allocation2 + $0x100] sm:$0xff] %v2055
        %2076 = vst [vmem:[#allocation2 + $0x148] sm:$0xff] %v2056
        %2077 = vst [vmem:[#allocation2 + $0x190] sm:$0xff] %v2057
        %2078 = vst [vmem:[#allocation2 + $0x1d8] sm:$0xff] %v2058
        %2079 = vst [vmem:[#allocation2 + $0x220] sm:$0xff] %v2059
        %2080 = vst [vmem:[#allocation2 + $0x268] sm:$0xff] %v2060
        %2081 = vst [vmem:[#allocation2 + $0x2b0] sm:$0xff] %v2061
        %v2082 = vld [vmem:[%s312] sm:$0xf]
        %v2083 = vld [vmem:[%s312 + $0x4] sm:$0xf]
        %v2084 = vld [vmem:[%s312 + $0xc] sm:$0xf]
        %v2085 = vld [vmem:[%s312 + $0x10] sm:$0xf]
        %v2086 = vld [vmem:[%s312 + $0x18] sm:$0xf]
        %v2087 = vld [vmem:[%s312 + $0x1c] sm:$0xf]
        %v2088 = vld [vmem:[%s312 + $0x24] sm:$0xf]
        %v2089 = vld [vmem:[%s312 + $0x28] sm:$0xf]
        %v2090 = vld [vmem:[%s312 + $0x30] sm:$0xf]
        %v2091 = vld [vmem:[%s312 + $0x34] sm:$0xf]
        %v2092 = vld [vmem:[%s312 + $0x3c] sm:$0xf]
        %v2093 = vld [vmem:[%s312 + $0x40] sm:$0xf]
        %v2094 = vld [vmem:[%s312 + $0x48] sm:$0xf]
        %v2095 = vld [vmem:[%s312 + $0x4c] sm:$0xf]
        %v2096 = vld [vmem:[%s312 + $0x54] sm:$0xf]
        %v2097 = vld [vmem:[%s312 + $0x58] sm:$0xf]
        %v2098 = vld [vmem:[%s312 + $0x60] sm:$0xf]
        %v2099 = vld [vmem:[%s312 + $0x64] sm:$0xf]
        %v2100 = vld [vmem:[%s312 + $0x6c] sm:$0xf]
        %v2101 = vld [vmem:[%s312 + $0x70] sm:$0xf]
        %v2102 = vmax.bf16 %v2082, 0
        %v2103 = vmax.bf16 %v2083, 0
        %v2104 = vmax.bf16 %v2084, 0
        %v2105 = vmax.bf16 %v2085, 0
        %v2106 = vmax.bf16 %v2086, 0
        %v2107 = vmax.bf16 %v2087, 0
        %v2108 = vmax.bf16 %v2088, 0
        %v2109 = vmax.bf16 %v2089, 0
        %v2110 = vmax.bf16 %v2090, 0
        %v2111 = vmax.bf16 %v2091, 0
        %v2112 = vmax.bf16 %v2092, 0
        %v2113 = vmax.bf16 %v2093, 0
        %v2114 = vmax.bf16 %v2094, 0
        %v2115 = vmax.bf16 %v2095, 0
        %v2116 = vmax.bf16 %v2096, 0
        %v2117 = vmax.bf16 %v2097, 0
        %v2118 = vmax.bf16 %v2098, 0
        %v2119 = vmax.bf16 %v2099, 0
        %v2120 = vmax.bf16 %v2100, 0
        %v2121 = vmax.bf16 %v2101, 0
        %v2142 = vunpack.c.l.b16 %v2102
        %v2143 = vunpack.c.l.b16 %v2103
        %v2144 = vunpack.c.l.b16 %v2104
        %v2145 = vunpack.c.l.b16 %v2105
        %v2146 = vunpack.c.l.b16 %v2106
        %v2147 = vunpack.c.l.b16 %v2107
        %v2148 = vunpack.c.l.b16 %v2108
        %v2149 = vunpack.c.l.b16 %v2109
        %v2150 = vunpack.c.l.b16 %v2110
        %v2151 = vunpack.c.l.b16 %v2111
        %v2152 = vunpack.c.l.b16 %v2112
        %v2153 = vunpack.c.l.b16 %v2113
        %v2154 = vunpack.c.l.b16 %v2114
        %v2155 = vunpack.c.l.b16 %v2115
        %v2156 = vunpack.c.l.b16 %v2116
        %v2157 = vunpack.c.l.b16 %v2117
        %v2158 = vunpack.c.l.b16 %v2118
        %v2159 = vunpack.c.l.b16 %v2119
        %v2160 = vunpack.c.l.b16 %v2120
        %v2161 = vunpack.c.l.b16 %v2121
        %v2162 = vpack.c.b16 %v2143, %v2142
        %v2163 = vpack.c.b16 %v2145, %v2144
        %v2164 = vpack.c.b16 %v2147, %v2146
        %v2165 = vpack.c.b16 %v2149, %v2148
        %v2166 = vpack.c.b16 %v2151, %v2150
        %v2167 = vpack.c.b16 %v2153, %v2152
        %v2168 = vpack.c.b16 %v2155, %v2154
        %v2169 = vpack.c.b16 %v2157, %v2156
        %v2170 = vpack.c.b16 %v2159, %v2158
        %v2171 = vpack.c.b16 %v2161, %v2160
        %2182 = vst [vmem:[#allocation2 + $0x30] sm:$0xff] %v2162
        %2183 = vst [vmem:[#allocation2 + $0x78] sm:$0xff] %v2163
        %2184 = vst [vmem:[#allocation2 + $0xc0] sm:$0xff] %v2164
        %2185 = vst [vmem:[#allocation2 + $0x108] sm:$0xff] %v2165
        %2186 = vst [vmem:[#allocation2 + $0x150] sm:$0xff] %v2166
        %2187 = vst [vmem:[#allocation2 + $0x198] sm:$0xff] %v2167
        %2188 = vst [vmem:[#allocation2 + $0x1e0] sm:$0xff] %v2168
        %2189 = vst [vmem:[#allocation2 + $0x228] sm:$0xff] %v2169
        %2190 = vst [vmem:[#allocation2 + $0x270] sm:$0xff] %v2170
        %2191 = vst [vmem:[#allocation2 + $0x2b8] sm:$0xff] %v2171
        %v2192 = vld [vmem:[%s312] sm:$0xf]
        %v2193 = vld [vmem:[%s312 + $0x4] sm:$0xf]
        %v2194 = vld [vmem:[%s312 + $0x8] sm:$0x1]
        %v2195 = vld [vmem:[%s312 + $0xc] sm:$0xf]
        %v2196 = vld [vmem:[%s312 + $0x10] sm:$0xf]
        %v2197 = vld [vmem:[%s312 + $0x14] sm:$0x1]
        %v2198 = vld [vmem:[%s312 + $0x18] sm:$0xf]
        %v2199 = vld [vmem:[%s312 + $0x1c] sm:$0xf]
        %v2200 = vld [vmem:[%s312 + $0x20] sm:$0x1]
        %v2201 = vld [vmem:[%s312 + $0x24] sm:$0xf]
        %v2202 = vld [vmem:[%s312 + $0x28] sm:$0xf]
        %v2203 = vld [vmem:[%s312 + $0x2c] sm:$0x1]
        %v2204 = vld [vmem:[%s312 + $0x30] sm:$0xf]
        %v2205 = vld [vmem:[%s312 + $0x34] sm:$0xf]
        %v2206 = vld [vmem:[%s312 + $0x38] sm:$0x1]
        %v2207 = vld [vmem:[%s312 + $0x3c] sm:$0xf]
        %v2208 = vld [vmem:[%s312 + $0x40] sm:$0xf]
        %v2209 = vld [vmem:[%s312 + $0x44] sm:$0x1]
        %v2210 = vld [vmem:[%s312 + $0x48] sm:$0xf]
        %v2211 = vld [vmem:[%s312 + $0x4c] sm:$0xf]
        %v2212 = vld [vmem:[%s312 + $0x50] sm:$0x1]
        %v2213 = vld [vmem:[%s312 + $0x54] sm:$0xf]
        %v2214 = vld [vmem:[%s312 + $0x58] sm:$0xf]
        %v2215 = vld [vmem:[%s312 + $0x5c] sm:$0x1]
        %v2216 = vld [vmem:[%s312 + $0x60] sm:$0xf]
        %v2217 = vld [vmem:[%s312 + $0x64] sm:$0xf]
        %v2218 = vld [vmem:[%s312 + $0x68] sm:$0x1]
        %v2219 = vld [vmem:[%s312 + $0x6c] sm:$0xf]
        %v2220 = vld [vmem:[%s312 + $0x70] sm:$0xf]
        %v2221 = vld [vmem:[%s312 + $0x74] sm:$0x1]
        %v2222 = vmax.bf16 %v2192, 0
        %v2223 = vmax.bf16 %v2193, 0
        %v2224 = vmax.bf16 %v2194, 0
        %v2225 = vmax.bf16 %v2195, 0
        %v2226 = vmax.bf16 %v2196, 0
        %v2227 = vmax.bf16 %v2197, 0
        %v2228 = vmax.bf16 %v2198, 0
        %v2229 = vmax.bf16 %v2199, 0
        %v2230 = vmax.bf16 %v2200, 0
        %v2231 = vmax.bf16 %v2201, 0
        %v2232 = vmax.bf16 %v2202, 0
        %v2233 = vmax.bf16 %v2203, 0
        %v2234 = vmax.bf16 %v2204, 0
        %v2235 = vmax.bf16 %v2205, 0
        %v2236 = vmax.bf16 %v2206, 0
        %v2237 = vmax.bf16 %v2207, 0
        %v2238 = vmax.bf16 %v2208, 0
        %v2239 = vmax.bf16 %v2209, 0
        %v2240 = vmax.bf16 %v2210, 0
        %v2241 = vmax.bf16 %v2211, 0
        %v2242 = vmax.bf16 %v2212, 0
        %v2243 = vmax.bf16 %v2213, 0
        %v2244 = vmax.bf16 %v2214, 0
        %v2245 = vmax.bf16 %v2215, 0
        %v2246 = vmax.bf16 %v2216, 0
        %v2247 = vmax.bf16 %v2217, 0
        %v2248 = vmax.bf16 %v2218, 0
        %v2249 = vmax.bf16 %v2219, 0
        %v2250 = vmax.bf16 %v2220, 0
        %v2251 = vmax.bf16 %v2221, 0
        %v2253 = vshrl.u32 %v2222, 16
        %v2255 = vrot.slane %v2253, 4
        %v2256 = vshll.u32 %v2222, 16
        %v2258 = vrot.slane %v2256, 5
        %v2259 = vor.u32 %v2255, %v2258
        %v2260 = vrot.slane %v2259, 4
        %v2262 = vshll.u32 %v2223, 16
        %v2264 = vrot.slane %v2262, 5
        %v2265 = vsel %vm339, %v2260, %v2264
        %v2266 = vshrl.u32 %v2223, 16
        %v2268 = vrot.slane %v2266, 4
        %v2269 = vor.u32 %v2268, %v2264
        %v2270 = vrot.slane %v2269, 4
        %v2272 = vshll.u32 %v2224, 16
        %v2274 = vrot.slane %v2272, 5
        %v2275 = vsel %vm339, %v2270, %v2274
        %v2277 = vshrl.u32 %v2225, 16
        %v2279 = vrot.slane %v2277, 4
        %v2280 = vshll.u32 %v2225, 16
        %v2282 = vrot.slane %v2280, 5
        %v2283 = vor.u32 %v2279, %v2282
        %v2284 = vrot.slane %v2283, 4
        %v2286 = vshll.u32 %v2226, 16
        %v2288 = vrot.slane %v2286, 5
        %v2289 = vsel %vm339, %v2284, %v2288
        %v2290 = vshrl.u32 %v2226, 16
        %v2292 = vrot.slane %v2290, 4
        %v2293 = vor.u32 %v2292, %v2288
        %v2294 = vrot.slane %v2293, 4
        %v2296 = vshll.u32 %v2227, 16
        %v2298 = vrot.slane %v2296, 5
        %v2299 = vsel %vm339, %v2294, %v2298
        %v2301 = vshrl.u32 %v2228, 16
        %v2303 = vrot.slane %v2301, 4
        %v2304 = vshll.u32 %v2228, 16
        %v2306 = vrot.slane %v2304, 5
        %v2307 = vor.u32 %v2303, %v2306
        %v2308 = vrot.slane %v2307, 4
        %v2310 = vshll.u32 %v2229, 16
        %v2312 = vrot.slane %v2310, 5
        %v2313 = vsel %vm339, %v2308, %v2312
        %v2314 = vshrl.u32 %v2229, 16
        %v2316 = vrot.slane %v2314, 4
        %v2317 = vor.u32 %v2316, %v2312
        %v2318 = vrot.slane %v2317, 4
        %v2320 = vshll.u32 %v2230, 16
        %v2322 = vrot.slane %v2320, 5
        %v2323 = vsel %vm339, %v2318, %v2322
        %v2325 = vshrl.u32 %v2231, 16
        %v2327 = vrot.slane %v2325, 4
        %v2328 = vshll.u32 %v2231, 16
        %v2330 = vrot.slane %v2328, 5
        %v2331 = vor.u32 %v2327, %v2330
        %v2332 = vrot.slane %v2331, 4
        %v2334 = vshll.u32 %v2232, 16
        %v2336 = vrot.slane %v2334, 5
        %v2337 = vsel %vm339, %v2332, %v2336
        %v2338 = vshrl.u32 %v2232, 16
        %v2340 = vrot.slane %v2338, 4
        %v2341 = vor.u32 %v2340, %v2336
        %v2342 = vrot.slane %v2341, 4
        %v2344 = vshll.u32 %v2233, 16
        %v2346 = vrot.slane %v2344, 5
        %v2347 = vsel %vm339, %v2342, %v2346
        %v2349 = vshrl.u32 %v2234, 16
        %v2351 = vrot.slane %v2349, 4
        %v2352 = vshll.u32 %v2234, 16
        %v2354 = vrot.slane %v2352, 5
        %v2355 = vor.u32 %v2351, %v2354
        %v2356 = vrot.slane %v2355, 4
        %v2358 = vshll.u32 %v2235, 16
        %v2360 = vrot.slane %v2358, 5
        %v2361 = vsel %vm339, %v2356, %v2360
        %v2362 = vshrl.u32 %v2235, 16
        %v2364 = vrot.slane %v2362, 4
        %v2365 = vor.u32 %v2364, %v2360
        %v2366 = vrot.slane %v2365, 4
        %v2368 = vshll.u32 %v2236, 16
        %v2370 = vrot.slane %v2368, 5
        %v2371 = vsel %vm339, %v2366, %v2370
        %v2373 = vshrl.u32 %v2237, 16
        %v2375 = vrot.slane %v2373, 4
        %v2376 = vshll.u32 %v2237, 16
        %v2378 = vrot.slane %v2376, 5
        %v2379 = vor.u32 %v2375, %v2378
        %v2380 = vrot.slane %v2379, 4
        %v2382 = vshll.u32 %v2238, 16
        %v2384 = vrot.slane %v2382, 5
        %v2385 = vsel %vm339, %v2380, %v2384
        %v2386 = vshrl.u32 %v2238, 16
        %v2388 = vrot.slane %v2386, 4
        %v2389 = vor.u32 %v2388, %v2384
        %v2390 = vrot.slane %v2389, 4
        %v2392 = vshll.u32 %v2239, 16
        %v2394 = vrot.slane %v2392, 5
        %v2395 = vsel %vm339, %v2390, %v2394
        %v2397 = vshrl.u32 %v2240, 16
        %v2399 = vrot.slane %v2397, 4
        %v2400 = vshll.u32 %v2240, 16
        %v2402 = vrot.slane %v2400, 5
        %v2403 = vor.u32 %v2399, %v2402
        %v2404 = vrot.slane %v2403, 4
        %v2406 = vshll.u32 %v2241, 16
        %v2408 = vrot.slane %v2406, 5
        %v2409 = vsel %vm339, %v2404, %v2408
        %v2410 = vshrl.u32 %v2241, 16
        %v2412 = vrot.slane %v2410, 4
        %v2413 = vor.u32 %v2412, %v2408
        %v2414 = vrot.slane %v2413, 4
        %v2416 = vshll.u32 %v2242, 16
        %v2418 = vrot.slane %v2416, 5
        %v2419 = vsel %vm339, %v2414, %v2418
        %v2421 = vshrl.u32 %v2243, 16
        %v2423 = vrot.slane %v2421, 4
        %v2424 = vshll.u32 %v2243, 16
        %v2426 = vrot.slane %v2424, 5
        %v2427 = vor.u32 %v2423, %v2426
        %v2428 = vrot.slane %v2427, 4
        %v2430 = vshll.u32 %v2244, 16
        %v2432 = vrot.slane %v2430, 5
        %v2433 = vsel %vm339, %v2428, %v2432
        %v2434 = vshrl.u32 %v2244, 16
        %v2436 = vrot.slane %v2434, 4
        %v2437 = vor.u32 %v2436, %v2432
        %v2438 = vrot.slane %v2437, 4
        %v2440 = vshll.u32 %v2245, 16
        %v2442 = vrot.slane %v2440, 5
        %v2443 = vsel %vm339, %v2438, %v2442
        %v2445 = vshrl.u32 %v2246, 16
        %v2447 = vrot.slane %v2445, 4
        %v2448 = vshll.u32 %v2246, 16
        %v2450 = vrot.slane %v2448, 5
        %v2451 = vor.u32 %v2447, %v2450
        %v2452 = vrot.slane %v2451, 4
        %v2454 = vshll.u32 %v2247, 16
        %v2456 = vrot.slane %v2454, 5
        %v2457 = vsel %vm339, %v2452, %v2456
        %v2458 = vshrl.u32 %v2247, 16
        %v2460 = vrot.slane %v2458, 4
        %v2461 = vor.u32 %v2460, %v2456
        %v2462 = vrot.slane %v2461, 4
        %v2464 = vshll.u32 %v2248, 16
        %v2466 = vrot.slane %v2464, 5
        %v2467 = vsel %vm339, %v2462, %v2466
        %v2469 = vshrl.u32 %v2249, 16
        %v2471 = vrot.slane %v2469, 4
        %v2472 = vshll.u32 %v2249, 16
        %v2474 = vrot.slane %v2472, 5
        %v2475 = vor.u32 %v2471, %v2474
        %v2476 = vrot.slane %v2475, 4
        %v2478 = vshll.u32 %v2250, 16
        %v2480 = vrot.slane %v2478, 5
        %v2481 = vsel %vm339, %v2476, %v2480
        %v2482 = vshrl.u32 %v2250, 16
        %v2484 = vrot.slane %v2482, 4
        %v2485 = vor.u32 %v2484, %v2480
        %v2486 = vrot.slane %v2485, 4
        %v2488 = vshll.u32 %v2251, 16
        %v2490 = vrot.slane %v2488, 5
        %v2491 = vsel %vm339, %v2486, %v2490
        %v2492 = vunpack.c.l.b16 %v2265
        %v2493 = vunpack.c.l.b16 %v2275
        %v2494 = vunpack.c.l.b16 %v2289
        %v2495 = vunpack.c.l.b16 %v2299
        %v2496 = vunpack.c.l.b16 %v2313
        %v2497 = vunpack.c.l.b16 %v2323
        %v2498 = vunpack.c.l.b16 %v2337
        %v2499 = vunpack.c.l.b16 %v2347
        %v2500 = vunpack.c.l.b16 %v2361
        %v2501 = vunpack.c.l.b16 %v2371
        %v2502 = vunpack.c.l.b16 %v2385
        %v2503 = vunpack.c.l.b16 %v2395
        %v2504 = vunpack.c.l.b16 %v2409
        %v2505 = vunpack.c.l.b16 %v2419
        %v2506 = vunpack.c.l.b16 %v2433
        %v2507 = vunpack.c.l.b16 %v2443
        %v2508 = vunpack.c.l.b16 %v2457
        %v2509 = vunpack.c.l.b16 %v2467
        %v2510 = vunpack.c.l.b16 %v2481
        %v2511 = vunpack.c.l.b16 %v2491
        %v2512 = vpack.c.b16 %v2493, %v2492
        %v2513 = vpack.c.b16 %v2495, %v2494
        %v2514 = vpack.c.b16 %v2497, %v2496
        %v2515 = vpack.c.b16 %v2499, %v2498
        %v2516 = vpack.c.b16 %v2501, %v2500
        %v2517 = vpack.c.b16 %v2503, %v2502
        %v2518 = vpack.c.b16 %v2505, %v2504
        %v2519 = vpack.c.b16 %v2507, %v2506
        %v2520 = vpack.c.b16 %v2509, %v2508
        %v2521 = vpack.c.b16 %v2511, %v2510
        %2532 = vst [vmem:[#allocation2 + $0x38] sm:$0xff] %v2512
        %2533 = vst [vmem:[#allocation2 + $0x80] sm:$0xff] %v2513
        %2534 = vst [vmem:[#allocation2 + $0xc8] sm:$0xff] %v2514
        %2535 = vst [vmem:[#allocation2 + $0x110] sm:$0xff] %v2515
        %2536 = vst [vmem:[#allocation2 + $0x158] sm:$0xff] %v2516
        %2537 = vst [vmem:[#allocation2 + $0x1a0] sm:$0xff] %v2517
        %2538 = vst [vmem:[#allocation2 + $0x1e8] sm:$0xff] %v2518
        %2539 = vst [vmem:[#allocation2 + $0x230] sm:$0xff] %v2519
        %2540 = vst [vmem:[#allocation2 + $0x278] sm:$0xff] %v2520
        %2541 = vst [vmem:[#allocation2 + $0x2c0] sm:$0xff] %v2521
        %v2542 = vld [vmem:[%s312] sm:$0xe]
        %v2543 = vld [vmem:[%s312 + $0x4] sm:$0xf]
        %v2544 = vld [vmem:[%s312 + $0x8] sm:$0x1]
        %v2545 = vld [vmem:[%s312 + $0xc] sm:$0xe]
        %v2546 = vld [vmem:[%s312 + $0x10] sm:$0xf]
        %v2547 = vld [vmem:[%s312 + $0x14] sm:$0x1]
        %v2548 = vld [vmem:[%s312 + $0x18] sm:$0xe]
        %v2549 = vld [vmem:[%s312 + $0x1c] sm:$0xf]
        %v2550 = vld [vmem:[%s312 + $0x20] sm:$0x1]
        %v2551 = vld [vmem:[%s312 + $0x24] sm:$0xe]
        %v2552 = vld [vmem:[%s312 + $0x28] sm:$0xf]
        %v2553 = vld [vmem:[%s312 + $0x2c] sm:$0x1]
        %v2554 = vld [vmem:[%s312 + $0x30] sm:$0xe]
        %v2555 = vld [vmem:[%s312 + $0x34] sm:$0xf]
        %v2556 = vld [vmem:[%s312 + $0x38] sm:$0x1]
        %v2557 = vld [vmem:[%s312 + $0x3c] sm:$0xe]
        %v2558 = vld [vmem:[%s312 + $0x40] sm:$0xf]
        %v2559 = vld [vmem:[%s312 + $0x44] sm:$0x1]
        %v2560 = vld [vmem:[%s312 + $0x48] sm:$0xe]
        %v2561 = vld [vmem:[%s312 + $0x4c] sm:$0xf]
        %v2562 = vld [vmem:[%s312 + $0x50] sm:$0x1]
        %v2563 = vld [vmem:[%s312 + $0x54] sm:$0xe]
        %v2564 = vld [vmem:[%s312 + $0x58] sm:$0xf]
        %v2565 = vld [vmem:[%s312 + $0x5c] sm:$0x1]
        %v2566 = vld [vmem:[%s312 + $0x60] sm:$0xe]
        %v2567 = vld [vmem:[%s312 + $0x64] sm:$0xf]
        %v2568 = vld [vmem:[%s312 + $0x68] sm:$0x1]
        %v2569 = vld [vmem:[%s312 + $0x6c] sm:$0xe]
        %v2570 = vld [vmem:[%s312 + $0x70] sm:$0xf]
        %v2571 = vld [vmem:[%s312 + $0x74] sm:$0x1]
        %v2572 = vmax.bf16 %v2542, 0
        %v2573 = vmax.bf16 %v2543, 0
        %v2574 = vmax.bf16 %v2544, 0
        %v2575 = vmax.bf16 %v2545, 0
        %v2576 = vmax.bf16 %v2546, 0
        %v2577 = vmax.bf16 %v2547, 0
        %v2578 = vmax.bf16 %v2548, 0
        %v2579 = vmax.bf16 %v2549, 0
        %v2580 = vmax.bf16 %v2550, 0
        %v2581 = vmax.bf16 %v2551, 0
        %v2582 = vmax.bf16 %v2552, 0
        %v2583 = vmax.bf16 %v2553, 0
        %v2584 = vmax.bf16 %v2554, 0
        %v2585 = vmax.bf16 %v2555, 0
        %v2586 = vmax.bf16 %v2556, 0
        %v2587 = vmax.bf16 %v2557, 0
        %v2588 = vmax.bf16 %v2558, 0
        %v2589 = vmax.bf16 %v2559, 0
        %v2590 = vmax.bf16 %v2560, 0
        %v2591 = vmax.bf16 %v2561, 0
        %v2592 = vmax.bf16 %v2562, 0
        %v2593 = vmax.bf16 %v2563, 0
        %v2594 = vmax.bf16 %v2564, 0
        %v2595 = vmax.bf16 %v2565, 0
        %v2596 = vmax.bf16 %v2566, 0
        %v2597 = vmax.bf16 %v2567, 0
        %v2598 = vmax.bf16 %v2568, 0
        %v2599 = vmax.bf16 %v2569, 0
        %v2600 = vmax.bf16 %v2570, 0
        %v2601 = vmax.bf16 %v2571, 0
        %v2632 = vrot.slane %v2572, 5
        %v2633 = vrot.slane %v2632, 4
        %v2634 = vrot.slane %v2573, 5
        %v2635 = vsel %vm1287, %v2633, %v2634
        %v2636 = vrot.slane %v2634, 4
        %v2637 = vrot.slane %v2574, 5
        %v2638 = vsel %vm1287, %v2636, %v2637
        %v2639 = vrot.slane %v2575, 5
        %v2640 = vrot.slane %v2639, 4
        %v2641 = vrot.slane %v2576, 5
        %v2642 = vsel %vm1287, %v2640, %v2641
        %v2643 = vrot.slane %v2641, 4
        %v2644 = vrot.slane %v2577, 5
        %v2645 = vsel %vm1287, %v2643, %v2644
        %v2646 = vrot.slane %v2578, 5
        %v2647 = vrot.slane %v2646, 4
        %v2648 = vrot.slane %v2579, 5
        %v2649 = vsel %vm1287, %v2647, %v2648
        %v2650 = vrot.slane %v2648, 4
        %v2651 = vrot.slane %v2580, 5
        %v2652 = vsel %vm1287, %v2650, %v2651
        %v2653 = vrot.slane %v2581, 5
        %v2654 = vrot.slane %v2653, 4
        %v2655 = vrot.slane %v2582, 5
        %v2656 = vsel %vm1287, %v2654, %v2655
        %v2657 = vrot.slane %v2655, 4
        %v2658 = vrot.slane %v2583, 5
        %v2659 = vsel %vm1287, %v2657, %v2658
        %v2660 = vrot.slane %v2584, 5
        %v2661 = vrot.slane %v2660, 4
        %v2662 = vrot.slane %v2585, 5
        %v2663 = vsel %vm1287, %v2661, %v2662
        %v2664 = vrot.slane %v2662, 4
        %v2665 = vrot.slane %v2586, 5
        %v2666 = vsel %vm1287, %v2664, %v2665
        %v2667 = vrot.slane %v2587, 5
        %v2668 = vrot.slane %v2667, 4
        %v2669 = vrot.slane %v2588, 5
        %v2670 = vsel %vm1287, %v2668, %v2669
        %v2671 = vrot.slane %v2669, 4
        %v2672 = vrot.slane %v2589, 5
        %v2673 = vsel %vm1287, %v2671, %v2672
        %v2674 = vrot.slane %v2590, 5
        %v2675 = vrot.slane %v2674, 4
        %v2676 = vrot.slane %v2591, 5
        %v2677 = vsel %vm1287, %v2675, %v2676
        %v2678 = vrot.slane %v2676, 4
        %v2679 = vrot.slane %v2592, 5
        %v2680 = vsel %vm1287, %v2678, %v2679
        %v2681 = vrot.slane %v2593, 5
        %v2682 = vrot.slane %v2681, 4
        %v2683 = vrot.slane %v2594, 5
        %v2684 = vsel %vm1287, %v2682, %v2683
        %v2685 = vrot.slane %v2683, 4
        %v2686 = vrot.slane %v2595, 5
        %v2687 = vsel %vm1287, %v2685, %v2686
        %v2688 = vrot.slane %v2596, 5
        %v2689 = vrot.slane %v2688, 4
        %v2690 = vrot.slane %v2597, 5
        %v2691 = vsel %vm1287, %v2689, %v2690
        %v2692 = vrot.slane %v2690, 4
        %v2693 = vrot.slane %v2598, 5
        %v2694 = vsel %vm1287, %v2692, %v2693
        %v2695 = vrot.slane %v2599, 5
        %v2696 = vrot.slane %v2695, 4
        %v2697 = vrot.slane %v2600, 5
        %v2698 = vsel %vm1287, %v2696, %v2697
        %v2699 = vrot.slane %v2697, 4
        %v2700 = vrot.slane %v2601, 5
        %v2701 = vsel %vm1287, %v2699, %v2700
        %v2702 = vunpack.c.l.b16 %v2635
        %v2703 = vunpack.c.l.b16 %v2638
        %v2704 = vunpack.c.l.b16 %v2642
        %v2705 = vunpack.c.l.b16 %v2645
        %v2706 = vunpack.c.l.b16 %v2649
        %v2707 = vunpack.c.l.b16 %v2652
        %v2708 = vunpack.c.l.b16 %v2656
        %v2709 = vunpack.c.l.b16 %v2659
        %v2710 = vunpack.c.l.b16 %v2663
        %v2711 = vunpack.c.l.b16 %v2666
        %v2712 = vunpack.c.l.b16 %v2670
        %v2713 = vunpack.c.l.b16 %v2673
        %v2714 = vunpack.c.l.b16 %v2677
        %v2715 = vunpack.c.l.b16 %v2680
        %v2716 = vunpack.c.l.b16 %v2684
        %v2717 = vunpack.c.l.b16 %v2687
        %v2718 = vunpack.c.l.b16 %v2691
        %v2719 = vunpack.c.l.b16 %v2694
        %v2720 = vunpack.c.l.b16 %v2698
        %v2721 = vunpack.c.l.b16 %v2701
        %v2722 = vpack.c.b16 %v2703, %v2702
        %v2723 = vpack.c.b16 %v2705, %v2704
        %v2724 = vpack.c.b16 %v2707, %v2706
        %v2725 = vpack.c.b16 %v2709, %v2708
        %v2726 = vpack.c.b16 %v2711, %v2710
        %v2727 = vpack.c.b16 %v2713, %v2712
        %v2728 = vpack.c.b16 %v2715, %v2714
        %v2729 = vpack.c.b16 %v2717, %v2716
        %v2730 = vpack.c.b16 %v2719, %v2718
        %v2731 = vpack.c.b16 %v2721, %v2720
        %2742 = vst [vmem:[#allocation2 + $0x40] sm:$0xff] %v2722
        %2743 = vst [vmem:[#allocation2 + $0x88] sm:$0xff] %v2723
        %2744 = vst [vmem:[#allocation2 + $0xd0] sm:$0xff] %v2724
        %2745 = vst [vmem:[#allocation2 + $0x118] sm:$0xff] %v2725
        %2746 = vst [vmem:[#allocation2 + $0x160] sm:$0xff] %v2726
        %2747 = vst [vmem:[#allocation2 + $0x1a8] sm:$0xff] %v2727
        %2748 = vst [vmem:[#allocation2 + $0x1f0] sm:$0xff] %v2728
        %2749 = vst [vmem:[#allocation2 + $0x238] sm:$0xff] %v2729
        %2750 = vst [vmem:[#allocation2 + $0x280] sm:$0xff] %v2730
        %2751 = vst [vmem:[#allocation2 + $0x2c8] sm:$0xff] %v2731
        %v2752 = vld [vmem:[#allocation2] sm:$0xff]
        %v2753 = vld [vmem:[#allocation2 + $0x8] sm:$0xff]
        %v2754 = vld [vmem:[#allocation2 + $0x10] sm:$0xff]
        %v2755 = vld [vmem:[#allocation2 + $0x18] sm:$0xff]
        %v2756 = vld [vmem:[#allocation2 + $0x20] sm:$0xff]
        %v2757 = vld [vmem:[#allocation2 + $0x28] sm:$0xff]
        %v2758 = vld [vmem:[#allocation2 + $0x30] sm:$0xff]
        %v2759 = vld [vmem:[#allocation2 + $0x38] sm:$0xff]
        %v2760 = vld [vmem:[#allocation2 + $0x40] sm:$0xff]
        %v2761 = vld [vmem:[#allocation2 + $0x48] sm:$0xff]
        %v2762 = vld [vmem:[#allocation2 + $0x50] sm:$0xff]
        %v2763 = vld [vmem:[#allocation2 + $0x58] sm:$0xff]
        %v2764 = vld [vmem:[#allocation2 + $0x60] sm:$0xff]
        %v2765 = vld [vmem:[#allocation2 + $0x68] sm:$0xff]
        %v2766 = vld [vmem:[#allocation2 + $0x70] sm:$0xff]
        %v2767 = vld [vmem:[#allocation2 + $0x78] sm:$0xff]
        %v2768 = vld [vmem:[#allocation2 + $0x80] sm:$0xff]
        %v2769 = vld [vmem:[#allocation2 + $0x88] sm:$0xff]
        %v2770 = vld [vmem:[#allocation2 + $0x90] sm:$0xff]
        %v2771 = vld [vmem:[#allocation2 + $0x98] sm:$0xff]
        %v2772 = vld [vmem:[#allocation2 + $0xa0] sm:$0xff]
        %v2773 = vld [vmem:[#allocation2 + $0xa8] sm:$0xff]
        %v2774 = vld [vmem:[#allocation2 + $0xb0] sm:$0xff]
        %v2775 = vld [vmem:[#allocation2 + $0xb8] sm:$0xff]
        %v2776 = vld [vmem:[#allocation2 + $0xc0] sm:$0xff]
        %v2777 = vld [vmem:[#allocation2 + $0xc8] sm:$0xff]
        %v2778 = vld [vmem:[#allocation2 + $0xd0] sm:$0xff]
        %v2779 = vld [vmem:[#allocation2 + $0xd8] sm:$0xff]
        %v2780 = vld [vmem:[#allocation2 + $0xe0] sm:$0xff]
        %v2781 = vld [vmem:[#allocation2 + $0xe8] sm:$0xff]
        %v2782 = vld [vmem:[#allocation2 + $0xf0] sm:$0xff]
        %v2783 = vld [vmem:[#allocation2 + $0xf8] sm:$0xff]
        %v2784 = vld [vmem:[#allocation2 + $0x100] sm:$0xff]
        %v2785 = vld [vmem:[#allocation2 + $0x108] sm:$0xff]
        %v2786 = vld [vmem:[#allocation2 + $0x110] sm:$0xff]
        %v2787 = vld [vmem:[#allocation2 + $0x118] sm:$0xff]
        %v2788 = vld [vmem:[#allocation2 + $0x120] sm:$0xff]
        %v2789 = vld [vmem:[#allocation2 + $0x128] sm:$0xff]
        %v2790 = vld [vmem:[#allocation2 + $0x130] sm:$0xff]
        %v2791 = vld [vmem:[#allocation2 + $0x138] sm:$0xff]
        %v2792 = vld [vmem:[#allocation2 + $0x140] sm:$0xff]
        %v2793 = vld [vmem:[#allocation2 + $0x148] sm:$0xff]
        %v2794 = vld [vmem:[#allocation2 + $0x150] sm:$0xff]
        %v2795 = vld [vmem:[#allocation2 + $0x158] sm:$0xff]
        %v2796 = vld [vmem:[#allocation2 + $0x160] sm:$0xff]
        %v2797 = vld [vmem:[#allocation2 + $0x168] sm:$0xff]
        %v2798 = vld [vmem:[#allocation2 + $0x170] sm:$0xff]
        %v2799 = vld [vmem:[#allocation2 + $0x178] sm:$0xff]
        %v2800 = vld [vmem:[#allocation2 + $0x180] sm:$0xff]
        %v2801 = vld [vmem:[#allocation2 + $0x188] sm:$0xff]
        %v2802 = vld [vmem:[#allocation2 + $0x190] sm:$0xff]
        %v2803 = vld [vmem:[#allocation2 + $0x198] sm:$0xff]
        %v2804 = vld [vmem:[#allocation2 + $0x1a0] sm:$0xff]
        %v2805 = vld [vmem:[#allocation2 + $0x1a8] sm:$0xff]
        %v2806 = vld [vmem:[#allocation2 + $0x1b0] sm:$0xff]
        %v2807 = vld [vmem:[#allocation2 + $0x1b8] sm:$0xff]
        %v2808 = vld [vmem:[#allocation2 + $0x1c0] sm:$0xff]
        %v2809 = vld [vmem:[#allocation2 + $0x1c8] sm:$0xff]
        %v2810 = vld [vmem:[#allocation2 + $0x1d0] sm:$0xff]
        %v2811 = vld [vmem:[#allocation2 + $0x1d8] sm:$0xff]
        %v2812 = vld [vmem:[#allocation2 + $0x1e0] sm:$0xff]
        %v2813 = vld [vmem:[#allocation2 + $0x1e8] sm:$0xff]
        %v2814 = vld [vmem:[#allocation2 + $0x1f0] sm:$0xff]
        %v2815 = vld [vmem:[#allocation2 + $0x1f8] sm:$0xff]
        %v2816 = vld [vmem:[#allocation2 + $0x200] sm:$0xff]
        %v2817 = vld [vmem:[#allocation2 + $0x208] sm:$0xff]
        %v2818 = vld [vmem:[#allocation2 + $0x210] sm:$0xff]
        %v2819 = vld [vmem:[#allocation2 + $0x218] sm:$0xff]
        %v2820 = vld [vmem:[#allocation2 + $0x220] sm:$0xff]
        %v2821 = vld [vmem:[#allocation2 + $0x228] sm:$0xff]
        %v2822 = vld [vmem:[#allocation2 + $0x230] sm:$0xff]
        %v2823 = vld [vmem:[#allocation2 + $0x238] sm:$0xff]
        %v2824 = vld [vmem:[#allocation2 + $0x240] sm:$0xff]
        %v2825 = vld [vmem:[#allocation2 + $0x248] sm:$0xff]
        %v2826 = vld [vmem:[#allocation2 + $0x250] sm:$0xff]
        %v2827 = vld [vmem:[#allocation2 + $0x258] sm:$0xff]
        %v2828 = vld [vmem:[#allocation2 + $0x260] sm:$0xff]
        %v2829 = vld [vmem:[#allocation2 + $0x268] sm:$0xff]
        %v2830 = vld [vmem:[#allocation2 + $0x270] sm:$0xff]
        %v2831 = vld [vmem:[#allocation2 + $0x278] sm:$0xff]
        %v2832 = vld [vmem:[#allocation2 + $0x280] sm:$0xff]
        %v2833 = vld [vmem:[#allocation2 + $0x288] sm:$0xff]
        %v2834 = vld [vmem:[#allocation2 + $0x290] sm:$0xff]
        %v2835 = vld [vmem:[#allocation2 + $0x298] sm:$0xff]
        %v2836 = vld [vmem:[#allocation2 + $0x2a0] sm:$0xff]
        %v2837 = vld [vmem:[#allocation2 + $0x2a8] sm:$0xff]
        %v2838 = vld [vmem:[#allocation2 + $0x2b0] sm:$0xff]
        %v2839 = vld [vmem:[#allocation2 + $0x2b8] sm:$0xff]
        %v2840 = vld [vmem:[#allocation2 + $0x2c0] sm:$0xff]
        %v2841 = vld [vmem:[#allocation2 + $0x2c8] sm:$0xff]
        %v2842 = vld [vmem:[%s3] sm:$0xf]
        %v2843 = vld [vmem:[%s3 + $0x4] sm:$0xf]
        %v2844 = vld [vmem:[%s3 + $0x8] sm:$0xf]
        %v2845 = vld [vmem:[%s3 + $0xc] sm:$0xf]
        %v2846 = vld [vmem:[%s3 + $0x10] sm:$0xf]
        %v2847 = vld [vmem:[%s3 + $0x14] sm:$0xf]
        %v2848 = vld [vmem:[%s3 + $0x18] sm:$0xf]
        %v2849 = vld [vmem:[%s3 + $0x1c] sm:$0xf]
        %v2850 = vld [vmem:[%s3 + $0x20] sm:$0xf]
        %v2851 = vld [vmem:[%s3 + $0x24] sm:$0xf]
        %v2852 = vld [vmem:[%s3 + $0x28] sm:$0xf]
        %v2853 = vld [vmem:[%s3 + $0x2c] sm:$0xf]
        %v2854 = vld [vmem:[%s3 + $0x30] sm:$0xf]
        %v2855 = vld [vmem:[%s3 + $0x34] sm:$0xf]
        %v2856 = vld [vmem:[%s3 + $0x38] sm:$0xf]
        %v2857 = vld [vmem:[%s3 + $0x3c] sm:$0xf]
        %v2858 = vld [vmem:[%s3 + $0x40] sm:$0xf]
        %v2859 = vld [vmem:[%s3 + $0x44] sm:$0xf]
        %v2860 = vld [vmem:[%s3 + $0x48] sm:$0xf]
        %v2861 = vld [vmem:[%s3 + $0x4c] sm:$0xf]
        %v2862 = vld [vmem:[%s3 + $0x50] sm:$0xf]
        %v2863 = vld [vmem:[%s3 + $0x54] sm:$0xf]
        %v2864 = vld [vmem:[%s3 + $0x58] sm:$0xf]
        %v2865 = vld [vmem:[%s3 + $0x5c] sm:$0xf]
        %v2866 = vld [vmem:[%s3 + $0x60] sm:$0xf]
        %v2867 = vld [vmem:[%s3 + $0x64] sm:$0xf]
        %v2868 = vld [vmem:[%s3 + $0x68] sm:$0xf]
        %v2869 = vld [vmem:[%s3 + $0x6c] sm:$0xf]
        %v2870 = vld [vmem:[%s3 + $0x70] sm:$0xf]
        %v2871 = vld [vmem:[%s3 + $0x74] sm:$0xf]
        %v2872 = vld [vmem:[%s3 + $0x78] sm:$0xf]
        %v2873 = vld [vmem:[%s3 + $0x7c] sm:$0xf]
        %v2874 = vld [vmem:[%s3 + $0x80] sm:$0xf]
        %v2875 = vld [vmem:[%s3 + $0x84] sm:$0xf]
        %v2876 = vld [vmem:[%s3 + $0x88] sm:$0xf]
        %v2877 = vld [vmem:[%s3 + $0x8c] sm:$0xf]
        %v2878 = vld [vmem:[%s3 + $0x90] sm:$0xf]
        %v2879 = vld [vmem:[%s3 + $0x94] sm:$0xf]
        %v2880 = vld [vmem:[%s3 + $0x98] sm:$0xf]
        %v2881 = vld [vmem:[%s3 + $0x9c] sm:$0xf]
        %v2882 = vld [vmem:[%s3 + $0xa0] sm:$0xf]
        %v2883 = vld [vmem:[%s3 + $0xa4] sm:$0xf]
        %v2884 = vld [vmem:[%s3 + $0xa8] sm:$0xf]
        %v2885 = vld [vmem:[%s3 + $0xac] sm:$0xf]
        %v2886 = vld [vmem:[%s3 + $0xb0] sm:$0xf]
        %v2887 = vld [vmem:[%s3 + $0xb4] sm:$0xf]
        %v2888 = vld [vmem:[%s3 + $0xb8] sm:$0xf]
        %v2889 = vld [vmem:[%s3 + $0xbc] sm:$0xf]
        %v2890 = vld [vmem:[%s3 + $0xc0] sm:$0xf]
        %v2891 = vld [vmem:[%s3 + $0xc4] sm:$0xf]
        %v2892 = vld [vmem:[%s3 + $0xc8] sm:$0xf]
        %v2893 = vld [vmem:[%s3 + $0xcc] sm:$0xf]
        %v2894 = vld [vmem:[%s3 + $0xd0] sm:$0xf]
        %v2895 = vld [vmem:[%s3 + $0xd4] sm:$0xf]
        %v2896 = vld [vmem:[%s3 + $0xd8] sm:$0xf]
        %v2897 = vld [vmem:[%s3 + $0xdc] sm:$0xf]
        %v2898 = vld [vmem:[%s3 + $0xe0] sm:$0xf]
        %v2899 = vld [vmem:[%s3 + $0xe4] sm:$0xf]
        %v2900 = vld [vmem:[%s3 + $0xe8] sm:$0xf]
        %v2901 = vld [vmem:[%s3 + $0xec] sm:$0xf]
        %v2902 = vld [vmem:[%s3 + $0xf0] sm:$0xf]
        %v2903 = vld [vmem:[%s3 + $0xf4] sm:$0xf]
        %v2904 = vld [vmem:[%s3 + $0xf8] sm:$0xf]
        %v2905 = vld [vmem:[%s3 + $0xfc] sm:$0xf]
        %v2906 = vld [vmem:[%s3 + $0x100] sm:$0xf]
        %v2907 = vld [vmem:[%s3 + $0x104] sm:$0xf]
        %v2908 = vld [vmem:[%s3 + $0x108] sm:$0xf]
        %v2909 = vld [vmem:[%s3 + $0x10c] sm:$0xf]
        %v2910 = vld [vmem:[%s3 + $0x110] sm:$0xf]
        %v2911 = vld [vmem:[%s3 + $0x114] sm:$0xf]
        %v2912 = vld [vmem:[%s3 + $0x118] sm:$0xf]
        %v2913 = vld [vmem:[%s3 + $0x11c] sm:$0xf]
        %v2914 = vld [vmem:[%s3 + $0x120] sm:$0xf]
        %v2915 = vld [vmem:[%s3 + $0x124] sm:$0xf]
        %v2916 = vld [vmem:[%s3 + $0x128] sm:$0xf]
        %v2917 = vld [vmem:[%s3 + $0x12c] sm:$0xf]
        %v2918 = vld [vmem:[%s3 + $0x130] sm:$0xf]
        %v2919 = vld [vmem:[%s3 + $0x134] sm:$0xf]
        %v2920 = vld [vmem:[%s3 + $0x138] sm:$0xf]
        %v2921 = vld [vmem:[%s3 + $0x13c] sm:$0xf]
        %v2922 = vld [vmem:[%s3 + $0x140] sm:$0xf]
        %v2923 = vld [vmem:[%s3 + $0x144] sm:$0xf]
        %v2924 = vld [vmem:[%s3 + $0x148] sm:$0xf]
        %v2925 = vld [vmem:[%s3 + $0x14c] sm:$0xf]
        %v2926 = vld [vmem:[%s3 + $0x150] sm:$0xf]
        %v2927 = vld [vmem:[%s3 + $0x154] sm:$0xf]
        %v2928 = vld [vmem:[%s3 + $0x158] sm:$0xf]
        %v2929 = vld [vmem:[%s3 + $0x15c] sm:$0xf]
        %v2930 = vld [vmem:[%s3 + $0x160] sm:$0xf]
        %v2931 = vld [vmem:[%s3 + $0x164] sm:$0xf]
        %v2932 = vld [vmem:[%s3 + $0x168] sm:$0xf]
        %v2933 = vld [vmem:[%s3 + $0x16c] sm:$0xf]
        %v2934 = vld [vmem:[%s3 + $0x170] sm:$0xf]
        %v2935 = vld [vmem:[%s3 + $0x174] sm:$0xf]
        %v2936 = vld [vmem:[%s3 + $0x178] sm:$0xf]
        %v2937 = vld [vmem:[%s3 + $0x17c] sm:$0xf]
        %v2938 = vld [vmem:[%s3 + $0x180] sm:$0xf]
        %v2939 = vld [vmem:[%s3 + $0x184] sm:$0xf]
        %v2940 = vld [vmem:[%s3 + $0x188] sm:$0xf]
        %v2941 = vld [vmem:[%s3 + $0x18c] sm:$0xf]
        %v2942 = vld [vmem:[%s3 + $0x190] sm:$0xf]
        %v2943 = vld [vmem:[%s3 + $0x194] sm:$0xf]
        %v2944 = vld [vmem:[%s3 + $0x198] sm:$0xf]
        %v2945 = vld [vmem:[%s3 + $0x19c] sm:$0xf]
        %v2946 = vld [vmem:[%s3 + $0x1a0] sm:$0xf]
        %v2947 = vld [vmem:[%s3 + $0x1a4] sm:$0xf]
        %v2948 = vld [vmem:[%s3 + $0x1a8] sm:$0xf]
        %v2949 = vld [vmem:[%s3 + $0x1ac] sm:$0xf]
        %v2950 = vld [vmem:[%s3 + $0x1b0] sm:$0xf]
        %v2951 = vld [vmem:[%s3 + $0x1b4] sm:$0xf]
        %v2952 = vld [vmem:[%s3 + $0x1b8] sm:$0xf]
        %v2953 = vld [vmem:[%s3 + $0x1bc] sm:$0xf]
        %v2954 = vld [vmem:[%s3 + $0x1c0] sm:$0xf]
        %v2955 = vld [vmem:[%s3 + $0x1c4] sm:$0xf]
        %v2956 = vld [vmem:[%s3 + $0x1c8] sm:$0xf]
        %v2957 = vld [vmem:[%s3 + $0x1cc] sm:$0xf]
        %v2958 = vld [vmem:[%s3 + $0x1d0] sm:$0xf]
        %v2959 = vld [vmem:[%s3 + $0x1d4] sm:$0xf]
        %v2960 = vld [vmem:[%s3 + $0x1d8] sm:$0xf]
        %v2961 = vld [vmem:[%s3 + $0x1dc] sm:$0xf]
        %v2962 = vld [vmem:[%s3 + $0x1e0] sm:$0xf]
        %v2963 = vld [vmem:[%s3 + $0x1e4] sm:$0xf]
        %v2964 = vld [vmem:[%s3 + $0x1e8] sm:$0xf]
        %v2965 = vld [vmem:[%s3 + $0x1ec] sm:$0xf]
        %v2966 = vld [vmem:[%s3 + $0x1f0] sm:$0xf]
        %v2967 = vld [vmem:[%s3 + $0x1f4] sm:$0xf]
        %v2968 = vld [vmem:[%s3 + $0x1f8] sm:$0xf]
        %v2969 = vld [vmem:[%s3 + $0x1fc] sm:$0xf]
        %v2970 = vld [vmem:[%s3 + $0x200] sm:$0xf]
        %v2971 = vld [vmem:[%s3 + $0x204] sm:$0xf]
        %v2972 = vld [vmem:[%s3 + $0x208] sm:$0xf]
        %v2973 = vld [vmem:[%s3 + $0x20c] sm:$0xf]
        %v2974 = vld [vmem:[%s3 + $0x210] sm:$0xf]
        %v2975 = vld [vmem:[%s3 + $0x214] sm:$0xf]
        %v2976 = vld [vmem:[%s3 + $0x218] sm:$0xf]
        %v2977 = vld [vmem:[%s3 + $0x21c] sm:$0xf]
        %v2978 = vld [vmem:[%s3 + $0x220] sm:$0xf]
        %v2979 = vld [vmem:[%s3 + $0x224] sm:$0xf]
        %v2980 = vld [vmem:[%s3 + $0x228] sm:$0xf]
        %v2981 = vld [vmem:[%s3 + $0x22c] sm:$0xf]
        %v2982 = vld [vmem:[%s3 + $0x230] sm:$0xf]
        %v2983 = vld [vmem:[%s3 + $0x234] sm:$0xf]
        %v2984 = vld [vmem:[%s3 + $0x238] sm:$0xf]
        %v2985 = vld [vmem:[%s3 + $0x23c] sm:$0xf]
        %v2986 = vld [vmem:[%s4] sm:$0x1]
        %v2988 = vlaneseq
        %v2989 = vshrl.u32 %v2988, 7
        %v2990 = vsub.s32 0, %v2989
        %v2991 = vrot.slane %v2986, %v2990
        %v3137 = vunpack.c.l.b16 %v2842
        %v3138 = vunpack.c.l.b16 %v2843
        %v3139 = vunpack.c.l.b16 %v2844
        %v3140 = vunpack.c.l.b16 %v2845
        %v3141 = vunpack.c.l.b16 %v2846
        %v3142 = vunpack.c.l.b16 %v2847
        %v3143 = vunpack.c.l.b16 %v2848
        %v3144 = vunpack.c.l.b16 %v2849
        %v3145 = vunpack.c.l.b16 %v2850
        %v3146 = vunpack.c.l.b16 %v2851
        %v3147 = vunpack.c.l.b16 %v2852
        %v3148 = vunpack.c.l.b16 %v2853
        %v3149 = vunpack.c.l.b16 %v2854
        %v3150 = vunpack.c.l.b16 %v2855
        %v3151 = vunpack.c.l.b16 %v2856
        %v3152 = vunpack.c.l.b16 %v2857
        %v3153 = vunpack.c.l.b16 %v2858
        %v3154 = vunpack.c.l.b16 %v2859
        %v3155 = vunpack.c.l.b16 %v2860
        %v3156 = vunpack.c.l.b16 %v2861
        %v3157 = vunpack.c.l.b16 %v2862
        %v3158 = vunpack.c.l.b16 %v2863
        %v3159 = vunpack.c.l.b16 %v2864
        %v3160 = vunpack.c.l.b16 %v2865
        %v3161 = vunpack.c.l.b16 %v2866
        %v3162 = vunpack.c.l.b16 %v2867
        %v3163 = vunpack.c.l.b16 %v2868
        %v3164 = vunpack.c.l.b16 %v2869
        %v3165 = vunpack.c.l.b16 %v2870
        %v3166 = vunpack.c.l.b16 %v2871
        %v3167 = vunpack.c.l.b16 %v2872
        %v3168 = vunpack.c.l.b16 %v2873
        %v3169 = vunpack.c.l.b16 %v2874
        %v3170 = vunpack.c.l.b16 %v2875
        %v3171 = vunpack.c.l.b16 %v2876
        %v3172 = vunpack.c.l.b16 %v2877
        %v3173 = vunpack.c.l.b16 %v2878
        %v3174 = vunpack.c.l.b16 %v2879
        %v3175 = vunpack.c.l.b16 %v2880
        %v3176 = vunpack.c.l.b16 %v2881
        %v3177 = vunpack.c.l.b16 %v2882
        %v3178 = vunpack.c.l.b16 %v2883
        %v3179 = vunpack.c.l.b16 %v2884
        %v3180 = vunpack.c.l.b16 %v2885
        %v3181 = vunpack.c.l.b16 %v2886
        %v3182 = vunpack.c.l.b16 %v2887
        %v3183 = vunpack.c.l.b16 %v2888
        %v3184 = vunpack.c.l.b16 %v2889
        %v3185 = vunpack.c.l.b16 %v2890
        %v3186 = vunpack.c.l.b16 %v2891
        %v3187 = vunpack.c.l.b16 %v2892
        %v3188 = vunpack.c.l.b16 %v2893
        %v3189 = vunpack.c.l.b16 %v2894
        %v3190 = vunpack.c.l.b16 %v2895
        %v3191 = vunpack.c.l.b16 %v2896
        %v3192 = vunpack.c.l.b16 %v2897
        %v3193 = vunpack.c.l.b16 %v2898
        %v3194 = vunpack.c.l.b16 %v2899
        %v3195 = vunpack.c.l.b16 %v2900
        %v3196 = vunpack.c.l.b16 %v2901
        %v3197 = vunpack.c.l.b16 %v2902
        %v3198 = vunpack.c.l.b16 %v2903
        %v3199 = vunpack.c.l.b16 %v2904
        %v3200 = vunpack.c.l.b16 %v2905
        %v3201 = vunpack.c.l.b16 %v2906
        %v3202 = vunpack.c.l.b16 %v2907
        %v3203 = vunpack.c.l.b16 %v2908
        %v3204 = vunpack.c.l.b16 %v2909
        %v3205 = vunpack.c.l.b16 %v2910
        %v3206 = vunpack.c.l.b16 %v2911
        %v3207 = vunpack.c.l.b16 %v2912
        %v3208 = vunpack.c.l.b16 %v2913
        %v3209 = vunpack.c.l.b16 %v2914
        %v3210 = vunpack.c.l.b16 %v2915
        %v3211 = vunpack.c.l.b16 %v2916
        %v3212 = vunpack.c.l.b16 %v2917
        %v3213 = vunpack.c.l.b16 %v2918
        %v3214 = vunpack.c.l.b16 %v2919
        %v3215 = vunpack.c.l.b16 %v2920
        %v3216 = vunpack.c.l.b16 %v2921
        %v3217 = vunpack.c.l.b16 %v2922
        %v3218 = vunpack.c.l.b16 %v2923
        %v3219 = vunpack.c.l.b16 %v2924
        %v3220 = vunpack.c.l.b16 %v2925
        %v3221 = vunpack.c.l.b16 %v2926
        %v3222 = vunpack.c.l.b16 %v2927
        %v3223 = vunpack.c.l.b16 %v2928
        %v3224 = vunpack.c.l.b16 %v2929
        %v3225 = vunpack.c.l.b16 %v2930
        %v3226 = vunpack.c.l.b16 %v2931
        %v3227 = vunpack.c.l.b16 %v2932
        %v3228 = vunpack.c.l.b16 %v2933
        %v3229 = vunpack.c.l.b16 %v2934
        %v3230 = vunpack.c.l.b16 %v2935
        %v3231 = vunpack.c.l.b16 %v2936
        %v3232 = vunpack.c.l.b16 %v2937
        %v3233 = vunpack.c.l.b16 %v2938
        %v3234 = vunpack.c.l.b16 %v2939
        %v3235 = vunpack.c.l.b16 %v2940
        %v3236 = vunpack.c.l.b16 %v2941
        %v3237 = vunpack.c.l.b16 %v2942
        %v3238 = vunpack.c.l.b16 %v2943
        %v3239 = vunpack.c.l.b16 %v2944
        %v3240 = vunpack.c.l.b16 %v2945
        %v3241 = vunpack.c.l.b16 %v2946
        %v3242 = vunpack.c.l.b16 %v2947
        %v3243 = vunpack.c.l.b16 %v2948
        %v3244 = vunpack.c.l.b16 %v2949
        %v3245 = vunpack.c.l.b16 %v2950
        %v3246 = vunpack.c.l.b16 %v2951
        %v3247 = vunpack.c.l.b16 %v2952
        %v3248 = vunpack.c.l.b16 %v2953
        %v3249 = vunpack.c.l.b16 %v2954
        %v3250 = vunpack.c.l.b16 %v2955
        %v3251 = vunpack.c.l.b16 %v2956
        %v3252 = vunpack.c.l.b16 %v2957
        %v3253 = vunpack.c.l.b16 %v2958
        %v3254 = vunpack.c.l.b16 %v2959
        %v3255 = vunpack.c.l.b16 %v2960
        %v3256 = vunpack.c.l.b16 %v2961
        %v3257 = vunpack.c.l.b16 %v2962
        %v3258 = vunpack.c.l.b16 %v2963
        %v3259 = vunpack.c.l.b16 %v2964
        %v3260 = vunpack.c.l.b16 %v2965
        %v3261 = vunpack.c.l.b16 %v2966
        %v3262 = vunpack.c.l.b16 %v2967
        %v3263 = vunpack.c.l.b16 %v2968
        %v3264 = vunpack.c.l.b16 %v2969
        %v3265 = vunpack.c.l.b16 %v2970
        %v3266 = vunpack.c.l.b16 %v2971
        %v3267 = vunpack.c.l.b16 %v2972
        %v3268 = vunpack.c.l.b16 %v2973
        %v3269 = vunpack.c.l.b16 %v2974
        %v3270 = vunpack.c.l.b16 %v2975
        %v3271 = vunpack.c.l.b16 %v2976
        %v3272 = vunpack.c.l.b16 %v2977
        %v3273 = vunpack.c.l.b16 %v2978
        %v3274 = vunpack.c.l.b16 %v2979
        %v3275 = vunpack.c.l.b16 %v2980
        %v3276 = vunpack.c.l.b16 %v2981
        %v3277 = vunpack.c.l.b16 %v2982
        %v3278 = vunpack.c.l.b16 %v2983
        %v3279 = vunpack.c.l.b16 %v2984
        %v3280 = vunpack.c.l.b16 %v2985
        %v3281 = vpack.c.b16 %v3138, %v3137
        %v3282 = vpack.c.b16 %v3140, %v3139
        %v3283 = vpack.c.b16 %v3142, %v3141
        %v3284 = vpack.c.b16 %v3144, %v3143
        %v3285 = vpack.c.b16 %v3146, %v3145
        %v3286 = vpack.c.b16 %v3148, %v3147
        %v3287 = vpack.c.b16 %v3150, %v3149
        %v3288 = vpack.c.b16 %v3152, %v3151
        %v3289 = vpack.c.b16 %v3154, %v3153
        %v3290 = vpack.c.b16 %v3156, %v3155
        %v3291 = vpack.c.b16 %v3158, %v3157
        %v3292 = vpack.c.b16 %v3160, %v3159
        %v3293 = vpack.c.b16 %v3162, %v3161
        %v3294 = vpack.c.b16 %v3164, %v3163
        %v3295 = vpack.c.b16 %v3166, %v3165
        %v3296 = vpack.c.b16 %v3168, %v3167
        %v3297 = vpack.c.b16 %v3170, %v3169
        %v3298 = vpack.c.b16 %v3172, %v3171
        %v3299 = vpack.c.b16 %v3174, %v3173
        %v3300 = vpack.c.b16 %v3176, %v3175
        %v3301 = vpack.c.b16 %v3178, %v3177
        %v3302 = vpack.c.b16 %v3180, %v3179
        %v3303 = vpack.c.b16 %v3182, %v3181
        %v3304 = vpack.c.b16 %v3184, %v3183
        %v3305 = vpack.c.b16 %v3186, %v3185
        %v3306 = vpack.c.b16 %v3188, %v3187
        %v3307 = vpack.c.b16 %v3190, %v3189
        %v3308 = vpack.c.b16 %v3192, %v3191
        %v3309 = vpack.c.b16 %v3194, %v3193
        %v3310 = vpack.c.b16 %v3196, %v3195
        %v3311 = vpack.c.b16 %v3198, %v3197
        %v3312 = vpack.c.b16 %v3200, %v3199
        %v3313 = vpack.c.b16 %v3202, %v3201
        %v3314 = vpack.c.b16 %v3204, %v3203
        %v3315 = vpack.c.b16 %v3206, %v3205
        %v3316 = vpack.c.b16 %v3208, %v3207
        %v3317 = vpack.c.b16 %v3210, %v3209
        %v3318 = vpack.c.b16 %v3212, %v3211
        %v3319 = vpack.c.b16 %v3214, %v3213
        %v3320 = vpack.c.b16 %v3216, %v3215
        %v3321 = vpack.c.b16 %v3218, %v3217
        %v3322 = vpack.c.b16 %v3220, %v3219
        %v3323 = vpack.c.b16 %v3222, %v3221
        %v3324 = vpack.c.b16 %v3224, %v3223
        %v3325 = vpack.c.b16 %v3226, %v3225
        %v3326 = vpack.c.b16 %v3228, %v3227
        %v3327 = vpack.c.b16 %v3230, %v3229
        %v3328 = vpack.c.b16 %v3232, %v3231
        %v3329 = vpack.c.b16 %v3234, %v3233
        %v3330 = vpack.c.b16 %v3236, %v3235
        %v3331 = vpack.c.b16 %v3238, %v3237
        %v3332 = vpack.c.b16 %v3240, %v3239
        %v3333 = vpack.c.b16 %v3242, %v3241
        %v3334 = vpack.c.b16 %v3244, %v3243
        %v3335 = vpack.c.b16 %v3246, %v3245
        %v3336 = vpack.c.b16 %v3248, %v3247
        %v3337 = vpack.c.b16 %v3250, %v3249
        %v3338 = vpack.c.b16 %v3252, %v3251
        %v3339 = vpack.c.b16 %v3254, %v3253
        %v3340 = vpack.c.b16 %v3256, %v3255
        %v3341 = vpack.c.b16 %v3258, %v3257
        %v3342 = vpack.c.b16 %v3260, %v3259
        %v3343 = vpack.c.b16 %v3262, %v3261
        %v3344 = vpack.c.b16 %v3264, %v3263
        %v3345 = vpack.c.b16 %v3266, %v3265
        %v3346 = vpack.c.b16 %v3268, %v3267
        %v3347 = vpack.c.b16 %v3270, %v3269
        %v3348 = vpack.c.b16 %v3272, %v3271
        %v3349 = vpack.c.b16 %v3274, %v3273
        %v3350 = vpack.c.b16 %v3276, %v3275
        %v3351 = vpack.c.b16 %v3278, %v3277
        %v3352 = vpack.c.b16 %v3280, %v3279
        %3425 = vmatprep.subr.bf16.mxu0 0
        %3426 = vmatpush1.bf16.msra.mxu0 %v3281
        %3427 = vmatprep.subr.bf16.mxu0 0
        %3428 = vmatpush1.bf16.msra.mxu0 %v3282
        %3429 = vmatprep.subr.bf16.mxu0 0
        %3430 = vmatpush1.bf16.msra.mxu0 %v3283
        %3431 = vmatprep.subr.bf16.mxu0 0
        %3432 = vmatpush1.bf16.msra.mxu0 %v3284
        %3433 = vmatprep.subr.bf16.mxu0 0
        %3434 = vmatpush1.bf16.msra.mxu0 %v3285
        %3435 = vmatprep.subr.bf16.mxu0 0
        %3436 = vmatpush1.bf16.msra.mxu0 %v3286
        %3437 = vmatprep.subr.bf16.mxu0 0
        %3438 = vmatpush1.bf16.msra.mxu0 %v3287
        %3439 = vmatprep.subr.bf16.mxu0 0
        %3440 = vmatpush1.bf16.msra.mxu0 %v3288
        %3441 = vmatprep.subr.bf16.mxu0 0
        %3442 = vmatpush1.bf16.msra.mxu0 %v3289
        %3443 = vmatprep.subr.bf16.mxu0 0
        %3444 = vmatpush1.bf16.msra.mxu0 %v3290
        %3445 = vmatprep.subr.bf16.mxu0 0
        %3446 = vmatpush1.bf16.msra.mxu0 %v3291
        %3447 = vmatprep.subr.bf16.mxu0 0
        %3448 = vmatpush1.bf16.msra.mxu0 %v3292
        %3449 = vmatprep.subr.bf16.mxu0 0
        %3450 = vmatpush1.bf16.msra.mxu0 %v3293
        %3451 = vmatprep.subr.bf16.mxu0 0
        %3452 = vmatpush1.bf16.msra.mxu0 %v3294
        %3453 = vmatprep.subr.bf16.mxu0 0
        %3454 = vmatpush1.bf16.msra.mxu0 %v3295
        %3455 = vmatprep.subr.bf16.mxu0 0
        %3456 = vmatpush1.bf16.msra.mxu0 %v3296
        %3457 = vmatprep.mubr.bf16.mxu0 %v2753
        %3458 = vmatmul.mubr.bf16.gmra.mrb[0].mxu0 %v2752
        %v3459 = vpop.f32.mrb[0].mxu0
        %v3460 = vadd.f32 %v2991, %v3459
        %v3461 = vpop.f32.mrb[0].mxu0
        %v3462 = vpop.f32.mrb[0].mxu0
        %v3463 = vadd.f32 %v2991, %v3462
        %v3464 = vpop.f32.mrb[0].mxu0
        %3465 = vmatprep.mubr.bf16.mxu0 %v2762
        %3466 = vmatmul.mubr.bf16.gmra.mrb[0].mxu0 %v2761
        %v3467 = vpop.f32.mrb[0].mxu0
        %v3468 = vadd.f32 %v2991, %v3467
        %v3469 = vpop.f32.mrb[0].mxu0
        %v3470 = vpop.f32.mrb[0].mxu0
        %v3471 = vadd.f32 %v2991, %v3470
        %v3472 = vpop.f32.mrb[0].mxu0
        %3473 = vmatprep.mubr.bf16.mxu0 %v2771
        %3474 = vmatmul.mubr.bf16.gmra.mrb[0].mxu0 %v2770
        %v3475 = vpop.f32.mrb[0].mxu0
        %v3476 = vadd.f32 %v2991, %v3475
        %v3477 = vpop.f32.mrb[0].mxu0
        %v3478 = vpop.f32.mrb[0].mxu0
        %v3479 = vadd.f32 %v2991, %v3478
        %v3480 = vpop.f32.mrb[0].mxu0
        %3481 = vmatprep.mubr.bf16.mxu0 %v2780
        %3482 = vmatmul.mubr.bf16.gmra.mrb[0].mxu0 %v2779
        %v3483 = vpop.f32.mrb[0].mxu0
        %v3484 = vadd.f32 %v2991, %v3483
        %v3485 = vpop.f32.mrb[0].mxu0
        %v3486 = vpop.f32.mrb[0].mxu0
        %v3487 = vadd.f32 %v2991, %v3486
        %v3488 = vpop.f32.mrb[0].mxu0
        %3489 = vmatprep.mubr.bf16.mxu0 %v2789
        %3490 = vmatmul.mubr.bf16.gmra.mrb[0].mxu0 %v2788
        %v3491 = vpop.f32.mrb[0].mxu0
        %v3492 = vadd.f32 %v2991, %v3491
        %v3493 = vpop.f32.mrb[0].mxu0
        %v3494 = vpop.f32.mrb[0].mxu0
        %v3495 = vadd.f32 %v2991, %v3494
        %v3496 = vpop.f32.mrb[0].mxu0
        %3497 = vmatprep.mubr.bf16.mxu0 %v2798
        %3498 = vmatmul.mubr.bf16.gmra.mrb[0].mxu0 %v2797
        %v3499 = vpop.f32.mrb[0].mxu0
        %v3500 = vadd.f32 %v2991, %v3499
        %v3501 = vpop.f32.mrb[0].mxu0
        %v3502 = vpop.f32.mrb[0].mxu0
        %v3503 = vadd.f32 %v2991, %v3502
        %v3504 = vpop.f32.mrb[0].mxu0
        %3505 = vmatprep.mubr.bf16.mxu0 %v2807
        %3506 = vmatmul.mubr.bf16.gmra.mrb[0].mxu0 %v2806
        %v3507 = vpop.f32.mrb[0].mxu0
        %v3508 = vadd.f32 %v2991, %v3507
        %v3509 = vpop.f32.mrb[0].mxu0
        %v3510 = vpop.f32.mrb[0].mxu0
        %v3511 = vadd.f32 %v2991, %v3510
        %v3512 = vpop.f32.mrb[0].mxu0
        %3513 = vmatprep.mubr.bf16.mxu0 %v2816
        %3514 = vmatmul.mubr.bf16.gmra.mrb[0].mxu0 %v2815
        %v3515 = vpop.f32.mrb[0].mxu0
        %v3516 = vadd.f32 %v2991, %v3515
        %v3517 = vpop.f32.mrb[0].mxu0
        %v3518 = vpop.f32.mrb[0].mxu0
        %v3519 = vadd.f32 %v2991, %v3518
        %v3520 = vpop.f32.mrb[0].mxu0
        %3521 = vmatprep.mubr.bf16.mxu0 %v2825
        %3522 = vmatmul.mubr.bf16.gmra.mrb[0].mxu0 %v2824
        %v3523 = vpop.f32.mrb[0].mxu0
        %v3524 = vadd.f32 %v2991, %v3523
        %v3525 = vpop.f32.mrb[0].mxu0
        %v3526 = vpop.f32.mrb[0].mxu0
        %v3527 = vadd.f32 %v2991, %v3526
        %v3528 = vpop.f32.mrb[0].mxu0
        %3529 = vmatprep.mubr.bf16.mxu0 %v2834
        %3530 = vmatmul.mubr.bf16.gmra.mrb[0].mxu0 %v2833
        %v3531 = vpop.f32.mrb[0].mxu0
        %v3532 = vadd.f32 %v2991, %v3531
        %v3533 = vpop.f32.mrb[0].mxu0
        %v3534 = vpop.f32.mrb[0].mxu0
        %v3535 = vadd.f32 %v2991, %v3534
        %v3536 = vpop.f32.mrb[0].mxu0
        %3537 = vdwg.mxu0
        %3538 = vmatprep.subr.bf16.mxu0 0
        %3539 = vmatpush1.bf16.msra.mxu0 %v3297
        %3540 = vmatprep.subr.bf16.mxu0 0
        %3541 = vmatpush1.bf16.msra.mxu0 %v3298
        %3542 = vmatprep.subr.bf16.mxu0 0
        %3543 = vmatpush1.bf16.msra.mxu0 %v3299
        %3544 = vmatprep.subr.bf16.mxu0 0
        %3545 = vmatpush1.bf16.msra.mxu0 %v3300
        %3546 = vmatprep.subr.bf16.mxu0 0
        %3547 = vmatpush1.bf16.msra.mxu0 %v3301
        %3548 = vmatprep.subr.bf16.mxu0 0
        %3549 = vmatpush1.bf16.msra.mxu0 %v3302
        %3550 = vmatprep.subr.bf16.mxu0 0
        %3551 = vmatpush1.bf16.msra.mxu0 %v3303
        %3552 = vmatprep.subr.bf16.mxu0 0
        %3553 = vmatpush1.bf16.msra.mxu0 %v3304
        %3554 = vmatprep.subr.bf16.mxu0 0
        %3555 = vmatpush1.bf16.msra.mxu0 %v3305
        %3556 = vmatprep.subr.bf16.mxu0 0
        %3557 = vmatpush1.bf16.msra.mxu0 %v3306
        %3558 = vmatprep.subr.bf16.mxu0 0
        %3559 = vmatpush1.bf16.msra.mxu0 %v3307
        %3560 = vmatprep.subr.bf16.mxu0 0
        %3561 = vmatpush1.bf16.msra.mxu0 %v3308
        %3562 = vmatprep.subr.bf16.mxu0 0
        %3563 = vmatpush1.bf16.msra.mxu0 %v3309
        %3564 = vmatprep.subr.bf16.mxu0 0
        %3565 = vmatpush1.bf16.msra.mxu0 %v3310
        %3566 = vmatprep.subr.bf16.mxu0 0
        %3567 = vmatpush1.bf16.msra.mxu0 %v3311
        %3568 = vmatprep.subr.bf16.mxu0 0
        %3569 = vmatpush1.bf16.msra.mxu0 %v3312
        %3570 = vmatprep.mubr.bf16.mxu0 %v2755
        %3571 = vmatmul.mubr.bf16.gmra.mrb[0].mxu0 %v2754
        %v3572 = vpop.f32.mrb[0].mxu0
        %v3573 = vadd.f32 %v3460, %v3572
        %v3574 = vpop.f32.mrb[0].mxu0
        %v3575 = vpop.f32.mrb[0].mxu0
        %v3576 = vadd.f32 %v3463, %v3575
        %v3577 = vpop.f32.mrb[0].mxu0
        %3578 = vmatprep.mubr.bf16.mxu0 %v2764
        %3579 = vmatmul.mubr.bf16.gmra.mrb[0].mxu0 %v2763
        %v3580 = vpop.f32.mrb[0].mxu0
        %v3581 = vadd.f32 %v3468, %v3580
        %v3582 = vpop.f32.mrb[0].mxu0
        %v3583 = vpop.f32.mrb[0].mxu0
        %v3584 = vadd.f32 %v3471, %v3583
        %v3585 = vpop.f32.mrb[0].mxu0
        %3586 = vmatprep.mubr.bf16.mxu0 %v2773
        %3587 = vmatmul.mubr.bf16.gmra.mrb[0].mxu0 %v2772
        %v3588 = vpop.f32.mrb[0].mxu0
        %v3589 = vadd.f32 %v3476, %v3588
        %v3590 = vpop.f32.mrb[0].mxu0
        %v3591 = vpop.f32.mrb[0].mxu0
        %v3592 = vadd.f32 %v3479, %v3591
        %v3593 = vpop.f32.mrb[0].mxu0
        %3594 = vmatprep.mubr.bf16.mxu0 %v2782
        %3595 = vmatmul.mubr.bf16.gmra.mrb[0].mxu0 %v2781
        %v3596 = vpop.f32.mrb[0].mxu0
        %v3597 = vadd.f32 %v3484, %v3596
        %v3598 = vpop.f32.mrb[0].mxu0
        %v3599 = vpop.f32.mrb[0].mxu0
        %v3600 = vadd.f32 %v3487, %v3599
        %v3601 = vpop.f32.mrb[0].mxu0
        %3602 = vmatprep.mubr.bf16.mxu0 %v2791
        %3603 = vmatmul.mubr.bf16.gmra.mrb[0].mxu0 %v2790
        %v3604 = vpop.f32.mrb[0].mxu0
        %v3605 = vadd.f32 %v3492, %v3604
        %v3606 = vpop.f32.mrb[0].mxu0
        %v3607 = vpop.f32.mrb[0].mxu0
        %v3608 = vadd.f32 %v3495, %v3607
        %v3609 = vpop.f32.mrb[0].mxu0
        %3610 = vmatprep.mubr.bf16.mxu0 %v2800
        %3611 = vmatmul.mubr.bf16.gmra.mrb[0].mxu0 %v2799
        %v3612 = vpop.f32.mrb[0].mxu0
        %v3613 = vadd.f32 %v3500, %v3612
        %v3614 = vpop.f32.mrb[0].mxu0
        %v3615 = vpop.f32.mrb[0].mxu0
        %v3616 = vadd.f32 %v3503, %v3615
        %v3617 = vpop.f32.mrb[0].mxu0
        %3618 = vmatprep.mubr.bf16.mxu0 %v2809
        %3619 = vmatmul.mubr.bf16.gmra.mrb[0].mxu0 %v2808
        %v3620 = vpop.f32.mrb[0].mxu0
        %v3621 = vadd.f32 %v3508, %v3620
        %v3622 = vpop.f32.mrb[0].mxu0
        %v3623 = vpop.f32.mrb[0].mxu0
        %v3624 = vadd.f32 %v3511, %v3623
        %v3625 = vpop.f32.mrb[0].mxu0
        %3626 = vmatprep.mubr.bf16.mxu0 %v2818
        %3627 = vmatmul.mubr.bf16.gmra.mrb[0].mxu0 %v2817
        %v3628 = vpop.f32.mrb[0].mxu0
        %v3629 = vadd.f32 %v3516, %v3628
        %v3630 = vpop.f32.mrb[0].mxu0
        %v3631 = vpop.f32.mrb[0].mxu0
        %v3632 = vadd.f32 %v3519, %v3631
        %v3633 = vpop.f32.mrb[0].mxu0
        %3634 = vmatprep.mubr.bf16.mxu0 %v2827
        %3635 = vmatmul.mubr.bf16.gmra.mrb[0].mxu0 %v2826
        %v3636 = vpop.f32.mrb[0].mxu0
        %v3637 = vadd.f32 %v3524, %v3636
        %v3638 = vpop.f32.mrb[0].mxu0
        %v3639 = vpop.f32.mrb[0].mxu0
        %v3640 = vadd.f32 %v3527, %v3639
        %v3641 = vpop.f32.mrb[0].mxu0
        %3642 = vmatprep.mubr.bf16.mxu0 %v2836
        %3643 = vmatmul.mubr.bf16.gmra.mrb[0].mxu0 %v2835
        %v3644 = vpop.f32.mrb[0].mxu0
        %v3645 = vadd.f32 %v3532, %v3644
        %v3646 = vpop.f32.mrb[0].mxu0
        %v3647 = vpop.f32.mrb[0].mxu0
        %v3648 = vadd.f32 %v3535, %v3647
        %v3649 = vpop.f32.mrb[0].mxu0
        %3650 = vdwg.mxu0
        %3651 = vmatprep.subr.bf16.mxu0 0
        %3652 = vmatpush1.bf16.msra.mxu0 %v3313
        %3653 = vmatprep.subr.bf16.mxu0 0
        %3654 = vmatpush1.bf16.msra.mxu0 %v3314
        %3655 = vmatprep.subr.bf16.mxu0 0
        %3656 = vmatpush1.bf16.msra.mxu0 %v3315
        %3657 = vmatprep.subr.bf16.mxu0 0
        %3658 = vmatpush1.bf16.msra.mxu0 %v3316
        %3659 = vmatprep.subr.bf16.mxu0 0
        %3660 = vmatpush1.bf16.msra.mxu0 %v3317
        %3661 = vmatprep.subr.bf16.mxu0 0
        %3662 = vmatpush1.bf16.msra.mxu0 %v3318
        %3663 = vmatprep.subr.bf16.mxu0 0
        %3664 = vmatpush1.bf16.msra.mxu0 %v3319
        %3665 = vmatprep.subr.bf16.mxu0 0
        %3666 = vmatpush1.bf16.msra.mxu0 %v3320
        %3667 = vmatprep.subr.bf16.mxu0 0
        %3668 = vmatpush1.bf16.msra.mxu0 %v3321
        %3669 = vmatprep.subr.bf16.mxu0 0
        %3670 = vmatpush1.bf16.msra.mxu0 %v3322
        %3671 = vmatprep.subr.bf16.mxu0 0
        %3672 = vmatpush1.bf16.msra.mxu0 %v3323
        %3673 = vmatprep.subr.bf16.mxu0 0
        %3674 = vmatpush1.bf16.msra.mxu0 %v3324
        %3675 = vmatprep.subr.bf16.mxu0 0
        %3676 = vmatpush1.bf16.msra.mxu0 %v3325
        %3677 = vmatprep.subr.bf16.mxu0 0
        %3678 = vmatpush1.bf16.msra.mxu0 %v3326
        %3679 = vmatprep.subr.bf16.mxu0 0
        %3680 = vmatpush1.bf16.msra.mxu0 %v3327
        %3681 = vmatprep.subr.bf16.mxu0 0
        %3682 = vmatpush1.bf16.msra.mxu0 %v3328
        %3683 = vmatprep.mubr.bf16.mxu0 %v2757
        %3684 = vmatmul.mubr.bf16.gmra.mrb[0].mxu0 %v2756
        %v3685 = vpop.f32.mrb[0].mxu0
        %v3686 = vadd.f32 %v3573, %v3685
        %v3687 = vpop.f32.mrb[0].mxu0
        %v3688 = vpop.f32.mrb[0].mxu0
        %v3689 = vadd.f32 %v3576, %v3688
        %v3690 = vpop.f32.mrb[0].mxu0
        %3691 = vmatprep.mubr.bf16.mxu0 %v2766
        %3692 = vmatmul.mubr.bf16.gmra.mrb[0].mxu0 %v2765
        %v3693 = vpop.f32.mrb[0].mxu0
        %v3694 = vadd.f32 %v3581, %v3693
        %v3695 = vpop.f32.mrb[0].mxu0
        %v3696 = vpop.f32.mrb[0].mxu0
        %v3697 = vadd.f32 %v3584, %v3696
        %v3698 = vpop.f32.mrb[0].mxu0
        %3699 = vmatprep.mubr.bf16.mxu0 %v2775
        %3700 = vmatmul.mubr.bf16.gmra.mrb[0].mxu0 %v2774
        %v3701 = vpop.f32.mrb[0].mxu0
        %v3702 = vadd.f32 %v3589, %v3701
        %v3703 = vpop.f32.mrb[0].mxu0
        %v3704 = vpop.f32.mrb[0].mxu0
        %v3705 = vadd.f32 %v3592, %v3704
        %v3706 = vpop.f32.mrb[0].mxu0
        %3707 = vmatprep.mubr.bf16.mxu0 %v2784
        %3708 = vmatmul.mubr.bf16.gmra.mrb[0].mxu0 %v2783
        %v3709 = vpop.f32.mrb[0].mxu0
        %v3710 = vadd.f32 %v3597, %v3709
        %v3711 = vpop.f32.mrb[0].mxu0
        %v3712 = vpop.f32.mrb[0].mxu0
        %v3713 = vadd.f32 %v3600, %v3712
        %v3714 = vpop.f32.mrb[0].mxu0
        %3715 = vmatprep.mubr.bf16.mxu0 %v2793
        %3716 = vmatmul.mubr.bf16.gmra.mrb[0].mxu0 %v2792
        %v3717 = vpop.f32.mrb[0].mxu0
        %v3718 = vadd.f32 %v3605, %v3717
        %v3719 = vpop.f32.mrb[0].mxu0
        %v3720 = vpop.f32.mrb[0].mxu0
        %v3721 = vadd.f32 %v3608, %v3720
        %v3722 = vpop.f32.mrb[0].mxu0
        %3723 = vmatprep.mubr.bf16.mxu0 %v2802
        %3724 = vmatmul.mubr.bf16.gmra.mrb[0].mxu0 %v2801
        %v3725 = vpop.f32.mrb[0].mxu0
        %v3726 = vadd.f32 %v3613, %v3725
        %v3727 = vpop.f32.mrb[0].mxu0
        %v3728 = vpop.f32.mrb[0].mxu0
        %v3729 = vadd.f32 %v3616, %v3728
        %v3730 = vpop.f32.mrb[0].mxu0
        %3731 = vmatprep.mubr.bf16.mxu0 %v2811
        %3732 = vmatmul.mubr.bf16.gmra.mrb[0].mxu0 %v2810
        %v3733 = vpop.f32.mrb[0].mxu0
        %v3734 = vadd.f32 %v3621, %v3733
        %v3735 = vpop.f32.mrb[0].mxu0
        %v3736 = vpop.f32.mrb[0].mxu0
        %v3737 = vadd.f32 %v3624, %v3736
        %v3738 = vpop.f32.mrb[0].mxu0
        %3739 = vmatprep.mubr.bf16.mxu0 %v2820
        %3740 = vmatmul.mubr.bf16.gmra.mrb[0].mxu0 %v2819
        %v3741 = vpop.f32.mrb[0].mxu0
        %v3742 = vadd.f32 %v3629, %v3741
        %v3743 = vpop.f32.mrb[0].mxu0
        %v3744 = vpop.f32.mrb[0].mxu0
        %v3745 = vadd.f32 %v3632, %v3744
        %v3746 = vpop.f32.mrb[0].mxu0
        %3747 = vmatprep.mubr.bf16.mxu0 %v2829
        %3748 = vmatmul.mubr.bf16.gmra.mrb[0].mxu0 %v2828
        %v3749 = vpop.f32.mrb[0].mxu0
        %v3750 = vadd.f32 %v3637, %v3749
        %v3751 = vpop.f32.mrb[0].mxu0
        %v3752 = vpop.f32.mrb[0].mxu0
        %v3753 = vadd.f32 %v3640, %v3752
        %v3754 = vpop.f32.mrb[0].mxu0
        %3755 = vmatprep.mubr.bf16.mxu0 %v2838
        %3756 = vmatmul.mubr.bf16.gmra.mrb[0].mxu0 %v2837
        %v3757 = vpop.f32.mrb[0].mxu0
        %v3758 = vadd.f32 %v3645, %v3757
        %v3759 = vpop.f32.mrb[0].mxu0
        %v3760 = vpop.f32.mrb[0].mxu0
        %v3761 = vadd.f32 %v3648, %v3760
        %v3762 = vpop.f32.mrb[0].mxu0
        %3763 = vdwg.mxu0
        %3764 = vmatprep.subr.bf16.mxu0 0
        %3765 = vmatpush1.bf16.msra.mxu0 %v3329
        %3766 = vmatprep.subr.bf16.mxu0 0
        %3767 = vmatpush1.bf16.msra.mxu0 %v3330
        %3768 = vmatprep.subr.bf16.mxu0 0
        %3769 = vmatpush1.bf16.msra.mxu0 %v3331
        %3770 = vmatprep.subr.bf16.mxu0 0
        %3771 = vmatpush1.bf16.msra.mxu0 %v3332
        %3772 = vmatprep.subr.bf16.mxu0 0
        %3773 = vmatpush1.bf16.msra.mxu0 %v3333
        %3774 = vmatprep.subr.bf16.mxu0 0
        %3775 = vmatpush1.bf16.msra.mxu0 %v3334
        %3776 = vmatprep.subr.bf16.mxu0 0
        %3777 = vmatpush1.bf16.msra.mxu0 %v3335
        %3778 = vmatprep.subr.bf16.mxu0 0
        %3779 = vmatpush1.bf16.msra.mxu0 %v3336
        %3780 = vmatprep.subr.bf16.mxu0 0
        %3781 = vmatpush1.bf16.msra.mxu0 %v3337
        %3782 = vmatprep.subr.bf16.mxu0 0
        %3783 = vmatpush1.bf16.msra.mxu0 %v3338
        %3784 = vmatprep.subr.bf16.mxu0 0
        %3785 = vmatpush1.bf16.msra.mxu0 %v3339
        %3786 = vmatprep.subr.bf16.mxu0 0
        %3787 = vmatpush1.bf16.msra.mxu0 %v3340
        %3788 = vmatprep.subr.bf16.mxu0 0
        %3789 = vmatpush1.bf16.msra.mxu0 %v3341
        %3790 = vmatprep.subr.bf16.mxu0 0
        %3791 = vmatpush1.bf16.msra.mxu0 %v3342
        %3792 = vmatprep.subr.bf16.mxu0 0
        %3793 = vmatpush1.bf16.msra.mxu0 %v3343
        %3794 = vmatprep.subr.bf16.mxu0 0
        %3795 = vmatpush1.bf16.msra.mxu0 %v3344
        %3796 = vmatprep.mubr.bf16.mxu0 %v2759
        %3797 = vmatmul.mubr.bf16.gmra.mrb[0].mxu0 %v2758
        %v3798 = vpop.f32.mrb[0].mxu0
        %v3799 = vadd.f32 %v3686, %v3798
        %v3800 = vpop.f32.mrb[0].mxu0
        %v3801 = vpop.f32.mrb[0].mxu0
        %v3802 = vadd.f32 %v3689, %v3801
        %v3803 = vpop.f32.mrb[0].mxu0
        %3804 = vmatprep.mubr.bf16.mxu0 %v2768
        %3805 = vmatmul.mubr.bf16.gmra.mrb[0].mxu0 %v2767
        %v3806 = vpop.f32.mrb[0].mxu0
        %v3807 = vadd.f32 %v3694, %v3806
        %v3808 = vpop.f32.mrb[0].mxu0
        %v3809 = vpop.f32.mrb[0].mxu0
        %v3810 = vadd.f32 %v3697, %v3809
        %v3811 = vpop.f32.mrb[0].mxu0
        %3812 = vmatprep.mubr.bf16.mxu0 %v2777
        %3813 = vmatmul.mubr.bf16.gmra.mrb[0].mxu0 %v2776
        %v3814 = vpop.f32.mrb[0].mxu0
        %v3815 = vadd.f32 %v3702, %v3814
        %v3816 = vpop.f32.mrb[0].mxu0
        %v3817 = vpop.f32.mrb[0].mxu0
        %v3818 = vadd.f32 %v3705, %v3817
        %v3819 = vpop.f32.mrb[0].mxu0
        %3820 = vmatprep.mubr.bf16.mxu0 %v2786
        %3821 = vmatmul.mubr.bf16.gmra.mrb[0].mxu0 %v2785
        %v3822 = vpop.f32.mrb[0].mxu0
        %v3823 = vadd.f32 %v3710, %v3822
        %v3824 = vpop.f32.mrb[0].mxu0
        %v3825 = vpop.f32.mrb[0].mxu0
        %v3826 = vadd.f32 %v3713, %v3825
        %v3827 = vpop.f32.mrb[0].mxu0
        %3828 = vmatprep.mubr.bf16.mxu0 %v2795
        %3829 = vmatmul.mubr.bf16.gmra.mrb[0].mxu0 %v2794
        %v3830 = vpop.f32.mrb[0].mxu0
        %v3831 = vadd.f32 %v3718, %v3830
        %v3832 = vpop.f32.mrb[0].mxu0
        %v3833 = vpop.f32.mrb[0].mxu0
        %v3834 = vadd.f32 %v3721, %v3833
        %v3835 = vpop.f32.mrb[0].mxu0
        %3836 = vmatprep.mubr.bf16.mxu0 %v2804
        %3837 = vmatmul.mubr.bf16.gmra.mrb[0].mxu0 %v2803
        %v3838 = vpop.f32.mrb[0].mxu0
        %v3839 = vadd.f32 %v3726, %v3838
        %v3840 = vpop.f32.mrb[0].mxu0
        %v3841 = vpop.f32.mrb[0].mxu0
        %v3842 = vadd.f32 %v3729, %v3841
        %v3843 = vpop.f32.mrb[0].mxu0
        %3844 = vmatprep.mubr.bf16.mxu0 %v2813
        %3845 = vmatmul.mubr.bf16.gmra.mrb[0].mxu0 %v2812
        %v3846 = vpop.f32.mrb[0].mxu0
        %v3847 = vadd.f32 %v3734, %v3846
        %v3848 = vpop.f32.mrb[0].mxu0
        %v3849 = vpop.f32.mrb[0].mxu0
        %v3850 = vadd.f32 %v3737, %v3849
        %v3851 = vpop.f32.mrb[0].mxu0
        %3852 = vmatprep.mubr.bf16.mxu0 %v2822
        %3853 = vmatmul.mubr.bf16.gmra.mrb[0].mxu0 %v2821
        %v3854 = vpop.f32.mrb[0].mxu0
        %v3855 = vadd.f32 %v3742, %v3854
        %v3856 = vpop.f32.mrb[0].mxu0
        %v3857 = vpop.f32.mrb[0].mxu0
        %v3858 = vadd.f32 %v3745, %v3857
        %v3859 = vpop.f32.mrb[0].mxu0
        %3860 = vmatprep.mubr.bf16.mxu0 %v2831
        %3861 = vmatmul.mubr.bf16.gmra.mrb[0].mxu0 %v2830
        %v3862 = vpop.f32.mrb[0].mxu0
        %v3863 = vadd.f32 %v3750, %v3862
        %v3864 = vpop.f32.mrb[0].mxu0
        %v3865 = vpop.f32.mrb[0].mxu0
        %v3866 = vadd.f32 %v3753, %v3865
        %v3867 = vpop.f32.mrb[0].mxu0
        %3868 = vmatprep.mubr.bf16.mxu0 %v2840
        %3869 = vmatmul.mubr.bf16.gmra.mrb[0].mxu0 %v2839
        %v3870 = vpop.f32.mrb[0].mxu0
        %v3871 = vadd.f32 %v3758, %v3870
        %v3872 = vpop.f32.mrb[0].mxu0
        %v3873 = vpop.f32.mrb[0].mxu0
        %v3874 = vadd.f32 %v3761, %v3873
        %v3875 = vpop.f32.mrb[0].mxu0
        %3876 = vdwg.mxu0
        %3877 = vmatprep.subr.bf16.mxu0 0
        %3878 = vmatpush1.bf16.msra.mxu0 %v3345
        %3879 = vmatprep.subr.bf16.mxu0 0
        %3880 = vmatpush1.bf16.msra.mxu0 %v3346
        %3881 = vmatprep.subr.bf16.mxu0 0
        %3882 = vmatpush1.bf16.msra.mxu0 %v3347
        %3883 = vmatprep.subr.bf16.mxu0 0
        %3884 = vmatpush1.bf16.msra.mxu0 %v3348
        %3885 = vmatprep.subr.bf16.mxu0 0
        %3886 = vmatpush1.bf16.msra.mxu0 %v3349
        %3887 = vmatprep.subr.bf16.mxu0 0
        %3888 = vmatpush1.bf16.msra.mxu0 %v3350
        %3889 = vmatprep.subr.bf16.mxu0 0
        %3890 = vmatpush1.bf16.msra.mxu0 %v3351
        %3891 = vmatprep.subr.bf16.mxu0 0
        %3892 = vmatpush1.bf16.msra.mxu0 %v3352
        %3893 = vmatprep.subr.bf16.mxu0 0
        %3894 = vmatpush1.bf16.msra.mxu0 0
        %3895 = vmatprep.subr.bf16.mxu0 0
        %3896 = vmatpush1.bf16.msra.mxu0 0
        %3897 = vmatprep.subr.bf16.mxu0 0
        %3898 = vmatpush1.bf16.msra.mxu0 0
        %3899 = vmatprep.subr.bf16.mxu0 0
        %3900 = vmatpush1.bf16.msra.mxu0 0
        %3901 = vmatprep.subr.bf16.mxu0 0
        %3902 = vmatpush1.bf16.msra.mxu0 0
        %3903 = vmatprep.subr.bf16.mxu0 0
        %3904 = vmatpush1.bf16.msra.mxu0 0
        %3905 = vmatprep.subr.bf16.mxu0 0
        %3906 = vmatpush1.bf16.msra.mxu0 0
        %3907 = vmatprep.subr.bf16.mxu0 0
        %3908 = vmatpush1.bf16.msra.mxu0 0
        %3909 = vmatprep.mubr.bf16.mxu0 0
        %3910 = vmatmul.mubr.bf16.gmra.mrb[0].mxu0 %v2760
        %v3911 = vpop.f32.mrb[0].mxu0
        %v3912 = vadd.f32 %v3799, %v3911
        %v3913 = vpop.f32.mrb[0].mxu0
        %v3914 = vpop.f32.mrb[0].mxu0
        %v3915 = vadd.f32 %v3802, %v3914
        %v3916 = vpop.f32.mrb[0].mxu0
        %3917 = vmatprep.mubr.bf16.mxu0 0
        %3918 = vmatmul.mubr.bf16.gmra.mrb[0].mxu0 %v2769
        %v3919 = vpop.f32.mrb[0].mxu0
        %v3920 = vadd.f32 %v3807, %v3919
        %v3921 = vpop.f32.mrb[0].mxu0
        %v3922 = vpop.f32.mrb[0].mxu0
        %v3923 = vadd.f32 %v3810, %v3922
        %v3924 = vpop.f32.mrb[0].mxu0
        %3925 = vmatprep.mubr.bf16.mxu0 0
        %3926 = vmatmul.mubr.bf16.gmra.mrb[0].mxu0 %v2778
        %v3927 = vpop.f32.mrb[0].mxu0
        %v3928 = vadd.f32 %v3815, %v3927
        %v3929 = vpop.f32.mrb[0].mxu0
        %v3930 = vpop.f32.mrb[0].mxu0
        %v3931 = vadd.f32 %v3818, %v3930
        %v3932 = vpop.f32.mrb[0].mxu0
        %3933 = vmatprep.mubr.bf16.mxu0 0
        %3934 = vmatmul.mubr.bf16.gmra.mrb[0].mxu0 %v2787
        %v3935 = vpop.f32.mrb[0].mxu0
        %v3936 = vadd.f32 %v3823, %v3935
        %v3937 = vpop.f32.mrb[0].mxu0
        %v3938 = vpop.f32.mrb[0].mxu0
        %v3939 = vadd.f32 %v3826, %v3938
        %v3940 = vpop.f32.mrb[0].mxu0
        %3941 = vmatprep.mubr.bf16.mxu0 0
        %3942 = vmatmul.mubr.bf16.gmra.mrb[0].mxu0 %v2796
        %v3943 = vpop.f32.mrb[0].mxu0
        %v3944 = vadd.f32 %v3831, %v3943
        %v3945 = vpop.f32.mrb[0].mxu0
        %v3946 = vpop.f32.mrb[0].mxu0
        %v3947 = vadd.f32 %v3834, %v3946
        %v3948 = vpop.f32.mrb[0].mxu0
        %3949 = vmatprep.mubr.bf16.mxu0 0
        %3950 = vmatmul.mubr.bf16.gmra.mrb[0].mxu0 %v2805
        %v3951 = vpop.f32.mrb[0].mxu0
        %v3952 = vadd.f32 %v3839, %v3951
        %v3953 = vpop.f32.mrb[0].mxu0
        %v3954 = vpop.f32.mrb[0].mxu0
        %v3955 = vadd.f32 %v3842, %v3954
        %v3956 = vpop.f32.mrb[0].mxu0
        %3957 = vmatprep.mubr.bf16.mxu0 0
        %3958 = vmatmul.mubr.bf16.gmra.mrb[0].mxu0 %v2814
        %v3959 = vpop.f32.mrb[0].mxu0
        %v3960 = vadd.f32 %v3847, %v3959
        %v3961 = vpop.f32.mrb[0].mxu0
        %v3962 = vpop.f32.mrb[0].mxu0
        %v3963 = vadd.f32 %v3850, %v3962
        %v3964 = vpop.f32.mrb[0].mxu0
        %3965 = vmatprep.mubr.bf16.mxu0 0
        %3966 = vmatmul.mubr.bf16.gmra.mrb[0].mxu0 %v2823
        %v3967 = vpop.f32.mrb[0].mxu0
        %v3968 = vadd.f32 %v3855, %v3967
        %v3969 = vpop.f32.mrb[0].mxu0
        %v3970 = vpop.f32.mrb[0].mxu0
        %v3971 = vadd.f32 %v3858, %v3970
        %v3972 = vpop.f32.mrb[0].mxu0
        %3973 = vmatprep.mubr.bf16.mxu0 0
        %3974 = vmatmul.mubr.bf16.gmra.mrb[0].mxu0 %v2832
        %v3975 = vpop.f32.mrb[0].mxu0
        %v3976 = vadd.f32 %v3863, %v3975
        %v3977 = vpop.f32.mrb[0].mxu0
        %v3978 = vpop.f32.mrb[0].mxu0
        %v3979 = vadd.f32 %v3866, %v3978
        %v3980 = vpop.f32.mrb[0].mxu0
        %3981 = vmatprep.mubr.bf16.mxu0 0
        %3982 = vmatmul.mubr.bf16.gmra.mrb[0].mxu0 %v2841
        %v3983 = vpop.f32.mrb[0].mxu0
        %v3984 = vadd.f32 %v3871, %v3983
        %v3985 = vpop.f32.mrb[0].mxu0
        %v3986 = vpop.f32.mrb[0].mxu0
        %v3987 = vadd.f32 %v3874, %v3986
        %v3988 = vpop.f32.mrb[0].mxu0
        %3989 = vdwg.mxu0
        %v3990 = vmax.f32 %v3912, 0.0
        %v3991 = vmax.f32 %v3915, 0.0
        %v3992 = vmax.f32 %v3920, 0.0
        %v3993 = vmax.f32 %v3923, 0.0
        %v3994 = vmax.f32 %v3928, 0.0
        %v3995 = vmax.f32 %v3931, 0.0
        %v3996 = vmax.f32 %v3936, 0.0
        %v3997 = vmax.f32 %v3939, 0.0
        %v3998 = vmax.f32 %v3944, 0.0
        %v3999 = vmax.f32 %v3947, 0.0
        %v4000 = vmax.f32 %v3952, 0.0
        %v4001 = vmax.f32 %v3955, 0.0
        %v4002 = vmax.f32 %v3960, 0.0
        %v4003 = vmax.f32 %v3963, 0.0
        %v4004 = vmax.f32 %v3968, 0.0
        %v4005 = vmax.f32 %v3971, 0.0
        %v4006 = vmax.f32 %v3976, 0.0
        %v4007 = vmax.f32 %v3979, 0.0
        %v4008 = vmax.f32 %v3984, 0.0
        %v4009 = vmax.f32 %v3987, 0.0
        %s4010 = ssub.s32 %s308, 1
        %v4011 = vstv %s4010
        %v4012 = vadd.s32 %v4011, 1
        %v4013 = vadd.s32 %v4011, 2
        %v4014 = vadd.s32 %v4011, 3
        %v4015 = vadd.s32 %v4011, 4
        %v4016 = vadd.s32 %v4011, 5
        %v4017 = vadd.s32 %v4011, 6
        %v4018 = vadd.s32 %v4011, 7
        %v4019 = vadd.s32 %v4011, 8
        %v4020 = vadd.s32 %v4011, 9
        %vm4021 = vcmp.ge.s32.totalorder %v4011, 0
        %vm4022 = vcmp.ge.s32.totalorder %v4012, 0
        %vm4023 = vcmp.ge.s32.totalorder %v4013, 0
        %vm4024 = vcmp.ge.s32.totalorder %v4014, 0
        %vm4025 = vcmp.ge.s32.totalorder %v4015, 0
        %vm4026 = vcmp.ge.s32.totalorder %v4016, 0
        %vm4027 = vcmp.ge.s32.totalorder %v4017, 0
        %vm4028 = vcmp.ge.s32.totalorder %v4018, 0
        %vm4029 = vcmp.ge.s32.totalorder %v4019, 0
        %vm4030 = vcmp.ge.s32.totalorder %v4020, 0
        %vm4031 = vcmp.lt.s32.totalorder %v4011, 16
        %vm4032 = vcmp.lt.s32.totalorder %v4012, 16
        %vm4033 = vcmp.lt.s32.totalorder %v4013, 16
        %vm4034 = vcmp.lt.s32.totalorder %v4014, 16
        %vm4035 = vcmp.lt.s32.totalorder %v4015, 16
        %vm4036 = vcmp.lt.s32.totalorder %v4016, 16
        %vm4037 = vcmp.lt.s32.totalorder %v4017, 16
        %vm4038 = vcmp.lt.s32.totalorder %v4018, 16
        %vm4039 = vcmp.lt.s32.totalorder %v4019, 16
        %vm4040 = vcmp.lt.s32.totalorder %v4020, 16
        %vm4041 = vmand %vm4021, %vm4031
        %vm4042 = vmand %vm4022, %vm4032
        %vm4043 = vmand %vm4023, %vm4033
        %vm4044 = vmand %vm4024, %vm4034
        %vm4045 = vmand %vm4025, %vm4035
        %vm4046 = vmand %vm4026, %vm4036
        %vm4047 = vmand %vm4027, %vm4037
        %vm4048 = vmand %vm4028, %vm4038
        %vm4049 = vmand %vm4029, %vm4039
        %vm4050 = vmand %vm4030, %vm4040
        %v4051 = vsel %vm4041, %v3990, 0.0
        %v4052 = vsel %vm4041, %v3991, 0.0
        %v4053 = vsel %vm4042, %v3992, 0.0
        %v4054 = vsel %vm4042, %v3993, 0.0
        %v4055 = vsel %vm4043, %v3994, 0.0
        %v4056 = vsel %vm4043, %v3995, 0.0
        %v4057 = vsel %vm4044, %v3996, 0.0
        %v4058 = vsel %vm4044, %v3997, 0.0
        %v4059 = vsel %vm4045, %v3998, 0.0
        %v4060 = vsel %vm4045, %v3999, 0.0
        %v4061 = vsel %vm4046, %v4000, 0.0
        %v4062 = vsel %vm4046, %v4001, 0.0
        %v4063 = vsel %vm4047, %v4002, 0.0
        %v4064 = vsel %vm4047, %v4003, 0.0
        %v4065 = vsel %vm4048, %v4004, 0.0
        %v4066 = vsel %vm4048, %v4005, 0.0
        %v4067 = vsel %vm4049, %v4006, 0.0
        %v4068 = vsel %vm4049, %v4007, 0.0
        %v4069 = vsel %vm4050, %v4008, 0.0
        %v4070 = vsel %vm4050, %v4009, 0.0
        %vm4071 = vcmask 1040384
        %vm4072 = vsmask.f32 256
        %vm4073 = vmand %vm4071, %vm4072
        %v4074 = vld [vmem:[#allocation3] sm:$0x1]
        %v4075 = vsel %vm4073, 0, %v4074
        %4076 = vst [vmem:[#allocation3] sm:$0x1] %v4075
        %v4077 = vld [vmem:[#allocation3 + $0xc] sm:$0x1]
        %v4078 = vsel %vm4073, 0, %v4077
        %4079 = vst [vmem:[#allocation3 + $0xc] sm:$0x1] %v4078
        %v4080 = vld [vmem:[#allocation3 + $0x18] sm:$0x1]
        %v4081 = vsel %vm4073, 0, %v4080
        %4082 = vst [vmem:[#allocation3 + $0x18] sm:$0x1] %v4081
        %v4083 = vld [vmem:[#allocation3 + $0x24] sm:$0x1]
        %v4084 = vsel %vm4073, 0, %v4083
        %4085 = vst [vmem:[#allocation3 + $0x24] sm:$0x1] %v4084
        %v4086 = vld [vmem:[#allocation3 + $0x30] sm:$0x1]
        %v4087 = vsel %vm4073, 0, %v4086
        %4088 = vst [vmem:[#allocation3 + $0x30] sm:$0x1] %v4087
        %v4089 = vld [vmem:[#allocation3 + $0x3c] sm:$0x1]
        %v4090 = vsel %vm4073, 0, %v4089
        %4091 = vst [vmem:[#allocation3 + $0x3c] sm:$0x1] %v4090
        %v4092 = vld [vmem:[#allocation3 + $0x48] sm:$0x1]
        %v4093 = vsel %vm4073, 0, %v4092
        %4094 = vst [vmem:[#allocation3 + $0x48] sm:$0x1] %v4093
        %v4095 = vld [vmem:[#allocation3 + $0x54] sm:$0x1]
        %v4096 = vsel %vm4073, 0, %v4095
        %4097 = vst [vmem:[#allocation3 + $0x54] sm:$0x1] %v4096
        %v4098 = vld [vmem:[#allocation3 + $0x60] sm:$0x1]
        %v4099 = vsel %vm4073, 0, %v4098
        %4100 = vst [vmem:[#allocation3 + $0x60] sm:$0x1] %v4099
        %v4101 = vld [vmem:[#allocation3 + $0x6c] sm:$0x1]
        %v4102 = vsel %vm4073, 0, %v4101
        %4103 = vst [vmem:[#allocation3 + $0x6c] sm:$0x1] %v4102
        %vm4104 = vsmask.f32 7938
        %vm4105 = vmand %vm4071, %vm4104
        %v4106 = vld [vmem:[#allocation3 + $0x8] sm:$0x1]
        %v4107 = vsel %vm4105, 0, %v4106
        %4108 = vst [vmem:[#allocation3 + $0x8] sm:$0x1] %v4107
        %v4109 = vld [vmem:[#allocation3 + $0x14] sm:$0x1]
        %v4110 = vsel %vm4105, 0, %v4109
        %4111 = vst [vmem:[#allocation3 + $0x14] sm:$0x1] %v4110
        %v4112 = vld [vmem:[#allocation3 + $0x20] sm:$0x1]
        %v4113 = vsel %vm4105, 0, %v4112
        %4114 = vst [vmem:[#allocation3 + $0x20] sm:$0x1] %v4113
        %v4115 = vld [vmem:[#allocation3 + $0x2c] sm:$0x1]
        %v4116 = vsel %vm4105, 0, %v4115
        %4117 = vst [vmem:[#allocation3 + $0x2c] sm:$0x1] %v4116
        %v4118 = vld [vmem:[#allocation3 + $0x38] sm:$0x1]
        %v4119 = vsel %vm4105, 0, %v4118
        %4120 = vst [vmem:[#allocation3 + $0x38] sm:$0x1] %v4119
        %v4121 = vld [vmem:[#allocation3 + $0x44] sm:$0x1]
        %v4122 = vsel %vm4105, 0, %v4121
        %4123 = vst [vmem:[#allocation3 + $0x44] sm:$0x1] %v4122
        %v4124 = vld [vmem:[#allocation3 + $0x50] sm:$0x1]
        %v4125 = vsel %vm4105, 0, %v4124
        %4126 = vst [vmem:[#allocation3 + $0x50] sm:$0x1] %v4125
        %v4127 = vld [vmem:[#allocation3 + $0x5c] sm:$0x1]
        %v4128 = vsel %vm4105, 0, %v4127
        %4129 = vst [vmem:[#allocation3 + $0x5c] sm:$0x1] %v4128
        %v4130 = vld [vmem:[#allocation3 + $0x68] sm:$0x1]
        %v4131 = vsel %vm4105, 0, %v4130
        %4132 = vst [vmem:[#allocation3 + $0x68] sm:$0x1] %v4131
        %v4133 = vld [vmem:[#allocation3 + $0x74] sm:$0x1]
        %v4134 = vsel %vm4105, 0, %v4133
        %4135 = vst [vmem:[#allocation3 + $0x74] sm:$0x1] %v4134
        %v4136 = vpack.c.bf16 %v4052, %v4051
        %v4137 = vpack.c.bf16 %v4054, %v4053
        %v4138 = vpack.c.bf16 %v4056, %v4055
        %v4139 = vpack.c.bf16 %v4058, %v4057
        %v4140 = vpack.c.bf16 %v4060, %v4059
        %v4141 = vpack.c.bf16 %v4062, %v4061
        %v4142 = vpack.c.bf16 %v4064, %v4063
        %v4143 = vpack.c.bf16 %v4066, %v4065
        %v4144 = vpack.c.bf16 %v4068, %v4067
        %v4145 = vpack.c.bf16 %v4070, %v4069
        %v4156 = vunpack.c.l.b16 %v4136
        %v4157 = vunpack.c.h.b16 %v4136
        %v4158 = vunpack.c.l.b16 %v4137
        %v4159 = vunpack.c.h.b16 %v4137
        %v4160 = vunpack.c.l.b16 %v4138
        %v4161 = vunpack.c.h.b16 %v4138
        %v4162 = vunpack.c.l.b16 %v4139
        %v4163 = vunpack.c.h.b16 %v4139
        %v4164 = vunpack.c.l.b16 %v4140
        %v4165 = vunpack.c.h.b16 %v4140
        %v4166 = vunpack.c.l.b16 %v4141
        %v4167 = vunpack.c.h.b16 %v4141
        %v4168 = vunpack.c.l.b16 %v4142
        %v4169 = vunpack.c.h.b16 %v4142
        %v4170 = vunpack.c.l.b16 %v4143
        %v4171 = vunpack.c.h.b16 %v4143
        %v4172 = vunpack.c.l.b16 %v4144
        %v4173 = vunpack.c.h.b16 %v4144
        %v4174 = vunpack.c.l.b16 %v4145
        %v4175 = vunpack.c.h.b16 %v4145
        %v4176 = vpack.c.b16 %v4156, %v4156
        %v4177 = vpack.c.b16 %v4157, %v4157
        %v4178 = vpack.c.b16 %v4158, %v4158
        %v4179 = vpack.c.b16 %v4159, %v4159
        %v4180 = vpack.c.b16 %v4160, %v4160
        %v4181 = vpack.c.b16 %v4161, %v4161
        %v4182 = vpack.c.b16 %v4162, %v4162
        %v4183 = vpack.c.b16 %v4163, %v4163
        %v4184 = vpack.c.b16 %v4164, %v4164
        %v4185 = vpack.c.b16 %v4165, %v4165
        %v4186 = vpack.c.b16 %v4166, %v4166
        %v4187 = vpack.c.b16 %v4167, %v4167
        %v4188 = vpack.c.b16 %v4168, %v4168
        %v4189 = vpack.c.b16 %v4169, %v4169
        %v4190 = vpack.c.b16 %v4170, %v4170
        %v4191 = vpack.c.b16 %v4171, %v4171
        %v4192 = vpack.c.b16 %v4172, %v4172
        %v4193 = vpack.c.b16 %v4173, %v4173
        %v4194 = vpack.c.b16 %v4174, %v4174
        %v4195 = vpack.c.b16 %v4175, %v4175
        %vm4196 = vsmask.f32 4368
        %vm4197 = vmor %vm4072, %vm4196
        %v4199 = vshrl.u32 %v4176, 16
        %v4201 = vrot.slane %v4199, 7
        %v4202 = vshll.u32 %v4176, 16
        %v4204 = vor.u32 %v4201, %v4202
        %v4205 = vrot.slane %v4201, 4
        %v4207 = vshrl.u32 %v4177, 16
        %v4209 = vrot.slane %v4207, 7
        %v4210 = vshll.u32 %v4177, 16
        %v4212 = vor.u32 %v4209, %v4210
        %v4213 = vsel %vm4197, %v4205, %v4212
        %v4214 = vrot.slane %v4209, 4
        %v4216 = vshrl.u32 %v4178, 16
        %v4218 = vrot.slane %v4216, 7
        %v4219 = vshll.u32 %v4178, 16
        %v4221 = vor.u32 %v4218, %v4219
        %v4222 = vrot.slane %v4218, 4
        %v4224 = vshrl.u32 %v4179, 16
        %v4226 = vrot.slane %v4224, 7
        %v4227 = vshll.u32 %v4179, 16
        %v4229 = vor.u32 %v4226, %v4227
        %v4230 = vsel %vm4197, %v4222, %v4229
        %v4231 = vrot.slane %v4226, 4
        %v4233 = vshrl.u32 %v4180, 16
        %v4235 = vrot.slane %v4233, 7
        %v4236 = vshll.u32 %v4180, 16
        %v4238 = vor.u32 %v4235, %v4236
        %v4239 = vrot.slane %v4235, 4
        %v4241 = vshrl.u32 %v4181, 16
        %v4243 = vrot.slane %v4241, 7
        %v4244 = vshll.u32 %v4181, 16
        %v4246 = vor.u32 %v4243, %v4244
        %v4247 = vsel %vm4197, %v4239, %v4246
        %v4248 = vrot.slane %v4243, 4
        %v4250 = vshrl.u32 %v4182, 16
        %v4252 = vrot.slane %v4250, 7
        %v4253 = vshll.u32 %v4182, 16
        %v4255 = vor.u32 %v4252, %v4253
        %v4256 = vrot.slane %v4252, 4
        %v4258 = vshrl.u32 %v4183, 16
        %v4260 = vrot.slane %v4258, 7
        %v4261 = vshll.u32 %v4183, 16
        %v4263 = vor.u32 %v4260, %v4261
        %v4264 = vsel %vm4197, %v4256, %v4263
        %v4265 = vrot.slane %v4260, 4
        %v4267 = vshrl.u32 %v4184, 16
        %v4269 = vrot.slane %v4267, 7
        %v4270 = vshll.u32 %v4184, 16
        %v4272 = vor.u32 %v4269, %v4270
        %v4273 = vrot.slane %v4269, 4
        %v4275 = vshrl.u32 %v4185, 16
        %v4277 = vrot.slane %v4275, 7
        %v4278 = vshll.u32 %v4185, 16
        %v4280 = vor.u32 %v4277, %v4278
        %v4281 = vsel %vm4197, %v4273, %v4280
        %v4282 = vrot.slane %v4277, 4
        %v4284 = vshrl.u32 %v4186, 16
        %v4286 = vrot.slane %v4284, 7
        %v4287 = vshll.u32 %v4186, 16
        %v4289 = vor.u32 %v4286, %v4287
        %v4290 = vrot.slane %v4286, 4
        %v4292 = vshrl.u32 %v4187, 16
        %v4294 = vrot.slane %v4292, 7
        %v4295 = vshll.u32 %v4187, 16
        %v4297 = vor.u32 %v4294, %v4295
        %v4298 = vsel %vm4197, %v4290, %v4297
        %v4299 = vrot.slane %v4294, 4
        %v4301 = vshrl.u32 %v4188, 16
        %v4303 = vrot.slane %v4301, 7
        %v4304 = vshll.u32 %v4188, 16
        %v4306 = vor.u32 %v4303, %v4304
        %v4307 = vrot.slane %v4303, 4
        %v4309 = vshrl.u32 %v4189, 16
        %v4311 = vrot.slane %v4309, 7
        %v4312 = vshll.u32 %v4189, 16
        %v4314 = vor.u32 %v4311, %v4312
        %v4315 = vsel %vm4197, %v4307, %v4314
        %v4316 = vrot.slane %v4311, 4
        %v4318 = vshrl.u32 %v4190, 16
        %v4320 = vrot.slane %v4318, 7
        %v4321 = vshll.u32 %v4190, 16
        %v4323 = vor.u32 %v4320, %v4321
        %v4324 = vrot.slane %v4320, 4
        %v4326 = vshrl.u32 %v4191, 16
        %v4328 = vrot.slane %v4326, 7
        %v4329 = vshll.u32 %v4191, 16
        %v4331 = vor.u32 %v4328, %v4329
        %v4332 = vsel %vm4197, %v4324, %v4331
        %v4333 = vrot.slane %v4328, 4
        %v4335 = vshrl.u32 %v4192, 16
        %v4337 = vrot.slane %v4335, 7
        %v4338 = vshll.u32 %v4192, 16
        %v4340 = vor.u32 %v4337, %v4338
        %v4341 = vrot.slane %v4337, 4
        %v4343 = vshrl.u32 %v4193, 16
        %v4345 = vrot.slane %v4343, 7
        %v4346 = vshll.u32 %v4193, 16
        %v4348 = vor.u32 %v4345, %v4346
        %v4349 = vsel %vm4197, %v4341, %v4348
        %v4350 = vrot.slane %v4345, 4
        %v4352 = vshrl.u32 %v4194, 16
        %v4354 = vrot.slane %v4352, 7
        %v4355 = vshll.u32 %v4194, 16
        %v4357 = vor.u32 %v4354, %v4355
        %v4358 = vrot.slane %v4354, 4
        %v4360 = vshrl.u32 %v4195, 16
        %v4362 = vrot.slane %v4360, 7
        %v4363 = vshll.u32 %v4195, 16
        %v4365 = vor.u32 %v4362, %v4363
        %v4366 = vsel %vm4197, %v4358, %v4365
        %v4367 = vrot.slane %v4362, 4
        %vm4398 = vcmask 1043456
        %vm4399 = vmand %vm4398, %vm4104
        %v4400 = vld [vmem:[#allocation3] sm:$0xf]
        %v4401 = vsel %vm4399, %v4204, %v4400
        %4402 = vst [vmem:[#allocation3] sm:$0xf] %v4401
        %4403 = vst [vmem:[#allocation3 + $0x4] sm:$0xf] %v4213
        %v4404 = vld [vmem:[#allocation3 + $0x8] sm:$0x1]
        %v4405 = vsel %vm4073, %v4214, %v4404
        %4406 = vst [vmem:[#allocation3 + $0x8] sm:$0x1] %v4405
        %v4407 = vld [vmem:[#allocation3 + $0xc] sm:$0xf]
        %v4408 = vsel %vm4399, %v4221, %v4407
        %4409 = vst [vmem:[#allocation3 + $0xc] sm:$0xf] %v4408
        %4410 = vst [vmem:[#allocation3 + $0x10] sm:$0xf] %v4230
        %v4411 = vld [vmem:[#allocation3 + $0x14] sm:$0x1]
        %v4412 = vsel %vm4073, %v4231, %v4411
        %4413 = vst [vmem:[#allocation3 + $0x14] sm:$0x1] %v4412
        %v4414 = vld [vmem:[#allocation3 + $0x18] sm:$0xf]
        %v4415 = vsel %vm4399, %v4238, %v4414
        %4416 = vst [vmem:[#allocation3 + $0x18] sm:$0xf] %v4415
        %4417 = vst [vmem:[#allocation3 + $0x1c] sm:$0xf] %v4247
        %v4418 = vld [vmem:[#allocation3 + $0x20] sm:$0x1]
        %v4419 = vsel %vm4073, %v4248, %v4418
        %4420 = vst [vmem:[#allocation3 + $0x20] sm:$0x1] %v4419
        %v4421 = vld [vmem:[#allocation3 + $0x24] sm:$0xf]
        %v4422 = vsel %vm4399, %v4255, %v4421
        %4423 = vst [vmem:[#allocation3 + $0x24] sm:$0xf] %v4422
        %4424 = vst [vmem:[#allocation3 + $0x28] sm:$0xf] %v4264
        %v4425 = vld [vmem:[#allocation3 + $0x2c] sm:$0x1]
        %v4426 = vsel %vm4073, %v4265, %v4425
        %4427 = vst [vmem:[#allocation3 + $0x2c] sm:$0x1] %v4426
        %v4428 = vld [vmem:[#allocation3 + $0x30] sm:$0xf]
        %v4429 = vsel %vm4399, %v4272, %v4428
        %4430 = vst [vmem:[#allocation3 + $0x30] sm:$0xf] %v4429
        %4431 = vst [vmem:[#allocation3 + $0x34] sm:$0xf] %v4281
        %v4432 = vld [vmem:[#allocation3 + $0x38] sm:$0x1]
        %v4433 = vsel %vm4073, %v4282, %v4432
        %4434 = vst [vmem:[#allocation3 + $0x38] sm:$0x1] %v4433
        %v4435 = vld [vmem:[#allocation3 + $0x3c] sm:$0xf]
        %v4436 = vsel %vm4399, %v4289, %v4435
        %4437 = vst [vmem:[#allocation3 + $0x3c] sm:$0xf] %v4436
        %4438 = vst [vmem:[#allocation3 + $0x40] sm:$0xf] %v4298
        %v4439 = vld [vmem:[#allocation3 + $0x44] sm:$0x1]
        %v4440 = vsel %vm4073, %v4299, %v4439
        %4441 = vst [vmem:[#allocation3 + $0x44] sm:$0x1] %v4440
        %v4442 = vld [vmem:[#allocation3 + $0x48] sm:$0xf]
        %v4443 = vsel %vm4399, %v4306, %v4442
        %4444 = vst [vmem:[#allocation3 + $0x48] sm:$0xf] %v4443
        %4445 = vst [vmem:[#allocation3 + $0x4c] sm:$0xf] %v4315
        %v4446 = vld [vmem:[#allocation3 + $0x50] sm:$0x1]
        %v4447 = vsel %vm4073, %v4316, %v4446
        %4448 = vst [vmem:[#allocation3 + $0x50] sm:$0x1] %v4447
        %v4449 = vld [vmem:[#allocation3 + $0x54] sm:$0xf]
        %v4450 = vsel %vm4399, %v4323, %v4449
        %4451 = vst [vmem:[#allocation3 + $0x54] sm:$0xf] %v4450
        %4452 = vst [vmem:[#allocation3 + $0x58] sm:$0xf] %v4332
        %v4453 = vld [vmem:[#allocation3 + $0x5c] sm:$0x1]
        %v4454 = vsel %vm4073, %v4333, %v4453
        %4455 = vst [vmem:[#allocation3 + $0x5c] sm:$0x1] %v4454
        %v4456 = vld [vmem:[#allocation3 + $0x60] sm:$0xf]
        %v4457 = vsel %vm4399, %v4340, %v4456
        %4458 = vst [vmem:[#allocation3 + $0x60] sm:$0xf] %v4457
        %4459 = vst [vmem:[#allocation3 + $0x64] sm:$0xf] %v4349
        %v4460 = vld [vmem:[#allocation3 + $0x68] sm:$0x1]
        %v4461 = vsel %vm4073, %v4350, %v4460
        %4462 = vst [vmem:[#allocation3 + $0x68] sm:$0x1] %v4461
        %v4463 = vld [vmem:[#allocation3 + $0x6c] sm:$0xf]
        %v4464 = vsel %vm4399, %v4357, %v4463
        %4465 = vst [vmem:[#allocation3 + $0x6c] sm:$0xf] %v4464
        %4466 = vst [vmem:[#allocation3 + $0x70] sm:$0xf] %v4366
        %v4467 = vld [vmem:[#allocation3 + $0x74] sm:$0x1]
        %v4468 = vsel %vm4073, %v4367, %v4467
        %4469 = vst [vmem:[#allocation3 + $0x74] sm:$0x1] %v4468
        %v4470 = vld [vmem:[#allocation3] sm:$0xf]
        %v4471 = vld [vmem:[#allocation3 + $0x4] sm:$0xf]
        %v4472 = vld [vmem:[#allocation3 + $0xc] sm:$0xf]
        %v4473 = vld [vmem:[#allocation3 + $0x10] sm:$0xf]
        %v4474 = vld [vmem:[#allocation3 + $0x18] sm:$0xf]
        %v4475 = vld [vmem:[#allocation3 + $0x1c] sm:$0xf]
        %v4476 = vld [vmem:[#allocation3 + $0x24] sm:$0xf]
        %v4477 = vld [vmem:[#allocation3 + $0x28] sm:$0xf]
        %v4478 = vld [vmem:[#allocation3 + $0x30] sm:$0xf]
        %v4479 = vld [vmem:[#allocation3 + $0x34] sm:$0xf]
        %v4480 = vld [vmem:[#allocation3 + $0x3c] sm:$0xf]
        %v4481 = vld [vmem:[#allocation3 + $0x40] sm:$0xf]
        %v4482 = vld [vmem:[#allocation3 + $0x48] sm:$0xf]
        %v4483 = vld [vmem:[#allocation3 + $0x4c] sm:$0xf]
        %v4484 = vld [vmem:[#allocation3 + $0x54] sm:$0xf]
        %v4485 = vld [vmem:[#allocation3 + $0x58] sm:$0xf]
        %v4502 = vunpack.c.l.b16 %v4470
        %v4503 = vunpack.c.l.b16 %v4471
        %v4504 = vunpack.c.l.b16 %v4472
        %v4505 = vunpack.c.l.b16 %v4473
        %v4506 = vunpack.c.l.b16 %v4474
        %v4507 = vunpack.c.l.b16 %v4475
        %v4508 = vunpack.c.l.b16 %v4476
        %v4509 = vunpack.c.l.b16 %v4477
        %v4510 = vunpack.c.l.b16 %v4478
        %v4511 = vunpack.c.l.b16 %v4479
        %v4512 = vunpack.c.l.b16 %v4480
        %v4513 = vunpack.c.l.b16 %v4481
        %v4514 = vunpack.c.l.b16 %v4482
        %v4515 = vunpack.c.l.b16 %v4483
        %v4516 = vunpack.c.l.b16 %v4484
        %v4517 = vunpack.c.l.b16 %v4485
        %v4518 = vpack.c.b16 %v4503, %v4502
        %v4519 = vpack.c.b16 %v4505, %v4504
        %v4520 = vpack.c.b16 %v4507, %v4506
        %v4521 = vpack.c.b16 %v4509, %v4508
        %v4522 = vpack.c.b16 %v4511, %v4510
        %v4523 = vpack.c.b16 %v4513, %v4512
        %v4524 = vpack.c.b16 %v4515, %v4514
        %v4525 = vpack.c.b16 %v4517, %v4516
        %4534 = vst [vmem:[#allocation2] sm:$0xff] %v4518
        %4535 = vst [vmem:[#allocation2 + $0x48] sm:$0xff] %v4519
        %4536 = vst [vmem:[#allocation2 + $0x90] sm:$0xff] %v4520
        %4537 = vst [vmem:[#allocation2 + $0xd8] sm:$0xff] %v4521
        %4538 = vst [vmem:[#allocation2 + $0x120] sm:$0xff] %v4522
        %4539 = vst [vmem:[#allocation2 + $0x168] sm:$0xff] %v4523
        %4540 = vst [vmem:[#allocation2 + $0x1b0] sm:$0xff] %v4524
        %4541 = vst [vmem:[#allocation2 + $0x1f8] sm:$0xff] %v4525
        %v4542 = vld [vmem:[#allocation3] sm:$0xf]
        %v4543 = vld [vmem:[#allocation3 + $0x4] sm:$0xf]
        %v4544 = vld [vmem:[#allocation3 + $0x8] sm:$0x1]
        %v4545 = vld [vmem:[#allocation3 + $0xc] sm:$0xf]
        %v4546 = vld [vmem:[#allocation3 + $0x10] sm:$0xf]
        %v4547 = vld [vmem:[#allocation3 + $0x14] sm:$0x1]
        %v4548 = vld [vmem:[#allocation3 + $0x18] sm:$0xf]
        %v4549 = vld [vmem:[#allocation3 + $0x1c] sm:$0xf]
        %v4550 = vld [vmem:[#allocation3 + $0x20] sm:$0x1]
        %v4551 = vld [vmem:[#allocation3 + $0x24] sm:$0xf]
        %v4552 = vld [vmem:[#allocation3 + $0x28] sm:$0xf]
        %v4553 = vld [vmem:[#allocation3 + $0x2c] sm:$0x1]
        %v4554 = vld [vmem:[#allocation3 + $0x30] sm:$0xf]
        %v4555 = vld [vmem:[#allocation3 + $0x34] sm:$0xf]
        %v4556 = vld [vmem:[#allocation3 + $0x38] sm:$0x1]
        %v4557 = vld [vmem:[#allocation3 + $0x3c] sm:$0xf]
        %v4558 = vld [vmem:[#allocation3 + $0x40] sm:$0xf]
        %v4559 = vld [vmem:[#allocation3 + $0x44] sm:$0x1]
        %v4560 = vld [vmem:[#allocation3 + $0x48] sm:$0xf]
        %v4561 = vld [vmem:[#allocation3 + $0x4c] sm:$0xf]
        %v4562 = vld [vmem:[#allocation3 + $0x50] sm:$0x1]
        %v4563 = vld [vmem:[#allocation3 + $0x54] sm:$0xf]
        %v4564 = vld [vmem:[#allocation3 + $0x58] sm:$0xf]
        %v4565 = vld [vmem:[#allocation3 + $0x5c] sm:$0x1]
        %v4567 = vshrl.u32 %v4542, 16
        %v4569 = vrot.slane %v4567, 4
        %v4570 = vshll.u32 %v4542, 16
        %v4572 = vrot.slane %v4570, 5
        %v4573 = vor.u32 %v4569, %v4572
        %v4574 = vrot.slane %v4573, 4
        %v4576 = vshll.u32 %v4543, 16
        %v4578 = vrot.slane %v4576, 5
        %v4579 = vsel %vm339, %v4574, %v4578
        %v4580 = vshrl.u32 %v4543, 16
        %v4582 = vrot.slane %v4580, 4
        %v4583 = vor.u32 %v4582, %v4578
        %v4584 = vrot.slane %v4583, 4
        %v4586 = vshll.u32 %v4544, 16
        %v4588 = vrot.slane %v4586, 5
        %v4589 = vsel %vm339, %v4584, %v4588
        %v4591 = vshrl.u32 %v4545, 16
        %v4593 = vrot.slane %v4591, 4
        %v4594 = vshll.u32 %v4545, 16
        %v4596 = vrot.slane %v4594, 5
        %v4597 = vor.u32 %v4593, %v4596
        %v4598 = vrot.slane %v4597, 4
        %v4600 = vshll.u32 %v4546, 16
        %v4602 = vrot.slane %v4600, 5
        %v4603 = vsel %vm339, %v4598, %v4602
        %v4604 = vshrl.u32 %v4546, 16
        %v4606 = vrot.slane %v4604, 4
        %v4607 = vor.u32 %v4606, %v4602
        %v4608 = vrot.slane %v4607, 4
        %v4610 = vshll.u32 %v4547, 16
        %v4612 = vrot.slane %v4610, 5
        %v4613 = vsel %vm339, %v4608, %v4612
        %v4615 = vshrl.u32 %v4548, 16
        %v4617 = vrot.slane %v4615, 4
        %v4618 = vshll.u32 %v4548, 16
        %v4620 = vrot.slane %v4618, 5
        %v4621 = vor.u32 %v4617, %v4620
        %v4622 = vrot.slane %v4621, 4
        %v4624 = vshll.u32 %v4549, 16
        %v4626 = vrot.slane %v4624, 5
        %v4627 = vsel %vm339, %v4622, %v4626
        %v4628 = vshrl.u32 %v4549, 16
        %v4630 = vrot.slane %v4628, 4
        %v4631 = vor.u32 %v4630, %v4626
        %v4632 = vrot.slane %v4631, 4
        %v4634 = vshll.u32 %v4550, 16
        %v4636 = vrot.slane %v4634, 5
        %v4637 = vsel %vm339, %v4632, %v4636
        %v4639 = vshrl.u32 %v4551, 16
        %v4641 = vrot.slane %v4639, 4
        %v4642 = vshll.u32 %v4551, 16
        %v4644 = vrot.slane %v4642, 5
        %v4645 = vor.u32 %v4641, %v4644
        %v4646 = vrot.slane %v4645, 4
        %v4648 = vshll.u32 %v4552, 16
        %v4650 = vrot.slane %v4648, 5
        %v4651 = vsel %vm339, %v4646, %v4650
        %v4652 = vshrl.u32 %v4552, 16
        %v4654 = vrot.slane %v4652, 4
        %v4655 = vor.u32 %v4654, %v4650
        %v4656 = vrot.slane %v4655, 4
        %v4658 = vshll.u32 %v4553, 16
        %v4660 = vrot.slane %v4658, 5
        %v4661 = vsel %vm339, %v4656, %v4660
        %v4663 = vshrl.u32 %v4554, 16
        %v4665 = vrot.slane %v4663, 4
        %v4666 = vshll.u32 %v4554, 16
        %v4668 = vrot.slane %v4666, 5
        %v4669 = vor.u32 %v4665, %v4668
        %v4670 = vrot.slane %v4669, 4
        %v4672 = vshll.u32 %v4555, 16
        %v4674 = vrot.slane %v4672, 5
        %v4675 = vsel %vm339, %v4670, %v4674
        %v4676 = vshrl.u32 %v4555, 16
        %v4678 = vrot.slane %v4676, 4
        %v4679 = vor.u32 %v4678, %v4674
        %v4680 = vrot.slane %v4679, 4
        %v4682 = vshll.u32 %v4556, 16
        %v4684 = vrot.slane %v4682, 5
        %v4685 = vsel %vm339, %v4680, %v4684
        %v4687 = vshrl.u32 %v4557, 16
        %v4689 = vrot.slane %v4687, 4
        %v4690 = vshll.u32 %v4557, 16
        %v4692 = vrot.slane %v4690, 5
        %v4693 = vor.u32 %v4689, %v4692
        %v4694 = vrot.slane %v4693, 4
        %v4696 = vshll.u32 %v4558, 16
        %v4698 = vrot.slane %v4696, 5
        %v4699 = vsel %vm339, %v4694, %v4698
        %v4700 = vshrl.u32 %v4558, 16
        %v4702 = vrot.slane %v4700, 4
        %v4703 = vor.u32 %v4702, %v4698
        %v4704 = vrot.slane %v4703, 4
        %v4706 = vshll.u32 %v4559, 16
        %v4708 = vrot.slane %v4706, 5
        %v4709 = vsel %vm339, %v4704, %v4708
        %v4711 = vshrl.u32 %v4560, 16
        %v4713 = vrot.slane %v4711, 4
        %v4714 = vshll.u32 %v4560, 16
        %v4716 = vrot.slane %v4714, 5
        %v4717 = vor.u32 %v4713, %v4716
        %v4718 = vrot.slane %v4717, 4
        %v4720 = vshll.u32 %v4561, 16
        %v4722 = vrot.slane %v4720, 5
        %v4723 = vsel %vm339, %v4718, %v4722
        %v4724 = vshrl.u32 %v4561, 16
        %v4726 = vrot.slane %v4724, 4
        %v4727 = vor.u32 %v4726, %v4722
        %v4728 = vrot.slane %v4727, 4
        %v4730 = vshll.u32 %v4562, 16
        %v4732 = vrot.slane %v4730, 5
        %v4733 = vsel %vm339, %v4728, %v4732
        %v4735 = vshrl.u32 %v4563, 16
        %v4737 = vrot.slane %v4735, 4
        %v4738 = vshll.u32 %v4563, 16
        %v4740 = vrot.slane %v4738, 5
        %v4741 = vor.u32 %v4737, %v4740
        %v4742 = vrot.slane %v4741, 4
        %v4744 = vshll.u32 %v4564, 16
        %v4746 = vrot.slane %v4744, 5
        %v4747 = vsel %vm339, %v4742, %v4746
        %v4748 = vshrl.u32 %v4564, 16
        %v4750 = vrot.slane %v4748, 4
        %v4751 = vor.u32 %v4750, %v4746
        %v4752 = vrot.slane %v4751, 4
        %v4754 = vshll.u32 %v4565, 16
        %v4756 = vrot.slane %v4754, 5
        %v4757 = vsel %vm339, %v4752, %v4756
        %v4758 = vunpack.c.l.b16 %v4579
        %v4759 = vunpack.c.l.b16 %v4589
        %v4760 = vunpack.c.l.b16 %v4603
        %v4761 = vunpack.c.l.b16 %v4613
        %v4762 = vunpack.c.l.b16 %v4627
        %v4763 = vunpack.c.l.b16 %v4637
        %v4764 = vunpack.c.l.b16 %v4651
        %v4765 = vunpack.c.l.b16 %v4661
        %v4766 = vunpack.c.l.b16 %v4675
        %v4767 = vunpack.c.l.b16 %v4685
        %v4768 = vunpack.c.l.b16 %v4699
        %v4769 = vunpack.c.l.b16 %v4709
        %v4770 = vunpack.c.l.b16 %v4723
        %v4771 = vunpack.c.l.b16 %v4733
        %v4772 = vunpack.c.l.b16 %v4747
        %v4773 = vunpack.c.l.b16 %v4757
        %v4774 = vpack.c.b16 %v4759, %v4758
        %v4775 = vpack.c.b16 %v4761, %v4760
        %v4776 = vpack.c.b16 %v4763, %v4762
        %v4777 = vpack.c.b16 %v4765, %v4764
        %v4778 = vpack.c.b16 %v4767, %v4766
        %v4779 = vpack.c.b16 %v4769, %v4768
        %v4780 = vpack.c.b16 %v4771, %v4770
        %v4781 = vpack.c.b16 %v4773, %v4772
        %4790 = vst [vmem:[#allocation2 + $0x8] sm:$0xff] %v4774
        %4791 = vst [vmem:[#allocation2 + $0x50] sm:$0xff] %v4775
        %4792 = vst [vmem:[#allocation2 + $0x98] sm:$0xff] %v4776
        %4793 = vst [vmem:[#allocation2 + $0xe0] sm:$0xff] %v4777
        %4794 = vst [vmem:[#allocation2 + $0x128] sm:$0xff] %v4778
        %4795 = vst [vmem:[#allocation2 + $0x170] sm:$0xff] %v4779
        %4796 = vst [vmem:[#allocation2 + $0x1b8] sm:$0xff] %v4780
        %4797 = vst [vmem:[#allocation2 + $0x200] sm:$0xff] %v4781
        %v4798 = vld [vmem:[#allocation3] sm:$0xe]
        %v4799 = vld [vmem:[#allocation3 + $0x4] sm:$0xf]
        %v4800 = vld [vmem:[#allocation3 + $0x8] sm:$0x1]
        %v4801 = vld [vmem:[#allocation3 + $0xc] sm:$0xe]
        %v4802 = vld [vmem:[#allocation3 + $0x10] sm:$0xf]
        %v4803 = vld [vmem:[#allocation3 + $0x14] sm:$0x1]
        %v4804 = vld [vmem:[#allocation3 + $0x18] sm:$0xe]
        %v4805 = vld [vmem:[#allocation3 + $0x1c] sm:$0xf]
        %v4806 = vld [vmem:[#allocation3 + $0x20] sm:$0x1]
        %v4807 = vld [vmem:[#allocation3 + $0x24] sm:$0xe]
        %v4808 = vld [vmem:[#allocation3 + $0x28] sm:$0xf]
        %v4809 = vld [vmem:[#allocation3 + $0x2c] sm:$0x1]
        %v4810 = vld [vmem:[#allocation3 + $0x30] sm:$0xe]
        %v4811 = vld [vmem:[#allocation3 + $0x34] sm:$0xf]
        %v4812 = vld [vmem:[#allocation3 + $0x38] sm:$0x1]
        %v4813 = vld [vmem:[#allocation3 + $0x3c] sm:$0xe]
        %v4814 = vld [vmem:[#allocation3 + $0x40] sm:$0xf]
        %v4815 = vld [vmem:[#allocation3 + $0x44] sm:$0x1]
        %v4816 = vld [vmem:[#allocation3 + $0x48] sm:$0xe]
        %v4817 = vld [vmem:[#allocation3 + $0x4c] sm:$0xf]
        %v4818 = vld [vmem:[#allocation3 + $0x50] sm:$0x1]
        %v4819 = vld [vmem:[#allocation3 + $0x54] sm:$0xe]
        %v4820 = vld [vmem:[#allocation3 + $0x58] sm:$0xf]
        %v4821 = vld [vmem:[#allocation3 + $0x5c] sm:$0x1]
        %v4846 = vrot.slane %v4798, 5
        %v4847 = vrot.slane %v4846, 4
        %v4848 = vrot.slane %v4799, 5
        %v4849 = vsel %vm1287, %v4847, %v4848
        %v4850 = vrot.slane %v4848, 4
        %v4851 = vrot.slane %v4800, 5
        %v4852 = vsel %vm1287, %v4850, %v4851
        %v4853 = vrot.slane %v4801, 5
        %v4854 = vrot.slane %v4853, 4
        %v4855 = vrot.slane %v4802, 5
        %v4856 = vsel %vm1287, %v4854, %v4855
        %v4857 = vrot.slane %v4855, 4
        %v4858 = vrot.slane %v4803, 5
        %v4859 = vsel %vm1287, %v4857, %v4858
        %v4860 = vrot.slane %v4804, 5
        %v4861 = vrot.slane %v4860, 4
        %v4862 = vrot.slane %v4805, 5
        %v4863 = vsel %vm1287, %v4861, %v4862
        %v4864 = vrot.slane %v4862, 4
        %v4865 = vrot.slane %v4806, 5
        %v4866 = vsel %vm1287, %v4864, %v4865
        %v4867 = vrot.slane %v4807, 5
        %v4868 = vrot.slane %v4867, 4
        %v4869 = vrot.slane %v4808, 5
        %v4870 = vsel %vm1287, %v4868, %v4869
        %v4871 = vrot.slane %v4869, 4
        %v4872 = vrot.slane %v4809, 5
        %v4873 = vsel %vm1287, %v4871, %v4872
        %v4874 = vrot.slane %v4810, 5
        %v4875 = vrot.slane %v4874, 4
        %v4876 = vrot.slane %v4811, 5
        %v4877 = vsel %vm1287, %v4875, %v4876
        %v4878 = vrot.slane %v4876, 4
        %v4879 = vrot.slane %v4812, 5
        %v4880 = vsel %vm1287, %v4878, %v4879
        %v4881 = vrot.slane %v4813, 5
        %v4882 = vrot.slane %v4881, 4
        %v4883 = vrot.slane %v4814, 5
        %v4884 = vsel %vm1287, %v4882, %v4883
        %v4885 = vrot.slane %v4883, 4
        %v4886 = vrot.slane %v4815, 5
        %v4887 = vsel %vm1287, %v4885, %v4886
        %v4888 = vrot.slane %v4816, 5
        %v4889 = vrot.slane %v4888, 4
        %v4890 = vrot.slane %v4817, 5
        %v4891 = vsel %vm1287, %v4889, %v4890
        %v4892 = vrot.slane %v4890, 4
        %v4893 = vrot.slane %v4818, 5
        %v4894 = vsel %vm1287, %v4892, %v4893
        %v4895 = vrot.slane %v4819, 5
        %v4896 = vrot.slane %v4895, 4
        %v4897 = vrot.slane %v4820, 5
        %v4898 = vsel %vm1287, %v4896, %v4897
        %v4899 = vrot.slane %v4897, 4
        %v4900 = vrot.slane %v4821, 5
        %v4901 = vsel %vm1287, %v4899, %v4900
        %v4902 = vunpack.c.l.b16 %v4849
        %v4903 = vunpack.c.l.b16 %v4852
        %v4904 = vunpack.c.l.b16 %v4856
        %v4905 = vunpack.c.l.b16 %v4859
        %v4906 = vunpack.c.l.b16 %v4863
        %v4907 = vunpack.c.l.b16 %v4866
        %v4908 = vunpack.c.l.b16 %v4870
        %v4909 = vunpack.c.l.b16 %v4873
        %v4910 = vunpack.c.l.b16 %v4877
        %v4911 = vunpack.c.l.b16 %v4880
        %v4912 = vunpack.c.l.b16 %v4884
        %v4913 = vunpack.c.l.b16 %v4887
        %v4914 = vunpack.c.l.b16 %v4891
        %v4915 = vunpack.c.l.b16 %v4894
        %v4916 = vunpack.c.l.b16 %v4898
        %v4917 = vunpack.c.l.b16 %v4901
        %v4918 = vpack.c.b16 %v4903, %v4902
        %v4919 = vpack.c.b16 %v4905, %v4904
        %v4920 = vpack.c.b16 %v4907, %v4906
        %v4921 = vpack.c.b16 %v4909, %v4908
        %v4922 = vpack.c.b16 %v4911, %v4910
        %v4923 = vpack.c.b16 %v4913, %v4912
        %v4924 = vpack.c.b16 %v4915, %v4914
        %v4925 = vpack.c.b16 %v4917, %v4916
        %4934 = vst [vmem:[#allocation2 + $0x10] sm:$0xff] %v4918
        %4935 = vst [vmem:[#allocation2 + $0x58] sm:$0xff] %v4919
        %4936 = vst [vmem:[#allocation2 + $0xa0] sm:$0xff] %v4920
        %4937 = vst [vmem:[#allocation2 + $0xe8] sm:$0xff] %v4921
        %4938 = vst [vmem:[#allocation2 + $0x130] sm:$0xff] %v4922
        %4939 = vst [vmem:[#allocation2 + $0x178] sm:$0xff] %v4923
        %4940 = vst [vmem:[#allocation2 + $0x1c0] sm:$0xff] %v4924
        %4941 = vst [vmem:[#allocation2 + $0x208] sm:$0xff] %v4925
        %s4942 = scalar_lea.vmem [#allocation3], 12
        %v4943 = vld [vmem:[%s4942] sm:$0xf]
        %v4944 = vld [vmem:[%s4942 + $0x4] sm:$0xf]
        %v4945 = vld [vmem:[%s4942 + $0xc] sm:$0xf]
        %v4946 = vld [vmem:[%s4942 + $0x10] sm:$0xf]
        %v4947 = vld [vmem:[%s4942 + $0x18] sm:$0xf]
        %v4948 = vld [vmem:[%s4942 + $0x1c] sm:$0xf]
        %v4949 = vld [vmem:[%s4942 + $0x24] sm:$0xf]
        %v4950 = vld [vmem:[%s4942 + $0x28] sm:$0xf]
        %v4951 = vld [vmem:[%s4942 + $0x30] sm:$0xf]
        %v4952 = vld [vmem:[%s4942 + $0x34] sm:$0xf]
        %v4953 = vld [vmem:[%s4942 + $0x3c] sm:$0xf]
        %v4954 = vld [vmem:[%s4942 + $0x40] sm:$0xf]
        %v4955 = vld [vmem:[%s4942 + $0x48] sm:$0xf]
        %v4956 = vld [vmem:[%s4942 + $0x4c] sm:$0xf]
        %v4957 = vld [vmem:[%s4942 + $0x54] sm:$0xf]
        %v4958 = vld [vmem:[%s4942 + $0x58] sm:$0xf]
        %v4975 = vunpack.c.l.b16 %v4943
        %v4976 = vunpack.c.l.b16 %v4944
        %v4977 = vunpack.c.l.b16 %v4945
        %v4978 = vunpack.c.l.b16 %v4946
        %v4979 = vunpack.c.l.b16 %v4947
        %v4980 = vunpack.c.l.b16 %v4948
        %v4981 = vunpack.c.l.b16 %v4949
        %v4982 = vunpack.c.l.b16 %v4950
        %v4983 = vunpack.c.l.b16 %v4951
        %v4984 = vunpack.c.l.b16 %v4952
        %v4985 = vunpack.c.l.b16 %v4953
        %v4986 = vunpack.c.l.b16 %v4954
        %v4987 = vunpack.c.l.b16 %v4955
        %v4988 = vunpack.c.l.b16 %v4956
        %v4989 = vunpack.c.l.b16 %v4957
        %v4990 = vunpack.c.l.b16 %v4958
        %v4991 = vpack.c.b16 %v4976, %v4975
        %v4992 = vpack.c.b16 %v4978, %v4977
        %v4993 = vpack.c.b16 %v4980, %v4979
        %v4994 = vpack.c.b16 %v4982, %v4981
        %v4995 = vpack.c.b16 %v4984, %v4983
        %v4996 = vpack.c.b16 %v4986, %v4985
        %v4997 = vpack.c.b16 %v4988, %v4987
        %v4998 = vpack.c.b16 %v4990, %v4989
        %5007 = vst [vmem:[#allocation2 + $0x18] sm:$0xff] %v4991
        %5008 = vst [vmem:[#allocation2 + $0x60] sm:$0xff] %v4992
        %5009 = vst [vmem:[#allocation2 + $0xa8] sm:$0xff] %v4993
        %5010 = vst [vmem:[#allocation2 + $0xf0] sm:$0xff] %v4994
        %5011 = vst [vmem:[#allocation2 + $0x138] sm:$0xff] %v4995
        %5012 = vst [vmem:[#allocation2 + $0x180] sm:$0xff] %v4996
        %5013 = vst [vmem:[#allocation2 + $0x1c8] sm:$0xff] %v4997
        %5014 = vst [vmem:[#allocation2 + $0x210] sm:$0xff] %v4998
        %v5015 = vld [vmem:[%s4942] sm:$0xf]
        %v5016 = vld [vmem:[%s4942 + $0x4] sm:$0xf]
        %v5017 = vld [vmem:[%s4942 + $0x8] sm:$0x1]
        %v5018 = vld [vmem:[%s4942 + $0xc] sm:$0xf]
        %v5019 = vld [vmem:[%s4942 + $0x10] sm:$0xf]
        %v5020 = vld [vmem:[%s4942 + $0x14] sm:$0x1]
        %v5021 = vld [vmem:[%s4942 + $0x18] sm:$0xf]
        %v5022 = vld [vmem:[%s4942 + $0x1c] sm:$0xf]
        %v5023 = vld [vmem:[%s4942 + $0x20] sm:$0x1]
        %v5024 = vld [vmem:[%s4942 + $0x24] sm:$0xf]
        %v5025 = vld [vmem:[%s4942 + $0x28] sm:$0xf]
        %v5026 = vld [vmem:[%s4942 + $0x2c] sm:$0x1]
        %v5027 = vld [vmem:[%s4942 + $0x30] sm:$0xf]
        %v5028 = vld [vmem:[%s4942 + $0x34] sm:$0xf]
        %v5029 = vld [vmem:[%s4942 + $0x38] sm:$0x1]
        %v5030 = vld [vmem:[%s4942 + $0x3c] sm:$0xf]
        %v5031 = vld [vmem:[%s4942 + $0x40] sm:$0xf]
        %v5032 = vld [vmem:[%s4942 + $0x44] sm:$0x1]
        %v5033 = vld [vmem:[%s4942 + $0x48] sm:$0xf]
        %v5034 = vld [vmem:[%s4942 + $0x4c] sm:$0xf]
        %v5035 = vld [vmem:[%s4942 + $0x50] sm:$0x1]
        %v5036 = vld [vmem:[%s4942 + $0x54] sm:$0xf]
        %v5037 = vld [vmem:[%s4942 + $0x58] sm:$0xf]
        %v5038 = vld [vmem:[%s4942 + $0x5c] sm:$0x1]
        %v5040 = vshrl.u32 %v5015, 16
        %v5042 = vrot.slane %v5040, 4
        %v5043 = vshll.u32 %v5015, 16
        %v5045 = vrot.slane %v5043, 5
        %v5046 = vor.u32 %v5042, %v5045
        %v5047 = vrot.slane %v5046, 4
        %v5049 = vshll.u32 %v5016, 16
        %v5051 = vrot.slane %v5049, 5
        %v5052 = vsel %vm339, %v5047, %v5051
        %v5053 = vshrl.u32 %v5016, 16
        %v5055 = vrot.slane %v5053, 4
        %v5056 = vor.u32 %v5055, %v5051
        %v5057 = vrot.slane %v5056, 4
        %v5059 = vshll.u32 %v5017, 16
        %v5061 = vrot.slane %v5059, 5
        %v5062 = vsel %vm339, %v5057, %v5061
        %v5064 = vshrl.u32 %v5018, 16
        %v5066 = vrot.slane %v5064, 4
        %v5067 = vshll.u32 %v5018, 16
        %v5069 = vrot.slane %v5067, 5
        %v5070 = vor.u32 %v5066, %v5069
        %v5071 = vrot.slane %v5070, 4
        %v5073 = vshll.u32 %v5019, 16
        %v5075 = vrot.slane %v5073, 5
        %v5076 = vsel %vm339, %v5071, %v5075
        %v5077 = vshrl.u32 %v5019, 16
        %v5079 = vrot.slane %v5077, 4
        %v5080 = vor.u32 %v5079, %v5075
        %v5081 = vrot.slane %v5080, 4
        %v5083 = vshll.u32 %v5020, 16
        %v5085 = vrot.slane %v5083, 5
        %v5086 = vsel %vm339, %v5081, %v5085
        %v5088 = vshrl.u32 %v5021, 16
        %v5090 = vrot.slane %v5088, 4
        %v5091 = vshll.u32 %v5021, 16
        %v5093 = vrot.slane %v5091, 5
        %v5094 = vor.u32 %v5090, %v5093
        %v5095 = vrot.slane %v5094, 4
        %v5097 = vshll.u32 %v5022, 16
        %v5099 = vrot.slane %v5097, 5
        %v5100 = vsel %vm339, %v5095, %v5099
        %v5101 = vshrl.u32 %v5022, 16
        %v5103 = vrot.slane %v5101, 4
        %v5104 = vor.u32 %v5103, %v5099
        %v5105 = vrot.slane %v5104, 4
        %v5107 = vshll.u32 %v5023, 16
        %v5109 = vrot.slane %v5107, 5
        %v5110 = vsel %vm339, %v5105, %v5109
        %v5112 = vshrl.u32 %v5024, 16
        %v5114 = vrot.slane %v5112, 4
        %v5115 = vshll.u32 %v5024, 16
        %v5117 = vrot.slane %v5115, 5
        %v5118 = vor.u32 %v5114, %v5117
        %v5119 = vrot.slane %v5118, 4
        %v5121 = vshll.u32 %v5025, 16
        %v5123 = vrot.slane %v5121, 5
        %v5124 = vsel %vm339, %v5119, %v5123
        %v5125 = vshrl.u32 %v5025, 16
        %v5127 = vrot.slane %v5125, 4
        %v5128 = vor.u32 %v5127, %v5123
        %v5129 = vrot.slane %v5128, 4
        %v5131 = vshll.u32 %v5026, 16
        %v5133 = vrot.slane %v5131, 5
        %v5134 = vsel %vm339, %v5129, %v5133
        %v5136 = vshrl.u32 %v5027, 16
        %v5138 = vrot.slane %v5136, 4
        %v5139 = vshll.u32 %v5027, 16
        %v5141 = vrot.slane %v5139, 5
        %v5142 = vor.u32 %v5138, %v5141
        %v5143 = vrot.slane %v5142, 4
        %v5145 = vshll.u32 %v5028, 16
        %v5147 = vrot.slane %v5145, 5
        %v5148 = vsel %vm339, %v5143, %v5147
        %v5149 = vshrl.u32 %v5028, 16
        %v5151 = vrot.slane %v5149, 4
        %v5152 = vor.u32 %v5151, %v5147
        %v5153 = vrot.slane %v5152, 4
        %v5155 = vshll.u32 %v5029, 16
        %v5157 = vrot.slane %v5155, 5
        %v5158 = vsel %vm339, %v5153, %v5157
        %v5160 = vshrl.u32 %v5030, 16
        %v5162 = vrot.slane %v5160, 4
        %v5163 = vshll.u32 %v5030, 16
        %v5165 = vrot.slane %v5163, 5
        %v5166 = vor.u32 %v5162, %v5165
        %v5167 = vrot.slane %v5166, 4
        %v5169 = vshll.u32 %v5031, 16
        %v5171 = vrot.slane %v5169, 5
        %v5172 = vsel %vm339, %v5167, %v5171
        %v5173 = vshrl.u32 %v5031, 16
        %v5175 = vrot.slane %v5173, 4
        %v5176 = vor.u32 %v5175, %v5171
        %v5177 = vrot.slane %v5176, 4
        %v5179 = vshll.u32 %v5032, 16
        %v5181 = vrot.slane %v5179, 5
        %v5182 = vsel %vm339, %v5177, %v5181
        %v5184 = vshrl.u32 %v5033, 16
        %v5186 = vrot.slane %v5184, 4
        %v5187 = vshll.u32 %v5033, 16
        %v5189 = vrot.slane %v5187, 5
        %v5190 = vor.u32 %v5186, %v5189
        %v5191 = vrot.slane %v5190, 4
        %v5193 = vshll.u32 %v5034, 16
        %v5195 = vrot.slane %v5193, 5
        %v5196 = vsel %vm339, %v5191, %v5195
        %v5197 = vshrl.u32 %v5034, 16
        %v5199 = vrot.slane %v5197, 4
        %v5200 = vor.u32 %v5199, %v5195
        %v5201 = vrot.slane %v5200, 4
        %v5203 = vshll.u32 %v5035, 16
        %v5205 = vrot.slane %v5203, 5
        %v5206 = vsel %vm339, %v5201, %v5205
        %v5208 = vshrl.u32 %v5036, 16
        %v5210 = vrot.slane %v5208, 4
        %v5211 = vshll.u32 %v5036, 16
        %v5213 = vrot.slane %v5211, 5
        %v5214 = vor.u32 %v5210, %v5213
        %v5215 = vrot.slane %v5214, 4
        %v5217 = vshll.u32 %v5037, 16
        %v5219 = vrot.slane %v5217, 5
        %v5220 = vsel %vm339, %v5215, %v5219
        %v5221 = vshrl.u32 %v5037, 16
        %v5223 = vrot.slane %v5221, 4
        %v5224 = vor.u32 %v5223, %v5219
        %v5225 = vrot.slane %v5224, 4
        %v5227 = vshll.u32 %v5038, 16
        %v5229 = vrot.slane %v5227, 5
        %v5230 = vsel %vm339, %v5225, %v5229
        %v5231 = vunpack.c.l.b16 %v5052
        %v5232 = vunpack.c.l.b16 %v5062
        %v5233 = vunpack.c.l.b16 %v5076
        %v5234 = vunpack.c.l.b16 %v5086
        %v5235 = vunpack.c.l.b16 %v5100
        %v5236 = vunpack.c.l.b16 %v5110
        %v5237 = vunpack.c.l.b16 %v5124
        %v5238 = vunpack.c.l.b16 %v5134
        %v5239 = vunpack.c.l.b16 %v5148
        %v5240 = vunpack.c.l.b16 %v5158
        %v5241 = vunpack.c.l.b16 %v5172
        %v5242 = vunpack.c.l.b16 %v5182
        %v5243 = vunpack.c.l.b16 %v5196
        %v5244 = vunpack.c.l.b16 %v5206
        %v5245 = vunpack.c.l.b16 %v5220
        %v5246 = vunpack.c.l.b16 %v5230
        %v5247 = vpack.c.b16 %v5232, %v5231
        %v5248 = vpack.c.b16 %v5234, %v5233
        %v5249 = vpack.c.b16 %v5236, %v5235
        %v5250 = vpack.c.b16 %v5238, %v5237
        %v5251 = vpack.c.b16 %v5240, %v5239
        %v5252 = vpack.c.b16 %v5242, %v5241
        %v5253 = vpack.c.b16 %v5244, %v5243
        %v5254 = vpack.c.b16 %v5246, %v5245
        %5263 = vst [vmem:[#allocation2 + $0x20] sm:$0xff] %v5247
        %5264 = vst [vmem:[#allocation2 + $0x68] sm:$0xff] %v5248
        %5265 = vst [vmem:[#allocation2 + $0xb0] sm:$0xff] %v5249
        %5266 = vst [vmem:[#allocation2 + $0xf8] sm:$0xff] %v5250
        %5267 = vst [vmem:[#allocation2 + $0x140] sm:$0xff] %v5251
        %5268 = vst [vmem:[#allocation2 + $0x188] sm:$0xff] %v5252
        %5269 = vst [vmem:[#allocation2 + $0x1d0] sm:$0xff] %v5253
        %5270 = vst [vmem:[#allocation2 + $0x218] sm:$0xff] %v5254
        %v5271 = vld [vmem:[%s4942] sm:$0xe]
        %v5272 = vld [vmem:[%s4942 + $0x4] sm:$0xf]
        %v5273 = vld [vmem:[%s4942 + $0x8] sm:$0x1]
        %v5274 = vld [vmem:[%s4942 + $0xc] sm:$0xe]
        %v5275 = vld [vmem:[%s4942 + $0x10] sm:$0xf]
        %v5276 = vld [vmem:[%s4942 + $0x14] sm:$0x1]
        %v5277 = vld [vmem:[%s4942 + $0x18] sm:$0xe]
        %v5278 = vld [vmem:[%s4942 + $0x1c] sm:$0xf]
        %v5279 = vld [vmem:[%s4942 + $0x20] sm:$0x1]
        %v5280 = vld [vmem:[%s4942 + $0x24] sm:$0xe]
        %v5281 = vld [vmem:[%s4942 + $0x28] sm:$0xf]
        %v5282 = vld [vmem:[%s4942 + $0x2c] sm:$0x1]
        %v5283 = vld [vmem:[%s4942 + $0x30] sm:$0xe]
        %v5284 = vld [vmem:[%s4942 + $0x34] sm:$0xf]
        %v5285 = vld [vmem:[%s4942 + $0x38] sm:$0x1]
        %v5286 = vld [vmem:[%s4942 + $0x3c] sm:$0xe]
        %v5287 = vld [vmem:[%s4942 + $0x40] sm:$0xf]
        %v5288 = vld [vmem:[%s4942 + $0x44] sm:$0x1]
        %v5289 = vld [vmem:[%s4942 + $0x48] sm:$0xe]
        %v5290 = vld [vmem:[%s4942 + $0x4c] sm:$0xf]
        %v5291 = vld [vmem:[%s4942 + $0x50] sm:$0x1]
        %v5292 = vld [vmem:[%s4942 + $0x54] sm:$0xe]
        %v5293 = vld [vmem:[%s4942 + $0x58] sm:$0xf]
        %v5294 = vld [vmem:[%s4942 + $0x5c] sm:$0x1]
        %v5319 = vrot.slane %v5271, 5
        %v5320 = vrot.slane %v5319, 4
        %v5321 = vrot.slane %v5272, 5
        %v5322 = vsel %vm1287, %v5320, %v5321
        %v5323 = vrot.slane %v5321, 4
        %v5324 = vrot.slane %v5273, 5
        %v5325 = vsel %vm1287, %v5323, %v5324
        %v5326 = vrot.slane %v5274, 5
        %v5327 = vrot.slane %v5326, 4
        %v5328 = vrot.slane %v5275, 5
        %v5329 = vsel %vm1287, %v5327, %v5328
        %v5330 = vrot.slane %v5328, 4
        %v5331 = vrot.slane %v5276, 5
        %v5332 = vsel %vm1287, %v5330, %v5331
        %v5333 = vrot.slane %v5277, 5
        %v5334 = vrot.slane %v5333, 4
        %v5335 = vrot.slane %v5278, 5
        %v5336 = vsel %vm1287, %v5334, %v5335
        %v5337 = vrot.slane %v5335, 4
        %v5338 = vrot.slane %v5279, 5
        %v5339 = vsel %vm1287, %v5337, %v5338
        %v5340 = vrot.slane %v5280, 5
        %v5341 = vrot.slane %v5340, 4
        %v5342 = vrot.slane %v5281, 5
        %v5343 = vsel %vm1287, %v5341, %v5342
        %v5344 = vrot.slane %v5342, 4
        %v5345 = vrot.slane %v5282, 5
        %v5346 = vsel %vm1287, %v5344, %v5345
        %v5347 = vrot.slane %v5283, 5
        %v5348 = vrot.slane %v5347, 4
        %v5349 = vrot.slane %v5284, 5
        %v5350 = vsel %vm1287, %v5348, %v5349
        %v5351 = vrot.slane %v5349, 4
        %v5352 = vrot.slane %v5285, 5
        %v5353 = vsel %vm1287, %v5351, %v5352
        %v5354 = vrot.slane %v5286, 5
        %v5355 = vrot.slane %v5354, 4
        %v5356 = vrot.slane %v5287, 5
        %v5357 = vsel %vm1287, %v5355, %v5356
        %v5358 = vrot.slane %v5356, 4
        %v5359 = vrot.slane %v5288, 5
        %v5360 = vsel %vm1287, %v5358, %v5359
        %v5361 = vrot.slane %v5289, 5
        %v5362 = vrot.slane %v5361, 4
        %v5363 = vrot.slane %v5290, 5
        %v5364 = vsel %vm1287, %v5362, %v5363
        %v5365 = vrot.slane %v5363, 4
        %v5366 = vrot.slane %v5291, 5
        %v5367 = vsel %vm1287, %v5365, %v5366
        %v5368 = vrot.slane %v5292, 5
        %v5369 = vrot.slane %v5368, 4
        %v5370 = vrot.slane %v5293, 5
        %v5371 = vsel %vm1287, %v5369, %v5370
        %v5372 = vrot.slane %v5370, 4
        %v5373 = vrot.slane %v5294, 5
        %v5374 = vsel %vm1287, %v5372, %v5373
        %v5375 = vunpack.c.l.b16 %v5322
        %v5376 = vunpack.c.l.b16 %v5325
        %v5377 = vunpack.c.l.b16 %v5329
        %v5378 = vunpack.c.l.b16 %v5332
        %v5379 = vunpack.c.l.b16 %v5336
        %v5380 = vunpack.c.l.b16 %v5339
        %v5381 = vunpack.c.l.b16 %v5343
        %v5382 = vunpack.c.l.b16 %v5346
        %v5383 = vunpack.c.l.b16 %v5350
        %v5384 = vunpack.c.l.b16 %v5353
        %v5385 = vunpack.c.l.b16 %v5357
        %v5386 = vunpack.c.l.b16 %v5360
        %v5387 = vunpack.c.l.b16 %v5364
        %v5388 = vunpack.c.l.b16 %v5367
        %v5389 = vunpack.c.l.b16 %v5371
        %v5390 = vunpack.c.l.b16 %v5374
        %v5391 = vpack.c.b16 %v5376, %v5375
        %v5392 = vpack.c.b16 %v5378, %v5377
        %v5393 = vpack.c.b16 %v5380, %v5379
        %v5394 = vpack.c.b16 %v5382, %v5381
        %v5395 = vpack.c.b16 %v5384, %v5383
        %v5396 = vpack.c.b16 %v5386, %v5385
        %v5397 = vpack.c.b16 %v5388, %v5387
        %v5398 = vpack.c.b16 %v5390, %v5389
        %5407 = vst [vmem:[#allocation2 + $0x28] sm:$0xff] %v5391
        %5408 = vst [vmem:[#allocation2 + $0x70] sm:$0xff] %v5392
        %5409 = vst [vmem:[#allocation2 + $0xb8] sm:$0xff] %v5393
        %5410 = vst [vmem:[#allocation2 + $0x100] sm:$0xff] %v5394
        %5411 = vst [vmem:[#allocation2 + $0x148] sm:$0xff] %v5395
        %5412 = vst [vmem:[#allocation2 + $0x190] sm:$0xff] %v5396
        %5413 = vst [vmem:[#allocation2 + $0x1d8] sm:$0xff] %v5397
        %5414 = vst [vmem:[#allocation2 + $0x220] sm:$0xff] %v5398
        %s5415 = scalar_lea.vmem [#allocation3], 24
        %v5416 = vld [vmem:[%s5415] sm:$0xf]
        %v5417 = vld [vmem:[%s5415 + $0x4] sm:$0xf]
        %v5418 = vld [vmem:[%s5415 + $0xc] sm:$0xf]
        %v5419 = vld [vmem:[%s5415 + $0x10] sm:$0xf]
        %v5420 = vld [vmem:[%s5415 + $0x18] sm:$0xf]
        %v5421 = vld [vmem:[%s5415 + $0x1c] sm:$0xf]
        %v5422 = vld [vmem:[%s5415 + $0x24] sm:$0xf]
        %v5423 = vld [vmem:[%s5415 + $0x28] sm:$0xf]
        %v5424 = vld [vmem:[%s5415 + $0x30] sm:$0xf]
        %v5425 = vld [vmem:[%s5415 + $0x34] sm:$0xf]
        %v5426 = vld [vmem:[%s5415 + $0x3c] sm:$0xf]
        %v5427 = vld [vmem:[%s5415 + $0x40] sm:$0xf]
        %v5428 = vld [vmem:[%s5415 + $0x48] sm:$0xf]
        %v5429 = vld [vmem:[%s5415 + $0x4c] sm:$0xf]
        %v5430 = vld [vmem:[%s5415 + $0x54] sm:$0xf]
        %v5431 = vld [vmem:[%s5415 + $0x58] sm:$0xf]
        %v5448 = vunpack.c.l.b16 %v5416
        %v5449 = vunpack.c.l.b16 %v5417
        %v5450 = vunpack.c.l.b16 %v5418
        %v5451 = vunpack.c.l.b16 %v5419
        %v5452 = vunpack.c.l.b16 %v5420
        %v5453 = vunpack.c.l.b16 %v5421
        %v5454 = vunpack.c.l.b16 %v5422
        %v5455 = vunpack.c.l.b16 %v5423
        %v5456 = vunpack.c.l.b16 %v5424
        %v5457 = vunpack.c.l.b16 %v5425
        %v5458 = vunpack.c.l.b16 %v5426
        %v5459 = vunpack.c.l.b16 %v5427
        %v5460 = vunpack.c.l.b16 %v5428
        %v5461 = vunpack.c.l.b16 %v5429
        %v5462 = vunpack.c.l.b16 %v5430
        %v5463 = vunpack.c.l.b16 %v5431
        %v5464 = vpack.c.b16 %v5449, %v5448
        %v5465 = vpack.c.b16 %v5451, %v5450
        %v5466 = vpack.c.b16 %v5453, %v5452
        %v5467 = vpack.c.b16 %v5455, %v5454
        %v5468 = vpack.c.b16 %v5457, %v5456
        %v5469 = vpack.c.b16 %v5459, %v5458
        %v5470 = vpack.c.b16 %v5461, %v5460
        %v5471 = vpack.c.b16 %v5463, %v5462
        %5480 = vst [vmem:[#allocation2 + $0x30] sm:$0xff] %v5464
        %5481 = vst [vmem:[#allocation2 + $0x78] sm:$0xff] %v5465
        %5482 = vst [vmem:[#allocation2 + $0xc0] sm:$0xff] %v5466
        %5483 = vst [vmem:[#allocation2 + $0x108] sm:$0xff] %v5467
        %5484 = vst [vmem:[#allocation2 + $0x150] sm:$0xff] %v5468
        %5485 = vst [vmem:[#allocation2 + $0x198] sm:$0xff] %v5469
        %5486 = vst [vmem:[#allocation2 + $0x1e0] sm:$0xff] %v5470
        %5487 = vst [vmem:[#allocation2 + $0x228] sm:$0xff] %v5471
        %v5488 = vld [vmem:[%s5415] sm:$0xf]
        %v5489 = vld [vmem:[%s5415 + $0x4] sm:$0xf]
        %v5490 = vld [vmem:[%s5415 + $0x8] sm:$0x1]
        %v5491 = vld [vmem:[%s5415 + $0xc] sm:$0xf]
        %v5492 = vld [vmem:[%s5415 + $0x10] sm:$0xf]
        %v5493 = vld [vmem:[%s5415 + $0x14] sm:$0x1]
        %v5494 = vld [vmem:[%s5415 + $0x18] sm:$0xf]
        %v5495 = vld [vmem:[%s5415 + $0x1c] sm:$0xf]
        %v5496 = vld [vmem:[%s5415 + $0x20] sm:$0x1]
        %v5497 = vld [vmem:[%s5415 + $0x24] sm:$0xf]
        %v5498 = vld [vmem:[%s5415 + $0x28] sm:$0xf]
        %v5499 = vld [vmem:[%s5415 + $0x2c] sm:$0x1]
        %v5500 = vld [vmem:[%s5415 + $0x30] sm:$0xf]
        %v5501 = vld [vmem:[%s5415 + $0x34] sm:$0xf]
        %v5502 = vld [vmem:[%s5415 + $0x38] sm:$0x1]
        %v5503 = vld [vmem:[%s5415 + $0x3c] sm:$0xf]
        %v5504 = vld [vmem:[%s5415 + $0x40] sm:$0xf]
        %v5505 = vld [vmem:[%s5415 + $0x44] sm:$0x1]
        %v5506 = vld [vmem:[%s5415 + $0x48] sm:$0xf]
        %v5507 = vld [vmem:[%s5415 + $0x4c] sm:$0xf]
        %v5508 = vld [vmem:[%s5415 + $0x50] sm:$0x1]
        %v5509 = vld [vmem:[%s5415 + $0x54] sm:$0xf]
        %v5510 = vld [vmem:[%s5415 + $0x58] sm:$0xf]
        %v5511 = vld [vmem:[%s5415 + $0x5c] sm:$0x1]
        %v5513 = vshrl.u32 %v5488, 16
        %v5515 = vrot.slane %v5513, 4
        %v5516 = vshll.u32 %v5488, 16
        %v5518 = vrot.slane %v5516, 5
        %v5519 = vor.u32 %v5515, %v5518
        %v5520 = vrot.slane %v5519, 4
        %v5522 = vshll.u32 %v5489, 16
        %v5524 = vrot.slane %v5522, 5
        %v5525 = vsel %vm339, %v5520, %v5524
        %v5526 = vshrl.u32 %v5489, 16
        %v5528 = vrot.slane %v5526, 4
        %v5529 = vor.u32 %v5528, %v5524
        %v5530 = vrot.slane %v5529, 4
        %v5532 = vshll.u32 %v5490, 16
        %v5534 = vrot.slane %v5532, 5
        %v5535 = vsel %vm339, %v5530, %v5534
        %v5537 = vshrl.u32 %v5491, 16
        %v5539 = vrot.slane %v5537, 4
        %v5540 = vshll.u32 %v5491, 16
        %v5542 = vrot.slane %v5540, 5
        %v5543 = vor.u32 %v5539, %v5542
        %v5544 = vrot.slane %v5543, 4
        %v5546 = vshll.u32 %v5492, 16
        %v5548 = vrot.slane %v5546, 5
        %v5549 = vsel %vm339, %v5544, %v5548
        %v5550 = vshrl.u32 %v5492, 16
        %v5552 = vrot.slane %v5550, 4
        %v5553 = vor.u32 %v5552, %v5548
        %v5554 = vrot.slane %v5553, 4
        %v5556 = vshll.u32 %v5493, 16
        %v5558 = vrot.slane %v5556, 5
        %v5559 = vsel %vm339, %v5554, %v5558
        %v5561 = vshrl.u32 %v5494, 16
        %v5563 = vrot.slane %v5561, 4
        %v5564 = vshll.u32 %v5494, 16
        %v5566 = vrot.slane %v5564, 5
        %v5567 = vor.u32 %v5563, %v5566
        %v5568 = vrot.slane %v5567, 4
        %v5570 = vshll.u32 %v5495, 16
        %v5572 = vrot.slane %v5570, 5
        %v5573 = vsel %vm339, %v5568, %v5572
        %v5574 = vshrl.u32 %v5495, 16
        %v5576 = vrot.slane %v5574, 4
        %v5577 = vor.u32 %v5576, %v5572
        %v5578 = vrot.slane %v5577, 4
        %v5580 = vshll.u32 %v5496, 16
        %v5582 = vrot.slane %v5580, 5
        %v5583 = vsel %vm339, %v5578, %v5582
        %v5585 = vshrl.u32 %v5497, 16
        %v5587 = vrot.slane %v5585, 4
        %v5588 = vshll.u32 %v5497, 16
        %v5590 = vrot.slane %v5588, 5
        %v5591 = vor.u32 %v5587, %v5590
        %v5592 = vrot.slane %v5591, 4
        %v5594 = vshll.u32 %v5498, 16
        %v5596 = vrot.slane %v5594, 5
        %v5597 = vsel %vm339, %v5592, %v5596
        %v5598 = vshrl.u32 %v5498, 16
        %v5600 = vrot.slane %v5598, 4
        %v5601 = vor.u32 %v5600, %v5596
        %v5602 = vrot.slane %v5601, 4
        %v5604 = vshll.u32 %v5499, 16
        %v5606 = vrot.slane %v5604, 5
        %v5607 = vsel %vm339, %v5602, %v5606
        %v5609 = vshrl.u32 %v5500, 16
        %v5611 = vrot.slane %v5609, 4
        %v5612 = vshll.u32 %v5500, 16
        %v5614 = vrot.slane %v5612, 5
        %v5615 = vor.u32 %v5611, %v5614
        %v5616 = vrot.slane %v5615, 4
        %v5618 = vshll.u32 %v5501, 16
        %v5620 = vrot.slane %v5618, 5
        %v5621 = vsel %vm339, %v5616, %v5620
        %v5622 = vshrl.u32 %v5501, 16
        %v5624 = vrot.slane %v5622, 4
        %v5625 = vor.u32 %v5624, %v5620
        %v5626 = vrot.slane %v5625, 4
        %v5628 = vshll.u32 %v5502, 16
        %v5630 = vrot.slane %v5628, 5
        %v5631 = vsel %vm339, %v5626, %v5630
        %v5633 = vshrl.u32 %v5503, 16
        %v5635 = vrot.slane %v5633, 4
        %v5636 = vshll.u32 %v5503, 16
        %v5638 = vrot.slane %v5636, 5
        %v5639 = vor.u32 %v5635, %v5638
        %v5640 = vrot.slane %v5639, 4
        %v5642 = vshll.u32 %v5504, 16
        %v5644 = vrot.slane %v5642, 5
        %v5645 = vsel %vm339, %v5640, %v5644
        %v5646 = vshrl.u32 %v5504, 16
        %v5648 = vrot.slane %v5646, 4
        %v5649 = vor.u32 %v5648, %v5644
        %v5650 = vrot.slane %v5649, 4
        %v5652 = vshll.u32 %v5505, 16
        %v5654 = vrot.slane %v5652, 5
        %v5655 = vsel %vm339, %v5650, %v5654
        %v5657 = vshrl.u32 %v5506, 16
        %v5659 = vrot.slane %v5657, 4
        %v5660 = vshll.u32 %v5506, 16
        %v5662 = vrot.slane %v5660, 5
        %v5663 = vor.u32 %v5659, %v5662
        %v5664 = vrot.slane %v5663, 4
        %v5666 = vshll.u32 %v5507, 16
        %v5668 = vrot.slane %v5666, 5
        %v5669 = vsel %vm339, %v5664, %v5668
        %v5670 = vshrl.u32 %v5507, 16
        %v5672 = vrot.slane %v5670, 4
        %v5673 = vor.u32 %v5672, %v5668
        %v5674 = vrot.slane %v5673, 4
        %v5676 = vshll.u32 %v5508, 16
        %v5678 = vrot.slane %v5676, 5
        %v5679 = vsel %vm339, %v5674, %v5678
        %v5681 = vshrl.u32 %v5509, 16
        %v5683 = vrot.slane %v5681, 4
        %v5684 = vshll.u32 %v5509, 16
        %v5686 = vrot.slane %v5684, 5
        %v5687 = vor.u32 %v5683, %v5686
        %v5688 = vrot.slane %v5687, 4
        %v5690 = vshll.u32 %v5510, 16
        %v5692 = vrot.slane %v5690, 5
        %v5693 = vsel %vm339, %v5688, %v5692
        %v5694 = vshrl.u32 %v5510, 16
        %v5696 = vrot.slane %v5694, 4
        %v5697 = vor.u32 %v5696, %v5692
        %v5698 = vrot.slane %v5697, 4
        %v5700 = vshll.u32 %v5511, 16
        %v5702 = vrot.slane %v5700, 5
        %v5703 = vsel %vm339, %v5698, %v5702
        %v5704 = vunpack.c.l.b16 %v5525
        %v5705 = vunpack.c.l.b16 %v5535
        %v5706 = vunpack.c.l.b16 %v5549
        %v5707 = vunpack.c.l.b16 %v5559
        %v5708 = vunpack.c.l.b16 %v5573
        %v5709 = vunpack.c.l.b16 %v5583
        %v5710 = vunpack.c.l.b16 %v5597
        %v5711 = vunpack.c.l.b16 %v5607
        %v5712 = vunpack.c.l.b16 %v5621
        %v5713 = vunpack.c.l.b16 %v5631
        %v5714 = vunpack.c.l.b16 %v5645
        %v5715 = vunpack.c.l.b16 %v5655
        %v5716 = vunpack.c.l.b16 %v5669
        %v5717 = vunpack.c.l.b16 %v5679
        %v5718 = vunpack.c.l.b16 %v5693
        %v5719 = vunpack.c.l.b16 %v5703
        %v5720 = vpack.c.b16 %v5705, %v5704
        %v5721 = vpack.c.b16 %v5707, %v5706
        %v5722 = vpack.c.b16 %v5709, %v5708
        %v5723 = vpack.c.b16 %v5711, %v5710
        %v5724 = vpack.c.b16 %v5713, %v5712
        %v5725 = vpack.c.b16 %v5715, %v5714
        %v5726 = vpack.c.b16 %v5717, %v5716
        %v5727 = vpack.c.b16 %v5719, %v5718
        %5736 = vst [vmem:[#allocation2 + $0x38] sm:$0xff] %v5720
        %5737 = vst [vmem:[#allocation2 + $0x80] sm:$0xff] %v5721
        %5738 = vst [vmem:[#allocation2 + $0xc8] sm:$0xff] %v5722
        %5739 = vst [vmem:[#allocation2 + $0x110] sm:$0xff] %v5723
        %5740 = vst [vmem:[#allocation2 + $0x158] sm:$0xff] %v5724
        %5741 = vst [vmem:[#allocation2 + $0x1a0] sm:$0xff] %v5725
        %5742 = vst [vmem:[#allocation2 + $0x1e8] sm:$0xff] %v5726
        %5743 = vst [vmem:[#allocation2 + $0x230] sm:$0xff] %v5727
        %v5744 = vld [vmem:[%s5415] sm:$0xe]
        %v5745 = vld [vmem:[%s5415 + $0x4] sm:$0xf]
        %v5746 = vld [vmem:[%s5415 + $0x8] sm:$0x1]
        %v5747 = vld [vmem:[%s5415 + $0xc] sm:$0xe]
        %v5748 = vld [vmem:[%s5415 + $0x10] sm:$0xf]
        %v5749 = vld [vmem:[%s5415 + $0x14] sm:$0x1]
        %v5750 = vld [vmem:[%s5415 + $0x18] sm:$0xe]
        %v5751 = vld [vmem:[%s5415 + $0x1c] sm:$0xf]
        %v5752 = vld [vmem:[%s5415 + $0x20] sm:$0x1]
        %v5753 = vld [vmem:[%s5415 + $0x24] sm:$0xe]
        %v5754 = vld [vmem:[%s5415 + $0x28] sm:$0xf]
        %v5755 = vld [vmem:[%s5415 + $0x2c] sm:$0x1]
        %v5756 = vld [vmem:[%s5415 + $0x30] sm:$0xe]
        %v5757 = vld [vmem:[%s5415 + $0x34] sm:$0xf]
        %v5758 = vld [vmem:[%s5415 + $0x38] sm:$0x1]
        %v5759 = vld [vmem:[%s5415 + $0x3c] sm:$0xe]
        %v5760 = vld [vmem:[%s5415 + $0x40] sm:$0xf]
        %v5761 = vld [vmem:[%s5415 + $0x44] sm:$0x1]
        %v5762 = vld [vmem:[%s5415 + $0x48] sm:$0xe]
        %v5763 = vld [vmem:[%s5415 + $0x4c] sm:$0xf]
        %v5764 = vld [vmem:[%s5415 + $0x50] sm:$0x1]
        %v5765 = vld [vmem:[%s5415 + $0x54] sm:$0xe]
        %v5766 = vld [vmem:[%s5415 + $0x58] sm:$0xf]
        %v5767 = vld [vmem:[%s5415 + $0x5c] sm:$0x1]
        %v5792 = vrot.slane %v5744, 5
        %v5793 = vrot.slane %v5792, 4
        %v5794 = vrot.slane %v5745, 5
        %v5795 = vsel %vm1287, %v5793, %v5794
        %v5796 = vrot.slane %v5794, 4
        %v5797 = vrot.slane %v5746, 5
        %v5798 = vsel %vm1287, %v5796, %v5797
        %v5799 = vrot.slane %v5747, 5
        %v5800 = vrot.slane %v5799, 4
        %v5801 = vrot.slane %v5748, 5
        %v5802 = vsel %vm1287, %v5800, %v5801
        %v5803 = vrot.slane %v5801, 4
        %v5804 = vrot.slane %v5749, 5
        %v5805 = vsel %vm1287, %v5803, %v5804
        %v5806 = vrot.slane %v5750, 5
        %v5807 = vrot.slane %v5806, 4
        %v5808 = vrot.slane %v5751, 5
        %v5809 = vsel %vm1287, %v5807, %v5808
        %v5810 = vrot.slane %v5808, 4
        %v5811 = vrot.slane %v5752, 5
        %v5812 = vsel %vm1287, %v5810, %v5811
        %v5813 = vrot.slane %v5753, 5
        %v5814 = vrot.slane %v5813, 4
        %v5815 = vrot.slane %v5754, 5
        %v5816 = vsel %vm1287, %v5814, %v5815
        %v5817 = vrot.slane %v5815, 4
        %v5818 = vrot.slane %v5755, 5
        %v5819 = vsel %vm1287, %v5817, %v5818
        %v5820 = vrot.slane %v5756, 5
        %v5821 = vrot.slane %v5820, 4
        %v5822 = vrot.slane %v5757, 5
        %v5823 = vsel %vm1287, %v5821, %v5822
        %v5824 = vrot.slane %v5822, 4
        %v5825 = vrot.slane %v5758, 5
        %v5826 = vsel %vm1287, %v5824, %v5825
        %v5827 = vrot.slane %v5759, 5
        %v5828 = vrot.slane %v5827, 4
        %v5829 = vrot.slane %v5760, 5
        %v5830 = vsel %vm1287, %v5828, %v5829
        %v5831 = vrot.slane %v5829, 4
        %v5832 = vrot.slane %v5761, 5
        %v5833 = vsel %vm1287, %v5831, %v5832
        %v5834 = vrot.slane %v5762, 5
        %v5835 = vrot.slane %v5834, 4
        %v5836 = vrot.slane %v5763, 5
        %v5837 = vsel %vm1287, %v5835, %v5836
        %v5838 = vrot.slane %v5836, 4
        %v5839 = vrot.slane %v5764, 5
        %v5840 = vsel %vm1287, %v5838, %v5839
        %v5841 = vrot.slane %v5765, 5
        %v5842 = vrot.slane %v5841, 4
        %v5843 = vrot.slane %v5766, 5
        %v5844 = vsel %vm1287, %v5842, %v5843
        %v5845 = vrot.slane %v5843, 4
        %v5846 = vrot.slane %v5767, 5
        %v5847 = vsel %vm1287, %v5845, %v5846
        %v5848 = vunpack.c.l.b16 %v5795
        %v5849 = vunpack.c.l.b16 %v5798
        %v5850 = vunpack.c.l.b16 %v5802
        %v5851 = vunpack.c.l.b16 %v5805
        %v5852 = vunpack.c.l.b16 %v5809
        %v5853 = vunpack.c.l.b16 %v5812
        %v5854 = vunpack.c.l.b16 %v5816
        %v5855 = vunpack.c.l.b16 %v5819
        %v5856 = vunpack.c.l.b16 %v5823
        %v5857 = vunpack.c.l.b16 %v5826
        %v5858 = vunpack.c.l.b16 %v5830
        %v5859 = vunpack.c.l.b16 %v5833
        %v5860 = vunpack.c.l.b16 %v5837
        %v5861 = vunpack.c.l.b16 %v5840
        %v5862 = vunpack.c.l.b16 %v5844
        %v5863 = vunpack.c.l.b16 %v5847
        %v5864 = vpack.c.b16 %v5849, %v5848
        %v5865 = vpack.c.b16 %v5851, %v5850
        %v5866 = vpack.c.b16 %v5853, %v5852
        %v5867 = vpack.c.b16 %v5855, %v5854
        %v5868 = vpack.c.b16 %v5857, %v5856
        %v5869 = vpack.c.b16 %v5859, %v5858
        %v5870 = vpack.c.b16 %v5861, %v5860
        %v5871 = vpack.c.b16 %v5863, %v5862
        %5880 = vst [vmem:[#allocation2 + $0x40] sm:$0xff] %v5864
        %5881 = vst [vmem:[#allocation2 + $0x88] sm:$0xff] %v5865
        %5882 = vst [vmem:[#allocation2 + $0xd0] sm:$0xff] %v5866
        %5883 = vst [vmem:[#allocation2 + $0x118] sm:$0xff] %v5867
        %5884 = vst [vmem:[#allocation2 + $0x160] sm:$0xff] %v5868
        %5885 = vst [vmem:[#allocation2 + $0x1a8] sm:$0xff] %v5869
        %5886 = vst [vmem:[#allocation2 + $0x1f0] sm:$0xff] %v5870
        %5887 = vst [vmem:[#allocation2 + $0x238] sm:$0xff] %v5871
        %v5888 = vld [vmem:[#allocation2] sm:$0xff]
        %v5889 = vld [vmem:[#allocation2 + $0x8] sm:$0xff]
        %v5890 = vld [vmem:[#allocation2 + $0x10] sm:$0xff]
        %v5891 = vld [vmem:[#allocation2 + $0x18] sm:$0xff]
        %v5892 = vld [vmem:[#allocation2 + $0x20] sm:$0xff]
        %v5893 = vld [vmem:[#allocation2 + $0x28] sm:$0xff]
        %v5894 = vld [vmem:[#allocation2 + $0x30] sm:$0xff]
        %v5895 = vld [vmem:[#allocation2 + $0x38] sm:$0xff]
        %v5896 = vld [vmem:[#allocation2 + $0x40] sm:$0xff]
        %v5897 = vld [vmem:[#allocation2 + $0x48] sm:$0xff]
        %v5898 = vld [vmem:[#allocation2 + $0x50] sm:$0xff]
        %v5899 = vld [vmem:[#allocation2 + $0x58] sm:$0xff]
        %v5900 = vld [vmem:[#allocation2 + $0x60] sm:$0xff]
        %v5901 = vld [vmem:[#allocation2 + $0x68] sm:$0xff]
        %v5902 = vld [vmem:[#allocation2 + $0x70] sm:$0xff]
        %v5903 = vld [vmem:[#allocation2 + $0x78] sm:$0xff]
        %v5904 = vld [vmem:[#allocation2 + $0x80] sm:$0xff]
        %v5905 = vld [vmem:[#allocation2 + $0x88] sm:$0xff]
        %v5906 = vld [vmem:[#allocation2 + $0x90] sm:$0xff]
        %v5907 = vld [vmem:[#allocation2 + $0x98] sm:$0xff]
        %v5908 = vld [vmem:[#allocation2 + $0xa0] sm:$0xff]
        %v5909 = vld [vmem:[#allocation2 + $0xa8] sm:$0xff]
        %v5910 = vld [vmem:[#allocation2 + $0xb0] sm:$0xff]
        %v5911 = vld [vmem:[#allocation2 + $0xb8] sm:$0xff]
        %v5912 = vld [vmem:[#allocation2 + $0xc0] sm:$0xff]
        %v5913 = vld [vmem:[#allocation2 + $0xc8] sm:$0xff]
        %v5914 = vld [vmem:[#allocation2 + $0xd0] sm:$0xff]
        %v5915 = vld [vmem:[#allocation2 + $0xd8] sm:$0xff]
        %v5916 = vld [vmem:[#allocation2 + $0xe0] sm:$0xff]
        %v5917 = vld [vmem:[#allocation2 + $0xe8] sm:$0xff]
        %v5918 = vld [vmem:[#allocation2 + $0xf0] sm:$0xff]
        %v5919 = vld [vmem:[#allocation2 + $0xf8] sm:$0xff]
        %v5920 = vld [vmem:[#allocation2 + $0x100] sm:$0xff]
        %v5921 = vld [vmem:[#allocation2 + $0x108] sm:$0xff]
        %v5922 = vld [vmem:[#allocation2 + $0x110] sm:$0xff]
        %v5923 = vld [vmem:[#allocation2 + $0x118] sm:$0xff]
        %v5924 = vld [vmem:[#allocation2 + $0x120] sm:$0xff]
        %v5925 = vld [vmem:[#allocation2 + $0x128] sm:$0xff]
        %v5926 = vld [vmem:[#allocation2 + $0x130] sm:$0xff]
        %v5927 = vld [vmem:[#allocation2 + $0x138] sm:$0xff]
        %v5928 = vld [vmem:[#allocation2 + $0x140] sm:$0xff]
        %v5929 = vld [vmem:[#allocation2 + $0x148] sm:$0xff]
        %v5930 = vld [vmem:[#allocation2 + $0x150] sm:$0xff]
        %v5931 = vld [vmem:[#allocation2 + $0x158] sm:$0xff]
        %v5932 = vld [vmem:[#allocation2 + $0x160] sm:$0xff]
        %v5933 = vld [vmem:[#allocation2 + $0x168] sm:$0xff]
        %v5934 = vld [vmem:[#allocation2 + $0x170] sm:$0xff]
        %v5935 = vld [vmem:[#allocation2 + $0x178] sm:$0xff]
        %v5936 = vld [vmem:[#allocation2 + $0x180] sm:$0xff]
        %v5937 = vld [vmem:[#allocation2 + $0x188] sm:$0xff]
        %v5938 = vld [vmem:[#allocation2 + $0x190] sm:$0xff]
        %v5939 = vld [vmem:[#allocation2 + $0x198] sm:$0xff]
        %v5940 = vld [vmem:[#allocation2 + $0x1a0] sm:$0xff]
        %v5941 = vld [vmem:[#allocation2 + $0x1a8] sm:$0xff]
        %v5942 = vld [vmem:[#allocation2 + $0x1b0] sm:$0xff]
        %v5943 = vld [vmem:[#allocation2 + $0x1b8] sm:$0xff]
        %v5944 = vld [vmem:[#allocation2 + $0x1c0] sm:$0xff]
        %v5945 = vld [vmem:[#allocation2 + $0x1c8] sm:$0xff]
        %v5946 = vld [vmem:[#allocation2 + $0x1d0] sm:$0xff]
        %v5947 = vld [vmem:[#allocation2 + $0x1d8] sm:$0xff]
        %v5948 = vld [vmem:[#allocation2 + $0x1e0] sm:$0xff]
        %v5949 = vld [vmem:[#allocation2 + $0x1e8] sm:$0xff]
        %v5950 = vld [vmem:[#allocation2 + $0x1f0] sm:$0xff]
        %v5951 = vld [vmem:[#allocation2 + $0x1f8] sm:$0xff]
        %v5952 = vld [vmem:[#allocation2 + $0x200] sm:$0xff]
        %v5953 = vld [vmem:[#allocation2 + $0x208] sm:$0xff]
        %v5954 = vld [vmem:[#allocation2 + $0x210] sm:$0xff]
        %v5955 = vld [vmem:[#allocation2 + $0x218] sm:$0xff]
        %v5956 = vld [vmem:[#allocation2 + $0x220] sm:$0xff]
        %v5957 = vld [vmem:[#allocation2 + $0x228] sm:$0xff]
        %v5958 = vld [vmem:[#allocation2 + $0x230] sm:$0xff]
        %v5959 = vld [vmem:[#allocation2 + $0x238] sm:$0xff]
        %v5960 = vld [vmem:[#allocation4] sm:$0xf]
        %v5961 = vld [vmem:[#allocation4 + $0x4] sm:$0xf]
        %v5962 = vld [vmem:[#allocation4 + $0x8] sm:$0xf]
        %v5963 = vld [vmem:[#allocation4 + $0xc] sm:$0xf]
        %v5964 = vld [vmem:[#allocation4 + $0x10] sm:$0xf]
        %v5965 = vld [vmem:[#allocation4 + $0x14] sm:$0xf]
        %v5966 = vld [vmem:[#allocation4 + $0x18] sm:$0xf]
        %v5967 = vld [vmem:[#allocation4 + $0x1c] sm:$0xf]
        %v5968 = vld [vmem:[#allocation4 + $0x20] sm:$0xf]
        %v5969 = vld [vmem:[#allocation4 + $0x24] sm:$0xf]
        %v5970 = vld [vmem:[#allocation4 + $0x28] sm:$0xf]
        %v5971 = vld [vmem:[#allocation4 + $0x2c] sm:$0xf]
        %v5972 = vld [vmem:[#allocation4 + $0x30] sm:$0xf]
        %v5973 = vld [vmem:[#allocation4 + $0x34] sm:$0xf]
        %v5974 = vld [vmem:[#allocation4 + $0x38] sm:$0xf]
        %v5975 = vld [vmem:[#allocation4 + $0x3c] sm:$0xf]
        %v5976 = vld [vmem:[#allocation4 + $0x40] sm:$0xf]
        %v5977 = vld [vmem:[#allocation4 + $0x44] sm:$0xf]
        %v5978 = vld [vmem:[#allocation4 + $0x48] sm:$0xf]
        %v5979 = vld [vmem:[#allocation4 + $0x4c] sm:$0xf]
        %v5980 = vld [vmem:[#allocation4 + $0x50] sm:$0xf]
        %v5981 = vld [vmem:[#allocation4 + $0x54] sm:$0xf]
        %v5982 = vld [vmem:[#allocation4 + $0x58] sm:$0xf]
        %v5983 = vld [vmem:[#allocation4 + $0x5c] sm:$0xf]
        %v5984 = vld [vmem:[#allocation4 + $0x60] sm:$0xf]
        %v5985 = vld [vmem:[#allocation4 + $0x64] sm:$0xf]
        %v5986 = vld [vmem:[#allocation4 + $0x68] sm:$0xf]
        %v5987 = vld [vmem:[#allocation4 + $0x6c] sm:$0xf]
        %v5988 = vld [vmem:[#allocation4 + $0x70] sm:$0xf]
        %v5989 = vld [vmem:[#allocation4 + $0x74] sm:$0xf]
        %v5990 = vld [vmem:[#allocation4 + $0x78] sm:$0xf]
        %v5991 = vld [vmem:[#allocation4 + $0x7c] sm:$0xf]
        %v5992 = vld [vmem:[#allocation4 + $0x80] sm:$0xf]
        %v5993 = vld [vmem:[#allocation4 + $0x84] sm:$0xf]
        %v5994 = vld [vmem:[#allocation4 + $0x88] sm:$0xf]
        %v5995 = vld [vmem:[#allocation4 + $0x8c] sm:$0xf]
        %v5996 = vld [vmem:[#allocation4 + $0x90] sm:$0xf]
        %v5997 = vld [vmem:[#allocation4 + $0x94] sm:$0xf]
        %v5998 = vld [vmem:[#allocation4 + $0x98] sm:$0xf]
        %v5999 = vld [vmem:[#allocation4 + $0x9c] sm:$0xf]
        %v6000 = vld [vmem:[#allocation4 + $0xa0] sm:$0xf]
        %v6001 = vld [vmem:[#allocation4 + $0xa4] sm:$0xf]
        %v6002 = vld [vmem:[#allocation4 + $0xa8] sm:$0xf]
        %v6003 = vld [vmem:[#allocation4 + $0xac] sm:$0xf]
        %v6004 = vld [vmem:[#allocation4 + $0xb0] sm:$0xf]
        %v6005 = vld [vmem:[#allocation4 + $0xb4] sm:$0xf]
        %v6006 = vld [vmem:[#allocation4 + $0xb8] sm:$0xf]
        %v6007 = vld [vmem:[#allocation4 + $0xbc] sm:$0xf]
        %v6008 = vld [vmem:[#allocation4 + $0xc0] sm:$0xf]
        %v6009 = vld [vmem:[#allocation4 + $0xc4] sm:$0xf]
        %v6010 = vld [vmem:[#allocation4 + $0xc8] sm:$0xf]
        %v6011 = vld [vmem:[#allocation4 + $0xcc] sm:$0xf]
        %v6012 = vld [vmem:[#allocation4 + $0xd0] sm:$0xf]
        %v6013 = vld [vmem:[#allocation4 + $0xd4] sm:$0xf]
        %v6014 = vld [vmem:[#allocation4 + $0xd8] sm:$0xf]
        %v6015 = vld [vmem:[#allocation4 + $0xdc] sm:$0xf]
        %v6016 = vld [vmem:[#allocation4 + $0xe0] sm:$0xf]
        %v6017 = vld [vmem:[#allocation4 + $0xe4] sm:$0xf]
        %v6018 = vld [vmem:[#allocation4 + $0xe8] sm:$0xf]
        %v6019 = vld [vmem:[#allocation4 + $0xec] sm:$0xf]
        %v6020 = vld [vmem:[#allocation4 + $0xf0] sm:$0xf]
        %v6021 = vld [vmem:[#allocation4 + $0xf4] sm:$0xf]
        %v6022 = vld [vmem:[#allocation4 + $0xf8] sm:$0xf]
        %v6023 = vld [vmem:[#allocation4 + $0xfc] sm:$0xf]
        %v6024 = vld [vmem:[#allocation4 + $0x100] sm:$0xf]
        %v6025 = vld [vmem:[#allocation4 + $0x104] sm:$0xf]
        %v6026 = vld [vmem:[#allocation4 + $0x108] sm:$0xf]
        %v6027 = vld [vmem:[#allocation4 + $0x10c] sm:$0xf]
        %v6028 = vld [vmem:[#allocation4 + $0x110] sm:$0xf]
        %v6029 = vld [vmem:[#allocation4 + $0x114] sm:$0xf]
        %v6030 = vld [vmem:[#allocation4 + $0x118] sm:$0xf]
        %v6031 = vld [vmem:[#allocation4 + $0x11c] sm:$0xf]
        %v6032 = vld [vmem:[#allocation4 + $0x120] sm:$0xf]
        %v6033 = vld [vmem:[#allocation4 + $0x124] sm:$0xf]
        %v6034 = vld [vmem:[#allocation4 + $0x128] sm:$0xf]
        %v6035 = vld [vmem:[#allocation4 + $0x12c] sm:$0xf]
        %v6036 = vld [vmem:[#allocation4 + $0x130] sm:$0xf]
        %v6037 = vld [vmem:[#allocation4 + $0x134] sm:$0xf]
        %v6038 = vld [vmem:[#allocation4 + $0x138] sm:$0xf]
        %v6039 = vld [vmem:[#allocation4 + $0x13c] sm:$0xf]
        %v6040 = vld [vmem:[#allocation4 + $0x140] sm:$0xf]
        %v6041 = vld [vmem:[#allocation4 + $0x144] sm:$0xf]
        %v6042 = vld [vmem:[#allocation4 + $0x148] sm:$0xf]
        %v6043 = vld [vmem:[#allocation4 + $0x14c] sm:$0xf]
        %v6044 = vld [vmem:[#allocation4 + $0x150] sm:$0xf]
        %v6045 = vld [vmem:[#allocation4 + $0x154] sm:$0xf]
        %v6046 = vld [vmem:[#allocation4 + $0x158] sm:$0xf]
        %v6047 = vld [vmem:[#allocation4 + $0x15c] sm:$0xf]
        %v6048 = vld [vmem:[#allocation4 + $0x160] sm:$0xf]
        %v6049 = vld [vmem:[#allocation4 + $0x164] sm:$0xf]
        %v6050 = vld [vmem:[#allocation4 + $0x168] sm:$0xf]
        %v6051 = vld [vmem:[#allocation4 + $0x16c] sm:$0xf]
        %v6052 = vld [vmem:[#allocation4 + $0x170] sm:$0xf]
        %v6053 = vld [vmem:[#allocation4 + $0x174] sm:$0xf]
        %v6054 = vld [vmem:[#allocation4 + $0x178] sm:$0xf]
        %v6055 = vld [vmem:[#allocation4 + $0x17c] sm:$0xf]
        %v6056 = vld [vmem:[#allocation4 + $0x180] sm:$0xf]
        %v6057 = vld [vmem:[#allocation4 + $0x184] sm:$0xf]
        %v6058 = vld [vmem:[#allocation4 + $0x188] sm:$0xf]
        %v6059 = vld [vmem:[#allocation4 + $0x18c] sm:$0xf]
        %v6060 = vld [vmem:[#allocation4 + $0x190] sm:$0xf]
        %v6061 = vld [vmem:[#allocation4 + $0x194] sm:$0xf]
        %v6062 = vld [vmem:[#allocation4 + $0x198] sm:$0xf]
        %v6063 = vld [vmem:[#allocation4 + $0x19c] sm:$0xf]
        %v6064 = vld [vmem:[#allocation4 + $0x1a0] sm:$0xf]
        %v6065 = vld [vmem:[#allocation4 + $0x1a4] sm:$0xf]
        %v6066 = vld [vmem:[#allocation4 + $0x1a8] sm:$0xf]
        %v6067 = vld [vmem:[#allocation4 + $0x1ac] sm:$0xf]
        %v6068 = vld [vmem:[#allocation4 + $0x1b0] sm:$0xf]
        %v6069 = vld [vmem:[#allocation4 + $0x1b4] sm:$0xf]
        %v6070 = vld [vmem:[#allocation4 + $0x1b8] sm:$0xf]
        %v6071 = vld [vmem:[#allocation4 + $0x1bc] sm:$0xf]
        %v6072 = vld [vmem:[#allocation4 + $0x1c0] sm:$0xf]
        %v6073 = vld [vmem:[#allocation4 + $0x1c4] sm:$0xf]
        %v6074 = vld [vmem:[#allocation4 + $0x1c8] sm:$0xf]
        %v6075 = vld [vmem:[#allocation4 + $0x1cc] sm:$0xf]
        %v6076 = vld [vmem:[#allocation4 + $0x1d0] sm:$0xf]
        %v6077 = vld [vmem:[#allocation4 + $0x1d4] sm:$0xf]
        %v6078 = vld [vmem:[#allocation4 + $0x1d8] sm:$0xf]
        %v6079 = vld [vmem:[#allocation4 + $0x1dc] sm:$0xf]
        %v6080 = vld [vmem:[#allocation4 + $0x1e0] sm:$0xf]
        %v6081 = vld [vmem:[#allocation4 + $0x1e4] sm:$0xf]
        %v6082 = vld [vmem:[#allocation4 + $0x1e8] sm:$0xf]
        %v6083 = vld [vmem:[#allocation4 + $0x1ec] sm:$0xf]
        %v6084 = vld [vmem:[#allocation4 + $0x1f0] sm:$0xf]
        %v6085 = vld [vmem:[#allocation4 + $0x1f4] sm:$0xf]
        %v6086 = vld [vmem:[#allocation4 + $0x1f8] sm:$0xf]
        %v6087 = vld [vmem:[#allocation4 + $0x1fc] sm:$0xf]
        %v6088 = vld [vmem:[#allocation4 + $0x200] sm:$0xf]
        %v6089 = vld [vmem:[#allocation4 + $0x204] sm:$0xf]
        %v6090 = vld [vmem:[#allocation4 + $0x208] sm:$0xf]
        %v6091 = vld [vmem:[#allocation4 + $0x20c] sm:$0xf]
        %v6092 = vld [vmem:[#allocation4 + $0x210] sm:$0xf]
        %v6093 = vld [vmem:[#allocation4 + $0x214] sm:$0xf]
        %v6094 = vld [vmem:[#allocation4 + $0x218] sm:$0xf]
        %v6095 = vld [vmem:[#allocation4 + $0x21c] sm:$0xf]
        %v6096 = vld [vmem:[#allocation4 + $0x220] sm:$0xf]
        %v6097 = vld [vmem:[#allocation4 + $0x224] sm:$0xf]
        %v6098 = vld [vmem:[#allocation4 + $0x228] sm:$0xf]
        %v6099 = vld [vmem:[#allocation4 + $0x22c] sm:$0xf]
        %v6100 = vld [vmem:[#allocation4 + $0x230] sm:$0xf]
        %v6101 = vld [vmem:[#allocation4 + $0x234] sm:$0xf]
        %v6102 = vld [vmem:[#allocation4 + $0x238] sm:$0xf]
        %v6103 = vld [vmem:[#allocation4 + $0x23c] sm:$0xf]
        %v6104 = vld [vmem:[%s6] sm:$0x1]
        %v6106 = vlaneseq
        %v6107 = vshrl.u32 %v6106, 7
        %v6108 = vsub.s32 0, %v6107
        %v6109 = vrot.slane %v6104, %v6108
        %v6255 = vunpack.c.l.b16 %v5960
        %v6256 = vunpack.c.l.b16 %v5961
        %v6257 = vunpack.c.l.b16 %v5962
        %v6258 = vunpack.c.l.b16 %v5963
        %v6259 = vunpack.c.l.b16 %v5964
        %v6260 = vunpack.c.l.b16 %v5965
        %v6261 = vunpack.c.l.b16 %v5966
        %v6262 = vunpack.c.l.b16 %v5967
        %v6263 = vunpack.c.l.b16 %v5968
        %v6264 = vunpack.c.l.b16 %v5969
        %v6265 = vunpack.c.l.b16 %v5970
        %v6266 = vunpack.c.l.b16 %v5971
        %v6267 = vunpack.c.l.b16 %v5972
        %v6268 = vunpack.c.l.b16 %v5973
        %v6269 = vunpack.c.l.b16 %v5974
        %v6270 = vunpack.c.l.b16 %v5975
        %v6271 = vunpack.c.l.b16 %v5976
        %v6272 = vunpack.c.l.b16 %v5977
        %v6273 = vunpack.c.l.b16 %v5978
        %v6274 = vunpack.c.l.b16 %v5979
        %v6275 = vunpack.c.l.b16 %v5980
        %v6276 = vunpack.c.l.b16 %v5981
        %v6277 = vunpack.c.l.b16 %v5982
        %v6278 = vunpack.c.l.b16 %v5983
        %v6279 = vunpack.c.l.b16 %v5984
        %v6280 = vunpack.c.l.b16 %v5985
        %v6281 = vunpack.c.l.b16 %v5986
        %v6282 = vunpack.c.l.b16 %v5987
        %v6283 = vunpack.c.l.b16 %v5988
        %v6284 = vunpack.c.l.b16 %v5989
        %v6285 = vunpack.c.l.b16 %v5990
        %v6286 = vunpack.c.l.b16 %v5991
        %v6287 = vunpack.c.l.b16 %v5992
        %v6288 = vunpack.c.l.b16 %v5993
        %v6289 = vunpack.c.l.b16 %v5994
        %v6290 = vunpack.c.l.b16 %v5995
        %v6291 = vunpack.c.l.b16 %v5996
        %v6292 = vunpack.c.l.b16 %v5997
        %v6293 = vunpack.c.l.b16 %v5998
        %v6294 = vunpack.c.l.b16 %v5999
        %v6295 = vunpack.c.l.b16 %v6000
        %v6296 = vunpack.c.l.b16 %v6001
        %v6297 = vunpack.c.l.b16 %v6002
        %v6298 = vunpack.c.l.b16 %v6003
        %v6299 = vunpack.c.l.b16 %v6004
        %v6300 = vunpack.c.l.b16 %v6005
        %v6301 = vunpack.c.l.b16 %v6006
        %v6302 = vunpack.c.l.b16 %v6007
        %v6303 = vunpack.c.l.b16 %v6008
        %v6304 = vunpack.c.l.b16 %v6009
        %v6305 = vunpack.c.l.b16 %v6010
        %v6306 = vunpack.c.l.b16 %v6011
        %v6307 = vunpack.c.l.b16 %v6012
        %v6308 = vunpack.c.l.b16 %v6013
        %v6309 = vunpack.c.l.b16 %v6014
        %v6310 = vunpack.c.l.b16 %v6015
        %v6311 = vunpack.c.l.b16 %v6016
        %v6312 = vunpack.c.l.b16 %v6017
        %v6313 = vunpack.c.l.b16 %v6018
        %v6314 = vunpack.c.l.b16 %v6019
        %v6315 = vunpack.c.l.b16 %v6020
        %v6316 = vunpack.c.l.b16 %v6021
        %v6317 = vunpack.c.l.b16 %v6022
        %v6318 = vunpack.c.l.b16 %v6023
        %v6319 = vunpack.c.l.b16 %v6024
        %v6320 = vunpack.c.l.b16 %v6025
        %v6321 = vunpack.c.l.b16 %v6026
        %v6322 = vunpack.c.l.b16 %v6027
        %v6323 = vunpack.c.l.b16 %v6028
        %v6324 = vunpack.c.l.b16 %v6029
        %v6325 = vunpack.c.l.b16 %v6030
        %v6326 = vunpack.c.l.b16 %v6031
        %v6327 = vunpack.c.l.b16 %v6032
        %v6328 = vunpack.c.l.b16 %v6033
        %v6329 = vunpack.c.l.b16 %v6034
        %v6330 = vunpack.c.l.b16 %v6035
        %v6331 = vunpack.c.l.b16 %v6036
        %v6332 = vunpack.c.l.b16 %v6037
        %v6333 = vunpack.c.l.b16 %v6038
        %v6334 = vunpack.c.l.b16 %v6039
        %v6335 = vunpack.c.l.b16 %v6040
        %v6336 = vunpack.c.l.b16 %v6041
        %v6337 = vunpack.c.l.b16 %v6042
        %v6338 = vunpack.c.l.b16 %v6043
        %v6339 = vunpack.c.l.b16 %v6044
        %v6340 = vunpack.c.l.b16 %v6045
        %v6341 = vunpack.c.l.b16 %v6046
        %v6342 = vunpack.c.l.b16 %v6047
        %v6343 = vunpack.c.l.b16 %v6048
        %v6344 = vunpack.c.l.b16 %v6049
        %v6345 = vunpack.c.l.b16 %v6050
        %v6346 = vunpack.c.l.b16 %v6051
        %v6347 = vunpack.c.l.b16 %v6052
        %v6348 = vunpack.c.l.b16 %v6053
        %v6349 = vunpack.c.l.b16 %v6054
        %v6350 = vunpack.c.l.b16 %v6055
        %v6351 = vunpack.c.l.b16 %v6056
        %v6352 = vunpack.c.l.b16 %v6057
        %v6353 = vunpack.c.l.b16 %v6058
        %v6354 = vunpack.c.l.b16 %v6059
        %v6355 = vunpack.c.l.b16 %v6060
        %v6356 = vunpack.c.l.b16 %v6061
        %v6357 = vunpack.c.l.b16 %v6062
        %v6358 = vunpack.c.l.b16 %v6063
        %v6359 = vunpack.c.l.b16 %v6064
        %v6360 = vunpack.c.l.b16 %v6065
        %v6361 = vunpack.c.l.b16 %v6066
        %v6362 = vunpack.c.l.b16 %v6067
        %v6363 = vunpack.c.l.b16 %v6068
        %v6364 = vunpack.c.l.b16 %v6069
        %v6365 = vunpack.c.l.b16 %v6070
        %v6366 = vunpack.c.l.b16 %v6071
        %v6367 = vunpack.c.l.b16 %v6072
        %v6368 = vunpack.c.l.b16 %v6073
        %v6369 = vunpack.c.l.b16 %v6074
        %v6370 = vunpack.c.l.b16 %v6075
        %v6371 = vunpack.c.l.b16 %v6076
        %v6372 = vunpack.c.l.b16 %v6077
        %v6373 = vunpack.c.l.b16 %v6078
        %v6374 = vunpack.c.l.b16 %v6079
        %v6375 = vunpack.c.l.b16 %v6080
        %v6376 = vunpack.c.l.b16 %v6081
        %v6377 = vunpack.c.l.b16 %v6082
        %v6378 = vunpack.c.l.b16 %v6083
        %v6379 = vunpack.c.l.b16 %v6084
        %v6380 = vunpack.c.l.b16 %v6085
        %v6381 = vunpack.c.l.b16 %v6086
        %v6382 = vunpack.c.l.b16 %v6087
        %v6383 = vunpack.c.l.b16 %v6088
        %v6384 = vunpack.c.l.b16 %v6089
        %v6385 = vunpack.c.l.b16 %v6090
        %v6386 = vunpack.c.l.b16 %v6091
        %v6387 = vunpack.c.l.b16 %v6092
        %v6388 = vunpack.c.l.b16 %v6093
        %v6389 = vunpack.c.l.b16 %v6094
        %v6390 = vunpack.c.l.b16 %v6095
        %v6391 = vunpack.c.l.b16 %v6096
        %v6392 = vunpack.c.l.b16 %v6097
        %v6393 = vunpack.c.l.b16 %v6098
        %v6394 = vunpack.c.l.b16 %v6099
        %v6395 = vunpack.c.l.b16 %v6100
        %v6396 = vunpack.c.l.b16 %v6101
        %v6397 = vunpack.c.l.b16 %v6102
        %v6398 = vunpack.c.l.b16 %v6103
        %v6399 = vpack.c.b16 %v6256, %v6255
        %v6400 = vpack.c.b16 %v6258, %v6257
        %v6401 = vpack.c.b16 %v6260, %v6259
        %v6402 = vpack.c.b16 %v6262, %v6261
        %v6403 = vpack.c.b16 %v6264, %v6263
        %v6404 = vpack.c.b16 %v6266, %v6265
        %v6405 = vpack.c.b16 %v6268, %v6267
        %v6406 = vpack.c.b16 %v6270, %v6269
        %v6407 = vpack.c.b16 %v6272, %v6271
        %v6408 = vpack.c.b16 %v6274, %v6273
        %v6409 = vpack.c.b16 %v6276, %v6275
        %v6410 = vpack.c.b16 %v6278, %v6277
        %v6411 = vpack.c.b16 %v6280, %v6279
        %v6412 = vpack.c.b16 %v6282, %v6281
        %v6413 = vpack.c.b16 %v6284, %v6283
        %v6414 = vpack.c.b16 %v6286, %v6285
        %v6415 = vpack.c.b16 %v6288, %v6287
        %v6416 = vpack.c.b16 %v6290, %v6289
        %v6417 = vpack.c.b16 %v6292, %v6291
        %v6418 = vpack.c.b16 %v6294, %v6293
        %v6419 = vpack.c.b16 %v6296, %v6295
        %v6420 = vpack.c.b16 %v6298, %v6297
        %v6421 = vpack.c.b16 %v6300, %v6299
        %v6422 = vpack.c.b16 %v6302, %v6301
        %v6423 = vpack.c.b16 %v6304, %v6303
        %v6424 = vpack.c.b16 %v6306, %v6305
        %v6425 = vpack.c.b16 %v6308, %v6307
        %v6426 = vpack.c.b16 %v6310, %v6309
        %v6427 = vpack.c.b16 %v6312, %v6311
        %v6428 = vpack.c.b16 %v6314, %v6313
        %v6429 = vpack.c.b16 %v6316, %v6315
        %v6430 = vpack.c.b16 %v6318, %v6317
        %v6431 = vpack.c.b16 %v6320, %v6319
        %v6432 = vpack.c.b16 %v6322, %v6321
        %v6433 = vpack.c.b16 %v6324, %v6323
        %v6434 = vpack.c.b16 %v6326, %v6325
        %v6435 = vpack.c.b16 %v6328, %v6327
        %v6436 = vpack.c.b16 %v6330, %v6329
        %v6437 = vpack.c.b16 %v6332, %v6331
        %v6438 = vpack.c.b16 %v6334, %v6333
        %v6439 = vpack.c.b16 %v6336, %v6335
        %v6440 = vpack.c.b16 %v6338, %v6337
        %v6441 = vpack.c.b16 %v6340, %v6339
        %v6442 = vpack.c.b16 %v6342, %v6341
        %v6443 = vpack.c.b16 %v6344, %v6343
        %v6444 = vpack.c.b16 %v6346, %v6345
        %v6445 = vpack.c.b16 %v6348, %v6347
        %v6446 = vpack.c.b16 %v6350, %v6349
        %v6447 = vpack.c.b16 %v6352, %v6351
        %v6448 = vpack.c.b16 %v6354, %v6353
        %v6449 = vpack.c.b16 %v6356, %v6355
        %v6450 = vpack.c.b16 %v6358, %v6357
        %v6451 = vpack.c.b16 %v6360, %v6359
        %v6452 = vpack.c.b16 %v6362, %v6361
        %v6453 = vpack.c.b16 %v6364, %v6363
        %v6454 = vpack.c.b16 %v6366, %v6365
        %v6455 = vpack.c.b16 %v6368, %v6367
        %v6456 = vpack.c.b16 %v6370, %v6369
        %v6457 = vpack.c.b16 %v6372, %v6371
        %v6458 = vpack.c.b16 %v6374, %v6373
        %v6459 = vpack.c.b16 %v6376, %v6375
        %v6460 = vpack.c.b16 %v6378, %v6377
        %v6461 = vpack.c.b16 %v6380, %v6379
        %v6462 = vpack.c.b16 %v6382, %v6381
        %v6463 = vpack.c.b16 %v6384, %v6383
        %v6464 = vpack.c.b16 %v6386, %v6385
        %v6465 = vpack.c.b16 %v6388, %v6387
        %v6466 = vpack.c.b16 %v6390, %v6389
        %v6467 = vpack.c.b16 %v6392, %v6391
        %v6468 = vpack.c.b16 %v6394, %v6393
        %v6469 = vpack.c.b16 %v6396, %v6395
        %v6470 = vpack.c.b16 %v6398, %v6397
        %6543 = vmatprep.subr.bf16.mxu0 0
        %6544 = vmatpush1.bf16.msra.mxu0 %v6399
        %6545 = vmatprep.subr.bf16.mxu0 0
        %6546 = vmatpush1.bf16.msra.mxu0 %v6400
        %6547 = vmatprep.subr.bf16.mxu0 0
        %6548 = vmatpush1.bf16.msra.mxu0 %v6401
        %6549 = vmatprep.subr.bf16.mxu0 0
        %6550 = vmatpush1.bf16.msra.mxu0 %v6402
        %6551 = vmatprep.subr.bf16.mxu0 0
        %6552 = vmatpush1.bf16.msra.mxu0 %v6403
        %6553 = vmatprep.subr.bf16.mxu0 0
        %6554 = vmatpush1.bf16.msra.mxu0 %v6404
        %6555 = vmatprep.subr.bf16.mxu0 0
        %6556 = vmatpush1.bf16.msra.mxu0 %v6405
        %6557 = vmatprep.subr.bf16.mxu0 0
        %6558 = vmatpush1.bf16.msra.mxu0 %v6406
        %6559 = vmatprep.subr.bf16.mxu0 0
        %6560 = vmatpush1.bf16.msra.mxu0 %v6407
        %6561 = vmatprep.subr.bf16.mxu0 0
        %6562 = vmatpush1.bf16.msra.mxu0 %v6408
        %6563 = vmatprep.subr.bf16.mxu0 0
        %6564 = vmatpush1.bf16.msra.mxu0 %v6409
        %6565 = vmatprep.subr.bf16.mxu0 0
        %6566 = vmatpush1.bf16.msra.mxu0 %v6410
        %6567 = vmatprep.subr.bf16.mxu0 0
        %6568 = vmatpush1.bf16.msra.mxu0 %v6411
        %6569 = vmatprep.subr.bf16.mxu0 0
        %6570 = vmatpush1.bf16.msra.mxu0 %v6412
        %6571 = vmatprep.subr.bf16.mxu0 0
        %6572 = vmatpush1.bf16.msra.mxu0 %v6413
        %6573 = vmatprep.subr.bf16.mxu0 0
        %6574 = vmatpush1.bf16.msra.mxu0 %v6414
        %6575 = vmatprep.mubr.bf16.mxu0 %v5889
        %6576 = vmatmul.mubr.bf16.gmra.mrb[0].mxu0 %v5888
        %v6577 = vpop.f32.mrb[0].mxu0
        %v6578 = vadd.f32 %v6109, %v6577
        %v6579 = vpop.f32.mrb[0].mxu0
        %v6580 = vpop.f32.mrb[0].mxu0
        %v6581 = vadd.f32 %v6109, %v6580
        %v6582 = vpop.f32.mrb[0].mxu0
        %6583 = vmatprep.mubr.bf16.mxu0 %v5898
        %6584 = vmatmul.mubr.bf16.gmra.mrb[0].mxu0 %v5897
        %v6585 = vpop.f32.mrb[0].mxu0
        %v6586 = vadd.f32 %v6109, %v6585
        %v6587 = vpop.f32.mrb[0].mxu0
        %v6588 = vpop.f32.mrb[0].mxu0
        %v6589 = vadd.f32 %v6109, %v6588
        %v6590 = vpop.f32.mrb[0].mxu0
        %6591 = vmatprep.mubr.bf16.mxu0 %v5907
        %6592 = vmatmul.mubr.bf16.gmra.mrb[0].mxu0 %v5906
        %v6593 = vpop.f32.mrb[0].mxu0
        %v6594 = vadd.f32 %v6109, %v6593
        %v6595 = vpop.f32.mrb[0].mxu0
        %v6596 = vpop.f32.mrb[0].mxu0
        %v6597 = vadd.f32 %v6109, %v6596
        %v6598 = vpop.f32.mrb[0].mxu0
        %6599 = vmatprep.mubr.bf16.mxu0 %v5916
        %6600 = vmatmul.mubr.bf16.gmra.mrb[0].mxu0 %v5915
        %v6601 = vpop.f32.mrb[0].mxu0
        %v6602 = vadd.f32 %v6109, %v6601
        %v6603 = vpop.f32.mrb[0].mxu0
        %v6604 = vpop.f32.mrb[0].mxu0
        %v6605 = vadd.f32 %v6109, %v6604
        %v6606 = vpop.f32.mrb[0].mxu0
        %6607 = vmatprep.mubr.bf16.mxu0 %v5925
        %6608 = vmatmul.mubr.bf16.gmra.mrb[0].mxu0 %v5924
        %v6609 = vpop.f32.mrb[0].mxu0
        %v6610 = vadd.f32 %v6109, %v6609
        %v6611 = vpop.f32.mrb[0].mxu0
        %v6612 = vpop.f32.mrb[0].mxu0
        %v6613 = vadd.f32 %v6109, %v6612
        %v6614 = vpop.f32.mrb[0].mxu0
        %6615 = vmatprep.mubr.bf16.mxu0 %v5934
        %6616 = vmatmul.mubr.bf16.gmra.mrb[0].mxu0 %v5933
        %v6617 = vpop.f32.mrb[0].mxu0
        %v6618 = vadd.f32 %v6109, %v6617
        %v6619 = vpop.f32.mrb[0].mxu0
        %v6620 = vpop.f32.mrb[0].mxu0
        %v6621 = vadd.f32 %v6109, %v6620
        %v6622 = vpop.f32.mrb[0].mxu0
        %6623 = vmatprep.mubr.bf16.mxu0 %v5943
        %6624 = vmatmul.mubr.bf16.gmra.mrb[0].mxu0 %v5942
        %v6625 = vpop.f32.mrb[0].mxu0
        %v6626 = vadd.f32 %v6109, %v6625
        %v6627 = vpop.f32.mrb[0].mxu0
        %v6628 = vpop.f32.mrb[0].mxu0
        %v6629 = vadd.f32 %v6109, %v6628
        %v6630 = vpop.f32.mrb[0].mxu0
        %6631 = vmatprep.mubr.bf16.mxu0 %v5952
        %6632 = vmatmul.mubr.bf16.gmra.mrb[0].mxu0 %v5951
        %v6633 = vpop.f32.mrb[0].mxu0
        %v6634 = vadd.f32 %v6109, %v6633
        %v6635 = vpop.f32.mrb[0].mxu0
        %v6636 = vpop.f32.mrb[0].mxu0
        %v6637 = vadd.f32 %v6109, %v6636
        %v6638 = vpop.f32.mrb[0].mxu0
        %6639 = vdwg.mxu0
        %6640 = vmatprep.subr.bf16.mxu0 0
        %6641 = vmatpush1.bf16.msra.mxu0 %v6415
        %6642 = vmatprep.subr.bf16.mxu0 0
        %6643 = vmatpush1.bf16.msra.mxu0 %v6416
        %6644 = vmatprep.subr.bf16.mxu0 0
        %6645 = vmatpush1.bf16.msra.mxu0 %v6417
        %6646 = vmatprep.subr.bf16.mxu0 0
        %6647 = vmatpush1.bf16.msra.mxu0 %v6418
        %6648 = vmatprep.subr.bf16.mxu0 0
        %6649 = vmatpush1.bf16.msra.mxu0 %v6419
        %6650 = vmatprep.subr.bf16.mxu0 0
        %6651 = vmatpush1.bf16.msra.mxu0 %v6420
        %6652 = vmatprep.subr.bf16.mxu0 0
        %6653 = vmatpush1.bf16.msra.mxu0 %v6421
        %6654 = vmatprep.subr.bf16.mxu0 0
        %6655 = vmatpush1.bf16.msra.mxu0 %v6422
        %6656 = vmatprep.subr.bf16.mxu0 0
        %6657 = vmatpush1.bf16.msra.mxu0 %v6423
        %6658 = vmatprep.subr.bf16.mxu0 0
        %6659 = vmatpush1.bf16.msra.mxu0 %v6424
        %6660 = vmatprep.subr.bf16.mxu0 0
        %6661 = vmatpush1.bf16.msra.mxu0 %v6425
        %6662 = vmatprep.subr.bf16.mxu0 0
        %6663 = vmatpush1.bf16.msra.mxu0 %v6426
        %6664 = vmatprep.subr.bf16.mxu0 0
        %6665 = vmatpush1.bf16.msra.mxu0 %v6427
        %6666 = vmatprep.subr.bf16.mxu0 0
        %6667 = vmatpush1.bf16.msra.mxu0 %v6428
        %6668 = vmatprep.subr.bf16.mxu0 0
        %6669 = vmatpush1.bf16.msra.mxu0 %v6429
        %6670 = vmatprep.subr.bf16.mxu0 0
        %6671 = vmatpush1.bf16.msra.mxu0 %v6430
        %6672 = vmatprep.mubr.bf16.mxu0 %v5891
        %6673 = vmatmul.mubr.bf16.gmra.mrb[0].mxu0 %v5890
        %v6674 = vpop.f32.mrb[0].mxu0
        %v6675 = vadd.f32 %v6578, %v6674
        %v6676 = vpop.f32.mrb[0].mxu0
        %v6677 = vpop.f32.mrb[0].mxu0
        %v6678 = vadd.f32 %v6581, %v6677
        %v6679 = vpop.f32.mrb[0].mxu0
        %6680 = vmatprep.mubr.bf16.mxu0 %v5900
        %6681 = vmatmul.mubr.bf16.gmra.mrb[0].mxu0 %v5899
        %v6682 = vpop.f32.mrb[0].mxu0
        %v6683 = vadd.f32 %v6586, %v6682
        %v6684 = vpop.f32.mrb[0].mxu0
        %v6685 = vpop.f32.mrb[0].mxu0
        %v6686 = vadd.f32 %v6589, %v6685
        %v6687 = vpop.f32.mrb[0].mxu0
        %6688 = vmatprep.mubr.bf16.mxu0 %v5909
        %6689 = vmatmul.mubr.bf16.gmra.mrb[0].mxu0 %v5908
        %v6690 = vpop.f32.mrb[0].mxu0
        %v6691 = vadd.f32 %v6594, %v6690
        %v6692 = vpop.f32.mrb[0].mxu0
        %v6693 = vpop.f32.mrb[0].mxu0
        %v6694 = vadd.f32 %v6597, %v6693
        %v6695 = vpop.f32.mrb[0].mxu0
        %6696 = vmatprep.mubr.bf16.mxu0 %v5918
        %6697 = vmatmul.mubr.bf16.gmra.mrb[0].mxu0 %v5917
        %v6698 = vpop.f32.mrb[0].mxu0
        %v6699 = vadd.f32 %v6602, %v6698
        %v6700 = vpop.f32.mrb[0].mxu0
        %v6701 = vpop.f32.mrb[0].mxu0
        %v6702 = vadd.f32 %v6605, %v6701
        %v6703 = vpop.f32.mrb[0].mxu0
        %6704 = vmatprep.mubr.bf16.mxu0 %v5927
        %6705 = vmatmul.mubr.bf16.gmra.mrb[0].mxu0 %v5926
        %v6706 = vpop.f32.mrb[0].mxu0
        %v6707 = vadd.f32 %v6610, %v6706
        %v6708 = vpop.f32.mrb[0].mxu0
        %v6709 = vpop.f32.mrb[0].mxu0
        %v6710 = vadd.f32 %v6613, %v6709
        %v6711 = vpop.f32.mrb[0].mxu0
        %6712 = vmatprep.mubr.bf16.mxu0 %v5936
        %6713 = vmatmul.mubr.bf16.gmra.mrb[0].mxu0 %v5935
        %v6714 = vpop.f32.mrb[0].mxu0
        %v6715 = vadd.f32 %v6618, %v6714
        %v6716 = vpop.f32.mrb[0].mxu0
        %v6717 = vpop.f32.mrb[0].mxu0
        %v6718 = vadd.f32 %v6621, %v6717
        %v6719 = vpop.f32.mrb[0].mxu0
        %6720 = vmatprep.mubr.bf16.mxu0 %v5945
        %6721 = vmatmul.mubr.bf16.gmra.mrb[0].mxu0 %v5944
        %v6722 = vpop.f32.mrb[0].mxu0
        %v6723 = vadd.f32 %v6626, %v6722
        %v6724 = vpop.f32.mrb[0].mxu0
        %v6725 = vpop.f32.mrb[0].mxu0
        %v6726 = vadd.f32 %v6629, %v6725
        %v6727 = vpop.f32.mrb[0].mxu0
        %6728 = vmatprep.mubr.bf16.mxu0 %v5954
        %6729 = vmatmul.mubr.bf16.gmra.mrb[0].mxu0 %v5953
        %v6730 = vpop.f32.mrb[0].mxu0
        %v6731 = vadd.f32 %v6634, %v6730
        %v6732 = vpop.f32.mrb[0].mxu0
        %v6733 = vpop.f32.mrb[0].mxu0
        %v6734 = vadd.f32 %v6637, %v6733
        %v6735 = vpop.f32.mrb[0].mxu0
        %6736 = vdwg.mxu0
        %6737 = vmatprep.subr.bf16.mxu0 0
        %6738 = vmatpush1.bf16.msra.mxu0 %v6431
        %6739 = vmatprep.subr.bf16.mxu0 0
        %6740 = vmatpush1.bf16.msra.mxu0 %v6432
        %6741 = vmatprep.subr.bf16.mxu0 0
        %6742 = vmatpush1.bf16.msra.mxu0 %v6433
        %6743 = vmatprep.subr.bf16.mxu0 0
        %6744 = vmatpush1.bf16.msra.mxu0 %v6434
        %6745 = vmatprep.subr.bf16.mxu0 0
        %6746 = vmatpush1.bf16.msra.mxu0 %v6435
        %6747 = vmatprep.subr.bf16.mxu0 0
        %6748 = vmatpush1.bf16.msra.mxu0 %v6436
        %6749 = vmatprep.subr.bf16.mxu0 0
        %6750 = vmatpush1.bf16.msra.mxu0 %v6437
        %6751 = vmatprep.subr.bf16.mxu0 0
        %6752 = vmatpush1.bf16.msra.mxu0 %v6438
        %6753 = vmatprep.subr.bf16.mxu0 0
        %6754 = vmatpush1.bf16.msra.mxu0 %v6439
        %6755 = vmatprep.subr.bf16.mxu0 0
        %6756 = vmatpush1.bf16.msra.mxu0 %v6440
        %6757 = vmatprep.subr.bf16.mxu0 0
        %6758 = vmatpush1.bf16.msra.mxu0 %v6441
        %6759 = vmatprep.subr.bf16.mxu0 0
        %6760 = vmatpush1.bf16.msra.mxu0 %v6442
        %6761 = vmatprep.subr.bf16.mxu0 0
        %6762 = vmatpush1.bf16.msra.mxu0 %v6443
        %6763 = vmatprep.subr.bf16.mxu0 0
        %6764 = vmatpush1.bf16.msra.mxu0 %v6444
        %6765 = vmatprep.subr.bf16.mxu0 0
        %6766 = vmatpush1.bf16.msra.mxu0 %v6445
        %6767 = vmatprep.subr.bf16.mxu0 0
        %6768 = vmatpush1.bf16.msra.mxu0 %v6446
        %6769 = vmatprep.mubr.bf16.mxu0 %v5893
        %6770 = vmatmul.mubr.bf16.gmra.mrb[0].mxu0 %v5892
        %v6771 = vpop.f32.mrb[0].mxu0
        %v6772 = vadd.f32 %v6675, %v6771
        %v6773 = vpop.f32.mrb[0].mxu0
        %v6774 = vpop.f32.mrb[0].mxu0
        %v6775 = vadd.f32 %v6678, %v6774
        %v6776 = vpop.f32.mrb[0].mxu0
        %6777 = vmatprep.mubr.bf16.mxu0 %v5902
        %6778 = vmatmul.mubr.bf16.gmra.mrb[0].mxu0 %v5901
        %v6779 = vpop.f32.mrb[0].mxu0
        %v6780 = vadd.f32 %v6683, %v6779
        %v6781 = vpop.f32.mrb[0].mxu0
        %v6782 = vpop.f32.mrb[0].mxu0
        %v6783 = vadd.f32 %v6686, %v6782
        %v6784 = vpop.f32.mrb[0].mxu0
        %6785 = vmatprep.mubr.bf16.mxu0 %v5911
        %6786 = vmatmul.mubr.bf16.gmra.mrb[0].mxu0 %v5910
        %v6787 = vpop.f32.mrb[0].mxu0
        %v6788 = vadd.f32 %v6691, %v6787
        %v6789 = vpop.f32.mrb[0].mxu0
        %v6790 = vpop.f32.mrb[0].mxu0
        %v6791 = vadd.f32 %v6694, %v6790
        %v6792 = vpop.f32.mrb[0].mxu0
        %6793 = vmatprep.mubr.bf16.mxu0 %v5920
        %6794 = vmatmul.mubr.bf16.gmra.mrb[0].mxu0 %v5919
        %v6795 = vpop.f32.mrb[0].mxu0
        %v6796 = vadd.f32 %v6699, %v6795
        %v6797 = vpop.f32.mrb[0].mxu0
        %v6798 = vpop.f32.mrb[0].mxu0
        %v6799 = vadd.f32 %v6702, %v6798
        %v6800 = vpop.f32.mrb[0].mxu0
        %6801 = vmatprep.mubr.bf16.mxu0 %v5929
        %6802 = vmatmul.mubr.bf16.gmra.mrb[0].mxu0 %v5928
        %v6803 = vpop.f32.mrb[0].mxu0
        %v6804 = vadd.f32 %v6707, %v6803
        %v6805 = vpop.f32.mrb[0].mxu0
        %v6806 = vpop.f32.mrb[0].mxu0
        %v6807 = vadd.f32 %v6710, %v6806
        %v6808 = vpop.f32.mrb[0].mxu0
        %6809 = vmatprep.mubr.bf16.mxu0 %v5938
        %6810 = vmatmul.mubr.bf16.gmra.mrb[0].mxu0 %v5937
        %v6811 = vpop.f32.mrb[0].mxu0
        %v6812 = vadd.f32 %v6715, %v6811
        %v6813 = vpop.f32.mrb[0].mxu0
        %v6814 = vpop.f32.mrb[0].mxu0
        %v6815 = vadd.f32 %v6718, %v6814
        %v6816 = vpop.f32.mrb[0].mxu0
        %6817 = vmatprep.mubr.bf16.mxu0 %v5947
        %6818 = vmatmul.mubr.bf16.gmra.mrb[0].mxu0 %v5946
        %v6819 = vpop.f32.mrb[0].mxu0
        %v6820 = vadd.f32 %v6723, %v6819
        %v6821 = vpop.f32.mrb[0].mxu0
        %v6822 = vpop.f32.mrb[0].mxu0
        %v6823 = vadd.f32 %v6726, %v6822
        %v6824 = vpop.f32.mrb[0].mxu0
        %6825 = vmatprep.mubr.bf16.mxu0 %v5956
        %6826 = vmatmul.mubr.bf16.gmra.mrb[0].mxu0 %v5955
        %v6827 = vpop.f32.mrb[0].mxu0
        %v6828 = vadd.f32 %v6731, %v6827
        %v6829 = vpop.f32.mrb[0].mxu0
        %v6830 = vpop.f32.mrb[0].mxu0
        %v6831 = vadd.f32 %v6734, %v6830
        %v6832 = vpop.f32.mrb[0].mxu0
        %6833 = vdwg.mxu0
        %6834 = vmatprep.subr.bf16.mxu0 0
        %6835 = vmatpush1.bf16.msra.mxu0 %v6447
        %6836 = vmatprep.subr.bf16.mxu0 0
        %6837 = vmatpush1.bf16.msra.mxu0 %v6448
        %6838 = vmatprep.subr.bf16.mxu0 0
        %6839 = vmatpush1.bf16.msra.mxu0 %v6449
        %6840 = vmatprep.subr.bf16.mxu0 0
        %6841 = vmatpush1.bf16.msra.mxu0 %v6450
        %6842 = vmatprep.subr.bf16.mxu0 0
        %6843 = vmatpush1.bf16.msra.mxu0 %v6451
        %6844 = vmatprep.subr.bf16.mxu0 0
        %6845 = vmatpush1.bf16.msra.mxu0 %v6452
        %6846 = vmatprep.subr.bf16.mxu0 0
        %6847 = vmatpush1.bf16.msra.mxu0 %v6453
        %6848 = vmatprep.subr.bf16.mxu0 0
        %6849 = vmatpush1.bf16.msra.mxu0 %v6454
        %6850 = vmatprep.subr.bf16.mxu0 0
        %6851 = vmatpush1.bf16.msra.mxu0 %v6455
        %6852 = vmatprep.subr.bf16.mxu0 0
        %6853 = vmatpush1.bf16.msra.mxu0 %v6456
        %6854 = vmatprep.subr.bf16.mxu0 0
        %6855 = vmatpush1.bf16.msra.mxu0 %v6457
        %6856 = vmatprep.subr.bf16.mxu0 0
        %6857 = vmatpush1.bf16.msra.mxu0 %v6458
        %6858 = vmatprep.subr.bf16.mxu0 0
        %6859 = vmatpush1.bf16.msra.mxu0 %v6459
        %6860 = vmatprep.subr.bf16.mxu0 0
        %6861 = vmatpush1.bf16.msra.mxu0 %v6460
        %6862 = vmatprep.subr.bf16.mxu0 0
        %6863 = vmatpush1.bf16.msra.mxu0 %v6461
        %6864 = vmatprep.subr.bf16.mxu0 0
        %6865 = vmatpush1.bf16.msra.mxu0 %v6462
        %6866 = vmatprep.mubr.bf16.mxu0 %v5895
        %6867 = vmatmul.mubr.bf16.gmra.mrb[0].mxu0 %v5894
        %v6868 = vpop.f32.mrb[0].mxu0
        %v6869 = vadd.f32 %v6772, %v6868
        %v6870 = vpop.f32.mrb[0].mxu0
        %v6871 = vpop.f32.mrb[0].mxu0
        %v6872 = vadd.f32 %v6775, %v6871
        %v6873 = vpop.f32.mrb[0].mxu0
        %6874 = vmatprep.mubr.bf16.mxu0 %v5904
        %6875 = vmatmul.mubr.bf16.gmra.mrb[0].mxu0 %v5903
        %v6876 = vpop.f32.mrb[0].mxu0
        %v6877 = vadd.f32 %v6780, %v6876
        %v6878 = vpop.f32.mrb[0].mxu0
        %v6879 = vpop.f32.mrb[0].mxu0
        %v6880 = vadd.f32 %v6783, %v6879
        %v6881 = vpop.f32.mrb[0].mxu0
        %6882 = vmatprep.mubr.bf16.mxu0 %v5913
        %6883 = vmatmul.mubr.bf16.gmra.mrb[0].mxu0 %v5912
        %v6884 = vpop.f32.mrb[0].mxu0
        %v6885 = vadd.f32 %v6788, %v6884
        %v6886 = vpop.f32.mrb[0].mxu0
        %v6887 = vpop.f32.mrb[0].mxu0
        %v6888 = vadd.f32 %v6791, %v6887
        %v6889 = vpop.f32.mrb[0].mxu0
        %6890 = vmatprep.mubr.bf16.mxu0 %v5922
        %6891 = vmatmul.mubr.bf16.gmra.mrb[0].mxu0 %v5921
        %v6892 = vpop.f32.mrb[0].mxu0
        %v6893 = vadd.f32 %v6796, %v6892
        %v6894 = vpop.f32.mrb[0].mxu0
        %v6895 = vpop.f32.mrb[0].mxu0
        %v6896 = vadd.f32 %v6799, %v6895
        %v6897 = vpop.f32.mrb[0].mxu0
        %6898 = vmatprep.mubr.bf16.mxu0 %v5931
        %6899 = vmatmul.mubr.bf16.gmra.mrb[0].mxu0 %v5930
        %v6900 = vpop.f32.mrb[0].mxu0
        %v6901 = vadd.f32 %v6804, %v6900
        %v6902 = vpop.f32.mrb[0].mxu0
        %v6903 = vpop.f32.mrb[0].mxu0
        %v6904 = vadd.f32 %v6807, %v6903
        %v6905 = vpop.f32.mrb[0].mxu0
        %6906 = vmatprep.mubr.bf16.mxu0 %v5940
        %6907 = vmatmul.mubr.bf16.gmra.mrb[0].mxu0 %v5939
        %v6908 = vpop.f32.mrb[0].mxu0
        %v6909 = vadd.f32 %v6812, %v6908
        %v6910 = vpop.f32.mrb[0].mxu0
        %v6911 = vpop.f32.mrb[0].mxu0
        %v6912 = vadd.f32 %v6815, %v6911
        %v6913 = vpop.f32.mrb[0].mxu0
        %6914 = vmatprep.mubr.bf16.mxu0 %v5949
        %6915 = vmatmul.mubr.bf16.gmra.mrb[0].mxu0 %v5948
        %v6916 = vpop.f32.mrb[0].mxu0
        %v6917 = vadd.f32 %v6820, %v6916
        %v6918 = vpop.f32.mrb[0].mxu0
        %v6919 = vpop.f32.mrb[0].mxu0
        %v6920 = vadd.f32 %v6823, %v6919
        %v6921 = vpop.f32.mrb[0].mxu0
        %6922 = vmatprep.mubr.bf16.mxu0 %v5958
        %6923 = vmatmul.mubr.bf16.gmra.mrb[0].mxu0 %v5957
        %v6924 = vpop.f32.mrb[0].mxu0
        %v6925 = vadd.f32 %v6828, %v6924
        %v6926 = vpop.f32.mrb[0].mxu0
        %v6927 = vpop.f32.mrb[0].mxu0
        %v6928 = vadd.f32 %v6831, %v6927
        %v6929 = vpop.f32.mrb[0].mxu0
        %6930 = vdwg.mxu0
        %6931 = vmatprep.subr.bf16.mxu0 0
        %6932 = vmatpush1.bf16.msra.mxu0 %v6463
        %6933 = vmatprep.subr.bf16.mxu0 0
        %6934 = vmatpush1.bf16.msra.mxu0 %v6464
        %6935 = vmatprep.subr.bf16.mxu0 0
        %6936 = vmatpush1.bf16.msra.mxu0 %v6465
        %6937 = vmatprep.subr.bf16.mxu0 0
        %6938 = vmatpush1.bf16.msra.mxu0 %v6466
        %6939 = vmatprep.subr.bf16.mxu0 0
        %6940 = vmatpush1.bf16.msra.mxu0 %v6467
        %6941 = vmatprep.subr.bf16.mxu0 0
        %6942 = vmatpush1.bf16.msra.mxu0 %v6468
        %6943 = vmatprep.subr.bf16.mxu0 0
        %6944 = vmatpush1.bf16.msra.mxu0 %v6469
        %6945 = vmatprep.subr.bf16.mxu0 0
        %6946 = vmatpush1.bf16.msra.mxu0 %v6470
        %6947 = vmatprep.subr.bf16.mxu0 0
        %6948 = vmatpush1.bf16.msra.mxu0 0
        %6949 = vmatprep.subr.bf16.mxu0 0
        %6950 = vmatpush1.bf16.msra.mxu0 0
        %6951 = vmatprep.subr.bf16.mxu0 0
        %6952 = vmatpush1.bf16.msra.mxu0 0
        %6953 = vmatprep.subr.bf16.mxu0 0
        %6954 = vmatpush1.bf16.msra.mxu0 0
        %6955 = vmatprep.subr.bf16.mxu0 0
        %6956 = vmatpush1.bf16.msra.mxu0 0
        %6957 = vmatprep.subr.bf16.mxu0 0
        %6958 = vmatpush1.bf16.msra.mxu0 0
        %6959 = vmatprep.subr.bf16.mxu0 0
        %6960 = vmatpush1.bf16.msra.mxu0 0
        %6961 = vmatprep.subr.bf16.mxu0 0
        %6962 = vmatpush1.bf16.msra.mxu0 0
        %6963 = vmatprep.mubr.bf16.mxu0 0
        %6964 = vmatmul.mubr.bf16.gmra.mrb[0].mxu0 %v5896
        %v6965 = vpop.f32.mrb[0].mxu0
        %v6966 = vadd.f32 %v6869, %v6965
        %v6967 = vpop.f32.mrb[0].mxu0
        %v6968 = vpop.f32.mrb[0].mxu0
        %v6969 = vadd.f32 %v6872, %v6968
        %v6970 = vpop.f32.mrb[0].mxu0
        %6971 = vmatprep.mubr.bf16.mxu0 0
        %6972 = vmatmul.mubr.bf16.gmra.mrb[0].mxu0 %v5905
        %v6973 = vpop.f32.mrb[0].mxu0
        %v6974 = vadd.f32 %v6877, %v6973
        %v6975 = vpop.f32.mrb[0].mxu0
        %v6976 = vpop.f32.mrb[0].mxu0
        %v6977 = vadd.f32 %v6880, %v6976
        %v6978 = vpop.f32.mrb[0].mxu0
        %6979 = vmatprep.mubr.bf16.mxu0 0
        %6980 = vmatmul.mubr.bf16.gmra.mrb[0].mxu0 %v5914
        %v6981 = vpop.f32.mrb[0].mxu0
        %v6982 = vadd.f32 %v6885, %v6981
        %v6983 = vpop.f32.mrb[0].mxu0
        %v6984 = vpop.f32.mrb[0].mxu0
        %v6985 = vadd.f32 %v6888, %v6984
        %v6986 = vpop.f32.mrb[0].mxu0
        %6987 = vmatprep.mubr.bf16.mxu0 0
        %6988 = vmatmul.mubr.bf16.gmra.mrb[0].mxu0 %v5923
        %v6989 = vpop.f32.mrb[0].mxu0
        %v6990 = vadd.f32 %v6893, %v6989
        %v6991 = vpop.f32.mrb[0].mxu0
        %v6992 = vpop.f32.mrb[0].mxu0
        %v6993 = vadd.f32 %v6896, %v6992
        %v6994 = vpop.f32.mrb[0].mxu0
        %6995 = vmatprep.mubr.bf16.mxu0 0
        %6996 = vmatmul.mubr.bf16.gmra.mrb[0].mxu0 %v5932
        %v6997 = vpop.f32.mrb[0].mxu0
        %v6998 = vadd.f32 %v6901, %v6997
        %v6999 = vpop.f32.mrb[0].mxu0
        %v7000 = vpop.f32.mrb[0].mxu0
        %v7001 = vadd.f32 %v6904, %v7000
        %v7002 = vpop.f32.mrb[0].mxu0
        %7003 = vmatprep.mubr.bf16.mxu0 0
        %7004 = vmatmul.mubr.bf16.gmra.mrb[0].mxu0 %v5941
        %v7005 = vpop.f32.mrb[0].mxu0
        %v7006 = vadd.f32 %v6909, %v7005
        %v7007 = vpop.f32.mrb[0].mxu0
        %v7008 = vpop.f32.mrb[0].mxu0
        %v7009 = vadd.f32 %v6912, %v7008
        %v7010 = vpop.f32.mrb[0].mxu0
        %7011 = vmatprep.mubr.bf16.mxu0 0
        %7012 = vmatmul.mubr.bf16.gmra.mrb[0].mxu0 %v5950
        %v7013 = vpop.f32.mrb[0].mxu0
        %v7014 = vadd.f32 %v6917, %v7013
        %v7015 = vpop.f32.mrb[0].mxu0
        %v7016 = vpop.f32.mrb[0].mxu0
        %v7017 = vadd.f32 %v6920, %v7016
        %v7018 = vpop.f32.mrb[0].mxu0
        %7019 = vmatprep.mubr.bf16.mxu0 0
        %7020 = vmatmul.mubr.bf16.gmra.mrb[0].mxu0 %v5959
        %v7021 = vpop.f32.mrb[0].mxu0
        %v7022 = vadd.f32 %v6925, %v7021
        %v7023 = vpop.f32.mrb[0].mxu0
        %v7024 = vpop.f32.mrb[0].mxu0
        %v7025 = vadd.f32 %v6928, %v7024
        %v7026 = vpop.f32.mrb[0].mxu0
        %7027 = vdwg.mxu0
        %v7028 = vadd.f32 %v670, %v6966
        %v7029 = vadd.f32 %v673, %v6969
        %v7030 = vadd.f32 %v678, %v6974
        %v7031 = vadd.f32 %v681, %v6977
        %v7032 = vadd.f32 %v686, %v6982
        %v7033 = vadd.f32 %v689, %v6985
        %v7034 = vadd.f32 %v694, %v6990
        %v7035 = vadd.f32 %v697, %v6993
        %v7036 = vadd.f32 %v702, %v6998
        %v7037 = vadd.f32 %v705, %v7001
        %v7038 = vadd.f32 %v710, %v7006
        %v7039 = vadd.f32 %v713, %v7009
        %v7040 = vadd.f32 %v718, %v7014
        %v7041 = vadd.f32 %v721, %v7017
        %v7042 = vadd.f32 %v726, %v7022
        %v7043 = vadd.f32 %v729, %v7025
        %v7044 = vadd.f32 %v7028, %v7030
        %v7045 = vadd.f32 %v7029, %v7031
        %v7046 = vadd.f32 %v7032, %v7034
        %v7047 = vadd.f32 %v7033, %v7035
        %v7048 = vadd.f32 %v7036, %v7038
        %v7049 = vadd.f32 %v7037, %v7039
        %v7050 = vadd.f32 %v7040, %v7042
        %v7051 = vadd.f32 %v7041, %v7043
        %v7060 = vcombine.high %v7044, %v7044
        %v7062 = vunpack.c.l.s4 1983009808
        %v7063 = vunpack.c.0.s8 %v7062
        %v7064 = vlaneseq
        %v7065 = vshrl.u32 %v7064, 7
        %v7066 = vsub.s32 %v7063, %v7065
        %v7067 = vrot.slane %v7044, %v7066
        %v7069 = vunpack.c.l.s4 1983009808
        %v7070 = vunpack.c.0.s8 %v7069
        %v7071 = vlaneseq
        %v7072 = vshrl.u32 %v7071, 7
        %v7073 = vsub.s32 %v7070, %v7072
        %v7074 = vrot.slane %v7060, %v7073
        %v7075 = vcombine.high %v7067, %v7067
        %v7076 = vcombine.high %v7074, %v7074
        %v7077 = vcombine.high %v7045, %v7045
        %v7079 = vunpack.c.l.s4 1983009808
        %v7080 = vunpack.c.0.s8 %v7079
        %v7081 = vlaneseq
        %v7082 = vshrl.u32 %v7081, 7
        %v7083 = vsub.s32 %v7080, %v7082
        %v7084 = vrot.slane %v7045, %v7083
        %v7086 = vunpack.c.l.s4 1983009808
        %v7087 = vunpack.c.0.s8 %v7086
        %v7088 = vlaneseq
        %v7089 = vshrl.u32 %v7088, 7
        %v7090 = vsub.s32 %v7087, %v7089
        %v7091 = vrot.slane %v7077, %v7090
        %v7092 = vcombine.high %v7084, %v7084
        %v7093 = vcombine.high %v7091, %v7091
        %v7094 = vcombine.high %v7046, %v7046
        %v7096 = vunpack.c.l.s4 1983009808
        %v7097 = vunpack.c.0.s8 %v7096
        %v7098 = vlaneseq
        %v7099 = vshrl.u32 %v7098, 7
        %v7100 = vsub.s32 %v7097, %v7099
        %v7101 = vrot.slane %v7046, %v7100
        %v7103 = vunpack.c.l.s4 1983009808
        %v7104 = vunpack.c.0.s8 %v7103
        %v7105 = vlaneseq
        %v7106 = vshrl.u32 %v7105, 7
        %v7107 = vsub.s32 %v7104, %v7106
        %v7108 = vrot.slane %v7094, %v7107
        %v7109 = vcombine.high %v7101, %v7101
        %v7110 = vcombine.high %v7108, %v7108
        %v7111 = vcombine.high %v7047, %v7047
        %v7113 = vunpack.c.l.s4 1983009808
        %v7114 = vunpack.c.0.s8 %v7113
        %v7115 = vlaneseq
        %v7116 = vshrl.u32 %v7115, 7
        %v7117 = vsub.s32 %v7114, %v7116
        %v7118 = vrot.slane %v7047, %v7117
        %v7120 = vunpack.c.l.s4 1983009808
        %v7121 = vunpack.c.0.s8 %v7120
        %v7122 = vlaneseq
        %v7123 = vshrl.u32 %v7122, 7
        %v7124 = vsub.s32 %v7121, %v7123
        %v7125 = vrot.slane %v7111, %v7124
        %v7126 = vcombine.high %v7118, %v7118
        %v7127 = vcombine.high %v7125, %v7125
        %v7128 = vcombine.high %v7048, %v7048
        %v7130 = vunpack.c.l.s4 1983009808
        %v7131 = vunpack.c.0.s8 %v7130
        %v7132 = vlaneseq
        %v7133 = vshrl.u32 %v7132, 7
        %v7134 = vsub.s32 %v7131, %v7133
        %v7135 = vrot.slane %v7048, %v7134
        %v7137 = vunpack.c.l.s4 1983009808
        %v7138 = vunpack.c.0.s8 %v7137
        %v7139 = vlaneseq
        %v7140 = vshrl.u32 %v7139, 7
        %v7141 = vsub.s32 %v7138, %v7140
        %v7142 = vrot.slane %v7128, %v7141
        %v7143 = vcombine.high %v7135, %v7135
        %v7144 = vcombine.high %v7142, %v7142
        %v7145 = vcombine.high %v7049, %v7049
        %v7147 = vunpack.c.l.s4 1983009808
        %v7148 = vunpack.c.0.s8 %v7147
        %v7149 = vlaneseq
        %v7150 = vshrl.u32 %v7149, 7
        %v7151 = vsub.s32 %v7148, %v7150
        %v7152 = vrot.slane %v7049, %v7151
        %v7154 = vunpack.c.l.s4 1983009808
        %v7155 = vunpack.c.0.s8 %v7154
        %v7156 = vlaneseq
        %v7157 = vshrl.u32 %v7156, 7
        %v7158 = vsub.s32 %v7155, %v7157
        %v7159 = vrot.slane %v7145, %v7158
        %v7160 = vcombine.high %v7152, %v7152
        %v7161 = vcombine.high %v7159, %v7159
        %v7162 = vcombine.high %v7050, %v7050
        %v7164 = vunpack.c.l.s4 1983009808
        %v7165 = vunpack.c.0.s8 %v7164
        %v7166 = vlaneseq
        %v7167 = vshrl.u32 %v7166, 7
        %v7168 = vsub.s32 %v7165, %v7167
        %v7169 = vrot.slane %v7050, %v7168
        %v7171 = vunpack.c.l.s4 1983009808
        %v7172 = vunpack.c.0.s8 %v7171
        %v7173 = vlaneseq
        %v7174 = vshrl.u32 %v7173, 7
        %v7175 = vsub.s32 %v7172, %v7174
        %v7176 = vrot.slane %v7162, %v7175
        %v7177 = vcombine.high %v7169, %v7169
        %v7178 = vcombine.high %v7176, %v7176
        %v7179 = vcombine.high %v7051, %v7051
        %v7181 = vunpack.c.l.s4 1983009808
        %v7182 = vunpack.c.0.s8 %v7181
        %v7183 = vlaneseq
        %v7184 = vshrl.u32 %v7183, 7
        %v7185 = vsub.s32 %v7182, %v7184
        %v7186 = vrot.slane %v7051, %v7185
        %v7188 = vunpack.c.l.s4 1983009808
        %v7189 = vunpack.c.0.s8 %v7188
        %v7190 = vlaneseq
        %v7191 = vshrl.u32 %v7190, 7
        %v7192 = vsub.s32 %v7189, %v7191
        %v7193 = vrot.slane %v7179, %v7192
        %v7194 = vcombine.high %v7186, %v7186
        %v7195 = vcombine.high %v7193, %v7193
        %vm7228 = vcmask 1041408
        %v7229 = vsel %vm7228, %v7067, 0.0
        %v7230 = vrot.slane %v7229, 4
        %v7231 = vadd.f32 %v7229, %v7230
        %v7232 = vrot.slane %v7231, 2
        %v7233 = vadd.f32 %v7231, %v7232
        %v7234 = vrot.slane %v7233, 1
        %v7235 = vadd.f32 %v7233, %v7234
        %v7236 = vsel %vm7228, %v7075, 0.0
        %v7237 = vrot.slane %v7236, 4
        %v7238 = vadd.f32 %v7236, %v7237
        %v7239 = vrot.slane %v7238, 2
        %v7240 = vadd.f32 %v7238, %v7239
        %v7241 = vrot.slane %v7240, 1
        %v7242 = vadd.f32 %v7240, %v7241
        %v7243 = vsel %vm7228, %v7074, 0.0
        %v7244 = vrot.slane %v7243, 4
        %v7245 = vadd.f32 %v7243, %v7244
        %v7246 = vrot.slane %v7245, 2
        %v7247 = vadd.f32 %v7245, %v7246
        %v7248 = vrot.slane %v7247, 1
        %v7249 = vadd.f32 %v7247, %v7248
        %v7250 = vsel %vm7228, %v7076, 0.0
        %v7251 = vrot.slane %v7250, 4
        %v7252 = vadd.f32 %v7250, %v7251
        %v7253 = vrot.slane %v7252, 2
        %v7254 = vadd.f32 %v7252, %v7253
        %v7255 = vrot.slane %v7254, 1
        %v7256 = vadd.f32 %v7254, %v7255
        %v7257 = vsel %vm7228, %v7084, 0.0
        %v7258 = vrot.slane %v7257, 4
        %v7259 = vadd.f32 %v7257, %v7258
        %v7260 = vrot.slane %v7259, 2
        %v7261 = vadd.f32 %v7259, %v7260
        %v7262 = vrot.slane %v7261, 1
        %v7263 = vadd.f32 %v7261, %v7262
        %v7264 = vsel %vm7228, %v7092, 0.0
        %v7265 = vrot.slane %v7264, 4
        %v7266 = vadd.f32 %v7264, %v7265
        %v7267 = vrot.slane %v7266, 2
        %v7268 = vadd.f32 %v7266, %v7267
        %v7269 = vrot.slane %v7268, 1
        %v7270 = vadd.f32 %v7268, %v7269
        %v7271 = vsel %vm7228, %v7091, 0.0
        %v7272 = vrot.slane %v7271, 4
        %v7273 = vadd.f32 %v7271, %v7272
        %v7274 = vrot.slane %v7273, 2
        %v7275 = vadd.f32 %v7273, %v7274
        %v7276 = vrot.slane %v7275, 1
        %v7277 = vadd.f32 %v7275, %v7276
        %v7278 = vsel %vm7228, %v7093, 0.0
        %v7279 = vrot.slane %v7278, 4
        %v7280 = vadd.f32 %v7278, %v7279
        %v7281 = vrot.slane %v7280, 2
        %v7282 = vadd.f32 %v7280, %v7281
        %v7283 = vrot.slane %v7282, 1
        %v7284 = vadd.f32 %v7282, %v7283
        %v7285 = vsel %vm7228, %v7101, 0.0
        %v7286 = vrot.slane %v7285, 4
        %v7287 = vadd.f32 %v7285, %v7286
        %v7288 = vrot.slane %v7287, 2
        %v7289 = vadd.f32 %v7287, %v7288
        %v7290 = vrot.slane %v7289, 1
        %v7291 = vadd.f32 %v7289, %v7290
        %v7292 = vsel %vm7228, %v7109, 0.0
        %v7293 = vrot.slane %v7292, 4
        %v7294 = vadd.f32 %v7292, %v7293
        %v7295 = vrot.slane %v7294, 2
        %v7296 = vadd.f32 %v7294, %v7295
        %v7297 = vrot.slane %v7296, 1
        %v7298 = vadd.f32 %v7296, %v7297
        %v7299 = vsel %vm7228, %v7108, 0.0
        %v7300 = vrot.slane %v7299, 4
        %v7301 = vadd.f32 %v7299, %v7300
        %v7302 = vrot.slane %v7301, 2
        %v7303 = vadd.f32 %v7301, %v7302
        %v7304 = vrot.slane %v7303, 1
        %v7305 = vadd.f32 %v7303, %v7304
        %v7306 = vsel %vm7228, %v7110, 0.0
        %v7307 = vrot.slane %v7306, 4
        %v7308 = vadd.f32 %v7306, %v7307
        %v7309 = vrot.slane %v7308, 2
        %v7310 = vadd.f32 %v7308, %v7309
        %v7311 = vrot.slane %v7310, 1
        %v7312 = vadd.f32 %v7310, %v7311
        %v7313 = vsel %vm7228, %v7118, 0.0
        %v7314 = vrot.slane %v7313, 4
        %v7315 = vadd.f32 %v7313, %v7314
        %v7316 = vrot.slane %v7315, 2
        %v7317 = vadd.f32 %v7315, %v7316
        %v7318 = vrot.slane %v7317, 1
        %v7319 = vadd.f32 %v7317, %v7318
        %v7320 = vsel %vm7228, %v7126, 0.0
        %v7321 = vrot.slane %v7320, 4
        %v7322 = vadd.f32 %v7320, %v7321
        %v7323 = vrot.slane %v7322, 2
        %v7324 = vadd.f32 %v7322, %v7323
        %v7325 = vrot.slane %v7324, 1
        %v7326 = vadd.f32 %v7324, %v7325
        %v7327 = vsel %vm7228, %v7125, 0.0
        %v7328 = vrot.slane %v7327, 4
        %v7329 = vadd.f32 %v7327, %v7328
        %v7330 = vrot.slane %v7329, 2
        %v7331 = vadd.f32 %v7329, %v7330
        %v7332 = vrot.slane %v7331, 1
        %v7333 = vadd.f32 %v7331, %v7332
        %v7334 = vsel %vm7228, %v7127, 0.0
        %v7335 = vrot.slane %v7334, 4
        %v7336 = vadd.f32 %v7334, %v7335
        %v7337 = vrot.slane %v7336, 2
        %v7338 = vadd.f32 %v7336, %v7337
        %v7339 = vrot.slane %v7338, 1
        %v7340 = vadd.f32 %v7338, %v7339
        %v7341 = vsel %vm7228, %v7135, 0.0
        %v7342 = vrot.slane %v7341, 4
        %v7343 = vadd.f32 %v7341, %v7342
        %v7344 = vrot.slane %v7343, 2
        %v7345 = vadd.f32 %v7343, %v7344
        %v7346 = vrot.slane %v7345, 1
        %v7347 = vadd.f32 %v7345, %v7346
        %v7348 = vsel %vm7228, %v7143, 0.0
        %v7349 = vrot.slane %v7348, 4
        %v7350 = vadd.f32 %v7348, %v7349
        %v7351 = vrot.slane %v7350, 2
        %v7352 = vadd.f32 %v7350, %v7351
        %v7353 = vrot.slane %v7352, 1
        %v7354 = vadd.f32 %v7352, %v7353
        %v7355 = vsel %vm7228, %v7142, 0.0
        %v7356 = vrot.slane %v7355, 4
        %v7357 = vadd.f32 %v7355, %v7356
        %v7358 = vrot.slane %v7357, 2
        %v7359 = vadd.f32 %v7357, %v7358
        %v7360 = vrot.slane %v7359, 1
        %v7361 = vadd.f32 %v7359, %v7360
        %v7362 = vsel %vm7228, %v7144, 0.0
        %v7363 = vrot.slane %v7362, 4
        %v7364 = vadd.f32 %v7362, %v7363
        %v7365 = vrot.slane %v7364, 2
        %v7366 = vadd.f32 %v7364, %v7365
        %v7367 = vrot.slane %v7366, 1
        %v7368 = vadd.f32 %v7366, %v7367
        %v7369 = vsel %vm7228, %v7152, 0.0
        %v7370 = vrot.slane %v7369, 4
        %v7371 = vadd.f32 %v7369, %v7370
        %v7372 = vrot.slane %v7371, 2
        %v7373 = vadd.f32 %v7371, %v7372
        %v7374 = vrot.slane %v7373, 1
        %v7375 = vadd.f32 %v7373, %v7374
        %v7376 = vsel %vm7228, %v7160, 0.0
        %v7377 = vrot.slane %v7376, 4
        %v7378 = vadd.f32 %v7376, %v7377
        %v7379 = vrot.slane %v7378, 2
        %v7380 = vadd.f32 %v7378, %v7379
        %v7381 = vrot.slane %v7380, 1
        %v7382 = vadd.f32 %v7380, %v7381
        %v7383 = vsel %vm7228, %v7159, 0.0
        %v7384 = vrot.slane %v7383, 4
        %v7385 = vadd.f32 %v7383, %v7384
        %v7386 = vrot.slane %v7385, 2
        %v7387 = vadd.f32 %v7385, %v7386
        %v7388 = vrot.slane %v7387, 1
        %v7389 = vadd.f32 %v7387, %v7388
        %v7390 = vsel %vm7228, %v7161, 0.0
        %v7391 = vrot.slane %v7390, 4
        %v7392 = vadd.f32 %v7390, %v7391
        %v7393 = vrot.slane %v7392, 2
        %v7394 = vadd.f32 %v7392, %v7393
        %v7395 = vrot.slane %v7394, 1
        %v7396 = vadd.f32 %v7394, %v7395
        %v7397 = vsel %vm7228, %v7169, 0.0
        %v7398 = vrot.slane %v7397, 4
        %v7399 = vadd.f32 %v7397, %v7398
        %v7400 = vrot.slane %v7399, 2
        %v7401 = vadd.f32 %v7399, %v7400
        %v7402 = vrot.slane %v7401, 1
        %v7403 = vadd.f32 %v7401, %v7402
        %v7404 = vsel %vm7228, %v7177, 0.0
        %v7405 = vrot.slane %v7404, 4
        %v7406 = vadd.f32 %v7404, %v7405
        %v7407 = vrot.slane %v7406, 2
        %v7408 = vadd.f32 %v7406, %v7407
        %v7409 = vrot.slane %v7408, 1
        %v7410 = vadd.f32 %v7408, %v7409
        %v7411 = vsel %vm7228, %v7176, 0.0
        %v7412 = vrot.slane %v7411, 4
        %v7413 = vadd.f32 %v7411, %v7412
        %v7414 = vrot.slane %v7413, 2
        %v7415 = vadd.f32 %v7413, %v7414
        %v7416 = vrot.slane %v7415, 1
        %v7417 = vadd.f32 %v7415, %v7416
        %v7418 = vsel %vm7228, %v7178, 0.0
        %v7419 = vrot.slane %v7418, 4
        %v7420 = vadd.f32 %v7418, %v7419
        %v7421 = vrot.slane %v7420, 2
        %v7422 = vadd.f32 %v7420, %v7421
        %v7423 = vrot.slane %v7422, 1
        %v7424 = vadd.f32 %v7422, %v7423
        %v7425 = vsel %vm7228, %v7186, 0.0
        %v7426 = vrot.slane %v7425, 4
        %v7427 = vadd.f32 %v7425, %v7426
        %v7428 = vrot.slane %v7427, 2
        %v7429 = vadd.f32 %v7427, %v7428
        %v7430 = vrot.slane %v7429, 1
        %v7431 = vadd.f32 %v7429, %v7430
        %v7432 = vsel %vm7228, %v7194, 0.0
        %v7433 = vrot.slane %v7432, 4
        %v7434 = vadd.f32 %v7432, %v7433
        %v7435 = vrot.slane %v7434, 2
        %v7436 = vadd.f32 %v7434, %v7435
        %v7437 = vrot.slane %v7436, 1
        %v7438 = vadd.f32 %v7436, %v7437
        %v7439 = vsel %vm7228, %v7193, 0.0
        %v7440 = vrot.slane %v7439, 4
        %v7441 = vadd.f32 %v7439, %v7440
        %v7442 = vrot.slane %v7441, 2
        %v7443 = vadd.f32 %v7441, %v7442
        %v7444 = vrot.slane %v7443, 1
        %v7445 = vadd.f32 %v7443, %v7444
        %v7446 = vsel %vm7228, %v7195, 0.0
        %v7447 = vrot.slane %v7446, 4
        %v7448 = vadd.f32 %v7446, %v7447
        %v7449 = vrot.slane %v7448, 2
        %v7450 = vadd.f32 %v7448, %v7449
        %v7451 = vrot.slane %v7450, 1
        %v7452 = vadd.f32 %v7450, %v7451
        %v7453 = vmul.f32 %v7235, 0.25
        %v7454 = vmul.f32 %v7242, 0.25
        %v7455 = vmul.f32 %v7249, 0.25
        %v7456 = vmul.f32 %v7256, 0.25
        %v7457 = vmul.f32 %v7263, 0.25
        %v7458 = vmul.f32 %v7270, 0.25
        %v7459 = vmul.f32 %v7277, 0.25
        %v7460 = vmul.f32 %v7284, 0.25
        %v7461 = vmul.f32 %v7291, 0.25
        %v7462 = vmul.f32 %v7298, 0.25
        %v7463 = vmul.f32 %v7305, 0.25
        %v7464 = vmul.f32 %v7312, 0.25
        %v7465 = vmul.f32 %v7319, 0.25
        %v7466 = vmul.f32 %v7326, 0.25
        %v7467 = vmul.f32 %v7333, 0.25
        %v7468 = vmul.f32 %v7340, 0.25
        %v7469 = vmul.f32 %v7347, 0.25
        %v7470 = vmul.f32 %v7354, 0.25
        %v7471 = vmul.f32 %v7361, 0.25
        %v7472 = vmul.f32 %v7368, 0.25
        %v7473 = vmul.f32 %v7375, 0.25
        %v7474 = vmul.f32 %v7382, 0.25
        %v7475 = vmul.f32 %v7389, 0.25
        %v7476 = vmul.f32 %v7396, 0.25
        %v7477 = vmul.f32 %v7403, 0.25
        %v7478 = vmul.f32 %v7410, 0.25
        %v7479 = vmul.f32 %v7417, 0.25
        %v7480 = vmul.f32 %v7424, 0.25
        %v7481 = vmul.f32 %v7431, 0.25
        %v7482 = vmul.f32 %v7438, 0.25
        %v7483 = vmul.f32 %v7445, 0.25
        %v7484 = vmul.f32 %v7452, 0.25
        %vm7517 = vcmask 1041409
        %v7518 = vsel %vm7517, %v7454, %v7453
        %vm7519 = vcmask 1042434
        %v7520 = vsel %vm7519, %v7455, %v7518
        %vm7521 = vcmask 1043459
        %v7522 = vsel %vm7521, %v7456, %v7520
        %vm7523 = vcmask 1044484
        %v7524 = vsel %vm7523, %v7457, %v7522
        %vm7525 = vcmask 1045509
        %v7526 = vsel %vm7525, %v7458, %v7524
        %vm7527 = vcmask 1046534
        %v7528 = vsel %vm7527, %v7459, %v7526
        %vm7529 = vcmask 1047559
        %v7530 = vsel %vm7529, %v7460, %v7528
        %v7531 = vsel %vm7517, %v7462, %v7461
        %v7532 = vsel %vm7519, %v7463, %v7531
        %v7533 = vsel %vm7521, %v7464, %v7532
        %v7534 = vsel %vm7523, %v7465, %v7533
        %v7535 = vsel %vm7525, %v7466, %v7534
        %v7536 = vsel %vm7527, %v7467, %v7535
        %v7537 = vsel %vm7529, %v7468, %v7536
        %v7538 = vsel %vm7517, %v7470, %v7469
        %v7539 = vsel %vm7519, %v7471, %v7538
        %v7540 = vsel %vm7521, %v7472, %v7539
        %v7541 = vsel %vm7523, %v7473, %v7540
        %v7542 = vsel %vm7525, %v7474, %v7541
        %v7543 = vsel %vm7527, %v7475, %v7542
        %v7544 = vsel %vm7529, %v7476, %v7543
        %v7545 = vsel %vm7517, %v7478, %v7477
        %v7546 = vsel %vm7519, %v7479, %v7545
        %v7547 = vsel %vm7521, %v7480, %v7546
        %v7548 = vsel %vm7523, %v7481, %v7547
        %v7549 = vsel %vm7525, %v7482, %v7548
        %v7550 = vsel %vm7527, %v7483, %v7549
        %v7551 = vsel %vm7529, %v7484, %v7550
        %7556 = vst [vmem:[%s300] sm:$0xff] %v7530
        %7557 = vst [vmem:[%s300 + $0x8] sm:$0xff] %v7537
        %7558 = vst [vmem:[%s300 + $0x10] sm:$0xff] %v7544
        %7559 = vst [vmem:[%s300 + $0x18] sm:$0xff] %v7551
        %s7560 = sand.u32 %s196, 1
        %s7561 = scalar_lea.sflag [#allocation6], %s7560
        %s7562 = sand.u32 %s196, 1
        %s7563 = smul.addr %s7562, 32
        %s7564 = scalar_lea.vmem [#allocation7], %s7563
        // Predicated region
        $region53: #{tpu_custom_call.1} parent=47 // pred_check
          %p7565 = pneg %p206
        $region54: #{tpu_custom_call.1} parent=47 // pred_check_branch
          %7567 = sbr.rel (%p7565) target = $region56
        $region55: #{tpu_custom_call.1} parent=47 // pred_region
          %s7568 = smul.u32 4, %s27
          %s7570 = ssub.s32 512, 512
          %7571 = vsyncadd %s7561, %s7570
          %s7572 = smul.addr %s26, 8
          %s7573 = sadd.s32 %s7568, %s7572
          %s7574 = smul.addr %s7573, 128
          %s7575 = scalar_lea.hbm %s7, %s7574
          %s7576 = sshll.u32 %s7564, 4
          %s7577 = int_to_ptr.vmem [resolvable:$true] %s7576
          %7582 = dma.vmem_to_hbm [thread:$0]  %s7577, 512, %s7575, %s7561, 128, 128, 8
        $region56: #{tpu_custom_call.1} parent=47 // pred_fallthru
          _
      $region48: #{tpu_custom_call.1} parent=5 // pred_fallthru
        _
      %p7583 = scmp.le.s32.totalorder 2, %s17
      // Predicated region
      $region57: #{tpu_custom_call.1} parent=5 // pred_check
        %p7584 = pneg %p7583
      $region58: #{tpu_custom_call.1} parent=5 // pred_check_branch
        %7586 = sbr.rel (%p7584) target = $region60
      $region59: #{tpu_custom_call.1} parent=5 // pred_region
        %s7587 = ssub.s32 %s17, 2
        // Predicated region
        $region61: #{tpu_custom_call.1} parent=59 // pred_check
          %p7588 = pneg %p212
        $region62: #{tpu_custom_call.1} parent=59 // pred_check_branch
          %7590 = sbr.rel (%p7588) target = $region64
        $region63: #{tpu_custom_call.1} parent=59 // pred_region
          %s7591 = sand.u32 %s197, 1
          %s7592 = scalar_lea.sflag [#allocation6], %s7591
          %s7593 = sand.u32 %s197, 1
          %s7594 = smul.addr %s7593, 32
          %s7595 = scalar_lea.vmem [#allocation7], %s7594
          %7596 = dma.done %s7592, 512
        $region64: #{tpu_custom_call.1} parent=59 // pred_fallthru
          _
      $region60: #{tpu_custom_call.1} parent=5 // pred_fallthru
        _
    $region6: #{tpu_custom_call.1} parent=1 // loop_footer
      %s21 = sadd.s32 1, %s17
    $region7: #{tpu_custom_call.1} parent=1 // loop_footer_branch
      %16 = sbr.rel target = $region3
    $region8: #{tpu_custom_call.1} parent=1 // loop_exit
      _
    %7597 = vsyncpa [#allocation5], 1
    %s7598 = scalar_lea.sflag [#allocation5], 1
    %7599 = vsyncpa %s7598, 1
    %7600 = vsyncpa [#allocation6], 1
    %s7601 = scalar_lea.sflag [#allocation6], 1
    %7602 = vsyncpa %s7601, 1

</llo_original>
